<compile_context>
chip_gen: v5e
topology: v5e:2x2
jax: 0.10.0
libtpu: 0.0.40
codegen_flags: <defaults>
</compile_context>

<pallas_src>
import functools

import jax
import jax.numpy as jnp
from jax import lax
from jax.experimental import pallas as pl
from jax.experimental.pallas import tpu as pltpu


def _round_up(n, m):
    return ((n + m - 1) // m) * m


def _choose_tm(m, cap, align=8):
    """Row-tile size for the M grid axis.

    Single grid step while M fits under `cap` (small batch is launch-bound);
    otherwise prefer two ~equal 16/8-aligned steps (so the "parallel" axis can
    shard across v7x's two TensorCores) before falling back to `cap`."""
    m_al = _round_up(m, align)
    if m_al <= cap:
        return m_al
    half = _round_up((m_al + 1) // 2, align)
    return half if half <= cap else cap


# ----------------------------- Pallas kernels ------------------------------

def _conv_pool_kernel(p_ref, w_ref, b_ref, o_ref):
    """Fused conv(as im2col matmul) + bias + relu + 2x2 max-pool.

    p_ref: (4, TM, K) bf16 -- patch matrix for each of the 4 pool-window
           positions, rows ordered over pooled output positions (b, hp, wp).
    w_ref: (K, O) bf16, b_ref: (1, O) f32, o_ref: (TM, O) bf16.
    Single MXU dot on the contiguous (4*TM, K) view (TM is 8/16-aligned so the
    reshape is layout-free), then a VPU max over the 4 pool positions.
    relu(max_i(P_i @ W) + b) == maxpool(relu(conv + b)) since bias is shared
    and relu/+bias are monotone.
    """
    four, tm, kk = p_ref.shape
    w = w_ref[...]
    acc = jnp.dot(p_ref[...].reshape(four * tm, kk), w,
                  preferred_element_type=jnp.float32)
    acc = jnp.max(acc.reshape(four, tm, acc.shape[-1]), axis=0)
    o_ref[...] = jnp.maximum(acc + b_ref[...], 0.0).astype(o_ref.dtype)


def _fc_block_kernel(x_ref, w1_ref, b1_ref, w2_ref, b2_ref, o_ref, *, n_valid):
    """Fused fc1 -> relu -> fc2 -> log_softmax (fc2 lane-padded to >=128)."""
    h = jnp.dot(x_ref[...], w1_ref[...], preferred_element_type=jnp.float32)
    h = jnp.maximum(h + b1_ref[...], 0.0)
    logits = jnp.dot(h.astype(jnp.bfloat16), w2_ref[...],
                     preferred_element_type=jnp.float32) + b2_ref[...]
    # mask padded lanes to -inf so they do not perturb the normalizer
    col = lax.broadcasted_iota(jnp.int32, logits.shape, 1)
    logits = jnp.where(col < n_valid, logits,
                       jnp.full_like(logits, -jnp.inf))
    m = jnp.max(logits, axis=-1, keepdims=True)
    e = jnp.exp(logits - m)
    lse = m + jnp.log(jnp.sum(e, axis=-1, keepdims=True))
    o_ref[...] = (logits - lse).astype(o_ref.dtype)


# ----------------------------- Pallas wrappers -----------------------------

def _pool_patches(x_nhwc, k):
    """Build the 4 pool-window im2col matrices: (4, B*Hp*Wp, k*k*C).

    Feature index = (di*k + dj)*C + c, matching the (k,k,Cin,O) weight matrix.
    """
    B, H, W, C = x_nhwc.shape
    Ho, Wo = H - k + 1, W - k + 1
    assert Ho % 2 == 0 and Wo % 2 == 0, "conv output H/W must be even for 2x2 pool"
    Hp, Wp = Ho // 2, Wo // 2
    taps = jnp.stack([x_nhwc[:, di:di + Ho, dj:dj + Wo, :]
                      for di in range(k) for dj in range(k)],
                     axis=3)                       # (B, Ho, Wo, k*k, C)
    outs = [taps[:, pi:pi + 2 * Hp:2, pj:pj + 2 * Wp:2]
            .reshape(B * Hp * Wp, k * k * C)
            for pi in range(2) for pj in range(2)]
    return jnp.stack(outs, axis=0), (B, Hp, Wp)    # (4, M, K)


def conv_relu_pool_pallas(x_nhwc, w_mat, b_row, k=5):
    """x: (B,H,W,C) f32/bf16, w_mat: (k*k*C, O) bf16, b_row: (1,O) f32.
    Returns pooled feature map (B, Hp, Wp, O) bf16."""
    K, O = w_mat.shape
    p, (B, Hp, Wp) = _pool_patches(x_nhwc.astype(jnp.bfloat16), k)
    M = p.shape[1]
    # align=16 keeps the (4,TM,K) bf16 -> (4*TM,K) merge on packed-sublane
    # boundaries (layout-free).
    TM = _choose_tm(M, 512, align=16)
    Mp = _round_up(M, TM)
    if Mp != M:
        p = jnp.pad(p, ((0, 0), (0, Mp - M), (0, 0)))

    # TODO(synk): O=32/64 (<128 lanes) -> masked stores; only worth lane-padding
    # conv2's O if profiling at large batch shows the store slot binding (v5e).
    out = pl.pallas_call(
        _conv_pool_kernel,
        out_shape=jax.ShapeDtypeStruct((Mp, O), jnp.bfloat16),
        grid=(Mp // TM,),
        in_specs=[
            pl.BlockSpec((4, TM, K), lambda i: (0, i, 0)),   # patches tile
            pl.BlockSpec((K, O), lambda i: (0, 0)),          # full weight
            pl.BlockSpec((1, O), lambda i: (0, 0)),          # bias row
        ],
        out_specs=pl.BlockSpec((TM, O), lambda i: (i, 0)),
        compiler_params=pltpu.CompilerParams(
            dimension_semantics=("parallel",)),
    )(p, w_mat, b_row)
    return out[:M].reshape(B, Hp, Wp, O)


def fc_block_pallas(x, w1, b1, w2p, b2p, n_classes):
    """Fused fc1+relu+fc2+log_softmax. x: (M,1024) bf16 (NHWC-flattened),
    w1: (1024,2048) bf16 (rows pre-permuted for the NHWC flatten),
    w2p: (2048, Npad) bf16 (zero-padded), biases (1,.) f32."""
    M, K1 = x.shape
    H = w1.shape[1]
    Npad = w2p.shape[1]
    TM = _choose_tm(M, 512, align=8)
    Mp = _round_up(M, TM)
    xp = x.astype(jnp.bfloat16)
    if Mp != M:
        xp = jnp.pad(xp, ((0, Mp - M), (0, 0)))

    out = pl.pallas_call(
        functools.partial(_fc_block_kernel, n_valid=n_classes),
        out_shape=jax.ShapeDtypeStruct((Mp, Npad), jnp.float32),
        grid=(Mp // TM,),
        in_specs=[
            pl.BlockSpec((TM, K1), lambda i: (i, 0)),    # x tile
            pl.BlockSpec((K1, H), lambda i: (0, 0)),     # fc1 weight (resident)
            pl.BlockSpec((1, H), lambda i: (0, 0)),      # fc1 bias
            pl.BlockSpec((H, Npad), lambda i: (0, 0)),   # fc2 weight (resident)
            pl.BlockSpec((1, Npad), lambda i: (0, 0)),   # fc2 bias
        ],
        out_specs=pl.BlockSpec((TM, Npad), lambda i: (i, 0)),
        compiler_params=pltpu.CompilerParams(
            dimension_semantics=("parallel",),
            vmem_limit_bytes=32 * 1024 * 1024),
    )(xp, w1, b1, w2p, b2p)
    return out[:M, :n_classes]


# ------------------------------- forward pass --------------------------------

def flnet_forward(x_nchw, pp, n_classes=62):
    x = jnp.transpose(x_nchw, (0, 2, 3, 1))                      # NCHW -> NHWC
    x = conv_relu_pool_pallas(x, pp["conv1_w"], pp["conv1_b"])   # (B,12,12,32)
    x = conv_relu_pool_pallas(x, pp["conv2_w"], pp["conv2_b"])   # (B, 4, 4,64)
    B = x.shape[0]
    # plain NHWC flatten; the torch NCHW flatten order is folded into fc1_w
    x = x.reshape(B, -1)
    return fc_block_pallas(x, pp["fc1_w"], pp["fc1_b"],
                           pp["fc2_w"], pp["fc2_b"], n_classes)


# --------------------------- parameters & prep ------------------------------

def init_params(key):
    """Raw torch-layout f32 parameters (conv OIHW, fc (in, out))."""
    def uinit(k, shape, fan_in):
        bound = 1.0 / jnp.sqrt(float(fan_in))
        return jax.random.uniform(k, shape, jnp.float32, -bound, bound)

    ks = jax.random.split(key, 8)
    return {
        "conv1_w": uinit(ks[0], (32, 1, 5, 5), 1 * 5 * 5),
        "conv1_b": uinit(ks[1], (32,), 1 * 5 * 5),
        "conv2_w": uinit(ks[2], (64, 32, 5, 5), 32 * 5 * 5),
        "conv2_b": uinit(ks[3], (64,), 32 * 5 * 5),
        "fc1_w":   uinit(ks[4], (4 * 4 * 64, 2048), 4 * 4 * 64),
        "fc1_b":   uinit(ks[5], (2048,), 4 * 4 * 64),
        "fc2_w":   uinit(ks[6], (2048, 62), 2048),
        "fc2_b":   uinit(ks[7], (62,), 2048),
    }


def prepare_params(p):
    """One-time (outside jit) weight preprocessing for the kernels:
    bf16 cast, conv OIHW -> (k*k*Cin, O) matrix, fc2 lane padding 62->128,
    and the torch NCHW-flatten permutation folded into fc1_w's rows."""
    def conv_mat(w):
        O, Cin, k, _ = w.shape
        return (jnp.transpose(w, (2, 3, 1, 0))
                .reshape(k * k * Cin, O).astype(jnp.bfloat16))

    # fc1_w rows are indexed by torch's flatten order (c, h, w) over (64,4,4);
    # permute once to NHWC order (h, w, c) so the runtime flatten is a reshape.
    C2, Hf, Wf = 64, 4, 4
    w1_nhwc = (p["fc1_w"].reshape(C2, Hf, Wf, -1)
               .transpose(1, 2, 0, 3).reshape(C2 * Hf * Wf, -1))

    n_cls = p["fc2_w"].shape[1]
    npad = _round_up(n_cls, 128)
    return {
        "conv1_w": conv_mat(p["conv1_w"]),
        "conv1_b": p["conv1_b"].reshape(1, -1),
        "conv2_w": conv_mat(p["conv2_w"]),
        "conv2_b": p["conv2_b"].reshape(1, -1),
        "fc1_w": w1_nhwc.astype(jnp.bfloat16),
        "fc1_b": p["fc1_b"].reshape(1, -1),
        "fc2_w": jnp.pad(p["fc2_w"],
                         ((0, 0), (0, npad - n_cls))).astype(jnp.bfloat16),
        "fc2_b": jnp.pad(p["fc2_b"], (0, npad - n_cls)).reshape(1, -1),
    }


# ----------------------------- pure-JAX reference ---------------------------

def flnet_reference(x_nchw, p):
    """lax-based reference with the same bf16-operand / f32-accumulate points."""
    bf16, f32 = jnp.bfloat16, jnp.float32
    dn = ("NCHW", "OIHW", "NCHW")
    y = lax.conv_general_dilated(x_nchw.astype(bf16), p["conv1_w"].astype(bf16),
                                 (1, 1), "VALID", dimension_numbers=dn,
                                 preferred_element_type=f32)
    y = jnp.maximum(y + p["conv1_b"][None, :, None, None], 0.0)
    y = lax.reduce_window(y, -jnp.inf, lax.max, (1, 1, 2, 2), (1, 1, 2, 2),
                          "VALID")
    y = lax.conv_general_dilated(y.astype(bf16), p["conv2_w"].astype(bf16),
                                 (1, 1), "VALID", dimension_numbers=dn,
                                 preferred_element_type=f32)
    y = jnp.maximum(y + p["conv2_b"][None, :, None, None], 0.0)
    y = lax.reduce_window(y, -jnp.inf, lax.max, (1, 1, 2, 2), (1, 1, 2, 2),
                          "VALID")
    y = y.reshape(y.shape[0], -1)
    h = jnp.maximum(jnp.dot(y.astype(bf16), p["fc1_w"].astype(bf16),
                            preferred_element_type=f32) + p["fc1_b"], 0.0)
    logits = jnp.dot(h.astype(bf16), p["fc2_w"].astype(bf16),
                     preferred_element_type=f32) + p["fc2_b"]
    return jax.nn.log_softmax(logits, axis=1)


# ----------------------------------- main -----------------------------------

if __name__ == "__main__":
    key = jax.random.PRNGKey(0)
    kx, kp = jax.random.split(key)
    # forward() implies a 1x28x28 input (-> 4*4*64 flatten); batch=2.
    x = jax.random.normal(kx, (2, 1, 28, 28), jnp.float32)
    params = init_params(kp)
    pp = prepare_params(params)          # one-time weight prep, outside jit

    fwd = jax.jit(flnet_forward)
    out = jax.block_until_ready(fwd(x, pp))
    assert out.shape == (2, 62) and out.dtype == jnp.float32

    ref = flnet_reference(x, params)
    err = float(jnp.max(jnp.abs(out - ref)))
    assert jnp.allclose(out, ref, rtol=1e-2, atol=1e-2), err

    print("KERNEL_OK")
</pallas_src>

<mosaic_0001>
module attributes {stable_mosaic.version = 11 : i64} {
  func.func @_conv_pool_kernel(%arg0: i32, %arg1: memref<4x288x25xbf16, #tpu.memory_space<vmem>>, %arg2: memref<25x32xbf16, #tpu.memory_space<vmem>>, %arg3: memref<1x32xf32, #tpu.memory_space<vmem>>, %arg4: memref<288x32xbf16, #tpu.memory_space<vmem>>) attributes {dimension_semantics = [#tpu.dimension_semantics<parallel>], iteration_bounds = array<i64: 1>, scalar_prefetch = 0 : i64, scratch_operands = 0 : i64, tpu.core_type = #tpu.core_type<tc>, window_params = [{transform_indices = @transform_0, window_bounds = array<i64: 4, 288, 25>}, {pipeline_mode = #tpu.pipeline_mode<synchronous>, transform_indices = @transform_1, window_bounds = array<i64: 25, 32>}, {pipeline_mode = #tpu.pipeline_mode<synchronous>, transform_indices = @transform_2, window_bounds = array<i64: 1, 32>}, {transform_indices = @transform_3, window_bounds = array<i64: 288, 32>}]} {
    %c0 = arith.constant 0 : index
    %c0_0 = arith.constant 0 : index
    %0 = vector.load %arg2[%c0, %c0_0] : memref<25x32xbf16, #tpu.memory_space<vmem>>, vector<25x32xbf16>
    %c0_1 = arith.constant 0 : index
    %c0_2 = arith.constant 0 : index
    %c0_3 = arith.constant 0 : index
    %1 = vector.load %arg1[%c0_1, %c0_2, %c0_3] : memref<4x288x25xbf16, #tpu.memory_space<vmem>>, vector<4x288x25xbf16>
    %2 = vector.shape_cast %1 : vector<4x288x25xbf16> to vector<1152x25xbf16>
    %cst = arith.constant dense<0.000000e+00> : vector<1152x32xf32>
    %3 = tpu.matmul %2, %0, %cst {dimension_numbers = #tpu.dot_dimension_numbers<[1], [0], [0], [1], [0, 0, 1, 1], [], []>} : vector<1152x25xbf16>, vector<25x32xbf16>, vector<1152x32xf32> -> vector<1152x32xf32>
    %4 = vector.shape_cast %3 : vector<1152x32xf32> to vector<4x288x32xf32>
    %cst_4 = arith.constant dense<0xFF800000> : vector<288x32xf32>
    %5 = vector.multi_reduction <maximumf>, %4, %cst_4 [0] : vector<4x288x32xf32> to vector<288x32xf32>
    %c0_5 = arith.constant 0 : index
    %c0_6 = arith.constant 0 : index
    %6 = vector.load %arg3[%c0_5, %c0_6] : memref<1x32xf32, #tpu.memory_space<vmem>>, vector<1x32xf32>
    %7 = vector.broadcast %6 : vector<1x32xf32> to vector<288x32xf32>
    %8 = arith.addf %5, %7 : vector<288x32xf32>
    %cst_7 = arith.constant 0.000000e+00 : f32
    %9 = vector.broadcast %cst_7 : f32 to vector<288x32xf32>
    %10 = arith.maximumf %8, %9 : vector<288x32xf32>
    %11 = arith.truncf %10 : vector<288x32xf32> to vector<288x32xbf16>
    %c0_8 = arith.constant 0 : index
    %c0_9 = arith.constant 0 : index
    %12 = vector.load %arg4[%c0_8, %c0_9] : memref<288x32xbf16, #tpu.memory_space<vmem>>, vector<288x32xbf16>
    tpu.vector_store %arg4[%c0_8, %c0_9], %11 {strides = array<i32>} : memref<288x32xbf16, #tpu.memory_space<vmem>>, vector<288x32xbf16>,
    return
  }
  func.func @transform_0(%arg0: i32) -> (i32, i32, i32) {
    %c0_i32 = arith.constant 0 : i32
    %c0_i32_0 = arith.constant 0 : i32
    %c0_i32_1 = arith.constant 0 : i32
    return %c0_i32, %arg0, %c0_i32_0 : i32, i32, i32
  }
  func.func @transform_1(%arg0: i32) -> (i32, i32) {
    %c0_i32 = arith.constant 0 : i32
    %c0_i32_0 = arith.constant 0 : i32
    %c0_i32_1 = arith.constant 0 : i32
    return %c0_i32, %c0_i32_0 : i32, i32
  }
  func.func @transform_2(%arg0: i32) -> (i32, i32) {
    %c0_i32 = arith.constant 0 : i32
    %c0_i32_0 = arith.constant 0 : i32
    %c0_i32_1 = arith.constant 0 : i32
    return %c0_i32, %c0_i32_0 : i32, i32
  }
  func.func @transform_3(%arg0: i32) -> (i32, i32) {
    %c0_i32 = arith.constant 0 : i32
    %c0_i32_0 = arith.constant 0 : i32
    return %arg0, %c0_i32 : i32, i32
  }
}

module attributes {stable_mosaic.version = 11 : i64} {
  func.func @_conv_pool_kernel(%arg0: i32, %arg1: memref<4x32x800xbf16, #tpu.memory_space<vmem>>, %arg2: memref<800x64xbf16, #tpu.memory_space<vmem>>, %arg3: memref<1x64xf32, #tpu.memory_space<vmem>>, %arg4: memref<32x64xbf16, #tpu.memory_space<vmem>>) attributes {dimension_semantics = [#tpu.dimension_semantics<parallel>], iteration_bounds = array<i64: 1>, scalar_prefetch = 0 : i64, scratch_operands = 0 : i64, tpu.core_type = #tpu.core_type<tc>, window_params = [{transform_indices = @transform_0, window_bounds = array<i64: 4, 32, 800>}, {pipeline_mode = #tpu.pipeline_mode<synchronous>, transform_indices = @transform_1, window_bounds = array<i64: 800, 64>}, {pipeline_mode = #tpu.pipeline_mode<synchronous>, transform_indices = @transform_2, window_bounds = array<i64: 1, 64>}, {transform_indices = @transform_3, window_bounds = array<i64: 32, 64>}]} {
    %c0 = arith.constant 0 : index
    %c0_0 = arith.constant 0 : index
    %0 = vector.load %arg2[%c0, %c0_0] : memref<800x64xbf16, #tpu.memory_space<vmem>>, vector<800x64xbf16>
    %c0_1 = arith.constant 0 : index
    %c0_2 = arith.constant 0 : index
    %c0_3 = arith.constant 0 : index
    %1 = vector.load %arg1[%c0_1, %c0_2, %c0_3] : memref<4x32x800xbf16, #tpu.memory_space<vmem>>, vector<4x32x800xbf16>
    %2 = vector.shape_cast %1 : vector<4x32x800xbf16> to vector<128x800xbf16>
    %cst = arith.constant dense<0.000000e+00> : vector<128x64xf32>
    %3 = tpu.matmul %2, %0, %cst {dimension_numbers = #tpu.dot_dimension_numbers<[1], [0], [0], [1], [0, 0, 1, 1], [], []>} : vector<128x800xbf16>, vector<800x64xbf16>, vector<128x64xf32> -> vector<128x64xf32>
    %4 = vector.shape_cast %3 : vector<128x64xf32> to vector<4x32x64xf32>
    %cst_4 = arith.constant dense<0xFF800000> : vector<32x64xf32>
    %5 = vector.multi_reduction <maximumf>, %4, %cst_4 [0] : vector<4x32x64xf32> to vector<32x64xf32>
    %c0_5 = arith.constant 0 : index
    %c0_6 = arith.constant 0 : index
    %6 = vector.load %arg3[%c0_5, %c0_6] : memref<1x64xf32, #tpu.memory_space<vmem>>, vector<1x64xf32>
    %7 = vector.broadcast %6 : vector<1x64xf32> to vector<32x64xf32>
    %8 = arith.addf %5, %7 : vector<32x64xf32>
    %cst_7 = arith.constant 0.000000e+00 : f32
    %9 = vector.broadcast %cst_7 : f32 to vector<32x64xf32>
    %10 = arith.maximumf %8, %9 : vector<32x64xf32>
    %11 = arith.truncf %10 : vector<32x64xf32> to vector<32x64xbf16>
    %c0_8 = arith.constant 0 : index
    %c0_9 = arith.constant 0 : index
    %12 = vector.load %arg4[%c0_8, %c0_9] : memref<32x64xbf16, #tpu.memory_space<vmem>>, vector<32x64xbf16>
    tpu.vector_store %arg4[%c0_8, %c0_9], %11 {strides = array<i32>} : memref<32x64xbf16, #tpu.memory_space<vmem>>, vector<32x64xbf16>,
    return
  }
  func.func @transform_0(%arg0: i32) -> (i32, i32, i32) {
    %c0_i32 = arith.constant 0 : i32
    %c0_i32_0 = arith.constant 0 : i32
    %c0_i32_1 = arith.constant 0 : i32
    return %c0_i32, %arg0, %c0_i32_0 : i32, i32, i32
  }
  func.func @transform_1(%arg0: i32) -> (i32, i32) {
    %c0_i32 = arith.constant 0 : i32
    %c0_i32_0 = arith.constant 0 : i32
    %c0_i32_1 = arith.constant 0 : i32
    return %c0_i32, %c0_i32_0 : i32, i32
  }
  func.func @transform_2(%arg0: i32) -> (i32, i32) {
    %c0_i32 = arith.constant 0 : i32
    %c0_i32_0 = arith.constant 0 : i32
    %c0_i32_1 = arith.constant 0 : i32
    return %c0_i32, %c0_i32_0 : i32, i32
  }
  func.func @transform_3(%arg0: i32) -> (i32, i32) {
    %c0_i32 = arith.constant 0 : i32
    %c0_i32_0 = arith.constant 0 : i32
    return %arg0, %c0_i32 : i32, i32
  }
}

module attributes {stable_mosaic.version = 11 : i64} {
  func.func @_fc_block_kernel(%arg0: i32, %arg1: memref<8x1024xbf16, #tpu.memory_space<vmem>>, %arg2: memref<1024x2048xbf16, #tpu.memory_space<vmem>>, %arg3: memref<1x2048xf32, #tpu.memory_space<vmem>>, %arg4: memref<2048x128xbf16, #tpu.memory_space<vmem>>, %arg5: memref<1x128xf32, #tpu.memory_space<vmem>>, %arg6: memref<8x128xf32, #tpu.memory_space<vmem>>) attributes {dimension_semantics = [#tpu.dimension_semantics<parallel>], iteration_bounds = array<i64: 1>, scalar_prefetch = 0 : i64, scratch_operands = 0 : i64, tpu.core_type = #tpu.core_type<tc>, window_params = [{transform_indices = @transform_0, window_bounds = array<i64: 8, 1024>}, {pipeline_mode = #tpu.pipeline_mode<synchronous>, transform_indices = @transform_1, window_bounds = array<i64: 1024, 2048>}, {pipeline_mode = #tpu.pipeline_mode<synchronous>, transform_indices = @transform_2, window_bounds = array<i64: 1, 2048>}, {pipeline_mode = #tpu.pipeline_mode<synchronous>, transform_indices = @transform_3, window_bounds = array<i64: 2048, 128>}, {pipeline_mode = #tpu.pipeline_mode<synchronous>, transform_indices = @transform_4, window_bounds = array<i64: 1, 128>}, {transform_indices = @transform_5, window_bounds = array<i64: 8, 128>}]} {
    %c0 = arith.constant 0 : index
    %c0_0 = arith.constant 0 : index
    %0 = vector.load %arg1[%c0, %c0_0] : memref<8x1024xbf16, #tpu.memory_space<vmem>>, vector<8x1024xbf16>
    %c0_1 = arith.constant 0 : index
    %c0_2 = arith.constant 0 : index
    %1 = vector.load %arg2[%c0_1, %c0_2] : memref<1024x2048xbf16, #tpu.memory_space<vmem>>, vector<1024x2048xbf16>
    %cst = arith.constant dense<0.000000e+00> : vector<8x2048xf32>
    %2 = tpu.matmul %0, %1, %cst {dimension_numbers = #tpu.dot_dimension_numbers<[1], [0], [0], [1], [0, 0, 1, 1], [], []>} : vector<8x1024xbf16>, vector<1024x2048xbf16>, vector<8x2048xf32> -> vector<8x2048xf32>
    %c0_3 = arith.constant 0 : index
    %c0_4 = arith.constant 0 : index
    %3 = vector.load %arg3[%c0_3, %c0_4] : memref<1x2048xf32, #tpu.memory_space<vmem>>, vector<1x2048xf32>
    %4 = vector.broadcast %3 : vector<1x2048xf32> to vector<8x2048xf32>
    %5 = arith.addf %2, %4 : vector<8x2048xf32>
    %cst_5 = arith.constant 0.000000e+00 : f32
    %6 = vector.broadcast %cst_5 : f32 to vector<8x2048xf32>
    %7 = arith.maximumf %5, %6 : vector<8x2048xf32>
    %8 = arith.truncf %7 : vector<8x2048xf32> to vector<8x2048xbf16>
    %c0_6 = arith.constant 0 : index
    %c0_7 = arith.constant 0 : index
    %9 = vector.load %arg4[%c0_6, %c0_7] : memref<2048x128xbf16, #tpu.memory_space<vmem>>, vector<2048x128xbf16>
    %cst_8 = arith.constant dense<0.000000e+00> : vector<8x128xf32>
    %10 = tpu.matmul %8, %9, %cst_8 {dimension_numbers = #tpu.dot_dimension_numbers<[1], [0], [0], [1], [0, 0, 1, 1], [], []>} : vector<8x2048xbf16>, vector<2048x128xbf16>, vector<8x128xf32> -> vector<8x128xf32>
    %c0_9 = arith.constant 0 : index
    %c0_10 = arith.constant 0 : index
    %11 = vector.load %arg5[%c0_9, %c0_10] : memref<1x128xf32, #tpu.memory_space<vmem>>, vector<1x128xf32>
    %12 = vector.broadcast %11 : vector<1x128xf32> to vector<8x128xf32>
    %13 = arith.addf %10, %12 : vector<8x128xf32>
    %14 = tpu.iota {dimensions = array<i32: 1>} : vector<8x128xi32>
    %c62_i32 = arith.constant 62 : i32
    %15 = vector.broadcast %c62_i32 : i32 to vector<8x128xi32>
    %16 = arith.cmpi slt, %14, %15 : vector<8x128xi32>
    %cst_11 = arith.constant 0xFF800000 : f32
    %17 = vector.broadcast %cst_11 : f32 to vector<8x128xf32>
    %18 = arith.select %16, %13, %17 : vector<8x128xi1>, vector<8x128xf32>
    %cst_12 = arith.constant dense<0xFF800000> : vector<8xf32>
    %19 = vector.multi_reduction <maximumf>, %18, %cst_12 [1] : vector<8x128xf32> to vector<8xf32>
    %20 = vector.shape_cast %19 : vector<8xf32> to vector<8x1xf32>
    %21 = vector.broadcast %20 : vector<8x1xf32> to vector<8x128xf32>
    %22 = arith.subf %18, %21 : vector<8x128xf32>
    %23 = math.exp %22 : vector<8x128xf32>
    %cst_13 = arith.constant dense<0.000000e+00> : vector<8xf32>
    %24 = vector.multi_reduction <add>, %23, %cst_13 [1] : vector<8x128xf32> to vector<8xf32>
    %25 = vector.shape_cast %24 : vector<8xf32> to vector<8x1xf32>
    %26 = math.log %25 : vector<8x1xf32>
    %27 = arith.addf %20, %26 : vector<8x1xf32>
    %28 = vector.broadcast %27 : vector<8x1xf32> to vector<8x128xf32>
    %29 = arith.subf %18, %28 : vector<8x128xf32>
    %c0_14 = arith.constant 0 : index
    %c0_15 = arith.constant 0 : index
    %30 = vector.load %arg6[%c0_14, %c0_15] : memref<8x128xf32, #tpu.memory_space<vmem>>, vector<8x128xf32>
    tpu.vector_store %arg6[%c0_14, %c0_15], %29 {strides = array<i32>} : memref<8x128xf32, #tpu.memory_space<vmem>>, vector<8x128xf32>,
    return
  }
  func.func @transform_0(%arg0: i32) -> (i32, i32) {
    %c0_i32 = arith.constant 0 : i32
    %c0_i32_0 = arith.constant 0 : i32
    return %arg0, %c0_i32 : i32, i32
  }
  func.func @transform_1(%arg0: i32) -> (i32, i32) {
    %c0_i32 = arith.constant 0 : i32
    %c0_i32_0 = arith.constant 0 : i32
    %c0_i32_1 = arith.constant 0 : i32
    return %c0_i32, %c0_i32_0 : i32, i32
  }
  func.func @transform_2(%arg0: i32) -> (i32, i32) {
    %c0_i32 = arith.constant 0 : i32
    %c0_i32_0 = arith.constant 0 : i32
    %c0_i32_1 = arith.constant 0 : i32
    return %c0_i32, %c0_i32_0 : i32, i32
  }
  func.func @transform_3(%arg0: i32) -> (i32, i32) {
    %c0_i32 = arith.constant 0 : i32
    %c0_i32_0 = arith.constant 0 : i32
    %c0_i32_1 = arith.constant 0 : i32
    return %c0_i32, %c0_i32_0 : i32, i32
  }
  func.func @transform_4(%arg0: i32) -> (i32, i32) {
    %c0_i32 = arith.constant 0 : i32
    %c0_i32_0 = arith.constant 0 : i32
    %c0_i32_1 = arith.constant 0 : i32
    return %c0_i32, %c0_i32_0 : i32, i32
  }
  func.func @transform_5(%arg0: i32) -> (i32, i32) {
    %c0_i32 = arith.constant 0 : i32
    %c0_i32_0 = arith.constant 0 : i32
    return %arg0, %c0_i32 : i32, i32
  }
}

</mosaic_0001>

<llo_original>
// kernel: flnet_forward.3
$region0: #{flnet_forward.3}
  #allocation0 [shape = 'u32[]', space=smem, size = 0x4, offset = 0x4, fixed_abs, tag = 'smem constant byte address 0x4 - core index']
  #allocation1 [shape = 'u32[72,128]{1,0:T(1,128)}', space=vmem, size = 0x9000, scoped, tag = 'internal scratch']
  %s0 = inlined_call_operand.vmem [shape: bf16[4,288,25], index: 0, kind: input, shape index: {}]
  %s1 = inlined_call_operand.vmem [shape: bf16[25,32], index: 1, kind: input, shape index: {}]
  %s2 = inlined_call_operand.vmem [shape: f32[1,32], index: 2, kind: input, shape index: {}]
  %s3 = inlined_call_operand.vmem [shape: bf16[288,32], index: 3, kind: output, shape index: {}]
  %s4 = sld [smem:[#allocation0]]
  $region22: #{flnet_forward.3} parent=0
    _
  %s6 = ssub.s32 1, %s4
  %s7 = scalar_select 0, %s6, %s4
  // Predicated region
  $region2: #{flnet_forward.3} parent=0 // pred_check
    _
  $region3: #{flnet_forward.3} parent=0 // pred_check_branch
    %9 = sbr.rel (0) target = $region5
  $region4: #{flnet_forward.3} parent=0 // pred_region
    _
  $region5: #{flnet_forward.3} parent=0 // pred_fallthru
    _
  // Predicated region
  $region6: #{flnet_forward.3} parent=0 // pred_check
    _
  $region7: #{flnet_forward.3} parent=0 // pred_check_branch
    %11 = sbr.rel (0) target = $region9
  $region8: #{flnet_forward.3} parent=0 // pred_region
    _
  $region9: #{flnet_forward.3} parent=0 // pred_fallthru
    _
  // Predicated region
  $region10: #{flnet_forward.3} parent=0 // pred_check
    _
  $region11: #{flnet_forward.3} parent=0 // pred_check_branch
    %13 = sbr.rel (0) target = $region13
  $region12: #{flnet_forward.3} parent=0 // pred_region
    _
  $region13: #{flnet_forward.3} parent=0 // pred_fallthru
    _
  %v15 = vld [vmem:[%s1] sm:$0xf]
  %v16 = vld [vmem:[%s1 + $0x4] sm:$0xf]
  %v17 = vld [vmem:[%s1 + $0x8] sm:$0xf]
  %v18 = vld [vmem:[%s1 + $0xc] sm:$0x1]
  %v19 = vld [vmem:[%s0] sm:$0xf]
  %v20 = vld [vmem:[%s0 + $0x4] sm:$0xf]
  %v21 = vld [vmem:[%s0 + $0x8] sm:$0xf]
  %v22 = vld [vmem:[%s0 + $0xc] sm:$0xf]
  %v23 = vld [vmem:[%s0 + $0x10] sm:$0xf]
  %v24 = vld [vmem:[%s0 + $0x14] sm:$0xf]
  %v25 = vld [vmem:[%s0 + $0x18] sm:$0xf]
  %v26 = vld [vmem:[%s0 + $0x1c] sm:$0xf]
  %v27 = vld [vmem:[%s0 + $0x20] sm:$0xf]
  %v28 = vld [vmem:[%s0 + $0x24] sm:$0xf]
  %v29 = vld [vmem:[%s0 + $0x28] sm:$0xf]
  %v30 = vld [vmem:[%s0 + $0x2c] sm:$0xf]
  %v31 = vld [vmem:[%s0 + $0x30] sm:$0xf]
  %v32 = vld [vmem:[%s0 + $0x34] sm:$0xf]
  %v33 = vld [vmem:[%s0 + $0x38] sm:$0xf]
  %v34 = vld [vmem:[%s0 + $0x3c] sm:$0xf]
  %v35 = vld [vmem:[%s0 + $0x40] sm:$0xf]
  %v36 = vld [vmem:[%s0 + $0x44] sm:$0xf]
  %v37 = vld [vmem:[%s0 + $0x48] sm:$0xf]
  %v38 = vld [vmem:[%s0 + $0x4c] sm:$0xf]
  %v39 = vld [vmem:[%s0 + $0x50] sm:$0xf]
  %v40 = vld [vmem:[%s0 + $0x54] sm:$0xf]
  %v41 = vld [vmem:[%s0 + $0x58] sm:$0xf]
  %v42 = vld [vmem:[%s0 + $0x5c] sm:$0xf]
  %v43 = vld [vmem:[%s0 + $0x60] sm:$0xf]
  %v44 = vld [vmem:[%s0 + $0x64] sm:$0xf]
  %v45 = vld [vmem:[%s0 + $0x68] sm:$0xf]
  %v46 = vld [vmem:[%s0 + $0x6c] sm:$0xf]
  %v47 = vld [vmem:[%s0 + $0x70] sm:$0xf]
  %v48 = vld [vmem:[%s0 + $0x74] sm:$0xf]
  %v49 = vld [vmem:[%s0 + $0x78] sm:$0xf]
  %v50 = vld [vmem:[%s0 + $0x7c] sm:$0xf]
  %v51 = vld [vmem:[%s0 + $0x80] sm:$0xf]
  %v52 = vld [vmem:[%s0 + $0x84] sm:$0xf]
  %v53 = vld [vmem:[%s0 + $0x88] sm:$0xf]
  %v54 = vld [vmem:[%s0 + $0x8c] sm:$0xf]
  %v55 = vld [vmem:[%s0 + $0x90] sm:$0xf]
  %v56 = vld [vmem:[%s0 + $0x94] sm:$0xf]
  %v57 = vld [vmem:[%s0 + $0x98] sm:$0xf]
  %v58 = vld [vmem:[%s0 + $0x9c] sm:$0xf]
  %v59 = vld [vmem:[%s0 + $0xa0] sm:$0xf]
  %v60 = vld [vmem:[%s0 + $0xa4] sm:$0xf]
  %v61 = vld [vmem:[%s0 + $0xa8] sm:$0xf]
  %v62 = vld [vmem:[%s0 + $0xac] sm:$0xf]
  %v63 = vld [vmem:[%s0 + $0xb0] sm:$0xf]
  %v64 = vld [vmem:[%s0 + $0xb4] sm:$0xf]
  %v65 = vld [vmem:[%s0 + $0xb8] sm:$0xf]
  %v66 = vld [vmem:[%s0 + $0xbc] sm:$0xf]
  %v67 = vld [vmem:[%s0 + $0xc0] sm:$0xf]
  %v68 = vld [vmem:[%s0 + $0xc4] sm:$0xf]
  %v69 = vld [vmem:[%s0 + $0xc8] sm:$0xf]
  %v70 = vld [vmem:[%s0 + $0xcc] sm:$0xf]
  %v71 = vld [vmem:[%s0 + $0xd0] sm:$0xf]
  %v72 = vld [vmem:[%s0 + $0xd4] sm:$0xf]
  %v73 = vld [vmem:[%s0 + $0xd8] sm:$0xf]
  %v74 = vld [vmem:[%s0 + $0xdc] sm:$0xf]
  %v75 = vld [vmem:[%s0 + $0xe0] sm:$0xf]
  %v76 = vld [vmem:[%s0 + $0xe4] sm:$0xf]
  %v77 = vld [vmem:[%s0 + $0xe8] sm:$0xf]
  %v78 = vld [vmem:[%s0 + $0xec] sm:$0xf]
  %v79 = vld [vmem:[%s0 + $0xf0] sm:$0xf]
  %v80 = vld [vmem:[%s0 + $0xf4] sm:$0xf]
  %v81 = vld [vmem:[%s0 + $0xf8] sm:$0xf]
  %v82 = vld [vmem:[%s0 + $0xfc] sm:$0xf]
  %v83 = vld [vmem:[%s0 + $0x100] sm:$0xf]
  %v84 = vld [vmem:[%s0 + $0x104] sm:$0xf]
  %v85 = vld [vmem:[%s0 + $0x108] sm:$0xf]
  %v86 = vld [vmem:[%s0 + $0x10c] sm:$0xf]
  %v87 = vld [vmem:[%s0 + $0x110] sm:$0xf]
  %v88 = vld [vmem:[%s0 + $0x114] sm:$0xf]
  %v89 = vld [vmem:[%s0 + $0x118] sm:$0xf]
  %v90 = vld [vmem:[%s0 + $0x11c] sm:$0xf]
  %v91 = vld [vmem:[%s0 + $0x120] sm:$0xf]
  %v92 = vld [vmem:[%s0 + $0x124] sm:$0xf]
  %v93 = vld [vmem:[%s0 + $0x128] sm:$0xf]
  %v94 = vld [vmem:[%s0 + $0x12c] sm:$0xf]
  %v95 = vld [vmem:[%s0 + $0x130] sm:$0xf]
  %v96 = vld [vmem:[%s0 + $0x134] sm:$0xf]
  %v97 = vld [vmem:[%s0 + $0x138] sm:$0xf]
  %v98 = vld [vmem:[%s0 + $0x13c] sm:$0xf]
  %v99 = vld [vmem:[%s0 + $0x140] sm:$0xf]
  %v100 = vld [vmem:[%s0 + $0x144] sm:$0xf]
  %v101 = vld [vmem:[%s0 + $0x148] sm:$0xf]
  %v102 = vld [vmem:[%s0 + $0x14c] sm:$0xf]
  %v103 = vld [vmem:[%s0 + $0x150] sm:$0xf]
  %v104 = vld [vmem:[%s0 + $0x154] sm:$0xf]
  %v105 = vld [vmem:[%s0 + $0x158] sm:$0xf]
  %v106 = vld [vmem:[%s0 + $0x15c] sm:$0xf]
  %v107 = vld [vmem:[%s0 + $0x160] sm:$0xf]
  %v108 = vld [vmem:[%s0 + $0x164] sm:$0xf]
  %v109 = vld [vmem:[%s0 + $0x168] sm:$0xf]
  %v110 = vld [vmem:[%s0 + $0x16c] sm:$0xf]
  %v111 = vld [vmem:[%s0 + $0x170] sm:$0xf]
  %v112 = vld [vmem:[%s0 + $0x174] sm:$0xf]
  %v113 = vld [vmem:[%s0 + $0x178] sm:$0xf]
  %v114 = vld [vmem:[%s0 + $0x17c] sm:$0xf]
  %v115 = vld [vmem:[%s0 + $0x180] sm:$0xf]
  %v116 = vld [vmem:[%s0 + $0x184] sm:$0xf]
  %v117 = vld [vmem:[%s0 + $0x188] sm:$0xf]
  %v118 = vld [vmem:[%s0 + $0x18c] sm:$0xf]
  %v119 = vld [vmem:[%s0 + $0x190] sm:$0xf]
  %v120 = vld [vmem:[%s0 + $0x194] sm:$0xf]
  %v121 = vld [vmem:[%s0 + $0x198] sm:$0xf]
  %v122 = vld [vmem:[%s0 + $0x19c] sm:$0xf]
  %v123 = vld [vmem:[%s0 + $0x1a0] sm:$0xf]
  %v124 = vld [vmem:[%s0 + $0x1a4] sm:$0xf]
  %v125 = vld [vmem:[%s0 + $0x1a8] sm:$0xf]
  %v126 = vld [vmem:[%s0 + $0x1ac] sm:$0xf]
  %v127 = vld [vmem:[%s0 + $0x1b0] sm:$0xf]
  %v128 = vld [vmem:[%s0 + $0x1b4] sm:$0xf]
  %v129 = vld [vmem:[%s0 + $0x1b8] sm:$0xf]
  %v130 = vld [vmem:[%s0 + $0x1bc] sm:$0xf]
  %v131 = vld [vmem:[%s0 + $0x1c0] sm:$0xf]
  %v132 = vld [vmem:[%s0 + $0x1c4] sm:$0xf]
  %v133 = vld [vmem:[%s0 + $0x1c8] sm:$0xf]
  %v134 = vld [vmem:[%s0 + $0x1cc] sm:$0xf]
  %v135 = vld [vmem:[%s0 + $0x1d0] sm:$0xf]
  %v136 = vld [vmem:[%s0 + $0x1d4] sm:$0xf]
  %v137 = vld [vmem:[%s0 + $0x1d8] sm:$0xf]
  %v138 = vld [vmem:[%s0 + $0x1dc] sm:$0xf]
  %v139 = vld [vmem:[%s0 + $0x1e0] sm:$0xf]
  %v140 = vld [vmem:[%s0 + $0x1e4] sm:$0xf]
  %v141 = vld [vmem:[%s0 + $0x1e8] sm:$0xf]
  %v142 = vld [vmem:[%s0 + $0x1ec] sm:$0xf]
  %v143 = vld [vmem:[%s0 + $0x1f0] sm:$0xf]
  %v144 = vld [vmem:[%s0 + $0x1f4] sm:$0xf]
  %v145 = vld [vmem:[%s0 + $0x1f8] sm:$0xf]
  %v146 = vld [vmem:[%s0 + $0x1fc] sm:$0xf]
  %v147 = vld [vmem:[%s0 + $0x200] sm:$0xf]
  %v148 = vld [vmem:[%s0 + $0x204] sm:$0xf]
  %v149 = vld [vmem:[%s0 + $0x208] sm:$0xf]
  %v150 = vld [vmem:[%s0 + $0x20c] sm:$0xf]
  %v151 = vld [vmem:[%s0 + $0x210] sm:$0xf]
  %v152 = vld [vmem:[%s0 + $0x214] sm:$0xf]
  %v153 = vld [vmem:[%s0 + $0x218] sm:$0xf]
  %v154 = vld [vmem:[%s0 + $0x21c] sm:$0xf]
  %v155 = vld [vmem:[%s0 + $0x220] sm:$0xf]
  %v156 = vld [vmem:[%s0 + $0x224] sm:$0xf]
  %v157 = vld [vmem:[%s0 + $0x228] sm:$0xf]
  %v158 = vld [vmem:[%s0 + $0x22c] sm:$0xf]
  %v159 = vld [vmem:[%s0 + $0x230] sm:$0xf]
  %v160 = vld [vmem:[%s0 + $0x234] sm:$0xf]
  %v161 = vld [vmem:[%s0 + $0x238] sm:$0xf]
  %v162 = vld [vmem:[%s0 + $0x23c] sm:$0xf]
  %v307 = vunpack.c.l.b16 %v19
  %v308 = vunpack.c.l.b16 %v20
  %v309 = vunpack.c.l.b16 %v21
  %v310 = vunpack.c.l.b16 %v22
  %v311 = vunpack.c.l.b16 %v23
  %v312 = vunpack.c.l.b16 %v24
  %v313 = vunpack.c.l.b16 %v25
  %v314 = vunpack.c.l.b16 %v26
  %v315 = vunpack.c.l.b16 %v27
  %v316 = vunpack.c.l.b16 %v28
  %v317 = vunpack.c.l.b16 %v29
  %v318 = vunpack.c.l.b16 %v30
  %v319 = vunpack.c.l.b16 %v31
  %v320 = vunpack.c.l.b16 %v32
  %v321 = vunpack.c.l.b16 %v33
  %v322 = vunpack.c.l.b16 %v34
  %v323 = vunpack.c.l.b16 %v35
  %v324 = vunpack.c.l.b16 %v36
  %v325 = vunpack.c.l.b16 %v37
  %v326 = vunpack.c.l.b16 %v38
  %v327 = vunpack.c.l.b16 %v39
  %v328 = vunpack.c.l.b16 %v40
  %v329 = vunpack.c.l.b16 %v41
  %v330 = vunpack.c.l.b16 %v42
  %v331 = vunpack.c.l.b16 %v43
  %v332 = vunpack.c.l.b16 %v44
  %v333 = vunpack.c.l.b16 %v45
  %v334 = vunpack.c.l.b16 %v46
  %v335 = vunpack.c.l.b16 %v47
  %v336 = vunpack.c.l.b16 %v48
  %v337 = vunpack.c.l.b16 %v49
  %v338 = vunpack.c.l.b16 %v50
  %v339 = vunpack.c.l.b16 %v51
  %v340 = vunpack.c.l.b16 %v52
  %v341 = vunpack.c.l.b16 %v53
  %v342 = vunpack.c.l.b16 %v54
  %v343 = vunpack.c.l.b16 %v55
  %v344 = vunpack.c.l.b16 %v56
  %v345 = vunpack.c.l.b16 %v57
  %v346 = vunpack.c.l.b16 %v58
  %v347 = vunpack.c.l.b16 %v59
  %v348 = vunpack.c.l.b16 %v60
  %v349 = vunpack.c.l.b16 %v61
  %v350 = vunpack.c.l.b16 %v62
  %v351 = vunpack.c.l.b16 %v63
  %v352 = vunpack.c.l.b16 %v64
  %v353 = vunpack.c.l.b16 %v65
  %v354 = vunpack.c.l.b16 %v66
  %v355 = vunpack.c.l.b16 %v67
  %v356 = vunpack.c.l.b16 %v68
  %v357 = vunpack.c.l.b16 %v69
  %v358 = vunpack.c.l.b16 %v70
  %v359 = vunpack.c.l.b16 %v71
  %v360 = vunpack.c.l.b16 %v72
  %v361 = vunpack.c.l.b16 %v73
  %v362 = vunpack.c.l.b16 %v74
  %v363 = vunpack.c.l.b16 %v75
  %v364 = vunpack.c.l.b16 %v76
  %v365 = vunpack.c.l.b16 %v77
  %v366 = vunpack.c.l.b16 %v78
  %v367 = vunpack.c.l.b16 %v79
  %v368 = vunpack.c.l.b16 %v80
  %v369 = vunpack.c.l.b16 %v81
  %v370 = vunpack.c.l.b16 %v82
  %v371 = vunpack.c.l.b16 %v83
  %v372 = vunpack.c.l.b16 %v84
  %v373 = vunpack.c.l.b16 %v85
  %v374 = vunpack.c.l.b16 %v86
  %v375 = vunpack.c.l.b16 %v87
  %v376 = vunpack.c.l.b16 %v88
  %v377 = vunpack.c.l.b16 %v89
  %v378 = vunpack.c.l.b16 %v90
  %v379 = vunpack.c.l.b16 %v91
  %v380 = vunpack.c.l.b16 %v92
  %v381 = vunpack.c.l.b16 %v93
  %v382 = vunpack.c.l.b16 %v94
  %v383 = vunpack.c.l.b16 %v95
  %v384 = vunpack.c.l.b16 %v96
  %v385 = vunpack.c.l.b16 %v97
  %v386 = vunpack.c.l.b16 %v98
  %v387 = vunpack.c.l.b16 %v99
  %v388 = vunpack.c.l.b16 %v100
  %v389 = vunpack.c.l.b16 %v101
  %v390 = vunpack.c.l.b16 %v102
  %v391 = vunpack.c.l.b16 %v103
  %v392 = vunpack.c.l.b16 %v104
  %v393 = vunpack.c.l.b16 %v105
  %v394 = vunpack.c.l.b16 %v106
  %v395 = vunpack.c.l.b16 %v107
  %v396 = vunpack.c.l.b16 %v108
  %v397 = vunpack.c.l.b16 %v109
  %v398 = vunpack.c.l.b16 %v110
  %v399 = vunpack.c.l.b16 %v111
  %v400 = vunpack.c.l.b16 %v112
  %v401 = vunpack.c.l.b16 %v113
  %v402 = vunpack.c.l.b16 %v114
  %v403 = vunpack.c.l.b16 %v115
  %v404 = vunpack.c.l.b16 %v116
  %v405 = vunpack.c.l.b16 %v117
  %v406 = vunpack.c.l.b16 %v118
  %v407 = vunpack.c.l.b16 %v119
  %v408 = vunpack.c.l.b16 %v120
  %v409 = vunpack.c.l.b16 %v121
  %v410 = vunpack.c.l.b16 %v122
  %v411 = vunpack.c.l.b16 %v123
  %v412 = vunpack.c.l.b16 %v124
  %v413 = vunpack.c.l.b16 %v125
  %v414 = vunpack.c.l.b16 %v126
  %v415 = vunpack.c.l.b16 %v127
  %v416 = vunpack.c.l.b16 %v128
  %v417 = vunpack.c.l.b16 %v129
  %v418 = vunpack.c.l.b16 %v130
  %v419 = vunpack.c.l.b16 %v131
  %v420 = vunpack.c.l.b16 %v132
  %v421 = vunpack.c.l.b16 %v133
  %v422 = vunpack.c.l.b16 %v134
  %v423 = vunpack.c.l.b16 %v135
  %v424 = vunpack.c.l.b16 %v136
  %v425 = vunpack.c.l.b16 %v137
  %v426 = vunpack.c.l.b16 %v138
  %v427 = vunpack.c.l.b16 %v139
  %v428 = vunpack.c.l.b16 %v140
  %v429 = vunpack.c.l.b16 %v141
  %v430 = vunpack.c.l.b16 %v142
  %v431 = vunpack.c.l.b16 %v143
  %v432 = vunpack.c.l.b16 %v144
  %v433 = vunpack.c.l.b16 %v145
  %v434 = vunpack.c.l.b16 %v146
  %v435 = vunpack.c.l.b16 %v147
  %v436 = vunpack.c.l.b16 %v148
  %v437 = vunpack.c.l.b16 %v149
  %v438 = vunpack.c.l.b16 %v150
  %v439 = vunpack.c.l.b16 %v151
  %v440 = vunpack.c.l.b16 %v152
  %v441 = vunpack.c.l.b16 %v153
  %v442 = vunpack.c.l.b16 %v154
  %v443 = vunpack.c.l.b16 %v155
  %v444 = vunpack.c.l.b16 %v156
  %v445 = vunpack.c.l.b16 %v157
  %v446 = vunpack.c.l.b16 %v158
  %v447 = vunpack.c.l.b16 %v159
  %v448 = vunpack.c.l.b16 %v160
  %v449 = vunpack.c.l.b16 %v161
  %v450 = vunpack.c.l.b16 %v162
  %v451 = vpack.c.b16 %v308, %v307
  %v452 = vpack.c.b16 %v310, %v309
  %v453 = vpack.c.b16 %v312, %v311
  %v454 = vpack.c.b16 %v314, %v313
  %v455 = vpack.c.b16 %v316, %v315
  %v456 = vpack.c.b16 %v318, %v317
  %v457 = vpack.c.b16 %v320, %v319
  %v458 = vpack.c.b16 %v322, %v321
  %v459 = vpack.c.b16 %v324, %v323
  %v460 = vpack.c.b16 %v326, %v325
  %v461 = vpack.c.b16 %v328, %v327
  %v462 = vpack.c.b16 %v330, %v329
  %v463 = vpack.c.b16 %v332, %v331
  %v464 = vpack.c.b16 %v334, %v333
  %v465 = vpack.c.b16 %v336, %v335
  %v466 = vpack.c.b16 %v338, %v337
  %v467 = vpack.c.b16 %v340, %v339
  %v468 = vpack.c.b16 %v342, %v341
  %v469 = vpack.c.b16 %v344, %v343
  %v470 = vpack.c.b16 %v346, %v345
  %v471 = vpack.c.b16 %v348, %v347
  %v472 = vpack.c.b16 %v350, %v349
  %v473 = vpack.c.b16 %v352, %v351
  %v474 = vpack.c.b16 %v354, %v353
  %v475 = vpack.c.b16 %v356, %v355
  %v476 = vpack.c.b16 %v358, %v357
  %v477 = vpack.c.b16 %v360, %v359
  %v478 = vpack.c.b16 %v362, %v361
  %v479 = vpack.c.b16 %v364, %v363
  %v480 = vpack.c.b16 %v366, %v365
  %v481 = vpack.c.b16 %v368, %v367
  %v482 = vpack.c.b16 %v370, %v369
  %v483 = vpack.c.b16 %v372, %v371
  %v484 = vpack.c.b16 %v374, %v373
  %v485 = vpack.c.b16 %v376, %v375
  %v486 = vpack.c.b16 %v378, %v377
  %v487 = vpack.c.b16 %v380, %v379
  %v488 = vpack.c.b16 %v382, %v381
  %v489 = vpack.c.b16 %v384, %v383
  %v490 = vpack.c.b16 %v386, %v385
  %v491 = vpack.c.b16 %v388, %v387
  %v492 = vpack.c.b16 %v390, %v389
  %v493 = vpack.c.b16 %v392, %v391
  %v494 = vpack.c.b16 %v394, %v393
  %v495 = vpack.c.b16 %v396, %v395
  %v496 = vpack.c.b16 %v398, %v397
  %v497 = vpack.c.b16 %v400, %v399
  %v498 = vpack.c.b16 %v402, %v401
  %v499 = vpack.c.b16 %v404, %v403
  %v500 = vpack.c.b16 %v406, %v405
  %v501 = vpack.c.b16 %v408, %v407
  %v502 = vpack.c.b16 %v410, %v409
  %v503 = vpack.c.b16 %v412, %v411
  %v504 = vpack.c.b16 %v414, %v413
  %v505 = vpack.c.b16 %v416, %v415
  %v506 = vpack.c.b16 %v418, %v417
  %v507 = vpack.c.b16 %v420, %v419
  %v508 = vpack.c.b16 %v422, %v421
  %v509 = vpack.c.b16 %v424, %v423
  %v510 = vpack.c.b16 %v426, %v425
  %v511 = vpack.c.b16 %v428, %v427
  %v512 = vpack.c.b16 %v430, %v429
  %v513 = vpack.c.b16 %v432, %v431
  %v514 = vpack.c.b16 %v434, %v433
  %v515 = vpack.c.b16 %v436, %v435
  %v516 = vpack.c.b16 %v438, %v437
  %v517 = vpack.c.b16 %v440, %v439
  %v518 = vpack.c.b16 %v442, %v441
  %v519 = vpack.c.b16 %v444, %v443
  %v520 = vpack.c.b16 %v446, %v445
  %v521 = vpack.c.b16 %v448, %v447
  %v522 = vpack.c.b16 %v450, %v449
  %v527 = vunpack.c.l.b16 %v15
  %v528 = vunpack.c.l.b16 %v16
  %v529 = vunpack.c.l.b16 %v17
  %v530 = vunpack.c.l.b16 %v18
  %v531 = vpack.c.b16 %v528, %v527
  %v532 = vpack.c.b16 %v530, %v529
  %vm534 = vcmask 203776
  %v536 = vsel %vm534, %v451, 0
  %v539 = vsel %vm534, %v452, 0
  %v542 = vsel %vm534, %v453, 0
  %v545 = vsel %vm534, %v454, 0
  %v548 = vsel %vm534, %v455, 0
  %v551 = vsel %vm534, %v456, 0
  %v554 = vsel %vm534, %v457, 0
  %v557 = vsel %vm534, %v458, 0
  %v560 = vsel %vm534, %v459, 0
  %v563 = vsel %vm534, %v460, 0
  %v566 = vsel %vm534, %v461, 0
  %v569 = vsel %vm534, %v462, 0
  %v572 = vsel %vm534, %v463, 0
  %v575 = vsel %vm534, %v464, 0
  %v578 = vsel %vm534, %v465, 0
  %v581 = vsel %vm534, %v466, 0
  %v584 = vsel %vm534, %v467, 0
  %v587 = vsel %vm534, %v468, 0
  %v590 = vsel %vm534, %v469, 0
  %v593 = vsel %vm534, %v470, 0
  %v596 = vsel %vm534, %v471, 0
  %v599 = vsel %vm534, %v472, 0
  %v602 = vsel %vm534, %v473, 0
  %v605 = vsel %vm534, %v474, 0
  %v608 = vsel %vm534, %v475, 0
  %v611 = vsel %vm534, %v476, 0
  %v614 = vsel %vm534, %v477, 0
  %v617 = vsel %vm534, %v478, 0
  %v620 = vsel %vm534, %v479, 0
  %v623 = vsel %vm534, %v480, 0
  %v626 = vsel %vm534, %v481, 0
  %v629 = vsel %vm534, %v482, 0
  %v632 = vsel %vm534, %v483, 0
  %v635 = vsel %vm534, %v484, 0
  %v638 = vsel %vm534, %v485, 0
  %v641 = vsel %vm534, %v486, 0
  %v644 = vsel %vm534, %v487, 0
  %v647 = vsel %vm534, %v488, 0
  %v650 = vsel %vm534, %v489, 0
  %v653 = vsel %vm534, %v490, 0
  %v656 = vsel %vm534, %v491, 0
  %v659 = vsel %vm534, %v492, 0
  %v662 = vsel %vm534, %v493, 0
  %v665 = vsel %vm534, %v494, 0
  %v668 = vsel %vm534, %v495, 0
  %v671 = vsel %vm534, %v496, 0
  %v674 = vsel %vm534, %v497, 0
  %v677 = vsel %vm534, %v498, 0
  %v680 = vsel %vm534, %v499, 0
  %v683 = vsel %vm534, %v500, 0
  %v686 = vsel %vm534, %v501, 0
  %v689 = vsel %vm534, %v502, 0
  %v692 = vsel %vm534, %v503, 0
  %v695 = vsel %vm534, %v504, 0
  %v698 = vsel %vm534, %v505, 0
  %v701 = vsel %vm534, %v506, 0
  %v704 = vsel %vm534, %v507, 0
  %v707 = vsel %vm534, %v508, 0
  %v710 = vsel %vm534, %v509, 0
  %v713 = vsel %vm534, %v510, 0
  %v716 = vsel %vm534, %v511, 0
  %v719 = vsel %vm534, %v512, 0
  %v722 = vsel %vm534, %v513, 0
  %v725 = vsel %vm534, %v514, 0
  %v728 = vsel %vm534, %v515, 0
  %v731 = vsel %vm534, %v516, 0
  %v734 = vsel %vm534, %v517, 0
  %v737 = vsel %vm534, %v518, 0
  %v740 = vsel %vm534, %v519, 0
  %v743 = vsel %vm534, %v520, 0
  %v746 = vsel %vm534, %v521, 0
  %v749 = vsel %vm534, %v522, 0
  %vm751 = vcmask 1043456
  %vm752 = vcmask 1044480
  %v753 = vsel %vm751, 4294967295, 65535
  %v754 = vsel %vm752, %v753, 0
  %v756 = vand.u32 %v532, %v754
  %758 = vmatpush.bf16.msra.mxu0 0
  %759 = vmatpush.bf16.msra.mxu0 0
  %760 = vmatpush.bf16.msra.mxu0 0
  %761 = vmatpush.bf16.msra.mxu0 0
  %762 = vmatpush.bf16.msra.mxu0 0
  %763 = vmatpush.bf16.msra.mxu0 0
  %764 = vmatpush.bf16.msra.mxu0 %v756
  %765 = vmatpush.bf16.msra.mxu0 %v531
  %766 = vmatmul.bf16.gmra.mxu0 %v536
  %v767 = vpop.f32.mrf.mxu0
  %v768 = vadd.f32 0.0, %v767
  %v769 = vpop.f32.mrf.mxu0
  %v770 = vadd.f32 0.0, %v769
  %771 = vmatmul.bf16.gmra.mxu0 %v539
  %v772 = vpop.f32.mrf.mxu0
  %v773 = vadd.f32 0.0, %v772
  %v774 = vpop.f32.mrf.mxu0
  %v775 = vadd.f32 0.0, %v774
  %776 = vmatmul.bf16.gmra.mxu0 %v542
  %v777 = vpop.f32.mrf.mxu0
  %v778 = vadd.f32 0.0, %v777
  %v779 = vpop.f32.mrf.mxu0
  %v780 = vadd.f32 0.0, %v779
  %781 = vmatmul.bf16.gmra.mxu0 %v545
  %v782 = vpop.f32.mrf.mxu0
  %v783 = vadd.f32 0.0, %v782
  %v784 = vpop.f32.mrf.mxu0
  %v785 = vadd.f32 0.0, %v784
  %786 = vmatmul.bf16.gmra.mxu0 %v548
  %v787 = vpop.f32.mrf.mxu0
  %v788 = vadd.f32 0.0, %v787
  %v789 = vpop.f32.mrf.mxu0
  %v790 = vadd.f32 0.0, %v789
  %791 = vmatmul.bf16.gmra.mxu0 %v551
  %v792 = vpop.f32.mrf.mxu0
  %v793 = vadd.f32 0.0, %v792
  %v794 = vpop.f32.mrf.mxu0
  %v795 = vadd.f32 0.0, %v794
  %796 = vmatmul.bf16.gmra.mxu0 %v554
  %v797 = vpop.f32.mrf.mxu0
  %v798 = vadd.f32 0.0, %v797
  %v799 = vpop.f32.mrf.mxu0
  %v800 = vadd.f32 0.0, %v799
  %801 = vmatmul.bf16.gmra.mxu0 %v557
  %v802 = vpop.f32.mrf.mxu0
  %v803 = vadd.f32 0.0, %v802
  %v804 = vpop.f32.mrf.mxu0
  %v805 = vadd.f32 0.0, %v804
  %806 = vmatmul.bf16.gmra.mxu0 %v560
  %v807 = vpop.f32.mrf.mxu0
  %v808 = vadd.f32 0.0, %v807
  %v809 = vpop.f32.mrf.mxu0
  %v810 = vadd.f32 0.0, %v809
  %811 = vmatmul.bf16.gmra.mxu0 %v563
  %v812 = vpop.f32.mrf.mxu0
  %v813 = vadd.f32 0.0, %v812
  %v814 = vpop.f32.mrf.mxu0
  %v815 = vadd.f32 0.0, %v814
  %816 = vmatmul.bf16.gmra.mxu0 %v566
  %v817 = vpop.f32.mrf.mxu0
  %v818 = vadd.f32 0.0, %v817
  %v819 = vpop.f32.mrf.mxu0
  %v820 = vadd.f32 0.0, %v819
  %821 = vmatmul.bf16.gmra.mxu0 %v569
  %v822 = vpop.f32.mrf.mxu0
  %v823 = vadd.f32 0.0, %v822
  %v824 = vpop.f32.mrf.mxu0
  %v825 = vadd.f32 0.0, %v824
  %826 = vmatmul.bf16.gmra.mxu0 %v572
  %v827 = vpop.f32.mrf.mxu0
  %v828 = vadd.f32 0.0, %v827
  %v829 = vpop.f32.mrf.mxu0
  %v830 = vadd.f32 0.0, %v829
  %831 = vmatmul.bf16.gmra.mxu0 %v575
  %v832 = vpop.f32.mrf.mxu0
  %v833 = vadd.f32 0.0, %v832
  %v834 = vpop.f32.mrf.mxu0
  %v835 = vadd.f32 0.0, %v834
  %836 = vmatmul.bf16.gmra.mxu0 %v578
  %v837 = vpop.f32.mrf.mxu0
  %v838 = vadd.f32 0.0, %v837
  %v839 = vpop.f32.mrf.mxu0
  %v840 = vadd.f32 0.0, %v839
  %841 = vmatmul.bf16.gmra.mxu0 %v581
  %v842 = vpop.f32.mrf.mxu0
  %v843 = vadd.f32 0.0, %v842
  %v844 = vpop.f32.mrf.mxu0
  %v845 = vadd.f32 0.0, %v844
  %846 = vmatmul.bf16.gmra.mxu0 %v584
  %v847 = vpop.f32.mrf.mxu0
  %v848 = vadd.f32 0.0, %v847
  %v849 = vpop.f32.mrf.mxu0
  %v850 = vadd.f32 0.0, %v849
  %851 = vmatmul.bf16.gmra.mxu0 %v587
  %v852 = vpop.f32.mrf.mxu0
  %v853 = vadd.f32 0.0, %v852
  %v854 = vpop.f32.mrf.mxu0
  %v855 = vadd.f32 0.0, %v854
  %856 = vmatmul.bf16.gmra.mxu0 %v590
  %v857 = vpop.f32.mrf.mxu0
  %v858 = vadd.f32 0.0, %v857
  %v859 = vpop.f32.mrf.mxu0
  %v860 = vadd.f32 0.0, %v859
  %861 = vmatmul.bf16.gmra.mxu0 %v593
  %v862 = vpop.f32.mrf.mxu0
  %v863 = vadd.f32 0.0, %v862
  %v864 = vpop.f32.mrf.mxu0
  %v865 = vadd.f32 0.0, %v864
  %866 = vmatmul.bf16.gmra.mxu0 %v596
  %v867 = vpop.f32.mrf.mxu0
  %v868 = vadd.f32 0.0, %v867
  %v869 = vpop.f32.mrf.mxu0
  %v870 = vadd.f32 0.0, %v869
  %871 = vmatmul.bf16.gmra.mxu0 %v599
  %v872 = vpop.f32.mrf.mxu0
  %v873 = vadd.f32 0.0, %v872
  %v874 = vpop.f32.mrf.mxu0
  %v875 = vadd.f32 0.0, %v874
  %876 = vmatmul.bf16.gmra.mxu0 %v602
  %v877 = vpop.f32.mrf.mxu0
  %v878 = vadd.f32 0.0, %v877
  %v879 = vpop.f32.mrf.mxu0
  %v880 = vadd.f32 0.0, %v879
  %881 = vmatmul.bf16.gmra.mxu0 %v605
  %v882 = vpop.f32.mrf.mxu0
  %v883 = vadd.f32 0.0, %v882
  %v884 = vpop.f32.mrf.mxu0
  %v885 = vadd.f32 0.0, %v884
  %886 = vmatmul.bf16.gmra.mxu0 %v608
  %v887 = vpop.f32.mrf.mxu0
  %v888 = vadd.f32 0.0, %v887
  %v889 = vpop.f32.mrf.mxu0
  %v890 = vadd.f32 0.0, %v889
  %891 = vmatmul.bf16.gmra.mxu0 %v611
  %v892 = vpop.f32.mrf.mxu0
  %v893 = vadd.f32 0.0, %v892
  %v894 = vpop.f32.mrf.mxu0
  %v895 = vadd.f32 0.0, %v894
  %896 = vmatmul.bf16.gmra.mxu0 %v614
  %v897 = vpop.f32.mrf.mxu0
  %v898 = vadd.f32 0.0, %v897
  %v899 = vpop.f32.mrf.mxu0
  %v900 = vadd.f32 0.0, %v899
  %901 = vmatmul.bf16.gmra.mxu0 %v617
  %v902 = vpop.f32.mrf.mxu0
  %v903 = vadd.f32 0.0, %v902
  %v904 = vpop.f32.mrf.mxu0
  %v905 = vadd.f32 0.0, %v904
  %906 = vmatmul.bf16.gmra.mxu0 %v620
  %v907 = vpop.f32.mrf.mxu0
  %v908 = vadd.f32 0.0, %v907
  %v909 = vpop.f32.mrf.mxu0
  %v910 = vadd.f32 0.0, %v909
  %911 = vmatmul.bf16.gmra.mxu0 %v623
  %v912 = vpop.f32.mrf.mxu0
  %v913 = vadd.f32 0.0, %v912
  %v914 = vpop.f32.mrf.mxu0
  %v915 = vadd.f32 0.0, %v914
  %916 = vmatmul.bf16.gmra.mxu0 %v626
  %v917 = vpop.f32.mrf.mxu0
  %v918 = vadd.f32 0.0, %v917
  %v919 = vpop.f32.mrf.mxu0
  %v920 = vadd.f32 0.0, %v919
  %921 = vmatmul.bf16.gmra.mxu0 %v629
  %v922 = vpop.f32.mrf.mxu0
  %v923 = vadd.f32 0.0, %v922
  %v924 = vpop.f32.mrf.mxu0
  %v925 = vadd.f32 0.0, %v924
  %926 = vmatmul.bf16.gmra.mxu0 %v632
  %v927 = vpop.f32.mrf.mxu0
  %v928 = vadd.f32 0.0, %v927
  %v929 = vpop.f32.mrf.mxu0
  %v930 = vadd.f32 0.0, %v929
  %931 = vmatmul.bf16.gmra.mxu0 %v635
  %v932 = vpop.f32.mrf.mxu0
  %v933 = vadd.f32 0.0, %v932
  %v934 = vpop.f32.mrf.mxu0
  %v935 = vadd.f32 0.0, %v934
  %936 = vmatmul.bf16.gmra.mxu0 %v638
  %v937 = vpop.f32.mrf.mxu0
  %v938 = vadd.f32 0.0, %v937
  %v939 = vpop.f32.mrf.mxu0
  %v940 = vadd.f32 0.0, %v939
  %941 = vmatmul.bf16.gmra.mxu0 %v641
  %v942 = vpop.f32.mrf.mxu0
  %v943 = vadd.f32 0.0, %v942
  %v944 = vpop.f32.mrf.mxu0
  %v945 = vadd.f32 0.0, %v944
  %946 = vmatmul.bf16.gmra.mxu0 %v644
  %v947 = vpop.f32.mrf.mxu0
  %v948 = vadd.f32 0.0, %v947
  %v949 = vpop.f32.mrf.mxu0
  %v950 = vadd.f32 0.0, %v949
  %951 = vmatmul.bf16.gmra.mxu0 %v647
  %v952 = vpop.f32.mrf.mxu0
  %v953 = vadd.f32 0.0, %v952
  %v954 = vpop.f32.mrf.mxu0
  %v955 = vadd.f32 0.0, %v954
  %956 = vmatmul.bf16.gmra.mxu0 %v650
  %v957 = vpop.f32.mrf.mxu0
  %v958 = vadd.f32 0.0, %v957
  %v959 = vpop.f32.mrf.mxu0
  %v960 = vadd.f32 0.0, %v959
  %961 = vmatmul.bf16.gmra.mxu0 %v653
  %v962 = vpop.f32.mrf.mxu0
  %v963 = vadd.f32 0.0, %v962
  %v964 = vpop.f32.mrf.mxu0
  %v965 = vadd.f32 0.0, %v964
  %966 = vmatmul.bf16.gmra.mxu0 %v656
  %v967 = vpop.f32.mrf.mxu0
  %v968 = vadd.f32 0.0, %v967
  %v969 = vpop.f32.mrf.mxu0
  %v970 = vadd.f32 0.0, %v969
  %971 = vmatmul.bf16.gmra.mxu0 %v659
  %v972 = vpop.f32.mrf.mxu0
  %v973 = vadd.f32 0.0, %v972
  %v974 = vpop.f32.mrf.mxu0
  %v975 = vadd.f32 0.0, %v974
  %976 = vmatmul.bf16.gmra.mxu0 %v662
  %v977 = vpop.f32.mrf.mxu0
  %v978 = vadd.f32 0.0, %v977
  %v979 = vpop.f32.mrf.mxu0
  %v980 = vadd.f32 0.0, %v979
  %981 = vmatmul.bf16.gmra.mxu0 %v665
  %v982 = vpop.f32.mrf.mxu0
  %v983 = vadd.f32 0.0, %v982
  %v984 = vpop.f32.mrf.mxu0
  %v985 = vadd.f32 0.0, %v984
  %986 = vmatmul.bf16.gmra.mxu0 %v668
  %v987 = vpop.f32.mrf.mxu0
  %v988 = vadd.f32 0.0, %v987
  %v989 = vpop.f32.mrf.mxu0
  %v990 = vadd.f32 0.0, %v989
  %991 = vmatmul.bf16.gmra.mxu0 %v671
  %v992 = vpop.f32.mrf.mxu0
  %v993 = vadd.f32 0.0, %v992
  %v994 = vpop.f32.mrf.mxu0
  %v995 = vadd.f32 0.0, %v994
  %996 = vmatmul.bf16.gmra.mxu0 %v674
  %v997 = vpop.f32.mrf.mxu0
  %v998 = vadd.f32 0.0, %v997
  %v999 = vpop.f32.mrf.mxu0
  %v1000 = vadd.f32 0.0, %v999
  %1001 = vmatmul.bf16.gmra.mxu0 %v677
  %v1002 = vpop.f32.mrf.mxu0
  %v1003 = vadd.f32 0.0, %v1002
  %v1004 = vpop.f32.mrf.mxu0
  %v1005 = vadd.f32 0.0, %v1004
  %1006 = vmatmul.bf16.gmra.mxu0 %v680
  %v1007 = vpop.f32.mrf.mxu0
  %v1008 = vadd.f32 0.0, %v1007
  %v1009 = vpop.f32.mrf.mxu0
  %v1010 = vadd.f32 0.0, %v1009
  %1011 = vmatmul.bf16.gmra.mxu0 %v683
  %v1012 = vpop.f32.mrf.mxu0
  %v1013 = vadd.f32 0.0, %v1012
  %v1014 = vpop.f32.mrf.mxu0
  %v1015 = vadd.f32 0.0, %v1014
  %1016 = vmatmul.bf16.gmra.mxu0 %v686
  %v1017 = vpop.f32.mrf.mxu0
  %v1018 = vadd.f32 0.0, %v1017
  %v1019 = vpop.f32.mrf.mxu0
  %v1020 = vadd.f32 0.0, %v1019
  %1021 = vmatmul.bf16.gmra.mxu0 %v689
  %v1022 = vpop.f32.mrf.mxu0
  %v1023 = vadd.f32 0.0, %v1022
  %v1024 = vpop.f32.mrf.mxu0
  %v1025 = vadd.f32 0.0, %v1024
  %1026 = vmatmul.bf16.gmra.mxu0 %v692
  %v1027 = vpop.f32.mrf.mxu0
  %v1028 = vadd.f32 0.0, %v1027
  %v1029 = vpop.f32.mrf.mxu0
  %v1030 = vadd.f32 0.0, %v1029
  %1031 = vmatmul.bf16.gmra.mxu0 %v695
  %v1032 = vpop.f32.mrf.mxu0
  %v1033 = vadd.f32 0.0, %v1032
  %v1034 = vpop.f32.mrf.mxu0
  %v1035 = vadd.f32 0.0, %v1034
  %1036 = vmatmul.bf16.gmra.mxu0 %v698
  %v1037 = vpop.f32.mrf.mxu0
  %v1038 = vadd.f32 0.0, %v1037
  %v1039 = vpop.f32.mrf.mxu0
  %v1040 = vadd.f32 0.0, %v1039
  %1041 = vmatmul.bf16.gmra.mxu0 %v701
  %v1042 = vpop.f32.mrf.mxu0
  %v1043 = vadd.f32 0.0, %v1042
  %v1044 = vpop.f32.mrf.mxu0
  %v1045 = vadd.f32 0.0, %v1044
  %1046 = vmatmul.bf16.gmra.mxu0 %v704
  %v1047 = vpop.f32.mrf.mxu0
  %v1048 = vadd.f32 0.0, %v1047
  %v1049 = vpop.f32.mrf.mxu0
  %v1050 = vadd.f32 0.0, %v1049
  %1051 = vmatmul.bf16.gmra.mxu0 %v707
  %v1052 = vpop.f32.mrf.mxu0
  %v1053 = vadd.f32 0.0, %v1052
  %v1054 = vpop.f32.mrf.mxu0
  %v1055 = vadd.f32 0.0, %v1054
  %1056 = vmatmul.bf16.gmra.mxu0 %v710
  %v1057 = vpop.f32.mrf.mxu0
  %v1058 = vadd.f32 0.0, %v1057
  %v1059 = vpop.f32.mrf.mxu0
  %v1060 = vadd.f32 0.0, %v1059
  %1061 = vmatmul.bf16.gmra.mxu0 %v713
  %v1062 = vpop.f32.mrf.mxu0
  %v1063 = vadd.f32 0.0, %v1062
  %v1064 = vpop.f32.mrf.mxu0
  %v1065 = vadd.f32 0.0, %v1064
  %1066 = vmatmul.bf16.gmra.mxu0 %v716
  %v1067 = vpop.f32.mrf.mxu0
  %v1068 = vadd.f32 0.0, %v1067
  %v1069 = vpop.f32.mrf.mxu0
  %v1070 = vadd.f32 0.0, %v1069
  %1071 = vmatmul.bf16.gmra.mxu0 %v719
  %v1072 = vpop.f32.mrf.mxu0
  %v1073 = vadd.f32 0.0, %v1072
  %v1074 = vpop.f32.mrf.mxu0
  %v1075 = vadd.f32 0.0, %v1074
  %1076 = vmatmul.bf16.gmra.mxu0 %v722
  %v1077 = vpop.f32.mrf.mxu0
  %v1078 = vadd.f32 0.0, %v1077
  %v1079 = vpop.f32.mrf.mxu0
  %v1080 = vadd.f32 0.0, %v1079
  %1081 = vmatmul.bf16.gmra.mxu0 %v725
  %v1082 = vpop.f32.mrf.mxu0
  %v1083 = vadd.f32 0.0, %v1082
  %v1084 = vpop.f32.mrf.mxu0
  %v1085 = vadd.f32 0.0, %v1084
  %1086 = vmatmul.bf16.gmra.mxu0 %v728
  %v1087 = vpop.f32.mrf.mxu0
  %v1088 = vadd.f32 0.0, %v1087
  %v1089 = vpop.f32.mrf.mxu0
  %v1090 = vadd.f32 0.0, %v1089
  %1091 = vmatmul.bf16.gmra.mxu0 %v731
  %v1092 = vpop.f32.mrf.mxu0
  %v1093 = vadd.f32 0.0, %v1092
  %v1094 = vpop.f32.mrf.mxu0
  %v1095 = vadd.f32 0.0, %v1094
  %1096 = vmatmul.bf16.gmra.mxu0 %v734
  %v1097 = vpop.f32.mrf.mxu0
  %v1098 = vadd.f32 0.0, %v1097
  %v1099 = vpop.f32.mrf.mxu0
  %v1100 = vadd.f32 0.0, %v1099
  %1101 = vmatmul.bf16.gmra.mxu0 %v737
  %v1102 = vpop.f32.mrf.mxu0
  %v1103 = vadd.f32 0.0, %v1102
  %v1104 = vpop.f32.mrf.mxu0
  %v1105 = vadd.f32 0.0, %v1104
  %1106 = vmatmul.bf16.gmra.mxu0 %v740
  %v1107 = vpop.f32.mrf.mxu0
  %v1108 = vadd.f32 0.0, %v1107
  %v1109 = vpop.f32.mrf.mxu0
  %v1110 = vadd.f32 0.0, %v1109
  %1111 = vmatmul.bf16.gmra.mxu0 %v743
  %v1112 = vpop.f32.mrf.mxu0
  %v1113 = vadd.f32 0.0, %v1112
  %v1114 = vpop.f32.mrf.mxu0
  %v1115 = vadd.f32 0.0, %v1114
  %1116 = vmatmul.bf16.gmra.mxu0 %v746
  %v1117 = vpop.f32.mrf.mxu0
  %v1118 = vadd.f32 0.0, %v1117
  %v1119 = vpop.f32.mrf.mxu0
  %v1120 = vadd.f32 0.0, %v1119
  %1121 = vmatmul.bf16.gmra.mxu0 %v749
  %v1122 = vpop.f32.mrf.mxu0
  %v1123 = vadd.f32 0.0, %v1122
  %v1124 = vpop.f32.mrf.mxu0
  %v1125 = vadd.f32 0.0, %v1124
  %1126 = vdwg.mxu0
  %vm1127 = vcmask 261120
  %v1128 = vsel %vm1127, %v768, -inf
  %v1129 = vsel %vm1127, %v858, -inf
  %v1130 = vmax.f32 %v1128, %v1129
  %v1131 = vsel %vm1127, %v948, -inf
  %v1132 = vmax.f32 %v1130, %v1131
  %v1133 = vsel %vm1127, %v1038, -inf
  %v1134 = vmax.f32 %v1132, %v1133
  %v1135 = vsel %vm1127, %v770, -inf
  %v1136 = vsel %vm1127, %v860, -inf
  %v1137 = vmax.f32 %v1135, %v1136
  %v1138 = vsel %vm1127, %v950, -inf
  %v1139 = vmax.f32 %v1137, %v1138
  %v1140 = vsel %vm1127, %v1040, -inf
  %v1141 = vmax.f32 %v1139, %v1140
  %v1142 = vsel %vm1127, %v773, -inf
  %v1143 = vsel %vm1127, %v863, -inf
  %v1144 = vmax.f32 %v1142, %v1143
  %v1145 = vsel %vm1127, %v953, -inf
  %v1146 = vmax.f32 %v1144, %v1145
  %v1147 = vsel %vm1127, %v1043, -inf
  %v1148 = vmax.f32 %v1146, %v1147
  %v1149 = vsel %vm1127, %v775, -inf
  %v1150 = vsel %vm1127, %v865, -inf
  %v1151 = vmax.f32 %v1149, %v1150
  %v1152 = vsel %vm1127, %v955, -inf
  %v1153 = vmax.f32 %v1151, %v1152
  %v1154 = vsel %vm1127, %v1045, -inf
  %v1155 = vmax.f32 %v1153, %v1154
  %v1156 = vsel %vm1127, %v778, -inf
  %v1157 = vsel %vm1127, %v868, -inf
  %v1158 = vmax.f32 %v1156, %v1157
  %v1159 = vsel %vm1127, %v958, -inf
  %v1160 = vmax.f32 %v1158, %v1159
  %v1161 = vsel %vm1127, %v1048, -inf
  %v1162 = vmax.f32 %v1160, %v1161
  %v1163 = vsel %vm1127, %v780, -inf
  %v1164 = vsel %vm1127, %v870, -inf
  %v1165 = vmax.f32 %v1163, %v1164
  %v1166 = vsel %vm1127, %v960, -inf
  %v1167 = vmax.f32 %v1165, %v1166
  %v1168 = vsel %vm1127, %v1050, -inf
  %v1169 = vmax.f32 %v1167, %v1168
  %v1170 = vsel %vm1127, %v783, -inf
  %v1171 = vsel %vm1127, %v873, -inf
  %v1172 = vmax.f32 %v1170, %v1171
  %v1173 = vsel %vm1127, %v963, -inf
  %v1174 = vmax.f32 %v1172, %v1173
  %v1175 = vsel %vm1127, %v1053, -inf
  %v1176 = vmax.f32 %v1174, %v1175
  %v1177 = vsel %vm1127, %v785, -inf
  %v1178 = vsel %vm1127, %v875, -inf
  %v1179 = vmax.f32 %v1177, %v1178
  %v1180 = vsel %vm1127, %v965, -inf
  %v1181 = vmax.f32 %v1179, %v1180
  %v1182 = vsel %vm1127, %v1055, -inf
  %v1183 = vmax.f32 %v1181, %v1182
  %v1184 = vsel %vm1127, %v788, -inf
  %v1185 = vsel %vm1127, %v878, -inf
  %v1186 = vmax.f32 %v1184, %v1185
  %v1187 = vsel %vm1127, %v968, -inf
  %v1188 = vmax.f32 %v1186, %v1187
  %v1189 = vsel %vm1127, %v1058, -inf
  %v1190 = vmax.f32 %v1188, %v1189
  %v1191 = vsel %vm1127, %v790, -inf
  %v1192 = vsel %vm1127, %v880, -inf
  %v1193 = vmax.f32 %v1191, %v1192
  %v1194 = vsel %vm1127, %v970, -inf
  %v1195 = vmax.f32 %v1193, %v1194
  %v1196 = vsel %vm1127, %v1060, -inf
  %v1197 = vmax.f32 %v1195, %v1196
  %v1198 = vsel %vm1127, %v793, -inf
  %v1199 = vsel %vm1127, %v883, -inf
  %v1200 = vmax.f32 %v1198, %v1199
  %v1201 = vsel %vm1127, %v973, -inf
  %v1202 = vmax.f32 %v1200, %v1201
  %v1203 = vsel %vm1127, %v1063, -inf
  %v1204 = vmax.f32 %v1202, %v1203
  %v1205 = vsel %vm1127, %v795, -inf
  %v1206 = vsel %vm1127, %v885, -inf
  %v1207 = vmax.f32 %v1205, %v1206
  %v1208 = vsel %vm1127, %v975, -inf
  %v1209 = vmax.f32 %v1207, %v1208
  %v1210 = vsel %vm1127, %v1065, -inf
  %v1211 = vmax.f32 %v1209, %v1210
  %v1212 = vsel %vm1127, %v798, -inf
  %v1213 = vsel %vm1127, %v888, -inf
  %v1214 = vmax.f32 %v1212, %v1213
  %v1215 = vsel %vm1127, %v978, -inf
  %v1216 = vmax.f32 %v1214, %v1215
  %v1217 = vsel %vm1127, %v1068, -inf
  %v1218 = vmax.f32 %v1216, %v1217
  %v1219 = vsel %vm1127, %v800, -inf
  %v1220 = vsel %vm1127, %v890, -inf
  %v1221 = vmax.f32 %v1219, %v1220
  %v1222 = vsel %vm1127, %v980, -inf
  %v1223 = vmax.f32 %v1221, %v1222
  %v1224 = vsel %vm1127, %v1070, -inf
  %v1225 = vmax.f32 %v1223, %v1224
  %v1226 = vsel %vm1127, %v803, -inf
  %v1227 = vsel %vm1127, %v893, -inf
  %v1228 = vmax.f32 %v1226, %v1227
  %v1229 = vsel %vm1127, %v983, -inf
  %v1230 = vmax.f32 %v1228, %v1229
  %v1231 = vsel %vm1127, %v1073, -inf
  %v1232 = vmax.f32 %v1230, %v1231
  %v1233 = vsel %vm1127, %v805, -inf
  %v1234 = vsel %vm1127, %v895, -inf
  %v1235 = vmax.f32 %v1233, %v1234
  %v1236 = vsel %vm1127, %v985, -inf
  %v1237 = vmax.f32 %v1235, %v1236
  %v1238 = vsel %vm1127, %v1075, -inf
  %v1239 = vmax.f32 %v1237, %v1238
  %v1240 = vsel %vm1127, %v808, -inf
  %v1241 = vsel %vm1127, %v898, -inf
  %v1242 = vmax.f32 %v1240, %v1241
  %v1243 = vsel %vm1127, %v988, -inf
  %v1244 = vmax.f32 %v1242, %v1243
  %v1245 = vsel %vm1127, %v1078, -inf
  %v1246 = vmax.f32 %v1244, %v1245
  %v1247 = vsel %vm1127, %v810, -inf
  %v1248 = vsel %vm1127, %v900, -inf
  %v1249 = vmax.f32 %v1247, %v1248
  %v1250 = vsel %vm1127, %v990, -inf
  %v1251 = vmax.f32 %v1249, %v1250
  %v1252 = vsel %vm1127, %v1080, -inf
  %v1253 = vmax.f32 %v1251, %v1252
  %v1254 = vsel %vm1127, %v813, -inf
  %v1255 = vsel %vm1127, %v903, -inf
  %v1256 = vmax.f32 %v1254, %v1255
  %v1257 = vsel %vm1127, %v993, -inf
  %v1258 = vmax.f32 %v1256, %v1257
  %v1259 = vsel %vm1127, %v1083, -inf
  %v1260 = vmax.f32 %v1258, %v1259
  %v1261 = vsel %vm1127, %v815, -inf
  %v1262 = vsel %vm1127, %v905, -inf
  %v1263 = vmax.f32 %v1261, %v1262
  %v1264 = vsel %vm1127, %v995, -inf
  %v1265 = vmax.f32 %v1263, %v1264
  %v1266 = vsel %vm1127, %v1085, -inf
  %v1267 = vmax.f32 %v1265, %v1266
  %v1268 = vsel %vm1127, %v818, -inf
  %v1269 = vsel %vm1127, %v908, -inf
  %v1270 = vmax.f32 %v1268, %v1269
  %v1271 = vsel %vm1127, %v998, -inf
  %v1272 = vmax.f32 %v1270, %v1271
  %v1273 = vsel %vm1127, %v1088, -inf
  %v1274 = vmax.f32 %v1272, %v1273
  %v1275 = vsel %vm1127, %v820, -inf
  %v1276 = vsel %vm1127, %v910, -inf
  %v1277 = vmax.f32 %v1275, %v1276
  %v1278 = vsel %vm1127, %v1000, -inf
  %v1279 = vmax.f32 %v1277, %v1278
  %v1280 = vsel %vm1127, %v1090, -inf
  %v1281 = vmax.f32 %v1279, %v1280
  %v1282 = vsel %vm1127, %v823, -inf
  %v1283 = vsel %vm1127, %v913, -inf
  %v1284 = vmax.f32 %v1282, %v1283
  %v1285 = vsel %vm1127, %v1003, -inf
  %v1286 = vmax.f32 %v1284, %v1285
  %v1287 = vsel %vm1127, %v1093, -inf
  %v1288 = vmax.f32 %v1286, %v1287
  %v1289 = vsel %vm1127, %v825, -inf
  %v1290 = vsel %vm1127, %v915, -inf
  %v1291 = vmax.f32 %v1289, %v1290
  %v1292 = vsel %vm1127, %v1005, -inf
  %v1293 = vmax.f32 %v1291, %v1292
  %v1294 = vsel %vm1127, %v1095, -inf
  %v1295 = vmax.f32 %v1293, %v1294
  %v1296 = vsel %vm1127, %v828, -inf
  %v1297 = vsel %vm1127, %v918, -inf
  %v1298 = vmax.f32 %v1296, %v1297
  %v1299 = vsel %vm1127, %v1008, -inf
  %v1300 = vmax.f32 %v1298, %v1299
  %v1301 = vsel %vm1127, %v1098, -inf
  %v1302 = vmax.f32 %v1300, %v1301
  %v1303 = vsel %vm1127, %v830, -inf
  %v1304 = vsel %vm1127, %v920, -inf
  %v1305 = vmax.f32 %v1303, %v1304
  %v1306 = vsel %vm1127, %v1010, -inf
  %v1307 = vmax.f32 %v1305, %v1306
  %v1308 = vsel %vm1127, %v1100, -inf
  %v1309 = vmax.f32 %v1307, %v1308
  %v1310 = vsel %vm1127, %v833, -inf
  %v1311 = vsel %vm1127, %v923, -inf
  %v1312 = vmax.f32 %v1310, %v1311
  %v1313 = vsel %vm1127, %v1013, -inf
  %v1314 = vmax.f32 %v1312, %v1313
  %v1315 = vsel %vm1127, %v1103, -inf
  %v1316 = vmax.f32 %v1314, %v1315
  %v1317 = vsel %vm1127, %v835, -inf
  %v1318 = vsel %vm1127, %v925, -inf
  %v1319 = vmax.f32 %v1317, %v1318
  %v1320 = vsel %vm1127, %v1015, -inf
  %v1321 = vmax.f32 %v1319, %v1320
  %v1322 = vsel %vm1127, %v1105, -inf
  %v1323 = vmax.f32 %v1321, %v1322
  %v1324 = vsel %vm1127, %v838, -inf
  %v1325 = vsel %vm1127, %v928, -inf
  %v1326 = vmax.f32 %v1324, %v1325
  %v1327 = vsel %vm1127, %v1018, -inf
  %v1328 = vmax.f32 %v1326, %v1327
  %v1329 = vsel %vm1127, %v1108, -inf
  %v1330 = vmax.f32 %v1328, %v1329
  %v1331 = vsel %vm1127, %v840, -inf
  %v1332 = vsel %vm1127, %v930, -inf
  %v1333 = vmax.f32 %v1331, %v1332
  %v1334 = vsel %vm1127, %v1020, -inf
  %v1335 = vmax.f32 %v1333, %v1334
  %v1336 = vsel %vm1127, %v1110, -inf
  %v1337 = vmax.f32 %v1335, %v1336
  %v1338 = vsel %vm1127, %v843, -inf
  %v1339 = vsel %vm1127, %v933, -inf
  %v1340 = vmax.f32 %v1338, %v1339
  %v1341 = vsel %vm1127, %v1023, -inf
  %v1342 = vmax.f32 %v1340, %v1341
  %v1343 = vsel %vm1127, %v1113, -inf
  %v1344 = vmax.f32 %v1342, %v1343
  %v1345 = vsel %vm1127, %v845, -inf
  %v1346 = vsel %vm1127, %v935, -inf
  %v1347 = vmax.f32 %v1345, %v1346
  %v1348 = vsel %vm1127, %v1025, -inf
  %v1349 = vmax.f32 %v1347, %v1348
  %v1350 = vsel %vm1127, %v1115, -inf
  %v1351 = vmax.f32 %v1349, %v1350
  %v1352 = vsel %vm1127, %v848, -inf
  %v1353 = vsel %vm1127, %v938, -inf
  %v1354 = vmax.f32 %v1352, %v1353
  %v1355 = vsel %vm1127, %v1028, -inf
  %v1356 = vmax.f32 %v1354, %v1355
  %v1357 = vsel %vm1127, %v1118, -inf
  %v1358 = vmax.f32 %v1356, %v1357
  %v1359 = vsel %vm1127, %v850, -inf
  %v1360 = vsel %vm1127, %v940, -inf
  %v1361 = vmax.f32 %v1359, %v1360
  %v1362 = vsel %vm1127, %v1030, -inf
  %v1363 = vmax.f32 %v1361, %v1362
  %v1364 = vsel %vm1127, %v1120, -inf
  %v1365 = vmax.f32 %v1363, %v1364
  %v1366 = vsel %vm1127, %v853, -inf
  %v1367 = vsel %vm1127, %v943, -inf
  %v1368 = vmax.f32 %v1366, %v1367
  %v1369 = vsel %vm1127, %v1033, -inf
  %v1370 = vmax.f32 %v1368, %v1369
  %v1371 = vsel %vm1127, %v1123, -inf
  %v1372 = vmax.f32 %v1370, %v1371
  %v1373 = vsel %vm1127, %v855, -inf
  %v1374 = vsel %vm1127, %v945, -inf
  %v1375 = vmax.f32 %v1373, %v1374
  %v1376 = vsel %vm1127, %v1035, -inf
  %v1377 = vmax.f32 %v1375, %v1376
  %v1378 = vsel %vm1127, %v1125, -inf
  %v1379 = vmax.f32 %v1377, %v1378
  %v1380 = vld [vmem:[%s2] sm:$0x1]
  %v1382 = vperm.slane %v1380, 0
  %v1384 = vadd.f32 %v1134, %v1382
  %v1385 = vadd.f32 %v1141, %v1382
  %v1386 = vadd.f32 %v1148, %v1382
  %v1387 = vadd.f32 %v1155, %v1382
  %v1388 = vadd.f32 %v1162, %v1382
  %v1389 = vadd.f32 %v1169, %v1382
  %v1390 = vadd.f32 %v1176, %v1382
  %v1391 = vadd.f32 %v1183, %v1382
  %v1392 = vadd.f32 %v1190, %v1382
  %v1393 = vadd.f32 %v1197, %v1382
  %v1394 = vadd.f32 %v1204, %v1382
  %v1395 = vadd.f32 %v1211, %v1382
  %v1396 = vadd.f32 %v1218, %v1382
  %v1397 = vadd.f32 %v1225, %v1382
  %v1398 = vadd.f32 %v1232, %v1382
  %v1399 = vadd.f32 %v1239, %v1382
  %v1400 = vadd.f32 %v1246, %v1382
  %v1401 = vadd.f32 %v1253, %v1382
  %v1402 = vadd.f32 %v1260, %v1382
  %v1403 = vadd.f32 %v1267, %v1382
  %v1404 = vadd.f32 %v1274, %v1382
  %v1405 = vadd.f32 %v1281, %v1382
  %v1406 = vadd.f32 %v1288, %v1382
  %v1407 = vadd.f32 %v1295, %v1382
  %v1408 = vadd.f32 %v1302, %v1382
  %v1409 = vadd.f32 %v1309, %v1382
  %v1410 = vadd.f32 %v1316, %v1382
  %v1411 = vadd.f32 %v1323, %v1382
  %v1412 = vadd.f32 %v1330, %v1382
  %v1413 = vadd.f32 %v1337, %v1382
  %v1414 = vadd.f32 %v1344, %v1382
  %v1415 = vadd.f32 %v1351, %v1382
  %v1416 = vadd.f32 %v1358, %v1382
  %v1417 = vadd.f32 %v1365, %v1382
  %v1418 = vadd.f32 %v1372, %v1382
  %v1419 = vadd.f32 %v1379, %v1382
  %v1420 = vmax.f32 %v1384, 0.0
  %v1421 = vmax.f32 %v1385, 0.0
  %v1422 = vmax.f32 %v1386, 0.0
  %v1423 = vmax.f32 %v1387, 0.0
  %v1424 = vmax.f32 %v1388, 0.0
  %v1425 = vmax.f32 %v1389, 0.0
  %v1426 = vmax.f32 %v1390, 0.0
  %v1427 = vmax.f32 %v1391, 0.0
  %v1428 = vmax.f32 %v1392, 0.0
  %v1429 = vmax.f32 %v1393, 0.0
  %v1430 = vmax.f32 %v1394, 0.0
  %v1431 = vmax.f32 %v1395, 0.0
  %v1432 = vmax.f32 %v1396, 0.0
  %v1433 = vmax.f32 %v1397, 0.0
  %v1434 = vmax.f32 %v1398, 0.0
  %v1435 = vmax.f32 %v1399, 0.0
  %v1436 = vmax.f32 %v1400, 0.0
  %v1437 = vmax.f32 %v1401, 0.0
  %v1438 = vmax.f32 %v1402, 0.0
  %v1439 = vmax.f32 %v1403, 0.0
  %v1440 = vmax.f32 %v1404, 0.0
  %v1441 = vmax.f32 %v1405, 0.0
  %v1442 = vmax.f32 %v1406, 0.0
  %v1443 = vmax.f32 %v1407, 0.0
  %v1444 = vmax.f32 %v1408, 0.0
  %v1445 = vmax.f32 %v1409, 0.0
  %v1446 = vmax.f32 %v1410, 0.0
  %v1447 = vmax.f32 %v1411, 0.0
  %v1448 = vmax.f32 %v1412, 0.0
  %v1449 = vmax.f32 %v1413, 0.0
  %v1450 = vmax.f32 %v1414, 0.0
  %v1451 = vmax.f32 %v1415, 0.0
  %v1452 = vmax.f32 %v1416, 0.0
  %v1453 = vmax.f32 %v1417, 0.0
  %v1454 = vmax.f32 %v1418, 0.0
  %v1455 = vmax.f32 %v1419, 0.0
  %v1456 = vpack.c.bf16 %v1420, %v1420
  %v1457 = vpack.c.bf16 %v1421, %v1421
  %v1458 = vpack.c.bf16 %v1422, %v1422
  %v1459 = vpack.c.bf16 %v1423, %v1423
  %v1460 = vpack.c.bf16 %v1424, %v1424
  %v1461 = vpack.c.bf16 %v1425, %v1425
  %v1462 = vpack.c.bf16 %v1426, %v1426
  %v1463 = vpack.c.bf16 %v1427, %v1427
  %v1464 = vpack.c.bf16 %v1428, %v1428
  %v1465 = vpack.c.bf16 %v1429, %v1429
  %v1466 = vpack.c.bf16 %v1430, %v1430
  %v1467 = vpack.c.bf16 %v1431, %v1431
  %v1468 = vpack.c.bf16 %v1432, %v1432
  %v1469 = vpack.c.bf16 %v1433, %v1433
  %v1470 = vpack.c.bf16 %v1434, %v1434
  %v1471 = vpack.c.bf16 %v1435, %v1435
  %v1472 = vpack.c.bf16 %v1436, %v1436
  %v1473 = vpack.c.bf16 %v1437, %v1437
  %v1474 = vpack.c.bf16 %v1438, %v1438
  %v1475 = vpack.c.bf16 %v1439, %v1439
  %v1476 = vpack.c.bf16 %v1440, %v1440
  %v1477 = vpack.c.bf16 %v1441, %v1441
  %v1478 = vpack.c.bf16 %v1442, %v1442
  %v1479 = vpack.c.bf16 %v1443, %v1443
  %v1480 = vpack.c.bf16 %v1444, %v1444
  %v1481 = vpack.c.bf16 %v1445, %v1445
  %v1482 = vpack.c.bf16 %v1446, %v1446
  %v1483 = vpack.c.bf16 %v1447, %v1447
  %v1484 = vpack.c.bf16 %v1448, %v1448
  %v1485 = vpack.c.bf16 %v1449, %v1449
  %v1486 = vpack.c.bf16 %v1450, %v1450
  %v1487 = vpack.c.bf16 %v1451, %v1451
  %v1488 = vpack.c.bf16 %v1452, %v1452
  %v1489 = vpack.c.bf16 %v1453, %v1453
  %v1490 = vpack.c.bf16 %v1454, %v1454
  %v1491 = vpack.c.bf16 %v1455, %v1455
  %vm1492 = vcmask 257024
  %1493 = vst.msk [vmem:[%s3] sm:$0xf] %vm1492, %v1456
  %1494 = vst.msk [vmem:[%s3 + $0x4] sm:$0xf] %vm1492, %v1457
  %1495 = vst.msk [vmem:[%s3 + $0x8] sm:$0xf] %vm1492, %v1458
  %1496 = vst.msk [vmem:[%s3 + $0xc] sm:$0xf] %vm1492, %v1459
  %1497 = vst.msk [vmem:[%s3 + $0x10] sm:$0xf] %vm1492, %v1460
  %1498 = vst.msk [vmem:[%s3 + $0x14] sm:$0xf] %vm1492, %v1461
  %1499 = vst.msk [vmem:[%s3 + $0x18] sm:$0xf] %vm1492, %v1462
  %1500 = vst.msk [vmem:[%s3 + $0x1c] sm:$0xf] %vm1492, %v1463
  %1501 = vst.msk [vmem:[%s3 + $0x20] sm:$0xf] %vm1492, %v1464
  %1502 = vst.msk [vmem:[%s3 + $0x24] sm:$0xf] %vm1492, %v1465
  %1503 = vst.msk [vmem:[%s3 + $0x28] sm:$0xf] %vm1492, %v1466
  %1504 = vst.msk [vmem:[%s3 + $0x2c] sm:$0xf] %vm1492, %v1467
  %1505 = vst.msk [vmem:[%s3 + $0x30] sm:$0xf] %vm1492, %v1468
  %1506 = vst.msk [vmem:[%s3 + $0x34] sm:$0xf] %vm1492, %v1469
  %1507 = vst.msk [vmem:[%s3 + $0x38] sm:$0xf] %vm1492, %v1470
  %1508 = vst.msk [vmem:[%s3 + $0x3c] sm:$0xf] %vm1492, %v1471
  %1509 = vst.msk [vmem:[%s3 + $0x40] sm:$0xf] %vm1492, %v1472
  %1510 = vst.msk [vmem:[%s3 + $0x44] sm:$0xf] %vm1492, %v1473
  %1511 = vst.msk [vmem:[%s3 + $0x48] sm:$0xf] %vm1492, %v1474
  %1512 = vst.msk [vmem:[%s3 + $0x4c] sm:$0xf] %vm1492, %v1475
  %1513 = vst.msk [vmem:[%s3 + $0x50] sm:$0xf] %vm1492, %v1476
  %1514 = vst.msk [vmem:[%s3 + $0x54] sm:$0xf] %vm1492, %v1477
  %1515 = vst.msk [vmem:[%s3 + $0x58] sm:$0xf] %vm1492, %v1478
  %1516 = vst.msk [vmem:[%s3 + $0x5c] sm:$0xf] %vm1492, %v1479
  %1517 = vst.msk [vmem:[%s3 + $0x60] sm:$0xf] %vm1492, %v1480
  %1518 = vst.msk [vmem:[%s3 + $0x64] sm:$0xf] %vm1492, %v1481
  %1519 = vst.msk [vmem:[%s3 + $0x68] sm:$0xf] %vm1492, %v1482
  %1520 = vst.msk [vmem:[%s3 + $0x6c] sm:$0xf] %vm1492, %v1483
  %1521 = vst.msk [vmem:[%s3 + $0x70] sm:$0xf] %vm1492, %v1484
  %1522 = vst.msk [vmem:[%s3 + $0x74] sm:$0xf] %vm1492, %v1485
  %1523 = vst.msk [vmem:[%s3 + $0x78] sm:$0xf] %vm1492, %v1486
  %1524 = vst.msk [vmem:[%s3 + $0x7c] sm:$0xf] %vm1492, %v1487
  %1525 = vst.msk [vmem:[%s3 + $0x80] sm:$0xf] %vm1492, %v1488
  %1526 = vst.msk [vmem:[%s3 + $0x84] sm:$0xf] %vm1492, %v1489
  %1527 = vst.msk [vmem:[%s3 + $0x88] sm:$0xf] %vm1492, %v1490
  %1528 = vst.msk [vmem:[%s3 + $0x8c] sm:$0xf] %vm1492, %v1491
  // Predicated region
  $region14: #{flnet_forward.3} parent=0 // pred_check
    _
  $region15: #{flnet_forward.3} parent=0 // pred_check_branch
    %1530 = sbr.rel (0) target = $region17
  $region16: #{flnet_forward.3} parent=0 // pred_region
    _
  $region17: #{flnet_forward.3} parent=0 // pred_fallthru
    _
  // Predicated region
  $region18: #{flnet_forward.3} parent=0 // pred_check
    _
  $region19: #{flnet_forward.3} parent=0 // pred_check_branch
    %1532 = sbr.rel (0) target = $region21
  $region20: #{flnet_forward.3} parent=0 // pred_region
    _
  $region21: #{flnet_forward.3} parent=0 // pred_fallthru
    _

// kernel: flnet_forward.4
$region0: #{flnet_forward.4}
  #allocation0 [shape = 'u32[]', space=smem, size = 0x4, offset = 0x4, fixed_abs, tag = 'smem constant byte address 0x4 - core index']
  #allocation1 [shape = 'u32[72,128]{1,0:T(1,128)}', space=vmem, size = 0x9000, scoped, tag = 'internal scratch']
  %s0 = inlined_call_operand.vmem [shape: bf16[4,32,800], index: 0, kind: input, shape index: {}]
  %s1 = inlined_call_operand.vmem [shape: bf16[800,64], index: 1, kind: input, shape index: {}]
  %s2 = inlined_call_operand.vmem [shape: f32[1,64], index: 2, kind: input, shape index: {}]
  %s3 = inlined_call_operand.vmem [shape: bf16[32,64], index: 3, kind: output, shape index: {}]
  %s4 = sld [smem:[#allocation0]]
  $region22: #{flnet_forward.4} parent=0
    _
  %s6 = ssub.s32 1, %s4
  %s7 = scalar_select 0, %s6, %s4
  // Predicated region
  $region2: #{flnet_forward.4} parent=0 // pred_check
    _
  $region3: #{flnet_forward.4} parent=0 // pred_check_branch
    %9 = sbr.rel (0) target = $region5
  $region4: #{flnet_forward.4} parent=0 // pred_region
    _
  $region5: #{flnet_forward.4} parent=0 // pred_fallthru
    _
  // Predicated region
  $region6: #{flnet_forward.4} parent=0 // pred_check
    _
  $region7: #{flnet_forward.4} parent=0 // pred_check_branch
    %11 = sbr.rel (0) target = $region9
  $region8: #{flnet_forward.4} parent=0 // pred_region
    _
  $region9: #{flnet_forward.4} parent=0 // pred_fallthru
    _
  // Predicated region
  $region10: #{flnet_forward.4} parent=0 // pred_check
    _
  $region11: #{flnet_forward.4} parent=0 // pred_check_branch
    %13 = sbr.rel (0) target = $region13
  $region12: #{flnet_forward.4} parent=0 // pred_region
    _
  $region13: #{flnet_forward.4} parent=0 // pred_fallthru
    _
  %v15 = vld [vmem:[%s1] sm:$0xf]
  %v16 = vld [vmem:[%s1 + $0x4] sm:$0xf]
  %v17 = vld [vmem:[%s1 + $0x8] sm:$0xf]
  %v18 = vld [vmem:[%s1 + $0xc] sm:$0xf]
  %v19 = vld [vmem:[%s1 + $0x10] sm:$0xf]
  %v20 = vld [vmem:[%s1 + $0x14] sm:$0xf]
  %v21 = vld [vmem:[%s1 + $0x18] sm:$0xf]
  %v22 = vld [vmem:[%s1 + $0x1c] sm:$0xf]
  %v23 = vld [vmem:[%s1 + $0x20] sm:$0xf]
  %v24 = vld [vmem:[%s1 + $0x24] sm:$0xf]
  %v25 = vld [vmem:[%s1 + $0x28] sm:$0xf]
  %v26 = vld [vmem:[%s1 + $0x2c] sm:$0xf]
  %v27 = vld [vmem:[%s1 + $0x30] sm:$0xf]
  %v28 = vld [vmem:[%s1 + $0x34] sm:$0xf]
  %v29 = vld [vmem:[%s1 + $0x38] sm:$0xf]
  %v30 = vld [vmem:[%s1 + $0x3c] sm:$0xf]
  %v31 = vld [vmem:[%s1 + $0x40] sm:$0xf]
  %v32 = vld [vmem:[%s1 + $0x44] sm:$0xf]
  %v33 = vld [vmem:[%s1 + $0x48] sm:$0xf]
  %v34 = vld [vmem:[%s1 + $0x4c] sm:$0xf]
  %v35 = vld [vmem:[%s1 + $0x50] sm:$0xf]
  %v36 = vld [vmem:[%s1 + $0x54] sm:$0xf]
  %v37 = vld [vmem:[%s1 + $0x58] sm:$0xf]
  %v38 = vld [vmem:[%s1 + $0x5c] sm:$0xf]
  %v39 = vld [vmem:[%s1 + $0x60] sm:$0xf]
  %v40 = vld [vmem:[%s1 + $0x64] sm:$0xf]
  %v41 = vld [vmem:[%s1 + $0x68] sm:$0xf]
  %v42 = vld [vmem:[%s1 + $0x6c] sm:$0xf]
  %v43 = vld [vmem:[%s1 + $0x70] sm:$0xf]
  %v44 = vld [vmem:[%s1 + $0x74] sm:$0xf]
  %v45 = vld [vmem:[%s1 + $0x78] sm:$0xf]
  %v46 = vld [vmem:[%s1 + $0x7c] sm:$0xf]
  %v47 = vld [vmem:[%s1 + $0x80] sm:$0xf]
  %v48 = vld [vmem:[%s1 + $0x84] sm:$0xf]
  %v49 = vld [vmem:[%s1 + $0x88] sm:$0xf]
  %v50 = vld [vmem:[%s1 + $0x8c] sm:$0xf]
  %v51 = vld [vmem:[%s1 + $0x90] sm:$0xf]
  %v52 = vld [vmem:[%s1 + $0x94] sm:$0xf]
  %v53 = vld [vmem:[%s1 + $0x98] sm:$0xf]
  %v54 = vld [vmem:[%s1 + $0x9c] sm:$0xf]
  %v55 = vld [vmem:[%s1 + $0xa0] sm:$0xf]
  %v56 = vld [vmem:[%s1 + $0xa4] sm:$0xf]
  %v57 = vld [vmem:[%s1 + $0xa8] sm:$0xf]
  %v58 = vld [vmem:[%s1 + $0xac] sm:$0xf]
  %v59 = vld [vmem:[%s1 + $0xb0] sm:$0xf]
  %v60 = vld [vmem:[%s1 + $0xb4] sm:$0xf]
  %v61 = vld [vmem:[%s1 + $0xb8] sm:$0xf]
  %v62 = vld [vmem:[%s1 + $0xbc] sm:$0xf]
  %v63 = vld [vmem:[%s1 + $0xc0] sm:$0xf]
  %v64 = vld [vmem:[%s1 + $0xc4] sm:$0xf]
  %v65 = vld [vmem:[%s1 + $0xc8] sm:$0xf]
  %v66 = vld [vmem:[%s1 + $0xcc] sm:$0xf]
  %v67 = vld [vmem:[%s1 + $0xd0] sm:$0xf]
  %v68 = vld [vmem:[%s1 + $0xd4] sm:$0xf]
  %v69 = vld [vmem:[%s1 + $0xd8] sm:$0xf]
  %v70 = vld [vmem:[%s1 + $0xdc] sm:$0xf]
  %v71 = vld [vmem:[%s1 + $0xe0] sm:$0xf]
  %v72 = vld [vmem:[%s1 + $0xe4] sm:$0xf]
  %v73 = vld [vmem:[%s1 + $0xe8] sm:$0xf]
  %v74 = vld [vmem:[%s1 + $0xec] sm:$0xf]
  %v75 = vld [vmem:[%s1 + $0xf0] sm:$0xf]
  %v76 = vld [vmem:[%s1 + $0xf4] sm:$0xf]
  %v77 = vld [vmem:[%s1 + $0xf8] sm:$0xf]
  %v78 = vld [vmem:[%s1 + $0xfc] sm:$0xf]
  %v79 = vld [vmem:[%s1 + $0x100] sm:$0xf]
  %v80 = vld [vmem:[%s1 + $0x104] sm:$0xf]
  %v81 = vld [vmem:[%s1 + $0x108] sm:$0xf]
  %v82 = vld [vmem:[%s1 + $0x10c] sm:$0xf]
  %v83 = vld [vmem:[%s1 + $0x110] sm:$0xf]
  %v84 = vld [vmem:[%s1 + $0x114] sm:$0xf]
  %v85 = vld [vmem:[%s1 + $0x118] sm:$0xf]
  %v86 = vld [vmem:[%s1 + $0x11c] sm:$0xf]
  %v87 = vld [vmem:[%s1 + $0x120] sm:$0xf]
  %v88 = vld [vmem:[%s1 + $0x124] sm:$0xf]
  %v89 = vld [vmem:[%s1 + $0x128] sm:$0xf]
  %v90 = vld [vmem:[%s1 + $0x12c] sm:$0xf]
  %v91 = vld [vmem:[%s1 + $0x130] sm:$0xf]
  %v92 = vld [vmem:[%s1 + $0x134] sm:$0xf]
  %v93 = vld [vmem:[%s1 + $0x138] sm:$0xf]
  %v94 = vld [vmem:[%s1 + $0x13c] sm:$0xf]
  %v95 = vld [vmem:[%s1 + $0x140] sm:$0xf]
  %v96 = vld [vmem:[%s1 + $0x144] sm:$0xf]
  %v97 = vld [vmem:[%s1 + $0x148] sm:$0xf]
  %v98 = vld [vmem:[%s1 + $0x14c] sm:$0xf]
  %v99 = vld [vmem:[%s1 + $0x150] sm:$0xf]
  %v100 = vld [vmem:[%s1 + $0x154] sm:$0xf]
  %v101 = vld [vmem:[%s1 + $0x158] sm:$0xf]
  %v102 = vld [vmem:[%s1 + $0x15c] sm:$0xf]
  %v103 = vld [vmem:[%s1 + $0x160] sm:$0xf]
  %v104 = vld [vmem:[%s1 + $0x164] sm:$0xf]
  %v105 = vld [vmem:[%s1 + $0x168] sm:$0xf]
  %v106 = vld [vmem:[%s1 + $0x16c] sm:$0xf]
  %v107 = vld [vmem:[%s1 + $0x170] sm:$0xf]
  %v108 = vld [vmem:[%s1 + $0x174] sm:$0xf]
  %v109 = vld [vmem:[%s1 + $0x178] sm:$0xf]
  %v110 = vld [vmem:[%s1 + $0x17c] sm:$0xf]
  %v111 = vld [vmem:[%s1 + $0x180] sm:$0xf]
  %v112 = vld [vmem:[%s1 + $0x184] sm:$0xf]
  %v113 = vld [vmem:[%s1 + $0x188] sm:$0xf]
  %v114 = vld [vmem:[%s1 + $0x18c] sm:$0xf]
  %v115 = vld [vmem:[%s0] sm:$0xff]
  %v116 = vld [vmem:[%s0 + $0x8] sm:$0xff]
  %v117 = vld [vmem:[%s0 + $0x10] sm:$0xff]
  %v118 = vld [vmem:[%s0 + $0x18] sm:$0xf]
  %v119 = vld [vmem:[%s0 + $0x1c] sm:$0xff]
  %v120 = vld [vmem:[%s0 + $0x24] sm:$0xff]
  %v121 = vld [vmem:[%s0 + $0x2c] sm:$0xff]
  %v122 = vld [vmem:[%s0 + $0x34] sm:$0xf]
  %v123 = vld [vmem:[%s0 + $0x38] sm:$0xff]
  %v124 = vld [vmem:[%s0 + $0x40] sm:$0xff]
  %v125 = vld [vmem:[%s0 + $0x48] sm:$0xff]
  %v126 = vld [vmem:[%s0 + $0x50] sm:$0xf]
  %v127 = vld [vmem:[%s0 + $0x54] sm:$0xff]
  %v128 = vld [vmem:[%s0 + $0x5c] sm:$0xff]
  %v129 = vld [vmem:[%s0 + $0x64] sm:$0xff]
  %v130 = vld [vmem:[%s0 + $0x6c] sm:$0xf]
  %v131 = vld [vmem:[%s0 + $0x70] sm:$0xff]
  %v132 = vld [vmem:[%s0 + $0x78] sm:$0xff]
  %v133 = vld [vmem:[%s0 + $0x80] sm:$0xff]
  %v134 = vld [vmem:[%s0 + $0x88] sm:$0xf]
  %v135 = vld [vmem:[%s0 + $0x8c] sm:$0xff]
  %v136 = vld [vmem:[%s0 + $0x94] sm:$0xff]
  %v137 = vld [vmem:[%s0 + $0x9c] sm:$0xff]
  %v138 = vld [vmem:[%s0 + $0xa4] sm:$0xf]
  %v139 = vld [vmem:[%s0 + $0xa8] sm:$0xff]
  %v140 = vld [vmem:[%s0 + $0xb0] sm:$0xff]
  %v141 = vld [vmem:[%s0 + $0xb8] sm:$0xff]
  %v142 = vld [vmem:[%s0 + $0xc0] sm:$0xf]
  %v143 = vld [vmem:[%s0 + $0xc4] sm:$0xff]
  %v144 = vld [vmem:[%s0 + $0xcc] sm:$0xff]
  %v145 = vld [vmem:[%s0 + $0xd4] sm:$0xff]
  %v146 = vld [vmem:[%s0 + $0xdc] sm:$0xf]
  %v147 = vld [vmem:[%s0 + $0xe0] sm:$0xff]
  %v148 = vld [vmem:[%s0 + $0xe8] sm:$0xff]
  %v149 = vld [vmem:[%s0 + $0xf0] sm:$0xff]
  %v150 = vld [vmem:[%s0 + $0xf8] sm:$0xf]
  %v151 = vld [vmem:[%s0 + $0xfc] sm:$0xff]
  %v152 = vld [vmem:[%s0 + $0x104] sm:$0xff]
  %v153 = vld [vmem:[%s0 + $0x10c] sm:$0xff]
  %v154 = vld [vmem:[%s0 + $0x114] sm:$0xf]
  %v155 = vld [vmem:[%s0 + $0x118] sm:$0xff]
  %v156 = vld [vmem:[%s0 + $0x120] sm:$0xff]
  %v157 = vld [vmem:[%s0 + $0x128] sm:$0xff]
  %v158 = vld [vmem:[%s0 + $0x130] sm:$0xf]
  %v159 = vld [vmem:[%s0 + $0x134] sm:$0xff]
  %v160 = vld [vmem:[%s0 + $0x13c] sm:$0xff]
  %v161 = vld [vmem:[%s0 + $0x144] sm:$0xff]
  %v162 = vld [vmem:[%s0 + $0x14c] sm:$0xf]
  %v163 = vld [vmem:[%s0 + $0x150] sm:$0xff]
  %v164 = vld [vmem:[%s0 + $0x158] sm:$0xff]
  %v165 = vld [vmem:[%s0 + $0x160] sm:$0xff]
  %v166 = vld [vmem:[%s0 + $0x168] sm:$0xf]
  %v167 = vld [vmem:[%s0 + $0x16c] sm:$0xff]
  %v168 = vld [vmem:[%s0 + $0x174] sm:$0xff]
  %v169 = vld [vmem:[%s0 + $0x17c] sm:$0xff]
  %v170 = vld [vmem:[%s0 + $0x184] sm:$0xf]
  %v171 = vld [vmem:[%s0 + $0x188] sm:$0xff]
  %v172 = vld [vmem:[%s0 + $0x190] sm:$0xff]
  %v173 = vld [vmem:[%s0 + $0x198] sm:$0xff]
  %v174 = vld [vmem:[%s0 + $0x1a0] sm:$0xf]
  %v175 = vld [vmem:[%s0 + $0x1a4] sm:$0xff]
  %v176 = vld [vmem:[%s0 + $0x1ac] sm:$0xff]
  %v177 = vld [vmem:[%s0 + $0x1b4] sm:$0xff]
  %v178 = vld [vmem:[%s0 + $0x1bc] sm:$0xf]
  %v243 = vunpack.c.l.b16 %v115
  %v244 = vunpack.c.h.b16 %v115
  %v245 = vunpack.c.l.b16 %v116
  %v246 = vunpack.c.h.b16 %v116
  %v247 = vunpack.c.l.b16 %v117
  %v248 = vunpack.c.h.b16 %v117
  %v249 = vunpack.c.l.b16 %v118
  %v250 = vunpack.c.l.b16 %v119
  %v251 = vunpack.c.h.b16 %v119
  %v252 = vunpack.c.l.b16 %v120
  %v253 = vunpack.c.h.b16 %v120
  %v254 = vunpack.c.l.b16 %v121
  %v255 = vunpack.c.h.b16 %v121
  %v256 = vunpack.c.l.b16 %v122
  %v257 = vunpack.c.l.b16 %v123
  %v258 = vunpack.c.h.b16 %v123
  %v259 = vunpack.c.l.b16 %v124
  %v260 = vunpack.c.h.b16 %v124
  %v261 = vunpack.c.l.b16 %v125
  %v262 = vunpack.c.h.b16 %v125
  %v263 = vunpack.c.l.b16 %v126
  %v264 = vunpack.c.l.b16 %v127
  %v265 = vunpack.c.h.b16 %v127
  %v266 = vunpack.c.l.b16 %v128
  %v267 = vunpack.c.h.b16 %v128
  %v268 = vunpack.c.l.b16 %v129
  %v269 = vunpack.c.h.b16 %v129
  %v270 = vunpack.c.l.b16 %v130
  %v271 = vunpack.c.l.b16 %v131
  %v272 = vunpack.c.h.b16 %v131
  %v273 = vunpack.c.l.b16 %v132
  %v274 = vunpack.c.h.b16 %v132
  %v275 = vunpack.c.l.b16 %v133
  %v276 = vunpack.c.h.b16 %v133
  %v277 = vunpack.c.l.b16 %v134
  %v278 = vunpack.c.l.b16 %v135
  %v279 = vunpack.c.h.b16 %v135
  %v280 = vunpack.c.l.b16 %v136
  %v281 = vunpack.c.h.b16 %v136
  %v282 = vunpack.c.l.b16 %v137
  %v283 = vunpack.c.h.b16 %v137
  %v284 = vunpack.c.l.b16 %v138
  %v285 = vunpack.c.l.b16 %v139
  %v286 = vunpack.c.h.b16 %v139
  %v287 = vunpack.c.l.b16 %v140
  %v288 = vunpack.c.h.b16 %v140
  %v289 = vunpack.c.l.b16 %v141
  %v290 = vunpack.c.h.b16 %v141
  %v291 = vunpack.c.l.b16 %v142
  %v292 = vunpack.c.l.b16 %v143
  %v293 = vunpack.c.h.b16 %v143
  %v294 = vunpack.c.l.b16 %v144
  %v295 = vunpack.c.h.b16 %v144
  %v296 = vunpack.c.l.b16 %v145
  %v297 = vunpack.c.h.b16 %v145
  %v298 = vunpack.c.l.b16 %v146
  %v299 = vunpack.c.l.b16 %v147
  %v300 = vunpack.c.h.b16 %v147
  %v301 = vunpack.c.l.b16 %v148
  %v302 = vunpack.c.h.b16 %v148
  %v303 = vunpack.c.l.b16 %v149
  %v304 = vunpack.c.h.b16 %v149
  %v305 = vunpack.c.l.b16 %v150
  %v306 = vunpack.c.l.b16 %v151
  %v307 = vunpack.c.h.b16 %v151
  %v308 = vunpack.c.l.b16 %v152
  %v309 = vunpack.c.h.b16 %v152
  %v310 = vunpack.c.l.b16 %v153
  %v311 = vunpack.c.h.b16 %v153
  %v312 = vunpack.c.l.b16 %v154
  %v313 = vunpack.c.l.b16 %v155
  %v314 = vunpack.c.h.b16 %v155
  %v315 = vunpack.c.l.b16 %v156
  %v316 = vunpack.c.h.b16 %v156
  %v317 = vunpack.c.l.b16 %v157
  %v318 = vunpack.c.h.b16 %v157
  %v319 = vunpack.c.l.b16 %v158
  %v320 = vunpack.c.l.b16 %v159
  %v321 = vunpack.c.h.b16 %v159
  %v322 = vunpack.c.l.b16 %v160
  %v323 = vunpack.c.h.b16 %v160
  %v324 = vunpack.c.l.b16 %v161
  %v325 = vunpack.c.h.b16 %v161
  %v326 = vunpack.c.l.b16 %v162
  %v327 = vunpack.c.l.b16 %v163
  %v328 = vunpack.c.h.b16 %v163
  %v329 = vunpack.c.l.b16 %v164
  %v330 = vunpack.c.h.b16 %v164
  %v331 = vunpack.c.l.b16 %v165
  %v332 = vunpack.c.h.b16 %v165
  %v333 = vunpack.c.l.b16 %v166
  %v334 = vunpack.c.l.b16 %v167
  %v335 = vunpack.c.h.b16 %v167
  %v336 = vunpack.c.l.b16 %v168
  %v337 = vunpack.c.h.b16 %v168
  %v338 = vunpack.c.l.b16 %v169
  %v339 = vunpack.c.h.b16 %v169
  %v340 = vunpack.c.l.b16 %v170
  %v341 = vunpack.c.l.b16 %v171
  %v342 = vunpack.c.h.b16 %v171
  %v343 = vunpack.c.l.b16 %v172
  %v344 = vunpack.c.h.b16 %v172
  %v345 = vunpack.c.l.b16 %v173
  %v346 = vunpack.c.h.b16 %v173
  %v347 = vunpack.c.l.b16 %v174
  %v348 = vunpack.c.l.b16 %v175
  %v349 = vunpack.c.h.b16 %v175
  %v350 = vunpack.c.l.b16 %v176
  %v351 = vunpack.c.h.b16 %v176
  %v352 = vunpack.c.l.b16 %v177
  %v353 = vunpack.c.h.b16 %v177
  %v354 = vunpack.c.l.b16 %v178
  %v355 = vpack.c.b16 %v250, %v243
  %v356 = vpack.c.b16 %v251, %v244
  %v357 = vpack.c.b16 %v252, %v245
  %v358 = vpack.c.b16 %v253, %v246
  %v359 = vpack.c.b16 %v254, %v247
  %v360 = vpack.c.b16 %v255, %v248
  %v361 = vpack.c.b16 %v256, %v249
  %v362 = vpack.c.b16 %v264, %v257
  %v363 = vpack.c.b16 %v265, %v258
  %v364 = vpack.c.b16 %v266, %v259
  %v365 = vpack.c.b16 %v267, %v260
  %v366 = vpack.c.b16 %v268, %v261
  %v367 = vpack.c.b16 %v269, %v262
  %v368 = vpack.c.b16 %v270, %v263
  %v369 = vpack.c.b16 %v278, %v271
  %v370 = vpack.c.b16 %v279, %v272
  %v371 = vpack.c.b16 %v280, %v273
  %v372 = vpack.c.b16 %v281, %v274
  %v373 = vpack.c.b16 %v282, %v275
  %v374 = vpack.c.b16 %v283, %v276
  %v375 = vpack.c.b16 %v284, %v277
  %v376 = vpack.c.b16 %v292, %v285
  %v377 = vpack.c.b16 %v293, %v286
  %v378 = vpack.c.b16 %v294, %v287
  %v379 = vpack.c.b16 %v295, %v288
  %v380 = vpack.c.b16 %v296, %v289
  %v381 = vpack.c.b16 %v297, %v290
  %v382 = vpack.c.b16 %v298, %v291
  %v383 = vpack.c.b16 %v306, %v299
  %v384 = vpack.c.b16 %v307, %v300
  %v385 = vpack.c.b16 %v308, %v301
  %v386 = vpack.c.b16 %v309, %v302
  %v387 = vpack.c.b16 %v310, %v303
  %v388 = vpack.c.b16 %v311, %v304
  %v389 = vpack.c.b16 %v312, %v305
  %v390 = vpack.c.b16 %v320, %v313
  %v391 = vpack.c.b16 %v321, %v314
  %v392 = vpack.c.b16 %v322, %v315
  %v393 = vpack.c.b16 %v323, %v316
  %v394 = vpack.c.b16 %v324, %v317
  %v395 = vpack.c.b16 %v325, %v318
  %v396 = vpack.c.b16 %v326, %v319
  %v397 = vpack.c.b16 %v334, %v327
  %v398 = vpack.c.b16 %v335, %v328
  %v399 = vpack.c.b16 %v336, %v329
  %v400 = vpack.c.b16 %v337, %v330
  %v401 = vpack.c.b16 %v338, %v331
  %v402 = vpack.c.b16 %v339, %v332
  %v403 = vpack.c.b16 %v340, %v333
  %v404 = vpack.c.b16 %v348, %v341
  %v405 = vpack.c.b16 %v349, %v342
  %v406 = vpack.c.b16 %v350, %v343
  %v407 = vpack.c.b16 %v351, %v344
  %v408 = vpack.c.b16 %v352, %v345
  %v409 = vpack.c.b16 %v353, %v346
  %v410 = vpack.c.b16 %v354, %v347
  %v559 = vunpack.c.l.b16 %v15
  %v560 = vunpack.c.l.b16 %v16
  %v561 = vunpack.c.l.b16 %v17
  %v562 = vunpack.c.l.b16 %v18
  %v563 = vunpack.c.l.b16 %v19
  %v564 = vunpack.c.l.b16 %v20
  %v565 = vunpack.c.l.b16 %v21
  %v566 = vunpack.c.l.b16 %v22
  %v567 = vunpack.c.l.b16 %v23
  %v568 = vunpack.c.l.b16 %v24
  %v569 = vunpack.c.l.b16 %v25
  %v570 = vunpack.c.l.b16 %v26
  %v571 = vunpack.c.l.b16 %v27
  %v572 = vunpack.c.l.b16 %v28
  %v573 = vunpack.c.l.b16 %v29
  %v574 = vunpack.c.l.b16 %v30
  %v575 = vunpack.c.l.b16 %v31
  %v576 = vunpack.c.l.b16 %v32
  %v577 = vunpack.c.l.b16 %v33
  %v578 = vunpack.c.l.b16 %v34
  %v579 = vunpack.c.l.b16 %v35
  %v580 = vunpack.c.l.b16 %v36
  %v581 = vunpack.c.l.b16 %v37
  %v582 = vunpack.c.l.b16 %v38
  %v583 = vunpack.c.l.b16 %v39
  %v584 = vunpack.c.l.b16 %v40
  %v585 = vunpack.c.l.b16 %v41
  %v586 = vunpack.c.l.b16 %v42
  %v587 = vunpack.c.l.b16 %v43
  %v588 = vunpack.c.l.b16 %v44
  %v589 = vunpack.c.l.b16 %v45
  %v590 = vunpack.c.l.b16 %v46
  %v591 = vunpack.c.l.b16 %v47
  %v592 = vunpack.c.l.b16 %v48
  %v593 = vunpack.c.l.b16 %v49
  %v594 = vunpack.c.l.b16 %v50
  %v595 = vunpack.c.l.b16 %v51
  %v596 = vunpack.c.l.b16 %v52
  %v597 = vunpack.c.l.b16 %v53
  %v598 = vunpack.c.l.b16 %v54
  %v599 = vunpack.c.l.b16 %v55
  %v600 = vunpack.c.l.b16 %v56
  %v601 = vunpack.c.l.b16 %v57
  %v602 = vunpack.c.l.b16 %v58
  %v603 = vunpack.c.l.b16 %v59
  %v604 = vunpack.c.l.b16 %v60
  %v605 = vunpack.c.l.b16 %v61
  %v606 = vunpack.c.l.b16 %v62
  %v607 = vunpack.c.l.b16 %v63
  %v608 = vunpack.c.l.b16 %v64
  %v609 = vunpack.c.l.b16 %v65
  %v610 = vunpack.c.l.b16 %v66
  %v611 = vunpack.c.l.b16 %v67
  %v612 = vunpack.c.l.b16 %v68
  %v613 = vunpack.c.l.b16 %v69
  %v614 = vunpack.c.l.b16 %v70
  %v615 = vunpack.c.l.b16 %v71
  %v616 = vunpack.c.l.b16 %v72
  %v617 = vunpack.c.l.b16 %v73
  %v618 = vunpack.c.l.b16 %v74
  %v619 = vunpack.c.l.b16 %v75
  %v620 = vunpack.c.l.b16 %v76
  %v621 = vunpack.c.l.b16 %v77
  %v622 = vunpack.c.l.b16 %v78
  %v623 = vunpack.c.l.b16 %v79
  %v624 = vunpack.c.l.b16 %v80
  %v625 = vunpack.c.l.b16 %v81
  %v626 = vunpack.c.l.b16 %v82
  %v627 = vunpack.c.l.b16 %v83
  %v628 = vunpack.c.l.b16 %v84
  %v629 = vunpack.c.l.b16 %v85
  %v630 = vunpack.c.l.b16 %v86
  %v631 = vunpack.c.l.b16 %v87
  %v632 = vunpack.c.l.b16 %v88
  %v633 = vunpack.c.l.b16 %v89
  %v634 = vunpack.c.l.b16 %v90
  %v635 = vunpack.c.l.b16 %v91
  %v636 = vunpack.c.l.b16 %v92
  %v637 = vunpack.c.l.b16 %v93
  %v638 = vunpack.c.l.b16 %v94
  %v639 = vunpack.c.l.b16 %v95
  %v640 = vunpack.c.l.b16 %v96
  %v641 = vunpack.c.l.b16 %v97
  %v642 = vunpack.c.l.b16 %v98
  %v643 = vunpack.c.l.b16 %v99
  %v644 = vunpack.c.l.b16 %v100
  %v645 = vunpack.c.l.b16 %v101
  %v646 = vunpack.c.l.b16 %v102
  %v647 = vunpack.c.l.b16 %v103
  %v648 = vunpack.c.l.b16 %v104
  %v649 = vunpack.c.l.b16 %v105
  %v650 = vunpack.c.l.b16 %v106
  %v651 = vunpack.c.l.b16 %v107
  %v652 = vunpack.c.l.b16 %v108
  %v653 = vunpack.c.l.b16 %v109
  %v654 = vunpack.c.l.b16 %v110
  %v655 = vunpack.c.l.b16 %v111
  %v656 = vunpack.c.l.b16 %v112
  %v657 = vunpack.c.l.b16 %v113
  %v658 = vunpack.c.l.b16 %v114
  %v659 = vpack.c.b16 %v560, %v559
  %v660 = vpack.c.b16 %v562, %v561
  %v661 = vpack.c.b16 %v564, %v563
  %v662 = vpack.c.b16 %v566, %v565
  %v663 = vpack.c.b16 %v568, %v567
  %v664 = vpack.c.b16 %v570, %v569
  %v665 = vpack.c.b16 %v572, %v571
  %v666 = vpack.c.b16 %v574, %v573
  %v667 = vpack.c.b16 %v576, %v575
  %v668 = vpack.c.b16 %v578, %v577
  %v669 = vpack.c.b16 %v580, %v579
  %v670 = vpack.c.b16 %v582, %v581
  %v671 = vpack.c.b16 %v584, %v583
  %v672 = vpack.c.b16 %v586, %v585
  %v673 = vpack.c.b16 %v588, %v587
  %v674 = vpack.c.b16 %v590, %v589
  %v675 = vpack.c.b16 %v592, %v591
  %v676 = vpack.c.b16 %v594, %v593
  %v677 = vpack.c.b16 %v596, %v595
  %v678 = vpack.c.b16 %v598, %v597
  %v679 = vpack.c.b16 %v600, %v599
  %v680 = vpack.c.b16 %v602, %v601
  %v681 = vpack.c.b16 %v604, %v603
  %v682 = vpack.c.b16 %v606, %v605
  %v683 = vpack.c.b16 %v608, %v607
  %v684 = vpack.c.b16 %v610, %v609
  %v685 = vpack.c.b16 %v612, %v611
  %v686 = vpack.c.b16 %v614, %v613
  %v687 = vpack.c.b16 %v616, %v615
  %v688 = vpack.c.b16 %v618, %v617
  %v689 = vpack.c.b16 %v620, %v619
  %v690 = vpack.c.b16 %v622, %v621
  %v691 = vpack.c.b16 %v624, %v623
  %v692 = vpack.c.b16 %v626, %v625
  %v693 = vpack.c.b16 %v628, %v627
  %v694 = vpack.c.b16 %v630, %v629
  %v695 = vpack.c.b16 %v632, %v631
  %v696 = vpack.c.b16 %v634, %v633
  %v697 = vpack.c.b16 %v636, %v635
  %v698 = vpack.c.b16 %v638, %v637
  %v699 = vpack.c.b16 %v640, %v639
  %v700 = vpack.c.b16 %v642, %v641
  %v701 = vpack.c.b16 %v644, %v643
  %v702 = vpack.c.b16 %v646, %v645
  %v703 = vpack.c.b16 %v648, %v647
  %v704 = vpack.c.b16 %v650, %v649
  %v705 = vpack.c.b16 %v652, %v651
  %v706 = vpack.c.b16 %v654, %v653
  %v707 = vpack.c.b16 %v656, %v655
  %v708 = vpack.c.b16 %v658, %v657
  %vm759 = vcmask 261120
  %v761 = vsel %vm759, %v361, 0
  %v764 = vsel %vm759, %v368, 0
  %v767 = vsel %vm759, %v375, 0
  %v770 = vsel %vm759, %v382, 0
  %v773 = vsel %vm759, %v389, 0
  %v776 = vsel %vm759, %v396, 0
  %v779 = vsel %vm759, %v403, 0
  %v782 = vsel %vm759, %v410, 0
  %784 = vmatpush.bf16.msra.mxu0 %v666
  %785 = vmatpush.bf16.msra.mxu0 %v665
  %786 = vmatpush.bf16.msra.mxu0 %v664
  %787 = vmatpush.bf16.msra.mxu0 %v663
  %788 = vmatpush.bf16.msra.mxu0 %v662
  %789 = vmatpush.bf16.msra.mxu0 %v661
  %790 = vmatpush.bf16.msra.mxu0 %v660
  %791 = vmatpush.bf16.msra.mxu0 %v659
  %792 = vmatmul.bf16.gmra.mxu0 %v355
  %v793 = vpop.f32.mrf.mxu0
  %v794 = vadd.f32 0.0, %v793
  %v795 = vpop.f32.mrf.mxu0
  %v796 = vadd.f32 0.0, %v795
  %797 = vmatmul.bf16.gmra.mxu0 %v362
  %v798 = vpop.f32.mrf.mxu0
  %v799 = vadd.f32 0.0, %v798
  %v800 = vpop.f32.mrf.mxu0
  %v801 = vadd.f32 0.0, %v800
  %802 = vmatmul.bf16.gmra.mxu0 %v369
  %v803 = vpop.f32.mrf.mxu0
  %v804 = vadd.f32 0.0, %v803
  %v805 = vpop.f32.mrf.mxu0
  %v806 = vadd.f32 0.0, %v805
  %807 = vmatmul.bf16.gmra.mxu0 %v376
  %v808 = vpop.f32.mrf.mxu0
  %v809 = vadd.f32 0.0, %v808
  %v810 = vpop.f32.mrf.mxu0
  %v811 = vadd.f32 0.0, %v810
  %812 = vmatmul.bf16.gmra.mxu0 %v383
  %v813 = vpop.f32.mrf.mxu0
  %v814 = vadd.f32 0.0, %v813
  %v815 = vpop.f32.mrf.mxu0
  %v816 = vadd.f32 0.0, %v815
  %817 = vmatmul.bf16.gmra.mxu0 %v390
  %v818 = vpop.f32.mrf.mxu0
  %v819 = vadd.f32 0.0, %v818
  %v820 = vpop.f32.mrf.mxu0
  %v821 = vadd.f32 0.0, %v820
  %822 = vmatmul.bf16.gmra.mxu0 %v397
  %v823 = vpop.f32.mrf.mxu0
  %v824 = vadd.f32 0.0, %v823
  %v825 = vpop.f32.mrf.mxu0
  %v826 = vadd.f32 0.0, %v825
  %827 = vmatmul.bf16.gmra.mxu0 %v404
  %v828 = vpop.f32.mrf.mxu0
  %v829 = vadd.f32 0.0, %v828
  %v830 = vpop.f32.mrf.mxu0
  %v831 = vadd.f32 0.0, %v830
  %832 = vdwg.mxu0
  %833 = vmatpush.bf16.msra.mxu0 %v674
  %834 = vmatpush.bf16.msra.mxu0 %v673
  %835 = vmatpush.bf16.msra.mxu0 %v672
  %836 = vmatpush.bf16.msra.mxu0 %v671
  %837 = vmatpush.bf16.msra.mxu0 %v670
  %838 = vmatpush.bf16.msra.mxu0 %v669
  %839 = vmatpush.bf16.msra.mxu0 %v668
  %840 = vmatpush.bf16.msra.mxu0 %v667
  %841 = vmatmul.bf16.gmra.mxu0 %v356
  %v842 = vpop.f32.mrf.mxu0
  %v843 = vadd.f32 %v794, %v842
  %v844 = vpop.f32.mrf.mxu0
  %v845 = vadd.f32 %v796, %v844
  %846 = vmatmul.bf16.gmra.mxu0 %v363
  %v847 = vpop.f32.mrf.mxu0
  %v848 = vadd.f32 %v799, %v847
  %v849 = vpop.f32.mrf.mxu0
  %v850 = vadd.f32 %v801, %v849
  %851 = vmatmul.bf16.gmra.mxu0 %v370
  %v852 = vpop.f32.mrf.mxu0
  %v853 = vadd.f32 %v804, %v852
  %v854 = vpop.f32.mrf.mxu0
  %v855 = vadd.f32 %v806, %v854
  %856 = vmatmul.bf16.gmra.mxu0 %v377
  %v857 = vpop.f32.mrf.mxu0
  %v858 = vadd.f32 %v809, %v857
  %v859 = vpop.f32.mrf.mxu0
  %v860 = vadd.f32 %v811, %v859
  %861 = vmatmul.bf16.gmra.mxu0 %v384
  %v862 = vpop.f32.mrf.mxu0
  %v863 = vadd.f32 %v814, %v862
  %v864 = vpop.f32.mrf.mxu0
  %v865 = vadd.f32 %v816, %v864
  %866 = vmatmul.bf16.gmra.mxu0 %v391
  %v867 = vpop.f32.mrf.mxu0
  %v868 = vadd.f32 %v819, %v867
  %v869 = vpop.f32.mrf.mxu0
  %v870 = vadd.f32 %v821, %v869
  %871 = vmatmul.bf16.gmra.mxu0 %v398
  %v872 = vpop.f32.mrf.mxu0
  %v873 = vadd.f32 %v824, %v872
  %v874 = vpop.f32.mrf.mxu0
  %v875 = vadd.f32 %v826, %v874
  %876 = vmatmul.bf16.gmra.mxu0 %v405
  %v877 = vpop.f32.mrf.mxu0
  %v878 = vadd.f32 %v829, %v877
  %v879 = vpop.f32.mrf.mxu0
  %v880 = vadd.f32 %v831, %v879
  %881 = vdwg.mxu0
  %882 = vmatpush.bf16.msra.mxu0 %v682
  %883 = vmatpush.bf16.msra.mxu0 %v681
  %884 = vmatpush.bf16.msra.mxu0 %v680
  %885 = vmatpush.bf16.msra.mxu0 %v679
  %886 = vmatpush.bf16.msra.mxu0 %v678
  %887 = vmatpush.bf16.msra.mxu0 %v677
  %888 = vmatpush.bf16.msra.mxu0 %v676
  %889 = vmatpush.bf16.msra.mxu0 %v675
  %890 = vmatmul.bf16.gmra.mxu0 %v357
  %v891 = vpop.f32.mrf.mxu0
  %v892 = vadd.f32 %v843, %v891
  %v893 = vpop.f32.mrf.mxu0
  %v894 = vadd.f32 %v845, %v893
  %895 = vmatmul.bf16.gmra.mxu0 %v364
  %v896 = vpop.f32.mrf.mxu0
  %v897 = vadd.f32 %v848, %v896
  %v898 = vpop.f32.mrf.mxu0
  %v899 = vadd.f32 %v850, %v898
  %900 = vmatmul.bf16.gmra.mxu0 %v371
  %v901 = vpop.f32.mrf.mxu0
  %v902 = vadd.f32 %v853, %v901
  %v903 = vpop.f32.mrf.mxu0
  %v904 = vadd.f32 %v855, %v903
  %905 = vmatmul.bf16.gmra.mxu0 %v378
  %v906 = vpop.f32.mrf.mxu0
  %v907 = vadd.f32 %v858, %v906
  %v908 = vpop.f32.mrf.mxu0
  %v909 = vadd.f32 %v860, %v908
  %910 = vmatmul.bf16.gmra.mxu0 %v385
  %v911 = vpop.f32.mrf.mxu0
  %v912 = vadd.f32 %v863, %v911
  %v913 = vpop.f32.mrf.mxu0
  %v914 = vadd.f32 %v865, %v913
  %915 = vmatmul.bf16.gmra.mxu0 %v392
  %v916 = vpop.f32.mrf.mxu0
  %v917 = vadd.f32 %v868, %v916
  %v918 = vpop.f32.mrf.mxu0
  %v919 = vadd.f32 %v870, %v918
  %920 = vmatmul.bf16.gmra.mxu0 %v399
  %v921 = vpop.f32.mrf.mxu0
  %v922 = vadd.f32 %v873, %v921
  %v923 = vpop.f32.mrf.mxu0
  %v924 = vadd.f32 %v875, %v923
  %925 = vmatmul.bf16.gmra.mxu0 %v406
  %v926 = vpop.f32.mrf.mxu0
  %v927 = vadd.f32 %v878, %v926
  %v928 = vpop.f32.mrf.mxu0
  %v929 = vadd.f32 %v880, %v928
  %930 = vdwg.mxu0
  %931 = vmatpush.bf16.msra.mxu0 %v690
  %932 = vmatpush.bf16.msra.mxu0 %v689
  %933 = vmatpush.bf16.msra.mxu0 %v688
  %934 = vmatpush.bf16.msra.mxu0 %v687
  %935 = vmatpush.bf16.msra.mxu0 %v686
  %936 = vmatpush.bf16.msra.mxu0 %v685
  %937 = vmatpush.bf16.msra.mxu0 %v684
  %938 = vmatpush.bf16.msra.mxu0 %v683
  %939 = vmatmul.bf16.gmra.mxu0 %v358
  %v940 = vpop.f32.mrf.mxu0
  %v941 = vadd.f32 %v892, %v940
  %v942 = vpop.f32.mrf.mxu0
  %v943 = vadd.f32 %v894, %v942
  %944 = vmatmul.bf16.gmra.mxu0 %v365
  %v945 = vpop.f32.mrf.mxu0
  %v946 = vadd.f32 %v897, %v945
  %v947 = vpop.f32.mrf.mxu0
  %v948 = vadd.f32 %v899, %v947
  %949 = vmatmul.bf16.gmra.mxu0 %v372
  %v950 = vpop.f32.mrf.mxu0
  %v951 = vadd.f32 %v902, %v950
  %v952 = vpop.f32.mrf.mxu0
  %v953 = vadd.f32 %v904, %v952
  %954 = vmatmul.bf16.gmra.mxu0 %v379
  %v955 = vpop.f32.mrf.mxu0
  %v956 = vadd.f32 %v907, %v955
  %v957 = vpop.f32.mrf.mxu0
  %v958 = vadd.f32 %v909, %v957
  %959 = vmatmul.bf16.gmra.mxu0 %v386
  %v960 = vpop.f32.mrf.mxu0
  %v961 = vadd.f32 %v912, %v960
  %v962 = vpop.f32.mrf.mxu0
  %v963 = vadd.f32 %v914, %v962
  %964 = vmatmul.bf16.gmra.mxu0 %v393
  %v965 = vpop.f32.mrf.mxu0
  %v966 = vadd.f32 %v917, %v965
  %v967 = vpop.f32.mrf.mxu0
  %v968 = vadd.f32 %v919, %v967
  %969 = vmatmul.bf16.gmra.mxu0 %v400
  %v970 = vpop.f32.mrf.mxu0
  %v971 = vadd.f32 %v922, %v970
  %v972 = vpop.f32.mrf.mxu0
  %v973 = vadd.f32 %v924, %v972
  %974 = vmatmul.bf16.gmra.mxu0 %v407
  %v975 = vpop.f32.mrf.mxu0
  %v976 = vadd.f32 %v927, %v975
  %v977 = vpop.f32.mrf.mxu0
  %v978 = vadd.f32 %v929, %v977
  %979 = vdwg.mxu0
  %980 = vmatpush.bf16.msra.mxu0 %v698
  %981 = vmatpush.bf16.msra.mxu0 %v697
  %982 = vmatpush.bf16.msra.mxu0 %v696
  %983 = vmatpush.bf16.msra.mxu0 %v695
  %984 = vmatpush.bf16.msra.mxu0 %v694
  %985 = vmatpush.bf16.msra.mxu0 %v693
  %986 = vmatpush.bf16.msra.mxu0 %v692
  %987 = vmatpush.bf16.msra.mxu0 %v691
  %988 = vmatmul.bf16.gmra.mxu0 %v359
  %v989 = vpop.f32.mrf.mxu0
  %v990 = vadd.f32 %v941, %v989
  %v991 = vpop.f32.mrf.mxu0
  %v992 = vadd.f32 %v943, %v991
  %993 = vmatmul.bf16.gmra.mxu0 %v366
  %v994 = vpop.f32.mrf.mxu0
  %v995 = vadd.f32 %v946, %v994
  %v996 = vpop.f32.mrf.mxu0
  %v997 = vadd.f32 %v948, %v996
  %998 = vmatmul.bf16.gmra.mxu0 %v373
  %v999 = vpop.f32.mrf.mxu0
  %v1000 = vadd.f32 %v951, %v999
  %v1001 = vpop.f32.mrf.mxu0
  %v1002 = vadd.f32 %v953, %v1001
  %1003 = vmatmul.bf16.gmra.mxu0 %v380
  %v1004 = vpop.f32.mrf.mxu0
  %v1005 = vadd.f32 %v956, %v1004
  %v1006 = vpop.f32.mrf.mxu0
  %v1007 = vadd.f32 %v958, %v1006
  %1008 = vmatmul.bf16.gmra.mxu0 %v387
  %v1009 = vpop.f32.mrf.mxu0
  %v1010 = vadd.f32 %v961, %v1009
  %v1011 = vpop.f32.mrf.mxu0
  %v1012 = vadd.f32 %v963, %v1011
  %1013 = vmatmul.bf16.gmra.mxu0 %v394
  %v1014 = vpop.f32.mrf.mxu0
  %v1015 = vadd.f32 %v966, %v1014
  %v1016 = vpop.f32.mrf.mxu0
  %v1017 = vadd.f32 %v968, %v1016
  %1018 = vmatmul.bf16.gmra.mxu0 %v401
  %v1019 = vpop.f32.mrf.mxu0
  %v1020 = vadd.f32 %v971, %v1019
  %v1021 = vpop.f32.mrf.mxu0
  %v1022 = vadd.f32 %v973, %v1021
  %1023 = vmatmul.bf16.gmra.mxu0 %v408
  %v1024 = vpop.f32.mrf.mxu0
  %v1025 = vadd.f32 %v976, %v1024
  %v1026 = vpop.f32.mrf.mxu0
  %v1027 = vadd.f32 %v978, %v1026
  %1028 = vdwg.mxu0
  %1029 = vmatpush.bf16.msra.mxu0 %v706
  %1030 = vmatpush.bf16.msra.mxu0 %v705
  %1031 = vmatpush.bf16.msra.mxu0 %v704
  %1032 = vmatpush.bf16.msra.mxu0 %v703
  %1033 = vmatpush.bf16.msra.mxu0 %v702
  %1034 = vmatpush.bf16.msra.mxu0 %v701
  %1035 = vmatpush.bf16.msra.mxu0 %v700
  %1036 = vmatpush.bf16.msra.mxu0 %v699
  %1037 = vmatmul.bf16.gmra.mxu0 %v360
  %v1038 = vpop.f32.mrf.mxu0
  %v1039 = vadd.f32 %v990, %v1038
  %v1040 = vpop.f32.mrf.mxu0
  %v1041 = vadd.f32 %v992, %v1040
  %1042 = vmatmul.bf16.gmra.mxu0 %v367
  %v1043 = vpop.f32.mrf.mxu0
  %v1044 = vadd.f32 %v995, %v1043
  %v1045 = vpop.f32.mrf.mxu0
  %v1046 = vadd.f32 %v997, %v1045
  %1047 = vmatmul.bf16.gmra.mxu0 %v374
  %v1048 = vpop.f32.mrf.mxu0
  %v1049 = vadd.f32 %v1000, %v1048
  %v1050 = vpop.f32.mrf.mxu0
  %v1051 = vadd.f32 %v1002, %v1050
  %1052 = vmatmul.bf16.gmra.mxu0 %v381
  %v1053 = vpop.f32.mrf.mxu0
  %v1054 = vadd.f32 %v1005, %v1053
  %v1055 = vpop.f32.mrf.mxu0
  %v1056 = vadd.f32 %v1007, %v1055
  %1057 = vmatmul.bf16.gmra.mxu0 %v388
  %v1058 = vpop.f32.mrf.mxu0
  %v1059 = vadd.f32 %v1010, %v1058
  %v1060 = vpop.f32.mrf.mxu0
  %v1061 = vadd.f32 %v1012, %v1060
  %1062 = vmatmul.bf16.gmra.mxu0 %v395
  %v1063 = vpop.f32.mrf.mxu0
  %v1064 = vadd.f32 %v1015, %v1063
  %v1065 = vpop.f32.mrf.mxu0
  %v1066 = vadd.f32 %v1017, %v1065
  %1067 = vmatmul.bf16.gmra.mxu0 %v402
  %v1068 = vpop.f32.mrf.mxu0
  %v1069 = vadd.f32 %v1020, %v1068
  %v1070 = vpop.f32.mrf.mxu0
  %v1071 = vadd.f32 %v1022, %v1070
  %1072 = vmatmul.bf16.gmra.mxu0 %v409
  %v1073 = vpop.f32.mrf.mxu0
  %v1074 = vadd.f32 %v1025, %v1073
  %v1075 = vpop.f32.mrf.mxu0
  %v1076 = vadd.f32 %v1027, %v1075
  %1077 = vdwg.mxu0
  %1078 = vmatpush.bf16.msra.mxu0 0
  %1079 = vmatpush.bf16.msra.mxu0 0
  %1080 = vmatpush.bf16.msra.mxu0 0
  %1081 = vmatpush.bf16.msra.mxu0 0
  %1082 = vmatpush.bf16.msra.mxu0 0
  %1083 = vmatpush.bf16.msra.mxu0 0
  %1084 = vmatpush.bf16.msra.mxu0 %v708
  %1085 = vmatpush.bf16.msra.mxu0 %v707
  %1086 = vmatmul.bf16.gmra.mxu0 %v761
  %v1087 = vpop.f32.mrf.mxu0
  %v1088 = vadd.f32 %v1039, %v1087
  %v1089 = vpop.f32.mrf.mxu0
  %v1090 = vadd.f32 %v1041, %v1089
  %1091 = vmatmul.bf16.gmra.mxu0 %v764
  %v1092 = vpop.f32.mrf.mxu0
  %v1093 = vadd.f32 %v1044, %v1092
  %v1094 = vpop.f32.mrf.mxu0
  %v1095 = vadd.f32 %v1046, %v1094
  %1096 = vmatmul.bf16.gmra.mxu0 %v767
  %v1097 = vpop.f32.mrf.mxu0
  %v1098 = vadd.f32 %v1049, %v1097
  %v1099 = vpop.f32.mrf.mxu0
  %v1100 = vadd.f32 %v1051, %v1099
  %1101 = vmatmul.bf16.gmra.mxu0 %v770
  %v1102 = vpop.f32.mrf.mxu0
  %v1103 = vadd.f32 %v1054, %v1102
  %v1104 = vpop.f32.mrf.mxu0
  %v1105 = vadd.f32 %v1056, %v1104
  %1106 = vmatmul.bf16.gmra.mxu0 %v773
  %v1107 = vpop.f32.mrf.mxu0
  %v1108 = vadd.f32 %v1059, %v1107
  %v1109 = vpop.f32.mrf.mxu0
  %v1110 = vadd.f32 %v1061, %v1109
  %1111 = vmatmul.bf16.gmra.mxu0 %v776
  %v1112 = vpop.f32.mrf.mxu0
  %v1113 = vadd.f32 %v1064, %v1112
  %v1114 = vpop.f32.mrf.mxu0
  %v1115 = vadd.f32 %v1066, %v1114
  %1116 = vmatmul.bf16.gmra.mxu0 %v779
  %v1117 = vpop.f32.mrf.mxu0
  %v1118 = vadd.f32 %v1069, %v1117
  %v1119 = vpop.f32.mrf.mxu0
  %v1120 = vadd.f32 %v1071, %v1119
  %1121 = vmatmul.bf16.gmra.mxu0 %v782
  %v1122 = vpop.f32.mrf.mxu0
  %v1123 = vadd.f32 %v1074, %v1122
  %v1124 = vpop.f32.mrf.mxu0
  %v1125 = vadd.f32 %v1076, %v1124
  %1126 = vdwg.mxu0
  %vm1127 = vcmask 523264
  %v1128 = vsel %vm1127, %v1088, -inf
  %v1129 = vsel %vm1127, %v1098, -inf
  %v1130 = vmax.f32 %v1128, %v1129
  %v1131 = vsel %vm1127, %v1108, -inf
  %v1132 = vmax.f32 %v1130, %v1131
  %v1133 = vsel %vm1127, %v1118, -inf
  %v1134 = vmax.f32 %v1132, %v1133
  %v1135 = vsel %vm1127, %v1090, -inf
  %v1136 = vsel %vm1127, %v1100, -inf
  %v1137 = vmax.f32 %v1135, %v1136
  %v1138 = vsel %vm1127, %v1110, -inf
  %v1139 = vmax.f32 %v1137, %v1138
  %v1140 = vsel %vm1127, %v1120, -inf
  %v1141 = vmax.f32 %v1139, %v1140
  %v1142 = vsel %vm1127, %v1093, -inf
  %v1143 = vsel %vm1127, %v1103, -inf
  %v1144 = vmax.f32 %v1142, %v1143
  %v1145 = vsel %vm1127, %v1113, -inf
  %v1146 = vmax.f32 %v1144, %v1145
  %v1147 = vsel %vm1127, %v1123, -inf
  %v1148 = vmax.f32 %v1146, %v1147
  %v1149 = vsel %vm1127, %v1095, -inf
  %v1150 = vsel %vm1127, %v1105, -inf
  %v1151 = vmax.f32 %v1149, %v1150
  %v1152 = vsel %vm1127, %v1115, -inf
  %v1153 = vmax.f32 %v1151, %v1152
  %v1154 = vsel %vm1127, %v1125, -inf
  %v1155 = vmax.f32 %v1153, %v1154
  %v1156 = vld [vmem:[%s2] sm:$0x1]
  %v1158 = vperm.slane %v1156, 0
  %v1160 = vadd.f32 %v1134, %v1158
  %v1161 = vadd.f32 %v1141, %v1158
  %v1162 = vadd.f32 %v1148, %v1158
  %v1163 = vadd.f32 %v1155, %v1158
  %v1164 = vmax.f32 %v1160, 0.0
  %v1165 = vmax.f32 %v1161, 0.0
  %v1166 = vmax.f32 %v1162, 0.0
  %v1167 = vmax.f32 %v1163, 0.0
  %v1168 = vpack.c.bf16 %v1164, %v1164
  %v1169 = vpack.c.bf16 %v1165, %v1165
  %v1170 = vpack.c.bf16 %v1166, %v1166
  %v1171 = vpack.c.bf16 %v1167, %v1167
  %vm1172 = vcmask 519168
  %1173 = vst.msk [vmem:[%s3] sm:$0xf] %vm1172, %v1168
  %1174 = vst.msk [vmem:[%s3 + $0x4] sm:$0xf] %vm1172, %v1169
  %1175 = vst.msk [vmem:[%s3 + $0x8] sm:$0xf] %vm1172, %v1170
  %1176 = vst.msk [vmem:[%s3 + $0xc] sm:$0xf] %vm1172, %v1171
  // Predicated region
  $region14: #{flnet_forward.4} parent=0 // pred_check
    _
  $region15: #{flnet_forward.4} parent=0 // pred_check_branch
    %1178 = sbr.rel (0) target = $region17
  $region16: #{flnet_forward.4} parent=0 // pred_region
    _
  $region17: #{flnet_forward.4} parent=0 // pred_fallthru
    _
  // Predicated region
  $region18: #{flnet_forward.4} parent=0 // pred_check
    _
  $region19: #{flnet_forward.4} parent=0 // pred_check_branch
    %1180 = sbr.rel (0) target = $region21
  $region20: #{flnet_forward.4} parent=0 // pred_region
    _
  $region21: #{flnet_forward.4} parent=0 // pred_fallthru
    _

// kernel: flnet_forward.5
$region0: #{flnet_forward.5}
  #allocation0 [shape = 'u32[]', space=smem, size = 0x4, offset = 0x4, fixed_abs, tag = 'smem constant byte address 0x4 - core index']
  #allocation1 [shape = 'u32[72,128]{1,0:T(1,128)}', space=vmem, size = 0x9000, scoped, tag = 'internal scratch']
  %s0 = inlined_call_operand.vmem [shape: bf16[8,1024], index: 0, kind: input, shape index: {}]
  %s1 = inlined_call_operand.vmem [shape: bf16[1024,2048], index: 1, kind: input, shape index: {}]
  %s2 = inlined_call_operand.vmem [shape: f32[1,2048], index: 2, kind: input, shape index: {}]
  %s3 = inlined_call_operand.vmem [shape: bf16[2048,128], index: 3, kind: input, shape index: {}]
  %s4 = inlined_call_operand.vmem [shape: f32[1,128], index: 4, kind: input, shape index: {}]
  %s5 = inlined_call_operand.vmem [shape: f32[8,128], index: 5, kind: output, shape index: {}]
  %s6 = sld [smem:[#allocation0]]
  $region30: #{flnet_forward.5} parent=0
    _
  %s8 = ssub.s32 1, %s6
  %s9 = scalar_select 0, %s8, %s6
  // Predicated region
  $region2: #{flnet_forward.5} parent=0 // pred_check
    _
  $region3: #{flnet_forward.5} parent=0 // pred_check_branch
    %11 = sbr.rel (0) target = $region5
  $region4: #{flnet_forward.5} parent=0 // pred_region
    _
  $region5: #{flnet_forward.5} parent=0 // pred_fallthru
    _
  // Predicated region
  $region6: #{flnet_forward.5} parent=0 // pred_check
    _
  $region7: #{flnet_forward.5} parent=0 // pred_check_branch
    %13 = sbr.rel (0) target = $region9
  $region8: #{flnet_forward.5} parent=0 // pred_region
    _
  $region9: #{flnet_forward.5} parent=0 // pred_fallthru
    _
  // Predicated region
  $region10: #{flnet_forward.5} parent=0 // pred_check
    _
  $region11: #{flnet_forward.5} parent=0 // pred_check_branch
    %15 = sbr.rel (0) target = $region13
  $region12: #{flnet_forward.5} parent=0 // pred_region
    _
  $region13: #{flnet_forward.5} parent=0 // pred_fallthru
    _
  // Predicated region
  $region14: #{flnet_forward.5} parent=0 // pred_check
    _
  $region15: #{flnet_forward.5} parent=0 // pred_check_branch
    %17 = sbr.rel (0) target = $region17
  $region16: #{flnet_forward.5} parent=0 // pred_region
    _
  $region17: #{flnet_forward.5} parent=0 // pred_fallthru
    _
  // Predicated region
  $region18: #{flnet_forward.5} parent=0 // pred_check
    _
  $region19: #{flnet_forward.5} parent=0 // pred_check_branch
    %19 = sbr.rel (0) target = $region21
  $region20: #{flnet_forward.5} parent=0 // pred_region
    _
  $region21: #{flnet_forward.5} parent=0 // pred_fallthru
    _
  %v20 = vld [vmem:[%s0] sm:$0xff]
  %v21 = vld [vmem:[%s0 + $0x8] sm:$0xff]
  %v22 = vld [vmem:[%s0 + $0x10] sm:$0xff]
  %v23 = vld [vmem:[%s0 + $0x18] sm:$0xff]
  %v24 = vld [vmem:[%s1] sm:$0xff]
  %v25 = vld [vmem:[%s1 + $0x8] sm:$0xff]
  %v26 = vld [vmem:[%s1 + $0x10] sm:$0xff]
  %v27 = vld [vmem:[%s1 + $0x18] sm:$0xff]
  %v28 = vld [vmem:[%s1 + $0x20] sm:$0xff]
  %v29 = vld [vmem:[%s1 + $0x28] sm:$0xff]
  %v30 = vld [vmem:[%s1 + $0x30] sm:$0xff]
  %v31 = vld [vmem:[%s1 + $0x38] sm:$0xff]
  %v32 = vld [vmem:[%s1 + $0x40] sm:$0xff]
  %v33 = vld [vmem:[%s1 + $0x48] sm:$0xff]
  %v34 = vld [vmem:[%s1 + $0x50] sm:$0xff]
  %v35 = vld [vmem:[%s1 + $0x58] sm:$0xff]
  %v36 = vld [vmem:[%s1 + $0x60] sm:$0xff]
  %v37 = vld [vmem:[%s1 + $0x68] sm:$0xff]
  %v38 = vld [vmem:[%s1 + $0x70] sm:$0xff]
  %v39 = vld [vmem:[%s1 + $0x78] sm:$0xff]
  %v40 = vld [vmem:[%s1 + $0x80] sm:$0xff]
  %v41 = vld [vmem:[%s1 + $0x88] sm:$0xff]
  %v42 = vld [vmem:[%s1 + $0x90] sm:$0xff]
  %v43 = vld [vmem:[%s1 + $0x98] sm:$0xff]
  %v44 = vld [vmem:[%s1 + $0xa0] sm:$0xff]
  %v45 = vld [vmem:[%s1 + $0xa8] sm:$0xff]
  %v46 = vld [vmem:[%s1 + $0xb0] sm:$0xff]
  %v47 = vld [vmem:[%s1 + $0xb8] sm:$0xff]
  %v48 = vld [vmem:[%s1 + $0xc0] sm:$0xff]
  %v49 = vld [vmem:[%s1 + $0xc8] sm:$0xff]
  %v50 = vld [vmem:[%s1 + $0xd0] sm:$0xff]
  %v51 = vld [vmem:[%s1 + $0xd8] sm:$0xff]
  %v52 = vld [vmem:[%s1 + $0xe0] sm:$0xff]
  %v53 = vld [vmem:[%s1 + $0xe8] sm:$0xff]
  %v54 = vld [vmem:[%s1 + $0xf0] sm:$0xff]
  %v55 = vld [vmem:[%s1 + $0xf8] sm:$0xff]
  %v56 = vld [vmem:[%s1 + $0x100] sm:$0xff]
  %v57 = vld [vmem:[%s1 + $0x108] sm:$0xff]
  %v58 = vld [vmem:[%s1 + $0x110] sm:$0xff]
  %v59 = vld [vmem:[%s1 + $0x118] sm:$0xff]
  %v60 = vld [vmem:[%s1 + $0x120] sm:$0xff]
  %v61 = vld [vmem:[%s1 + $0x128] sm:$0xff]
  %v62 = vld [vmem:[%s1 + $0x130] sm:$0xff]
  %v63 = vld [vmem:[%s1 + $0x138] sm:$0xff]
  %v64 = vld [vmem:[%s1 + $0x140] sm:$0xff]
  %v65 = vld [vmem:[%s1 + $0x148] sm:$0xff]
  %v66 = vld [vmem:[%s1 + $0x150] sm:$0xff]
  %v67 = vld [vmem:[%s1 + $0x158] sm:$0xff]
  %v68 = vld [vmem:[%s1 + $0x160] sm:$0xff]
  %v69 = vld [vmem:[%s1 + $0x168] sm:$0xff]
  %v70 = vld [vmem:[%s1 + $0x170] sm:$0xff]
  %v71 = vld [vmem:[%s1 + $0x178] sm:$0xff]
  %v72 = vld [vmem:[%s1 + $0x180] sm:$0xff]
  %v73 = vld [vmem:[%s1 + $0x188] sm:$0xff]
  %v74 = vld [vmem:[%s1 + $0x190] sm:$0xff]
  %v75 = vld [vmem:[%s1 + $0x198] sm:$0xff]
  %v76 = vld [vmem:[%s1 + $0x1a0] sm:$0xff]
  %v77 = vld [vmem:[%s1 + $0x1a8] sm:$0xff]
  %v78 = vld [vmem:[%s1 + $0x1b0] sm:$0xff]
  %v79 = vld [vmem:[%s1 + $0x1b8] sm:$0xff]
  %v80 = vld [vmem:[%s1 + $0x1c0] sm:$0xff]
  %v81 = vld [vmem:[%s1 + $0x1c8] sm:$0xff]
  %v82 = vld [vmem:[%s1 + $0x1d0] sm:$0xff]
  %v83 = vld [vmem:[%s1 + $0x1d8] sm:$0xff]
  %v84 = vld [vmem:[%s1 + $0x1e0] sm:$0xff]
  %v85 = vld [vmem:[%s1 + $0x1e8] sm:$0xff]
  %v86 = vld [vmem:[%s1 + $0x1f0] sm:$0xff]
  %v87 = vld [vmem:[%s1 + $0x1f8] sm:$0xff]
  %v88 = vld [vmem:[%s1 + $0x200] sm:$0xff]
  %v89 = vld [vmem:[%s1 + $0x208] sm:$0xff]
  %v90 = vld [vmem:[%s1 + $0x210] sm:$0xff]
  %v91 = vld [vmem:[%s1 + $0x218] sm:$0xff]
  %v92 = vld [vmem:[%s1 + $0x220] sm:$0xff]
  %v93 = vld [vmem:[%s1 + $0x228] sm:$0xff]
  %v94 = vld [vmem:[%s1 + $0x230] sm:$0xff]
  %v95 = vld [vmem:[%s1 + $0x238] sm:$0xff]
  %v96 = vld [vmem:[%s1 + $0x240] sm:$0xff]
  %v97 = vld [vmem:[%s1 + $0x248] sm:$0xff]
  %v98 = vld [vmem:[%s1 + $0x250] sm:$0xff]
  %v99 = vld [vmem:[%s1 + $0x258] sm:$0xff]
  %v100 = vld [vmem:[%s1 + $0x260] sm:$0xff]
  %v101 = vld [vmem:[%s1 + $0x268] sm:$0xff]
  %v102 = vld [vmem:[%s1 + $0x270] sm:$0xff]
  %v103 = vld [vmem:[%s1 + $0x278] sm:$0xff]
  %v104 = vld [vmem:[%s1 + $0x280] sm:$0xff]
  %v105 = vld [vmem:[%s1 + $0x288] sm:$0xff]
  %v106 = vld [vmem:[%s1 + $0x290] sm:$0xff]
  %v107 = vld [vmem:[%s1 + $0x298] sm:$0xff]
  %v108 = vld [vmem:[%s1 + $0x2a0] sm:$0xff]
  %v109 = vld [vmem:[%s1 + $0x2a8] sm:$0xff]
  %v110 = vld [vmem:[%s1 + $0x2b0] sm:$0xff]
  %v111 = vld [vmem:[%s1 + $0x2b8] sm:$0xff]
  %v112 = vld [vmem:[%s1 + $0x2c0] sm:$0xff]
  %v113 = vld [vmem:[%s1 + $0x2c8] sm:$0xff]
  %v114 = vld [vmem:[%s1 + $0x2d0] sm:$0xff]
  %v115 = vld [vmem:[%s1 + $0x2d8] sm:$0xff]
  %v116 = vld [vmem:[%s1 + $0x2e0] sm:$0xff]
  %v117 = vld [vmem:[%s1 + $0x2e8] sm:$0xff]
  %v118 = vld [vmem:[%s1 + $0x2f0] sm:$0xff]
  %v119 = vld [vmem:[%s1 + $0x2f8] sm:$0xff]
  %v120 = vld [vmem:[%s1 + $0x300] sm:$0xff]
  %v121 = vld [vmem:[%s1 + $0x308] sm:$0xff]
  %v122 = vld [vmem:[%s1 + $0x310] sm:$0xff]
  %v123 = vld [vmem:[%s1 + $0x318] sm:$0xff]
  %v124 = vld [vmem:[%s1 + $0x320] sm:$0xff]
  %v125 = vld [vmem:[%s1 + $0x328] sm:$0xff]
  %v126 = vld [vmem:[%s1 + $0x330] sm:$0xff]
  %v127 = vld [vmem:[%s1 + $0x338] sm:$0xff]
  %v128 = vld [vmem:[%s1 + $0x340] sm:$0xff]
  %v129 = vld [vmem:[%s1 + $0x348] sm:$0xff]
  %v130 = vld [vmem:[%s1 + $0x350] sm:$0xff]
  %v131 = vld [vmem:[%s1 + $0x358] sm:$0xff]
  %v132 = vld [vmem:[%s1 + $0x360] sm:$0xff]
  %v133 = vld [vmem:[%s1 + $0x368] sm:$0xff]
  %v134 = vld [vmem:[%s1 + $0x370] sm:$0xff]
  %v135 = vld [vmem:[%s1 + $0x378] sm:$0xff]
  %v136 = vld [vmem:[%s1 + $0x380] sm:$0xff]
  %v137 = vld [vmem:[%s1 + $0x388] sm:$0xff]
  %v138 = vld [vmem:[%s1 + $0x390] sm:$0xff]
  %v139 = vld [vmem:[%s1 + $0x398] sm:$0xff]
  %v140 = vld [vmem:[%s1 + $0x3a0] sm:$0xff]
  %v141 = vld [vmem:[%s1 + $0x3a8] sm:$0xff]
  %v142 = vld [vmem:[%s1 + $0x3b0] sm:$0xff]
  %v143 = vld [vmem:[%s1 + $0x3b8] sm:$0xff]
  %v144 = vld [vmem:[%s1 + $0x3c0] sm:$0xff]
  %v145 = vld [vmem:[%s1 + $0x3c8] sm:$0xff]
  %v146 = vld [vmem:[%s1 + $0x3d0] sm:$0xff]
  %v147 = vld [vmem:[%s1 + $0x3d8] sm:$0xff]
  %v148 = vld [vmem:[%s1 + $0x3e0] sm:$0xff]
  %v149 = vld [vmem:[%s1 + $0x3e8] sm:$0xff]
  %v150 = vld [vmem:[%s1 + $0x3f0] sm:$0xff]
  %v151 = vld [vmem:[%s1 + $0x3f8] sm:$0xff]
  %v152 = vld [vmem:[%s1 + $0x400] sm:$0xff]
  %v153 = vld [vmem:[%s1 + $0x408] sm:$0xff]
  %v154 = vld [vmem:[%s1 + $0x410] sm:$0xff]
  %v155 = vld [vmem:[%s1 + $0x418] sm:$0xff]
  %v156 = vld [vmem:[%s1 + $0x420] sm:$0xff]
  %v157 = vld [vmem:[%s1 + $0x428] sm:$0xff]
  %v158 = vld [vmem:[%s1 + $0x430] sm:$0xff]
  %v159 = vld [vmem:[%s1 + $0x438] sm:$0xff]
  %v160 = vld [vmem:[%s1 + $0x440] sm:$0xff]
  %v161 = vld [vmem:[%s1 + $0x448] sm:$0xff]
  %v162 = vld [vmem:[%s1 + $0x450] sm:$0xff]
  %v163 = vld [vmem:[%s1 + $0x458] sm:$0xff]
  %v164 = vld [vmem:[%s1 + $0x460] sm:$0xff]
  %v165 = vld [vmem:[%s1 + $0x468] sm:$0xff]
  %v166 = vld [vmem:[%s1 + $0x470] sm:$0xff]
  %v167 = vld [vmem:[%s1 + $0x478] sm:$0xff]
  %v168 = vld [vmem:[%s1 + $0x480] sm:$0xff]
  %v169 = vld [vmem:[%s1 + $0x488] sm:$0xff]
  %v170 = vld [vmem:[%s1 + $0x490] sm:$0xff]
  %v171 = vld [vmem:[%s1 + $0x498] sm:$0xff]
  %v172 = vld [vmem:[%s1 + $0x4a0] sm:$0xff]
  %v173 = vld [vmem:[%s1 + $0x4a8] sm:$0xff]
  %v174 = vld [vmem:[%s1 + $0x4b0] sm:$0xff]
  %v175 = vld [vmem:[%s1 + $0x4b8] sm:$0xff]
  %v176 = vld [vmem:[%s1 + $0x4c0] sm:$0xff]
  %v177 = vld [vmem:[%s1 + $0x4c8] sm:$0xff]
  %v178 = vld [vmem:[%s1 + $0x4d0] sm:$0xff]
  %v179 = vld [vmem:[%s1 + $0x4d8] sm:$0xff]
  %v180 = vld [vmem:[%s1 + $0x4e0] sm:$0xff]
  %v181 = vld [vmem:[%s1 + $0x4e8] sm:$0xff]
  %v182 = vld [vmem:[%s1 + $0x4f0] sm:$0xff]
  %v183 = vld [vmem:[%s1 + $0x4f8] sm:$0xff]
  %v184 = vld [vmem:[%s1 + $0x500] sm:$0xff]
  %v185 = vld [vmem:[%s1 + $0x508] sm:$0xff]
  %v186 = vld [vmem:[%s1 + $0x510] sm:$0xff]
  %v187 = vld [vmem:[%s1 + $0x518] sm:$0xff]
  %v188 = vld [vmem:[%s1 + $0x520] sm:$0xff]
  %v189 = vld [vmem:[%s1 + $0x528] sm:$0xff]
  %v190 = vld [vmem:[%s1 + $0x530] sm:$0xff]
  %v191 = vld [vmem:[%s1 + $0x538] sm:$0xff]
  %v192 = vld [vmem:[%s1 + $0x540] sm:$0xff]
  %v193 = vld [vmem:[%s1 + $0x548] sm:$0xff]
  %v194 = vld [vmem:[%s1 + $0x550] sm:$0xff]
  %v195 = vld [vmem:[%s1 + $0x558] sm:$0xff]
  %v196 = vld [vmem:[%s1 + $0x560] sm:$0xff]
  %v197 = vld [vmem:[%s1 + $0x568] sm:$0xff]
  %v198 = vld [vmem:[%s1 + $0x570] sm:$0xff]
  %v199 = vld [vmem:[%s1 + $0x578] sm:$0xff]
  %v200 = vld [vmem:[%s1 + $0x580] sm:$0xff]
  %v201 = vld [vmem:[%s1 + $0x588] sm:$0xff]
  %v202 = vld [vmem:[%s1 + $0x590] sm:$0xff]
  %v203 = vld [vmem:[%s1 + $0x598] sm:$0xff]
  %v204 = vld [vmem:[%s1 + $0x5a0] sm:$0xff]
  %v205 = vld [vmem:[%s1 + $0x5a8] sm:$0xff]
  %v206 = vld [vmem:[%s1 + $0x5b0] sm:$0xff]
  %v207 = vld [vmem:[%s1 + $0x5b8] sm:$0xff]
  %v208 = vld [vmem:[%s1 + $0x5c0] sm:$0xff]
  %v209 = vld [vmem:[%s1 + $0x5c8] sm:$0xff]
  %v210 = vld [vmem:[%s1 + $0x5d0] sm:$0xff]
  %v211 = vld [vmem:[%s1 + $0x5d8] sm:$0xff]
  %v212 = vld [vmem:[%s1 + $0x5e0] sm:$0xff]
  %v213 = vld [vmem:[%s1 + $0x5e8] sm:$0xff]
  %v214 = vld [vmem:[%s1 + $0x5f0] sm:$0xff]
  %v215 = vld [vmem:[%s1 + $0x5f8] sm:$0xff]
  %v216 = vld [vmem:[%s1 + $0x600] sm:$0xff]
  %v217 = vld [vmem:[%s1 + $0x608] sm:$0xff]
  %v218 = vld [vmem:[%s1 + $0x610] sm:$0xff]
  %v219 = vld [vmem:[%s1 + $0x618] sm:$0xff]
  %v220 = vld [vmem:[%s1 + $0x620] sm:$0xff]
  %v221 = vld [vmem:[%s1 + $0x628] sm:$0xff]
  %v222 = vld [vmem:[%s1 + $0x630] sm:$0xff]
  %v223 = vld [vmem:[%s1 + $0x638] sm:$0xff]
  %v224 = vld [vmem:[%s1 + $0x640] sm:$0xff]
  %v225 = vld [vmem:[%s1 + $0x648] sm:$0xff]
  %v226 = vld [vmem:[%s1 + $0x650] sm:$0xff]
  %v227 = vld [vmem:[%s1 + $0x658] sm:$0xff]
  %v228 = vld [vmem:[%s1 + $0x660] sm:$0xff]
  %v229 = vld [vmem:[%s1 + $0x668] sm:$0xff]
  %v230 = vld [vmem:[%s1 + $0x670] sm:$0xff]
  %v231 = vld [vmem:[%s1 + $0x678] sm:$0xff]
  %v232 = vld [vmem:[%s1 + $0x680] sm:$0xff]
  %v233 = vld [vmem:[%s1 + $0x688] sm:$0xff]
  %v234 = vld [vmem:[%s1 + $0x690] sm:$0xff]
  %v235 = vld [vmem:[%s1 + $0x698] sm:$0xff]
  %v236 = vld [vmem:[%s1 + $0x6a0] sm:$0xff]
  %v237 = vld [vmem:[%s1 + $0x6a8] sm:$0xff]
  %v238 = vld [vmem:[%s1 + $0x6b0] sm:$0xff]
  %v239 = vld [vmem:[%s1 + $0x6b8] sm:$0xff]
  %v240 = vld [vmem:[%s1 + $0x6c0] sm:$0xff]
  %v241 = vld [vmem:[%s1 + $0x6c8] sm:$0xff]
  %v242 = vld [vmem:[%s1 + $0x6d0] sm:$0xff]
  %v243 = vld [vmem:[%s1 + $0x6d8] sm:$0xff]
  %v244 = vld [vmem:[%s1 + $0x6e0] sm:$0xff]
  %v245 = vld [vmem:[%s1 + $0x6e8] sm:$0xff]
  %v246 = vld [vmem:[%s1 + $0x6f0] sm:$0xff]
  %v247 = vld [vmem:[%s1 + $0x6f8] sm:$0xff]
  %v248 = vld [vmem:[%s1 + $0x700] sm:$0xff]
  %v249 = vld [vmem:[%s1 + $0x708] sm:$0xff]
  %v250 = vld [vmem:[%s1 + $0x710] sm:$0xff]
  %v251 = vld [vmem:[%s1 + $0x718] sm:$0xff]
  %v252 = vld [vmem:[%s1 + $0x720] sm:$0xff]
  %v253 = vld [vmem:[%s1 + $0x728] sm:$0xff]
  %v254 = vld [vmem:[%s1 + $0x730] sm:$0xff]
  %v255 = vld [vmem:[%s1 + $0x738] sm:$0xff]
  %v256 = vld [vmem:[%s1 + $0x740] sm:$0xff]
  %v257 = vld [vmem:[%s1 + $0x748] sm:$0xff]
  %v258 = vld [vmem:[%s1 + $0x750] sm:$0xff]
  %v259 = vld [vmem:[%s1 + $0x758] sm:$0xff]
  %v260 = vld [vmem:[%s1 + $0x760] sm:$0xff]
  %v261 = vld [vmem:[%s1 + $0x768] sm:$0xff]
  %v262 = vld [vmem:[%s1 + $0x770] sm:$0xff]
  %v263 = vld [vmem:[%s1 + $0x778] sm:$0xff]
  %v264 = vld [vmem:[%s1 + $0x780] sm:$0xff]
  %v265 = vld [vmem:[%s1 + $0x788] sm:$0xff]
  %v266 = vld [vmem:[%s1 + $0x790] sm:$0xff]
  %v267 = vld [vmem:[%s1 + $0x798] sm:$0xff]
  %v268 = vld [vmem:[%s1 + $0x7a0] sm:$0xff]
  %v269 = vld [vmem:[%s1 + $0x7a8] sm:$0xff]
  %v270 = vld [vmem:[%s1 + $0x7b0] sm:$0xff]
  %v271 = vld [vmem:[%s1 + $0x7b8] sm:$0xff]
  %v272 = vld [vmem:[%s1 + $0x7c0] sm:$0xff]
  %v273 = vld [vmem:[%s1 + $0x7c8] sm:$0xff]
  %v274 = vld [vmem:[%s1 + $0x7d0] sm:$0xff]
  %v275 = vld [vmem:[%s1 + $0x7d8] sm:$0xff]
  %v276 = vld [vmem:[%s1 + $0x7e0] sm:$0xff]
  %v277 = vld [vmem:[%s1 + $0x7e8] sm:$0xff]
  %v278 = vld [vmem:[%s1 + $0x7f0] sm:$0xff]
  %v279 = vld [vmem:[%s1 + $0x7f8] sm:$0xff]
  %v280 = vld [vmem:[%s1 + $0x800] sm:$0xff]
  %v281 = vld [vmem:[%s1 + $0x808] sm:$0xff]
  %v282 = vld [vmem:[%s1 + $0x810] sm:$0xff]
  %v283 = vld [vmem:[%s1 + $0x818] sm:$0xff]
  %v284 = vld [vmem:[%s1 + $0x820] sm:$0xff]
  %v285 = vld [vmem:[%s1 + $0x828] sm:$0xff]
  %v286 = vld [vmem:[%s1 + $0x830] sm:$0xff]
  %v287 = vld [vmem:[%s1 + $0x838] sm:$0xff]
  %v288 = vld [vmem:[%s1 + $0x840] sm:$0xff]
  %v289 = vld [vmem:[%s1 + $0x848] sm:$0xff]
  %v290 = vld [vmem:[%s1 + $0x850] sm:$0xff]
  %v291 = vld [vmem:[%s1 + $0x858] sm:$0xff]
  %v292 = vld [vmem:[%s1 + $0x860] sm:$0xff]
  %v293 = vld [vmem:[%s1 + $0x868] sm:$0xff]
  %v294 = vld [vmem:[%s1 + $0x870] sm:$0xff]
  %v295 = vld [vmem:[%s1 + $0x878] sm:$0xff]
  %v296 = vld [vmem:[%s1 + $0x880] sm:$0xff]
  %v297 = vld [vmem:[%s1 + $0x888] sm:$0xff]
  %v298 = vld [vmem:[%s1 + $0x890] sm:$0xff]
  %v299 = vld [vmem:[%s1 + $0x898] sm:$0xff]
  %v300 = vld [vmem:[%s1 + $0x8a0] sm:$0xff]
  %v301 = vld [vmem:[%s1 + $0x8a8] sm:$0xff]
  %v302 = vld [vmem:[%s1 + $0x8b0] sm:$0xff]
  %v303 = vld [vmem:[%s1 + $0x8b8] sm:$0xff]
  %v304 = vld [vmem:[%s1 + $0x8c0] sm:$0xff]
  %v305 = vld [vmem:[%s1 + $0x8c8] sm:$0xff]
  %v306 = vld [vmem:[%s1 + $0x8d0] sm:$0xff]
  %v307 = vld [vmem:[%s1 + $0x8d8] sm:$0xff]
  %v308 = vld [vmem:[%s1 + $0x8e0] sm:$0xff]
  %v309 = vld [vmem:[%s1 + $0x8e8] sm:$0xff]
  %v310 = vld [vmem:[%s1 + $0x8f0] sm:$0xff]
  %v311 = vld [vmem:[%s1 + $0x8f8] sm:$0xff]
  %v312 = vld [vmem:[%s1 + $0x900] sm:$0xff]
  %v313 = vld [vmem:[%s1 + $0x908] sm:$0xff]
  %v314 = vld [vmem:[%s1 + $0x910] sm:$0xff]
  %v315 = vld [vmem:[%s1 + $0x918] sm:$0xff]
  %v316 = vld [vmem:[%s1 + $0x920] sm:$0xff]
  %v317 = vld [vmem:[%s1 + $0x928] sm:$0xff]
  %v318 = vld [vmem:[%s1 + $0x930] sm:$0xff]
  %v319 = vld [vmem:[%s1 + $0x938] sm:$0xff]
  %v320 = vld [vmem:[%s1 + $0x940] sm:$0xff]
  %v321 = vld [vmem:[%s1 + $0x948] sm:$0xff]
  %v322 = vld [vmem:[%s1 + $0x950] sm:$0xff]
  %v323 = vld [vmem:[%s1 + $0x958] sm:$0xff]
  %v324 = vld [vmem:[%s1 + $0x960] sm:$0xff]
  %v325 = vld [vmem:[%s1 + $0x968] sm:$0xff]
  %v326 = vld [vmem:[%s1 + $0x970] sm:$0xff]
  %v327 = vld [vmem:[%s1 + $0x978] sm:$0xff]
  %v328 = vld [vmem:[%s1 + $0x980] sm:$0xff]
  %v329 = vld [vmem:[%s1 + $0x988] sm:$0xff]
  %v330 = vld [vmem:[%s1 + $0x990] sm:$0xff]
  %v331 = vld [vmem:[%s1 + $0x998] sm:$0xff]
  %v332 = vld [vmem:[%s1 + $0x9a0] sm:$0xff]
  %v333 = vld [vmem:[%s1 + $0x9a8] sm:$0xff]
  %v334 = vld [vmem:[%s1 + $0x9b0] sm:$0xff]
  %v335 = vld [vmem:[%s1 + $0x9b8] sm:$0xff]
  %v336 = vld [vmem:[%s1 + $0x9c0] sm:$0xff]
  %v337 = vld [vmem:[%s1 + $0x9c8] sm:$0xff]
  %v338 = vld [vmem:[%s1 + $0x9d0] sm:$0xff]
  %v339 = vld [vmem:[%s1 + $0x9d8] sm:$0xff]
  %v340 = vld [vmem:[%s1 + $0x9e0] sm:$0xff]
  %v341 = vld [vmem:[%s1 + $0x9e8] sm:$0xff]
  %v342 = vld [vmem:[%s1 + $0x9f0] sm:$0xff]
  %v343 = vld [vmem:[%s1 + $0x9f8] sm:$0xff]
  %v344 = vld [vmem:[%s1 + $0xa00] sm:$0xff]
  %v345 = vld [vmem:[%s1 + $0xa08] sm:$0xff]
  %v346 = vld [vmem:[%s1 + $0xa10] sm:$0xff]
  %v347 = vld [vmem:[%s1 + $0xa18] sm:$0xff]
  %v348 = vld [vmem:[%s1 + $0xa20] sm:$0xff]
  %v349 = vld [vmem:[%s1 + $0xa28] sm:$0xff]
  %v350 = vld [vmem:[%s1 + $0xa30] sm:$0xff]
  %v351 = vld [vmem:[%s1 + $0xa38] sm:$0xff]
  %v352 = vld [vmem:[%s1 + $0xa40] sm:$0xff]
  %v353 = vld [vmem:[%s1 + $0xa48] sm:$0xff]
  %v354 = vld [vmem:[%s1 + $0xa50] sm:$0xff]
  %v355 = vld [vmem:[%s1 + $0xa58] sm:$0xff]
  %v356 = vld [vmem:[%s1 + $0xa60] sm:$0xff]
  %v357 = vld [vmem:[%s1 + $0xa68] sm:$0xff]
  %v358 = vld [vmem:[%s1 + $0xa70] sm:$0xff]
  %v359 = vld [vmem:[%s1 + $0xa78] sm:$0xff]
  %v360 = vld [vmem:[%s1 + $0xa80] sm:$0xff]
  %v361 = vld [vmem:[%s1 + $0xa88] sm:$0xff]
  %v362 = vld [vmem:[%s1 + $0xa90] sm:$0xff]
  %v363 = vld [vmem:[%s1 + $0xa98] sm:$0xff]
  %v364 = vld [vmem:[%s1 + $0xaa0] sm:$0xff]
  %v365 = vld [vmem:[%s1 + $0xaa8] sm:$0xff]
  %v366 = vld [vmem:[%s1 + $0xab0] sm:$0xff]
  %v367 = vld [vmem:[%s1 + $0xab8] sm:$0xff]
  %v368 = vld [vmem:[%s1 + $0xac0] sm:$0xff]
  %v369 = vld [vmem:[%s1 + $0xac8] sm:$0xff]
  %v370 = vld [vmem:[%s1 + $0xad0] sm:$0xff]
  %v371 = vld [vmem:[%s1 + $0xad8] sm:$0xff]
  %v372 = vld [vmem:[%s1 + $0xae0] sm:$0xff]
  %v373 = vld [vmem:[%s1 + $0xae8] sm:$0xff]
  %v374 = vld [vmem:[%s1 + $0xaf0] sm:$0xff]
  %v375 = vld [vmem:[%s1 + $0xaf8] sm:$0xff]
  %v376 = vld [vmem:[%s1 + $0xb00] sm:$0xff]
  %v377 = vld [vmem:[%s1 + $0xb08] sm:$0xff]
  %v378 = vld [vmem:[%s1 + $0xb10] sm:$0xff]
  %v379 = vld [vmem:[%s1 + $0xb18] sm:$0xff]
  %v380 = vld [vmem:[%s1 + $0xb20] sm:$0xff]
  %v381 = vld [vmem:[%s1 + $0xb28] sm:$0xff]
  %v382 = vld [vmem:[%s1 + $0xb30] sm:$0xff]
  %v383 = vld [vmem:[%s1 + $0xb38] sm:$0xff]
  %v384 = vld [vmem:[%s1 + $0xb40] sm:$0xff]
  %v385 = vld [vmem:[%s1 + $0xb48] sm:$0xff]
  %v386 = vld [vmem:[%s1 + $0xb50] sm:$0xff]
  %v387 = vld [vmem:[%s1 + $0xb58] sm:$0xff]
  %v388 = vld [vmem:[%s1 + $0xb60] sm:$0xff]
  %v389 = vld [vmem:[%s1 + $0xb68] sm:$0xff]
  %v390 = vld [vmem:[%s1 + $0xb70] sm:$0xff]
  %v391 = vld [vmem:[%s1 + $0xb78] sm:$0xff]
  %v392 = vld [vmem:[%s1 + $0xb80] sm:$0xff]
  %v393 = vld [vmem:[%s1 + $0xb88] sm:$0xff]
  %v394 = vld [vmem:[%s1 + $0xb90] sm:$0xff]
  %v395 = vld [vmem:[%s1 + $0xb98] sm:$0xff]
  %v396 = vld [vmem:[%s1 + $0xba0] sm:$0xff]
  %v397 = vld [vmem:[%s1 + $0xba8] sm:$0xff]
  %v398 = vld [vmem:[%s1 + $0xbb0] sm:$0xff]
  %v399 = vld [vmem:[%s1 + $0xbb8] sm:$0xff]
  %v400 = vld [vmem:[%s1 + $0xbc0] sm:$0xff]
  %v401 = vld [vmem:[%s1 + $0xbc8] sm:$0xff]
  %v402 = vld [vmem:[%s1 + $0xbd0] sm:$0xff]
  %v403 = vld [vmem:[%s1 + $0xbd8] sm:$0xff]
  %v404 = vld [vmem:[%s1 + $0xbe0] sm:$0xff]
  %v405 = vld [vmem:[%s1 + $0xbe8] sm:$0xff]
  %v406 = vld [vmem:[%s1 + $0xbf0] sm:$0xff]
  %v407 = vld [vmem:[%s1 + $0xbf8] sm:$0xff]
  %v408 = vld [vmem:[%s1 + $0xc00] sm:$0xff]
  %v409 = vld [vmem:[%s1 + $0xc08] sm:$0xff]
  %v410 = vld [vmem:[%s1 + $0xc10] sm:$0xff]
  %v411 = vld [vmem:[%s1 + $0xc18] sm:$0xff]
  %v412 = vld [vmem:[%s1 + $0xc20] sm:$0xff]
  %v413 = vld [vmem:[%s1 + $0xc28] sm:$0xff]
  %v414 = vld [vmem:[%s1 + $0xc30] sm:$0xff]
  %v415 = vld [vmem:[%s1 + $0xc38] sm:$0xff]
  %v416 = vld [vmem:[%s1 + $0xc40] sm:$0xff]
  %v417 = vld [vmem:[%s1 + $0xc48] sm:$0xff]
  %v418 = vld [vmem:[%s1 + $0xc50] sm:$0xff]
  %v419 = vld [vmem:[%s1 + $0xc58] sm:$0xff]
  %v420 = vld [vmem:[%s1 + $0xc60] sm:$0xff]
  %v421 = vld [vmem:[%s1 + $0xc68] sm:$0xff]
  %v422 = vld [vmem:[%s1 + $0xc70] sm:$0xff]
  %v423 = vld [vmem:[%s1 + $0xc78] sm:$0xff]
  %v424 = vld [vmem:[%s1 + $0xc80] sm:$0xff]
  %v425 = vld [vmem:[%s1 + $0xc88] sm:$0xff]
  %v426 = vld [vmem:[%s1 + $0xc90] sm:$0xff]
  %v427 = vld [vmem:[%s1 + $0xc98] sm:$0xff]
  %v428 = vld [vmem:[%s1 + $0xca0] sm:$0xff]
  %v429 = vld [vmem:[%s1 + $0xca8] sm:$0xff]
  %v430 = vld [vmem:[%s1 + $0xcb0] sm:$0xff]
  %v431 = vld [vmem:[%s1 + $0xcb8] sm:$0xff]
  %v432 = vld [vmem:[%s1 + $0xcc0] sm:$0xff]
  %v433 = vld [vmem:[%s1 + $0xcc8] sm:$0xff]
  %v434 = vld [vmem:[%s1 + $0xcd0] sm:$0xff]
  %v435 = vld [vmem:[%s1 + $0xcd8] sm:$0xff]
  %v436 = vld [vmem:[%s1 + $0xce0] sm:$0xff]
  %v437 = vld [vmem:[%s1 + $0xce8] sm:$0xff]
  %v438 = vld [vmem:[%s1 + $0xcf0] sm:$0xff]
  %v439 = vld [vmem:[%s1 + $0xcf8] sm:$0xff]
  %v440 = vld [vmem:[%s1 + $0xd00] sm:$0xff]
  %v441 = vld [vmem:[%s1 + $0xd08] sm:$0xff]
  %v442 = vld [vmem:[%s1 + $0xd10] sm:$0xff]
  %v443 = vld [vmem:[%s1 + $0xd18] sm:$0xff]
  %v444 = vld [vmem:[%s1 + $0xd20] sm:$0xff]
  %v445 = vld [vmem:[%s1 + $0xd28] sm:$0xff]
  %v446 = vld [vmem:[%s1 + $0xd30] sm:$0xff]
  %v447 = vld [vmem:[%s1 + $0xd38] sm:$0xff]
  %v448 = vld [vmem:[%s1 + $0xd40] sm:$0xff]
  %v449 = vld [vmem:[%s1 + $0xd48] sm:$0xff]
  %v450 = vld [vmem:[%s1 + $0xd50] sm:$0xff]
  %v451 = vld [vmem:[%s1 + $0xd58] sm:$0xff]
  %v452 = vld [vmem:[%s1 + $0xd60] sm:$0xff]
  %v453 = vld [vmem:[%s1 + $0xd68] sm:$0xff]
  %v454 = vld [vmem:[%s1 + $0xd70] sm:$0xff]
  %v455 = vld [vmem:[%s1 + $0xd78] sm:$0xff]
  %v456 = vld [vmem:[%s1 + $0xd80] sm:$0xff]
  %v457 = vld [vmem:[%s1 + $0xd88] sm:$0xff]
  %v458 = vld [vmem:[%s1 + $0xd90] sm:$0xff]
  %v459 = vld [vmem:[%s1 + $0xd98] sm:$0xff]
  %v460 = vld [vmem:[%s1 + $0xda0] sm:$0xff]
  %v461 = vld [vmem:[%s1 + $0xda8] sm:$0xff]
  %v462 = vld [vmem:[%s1 + $0xdb0] sm:$0xff]
  %v463 = vld [vmem:[%s1 + $0xdb8] sm:$0xff]
  %v464 = vld [vmem:[%s1 + $0xdc0] sm:$0xff]
  %v465 = vld [vmem:[%s1 + $0xdc8] sm:$0xff]
  %v466 = vld [vmem:[%s1 + $0xdd0] sm:$0xff]
  %v467 = vld [vmem:[%s1 + $0xdd8] sm:$0xff]
  %v468 = vld [vmem:[%s1 + $0xde0] sm:$0xff]
  %v469 = vld [vmem:[%s1 + $0xde8] sm:$0xff]
  %v470 = vld [vmem:[%s1 + $0xdf0] sm:$0xff]
  %v471 = vld [vmem:[%s1 + $0xdf8] sm:$0xff]
  %v472 = vld [vmem:[%s1 + $0xe00] sm:$0xff]
  %v473 = vld [vmem:[%s1 + $0xe08] sm:$0xff]
  %v474 = vld [vmem:[%s1 + $0xe10] sm:$0xff]
  %v475 = vld [vmem:[%s1 + $0xe18] sm:$0xff]
  %v476 = vld [vmem:[%s1 + $0xe20] sm:$0xff]
  %v477 = vld [vmem:[%s1 + $0xe28] sm:$0xff]
  %v478 = vld [vmem:[%s1 + $0xe30] sm:$0xff]
  %v479 = vld [vmem:[%s1 + $0xe38] sm:$0xff]
  %v480 = vld [vmem:[%s1 + $0xe40] sm:$0xff]
  %v481 = vld [vmem:[%s1 + $0xe48] sm:$0xff]
  %v482 = vld [vmem:[%s1 + $0xe50] sm:$0xff]
  %v483 = vld [vmem:[%s1 + $0xe58] sm:$0xff]
  %v484 = vld [vmem:[%s1 + $0xe60] sm:$0xff]
  %v485 = vld [vmem:[%s1 + $0xe68] sm:$0xff]
  %v486 = vld [vmem:[%s1 + $0xe70] sm:$0xff]
  %v487 = vld [vmem:[%s1 + $0xe78] sm:$0xff]
  %v488 = vld [vmem:[%s1 + $0xe80] sm:$0xff]
  %v489 = vld [vmem:[%s1 + $0xe88] sm:$0xff]
  %v490 = vld [vmem:[%s1 + $0xe90] sm:$0xff]
  %v491 = vld [vmem:[%s1 + $0xe98] sm:$0xff]
  %v492 = vld [vmem:[%s1 + $0xea0] sm:$0xff]
  %v493 = vld [vmem:[%s1 + $0xea8] sm:$0xff]
  %v494 = vld [vmem:[%s1 + $0xeb0] sm:$0xff]
  %v495 = vld [vmem:[%s1 + $0xeb8] sm:$0xff]
  %v496 = vld [vmem:[%s1 + $0xec0] sm:$0xff]
  %v497 = vld [vmem:[%s1 + $0xec8] sm:$0xff]
  %v498 = vld [vmem:[%s1 + $0xed0] sm:$0xff]
  %v499 = vld [vmem:[%s1 + $0xed8] sm:$0xff]
  %v500 = vld [vmem:[%s1 + $0xee0] sm:$0xff]
  %v501 = vld [vmem:[%s1 + $0xee8] sm:$0xff]
  %v502 = vld [vmem:[%s1 + $0xef0] sm:$0xff]
  %v503 = vld [vmem:[%s1 + $0xef8] sm:$0xff]
  %v504 = vld [vmem:[%s1 + $0xf00] sm:$0xff]
  %v505 = vld [vmem:[%s1 + $0xf08] sm:$0xff]
  %v506 = vld [vmem:[%s1 + $0xf10] sm:$0xff]
  %v507 = vld [vmem:[%s1 + $0xf18] sm:$0xff]
  %v508 = vld [vmem:[%s1 + $0xf20] sm:$0xff]
  %v509 = vld [vmem:[%s1 + $0xf28] sm:$0xff]
  %v510 = vld [vmem:[%s1 + $0xf30] sm:$0xff]
  %v511 = vld [vmem:[%s1 + $0xf38] sm:$0xff]
  %v512 = vld [vmem:[%s1 + $0xf40] sm:$0xff]
  %v513 = vld [vmem:[%s1 + $0xf48] sm:$0xff]
  %v514 = vld [vmem:[%s1 + $0xf50] sm:$0xff]
  %v515 = vld [vmem:[%s1 + $0xf58] sm:$0xff]
  %v516 = vld [vmem:[%s1 + $0xf60] sm:$0xff]
  %v517 = vld [vmem:[%s1 + $0xf68] sm:$0xff]
  %v518 = vld [vmem:[%s1 + $0xf70] sm:$0xff]
  %v519 = vld [vmem:[%s1 + $0xf78] sm:$0xff]
  %v520 = vld [vmem:[%s1 + $0xf80] sm:$0xff]
  %v521 = vld [vmem:[%s1 + $0xf88] sm:$0xff]
  %v522 = vld [vmem:[%s1 + $0xf90] sm:$0xff]
  %v523 = vld [vmem:[%s1 + $0xf98] sm:$0xff]
  %v524 = vld [vmem:[%s1 + $0xfa0] sm:$0xff]
  %v525 = vld [vmem:[%s1 + $0xfa8] sm:$0xff]
  %v526 = vld [vmem:[%s1 + $0xfb0] sm:$0xff]
  %v527 = vld [vmem:[%s1 + $0xfb8] sm:$0xff]
  %v528 = vld [vmem:[%s1 + $0xfc0] sm:$0xff]
  %v529 = vld [vmem:[%s1 + $0xfc8] sm:$0xff]
  %v530 = vld [vmem:[%s1 + $0xfd0] sm:$0xff]
  %v531 = vld [vmem:[%s1 + $0xfd8] sm:$0xff]
  %v532 = vld [vmem:[%s1 + $0xfe0] sm:$0xff]
  %v533 = vld [vmem:[%s1 + $0xfe8] sm:$0xff]
  %v534 = vld [vmem:[%s1 + $0xff0] sm:$0xff]
  %v535 = vld [vmem:[%s1 + $0xff8] sm:$0xff]
  %v536 = vld [vmem:[%s1 + $0x1000] sm:$0xff]
  %v537 = vld [vmem:[%s1 + $0x1008] sm:$0xff]
  %v538 = vld [vmem:[%s1 + $0x1010] sm:$0xff]
  %v539 = vld [vmem:[%s1 + $0x1018] sm:$0xff]
  %v540 = vld [vmem:[%s1 + $0x1020] sm:$0xff]
  %v541 = vld [vmem:[%s1 + $0x1028] sm:$0xff]
  %v542 = vld [vmem:[%s1 + $0x1030] sm:$0xff]
  %v543 = vld [vmem:[%s1 + $0x1038] sm:$0xff]
  %v544 = vld [vmem:[%s1 + $0x1040] sm:$0xff]
  %v545 = vld [vmem:[%s1 + $0x1048] sm:$0xff]
  %v546 = vld [vmem:[%s1 + $0x1050] sm:$0xff]
  %v547 = vld [vmem:[%s1 + $0x1058] sm:$0xff]
  %v548 = vld [vmem:[%s1 + $0x1060] sm:$0xff]
  %v549 = vld [vmem:[%s1 + $0x1068] sm:$0xff]
  %v550 = vld [vmem:[%s1 + $0x1070] sm:$0xff]
  %v551 = vld [vmem:[%s1 + $0x1078] sm:$0xff]
  %v552 = vld [vmem:[%s1 + $0x1080] sm:$0xff]
  %v553 = vld [vmem:[%s1 + $0x1088] sm:$0xff]
  %v554 = vld [vmem:[%s1 + $0x1090] sm:$0xff]
  %v555 = vld [vmem:[%s1 + $0x1098] sm:$0xff]
  %v556 = vld [vmem:[%s1 + $0x10a0] sm:$0xff]
  %v557 = vld [vmem:[%s1 + $0x10a8] sm:$0xff]
  %v558 = vld [vmem:[%s1 + $0x10b0] sm:$0xff]
  %v559 = vld [vmem:[%s1 + $0x10b8] sm:$0xff]
  %v560 = vld [vmem:[%s1 + $0x10c0] sm:$0xff]
  %v561 = vld [vmem:[%s1 + $0x10c8] sm:$0xff]
  %v562 = vld [vmem:[%s1 + $0x10d0] sm:$0xff]
  %v563 = vld [vmem:[%s1 + $0x10d8] sm:$0xff]
  %v564 = vld [vmem:[%s1 + $0x10e0] sm:$0xff]
  %v565 = vld [vmem:[%s1 + $0x10e8] sm:$0xff]
  %v566 = vld [vmem:[%s1 + $0x10f0] sm:$0xff]
  %v567 = vld [vmem:[%s1 + $0x10f8] sm:$0xff]
  %v568 = vld [vmem:[%s1 + $0x1100] sm:$0xff]
  %v569 = vld [vmem:[%s1 + $0x1108] sm:$0xff]
  %v570 = vld [vmem:[%s1 + $0x1110] sm:$0xff]
  %v571 = vld [vmem:[%s1 + $0x1118] sm:$0xff]
  %v572 = vld [vmem:[%s1 + $0x1120] sm:$0xff]
  %v573 = vld [vmem:[%s1 + $0x1128] sm:$0xff]
  %v574 = vld [vmem:[%s1 + $0x1130] sm:$0xff]
  %v575 = vld [vmem:[%s1 + $0x1138] sm:$0xff]
  %v576 = vld [vmem:[%s1 + $0x1140] sm:$0xff]
  %v577 = vld [vmem:[%s1 + $0x1148] sm:$0xff]
  %v578 = vld [vmem:[%s1 + $0x1150] sm:$0xff]
  %v579 = vld [vmem:[%s1 + $0x1158] sm:$0xff]
  %v580 = vld [vmem:[%s1 + $0x1160] sm:$0xff]
  %v581 = vld [vmem:[%s1 + $0x1168] sm:$0xff]
  %v582 = vld [vmem:[%s1 + $0x1170] sm:$0xff]
  %v583 = vld [vmem:[%s1 + $0x1178] sm:$0xff]
  %v584 = vld [vmem:[%s1 + $0x1180] sm:$0xff]
  %v585 = vld [vmem:[%s1 + $0x1188] sm:$0xff]
  %v586 = vld [vmem:[%s1 + $0x1190] sm:$0xff]
  %v587 = vld [vmem:[%s1 + $0x1198] sm:$0xff]
  %v588 = vld [vmem:[%s1 + $0x11a0] sm:$0xff]
  %v589 = vld [vmem:[%s1 + $0x11a8] sm:$0xff]
  %v590 = vld [vmem:[%s1 + $0x11b0] sm:$0xff]
  %v591 = vld [vmem:[%s1 + $0x11b8] sm:$0xff]
  %v592 = vld [vmem:[%s1 + $0x11c0] sm:$0xff]
  %v593 = vld [vmem:[%s1 + $0x11c8] sm:$0xff]
  %v594 = vld [vmem:[%s1 + $0x11d0] sm:$0xff]
  %v595 = vld [vmem:[%s1 + $0x11d8] sm:$0xff]
  %v596 = vld [vmem:[%s1 + $0x11e0] sm:$0xff]
  %v597 = vld [vmem:[%s1 + $0x11e8] sm:$0xff]
  %v598 = vld [vmem:[%s1 + $0x11f0] sm:$0xff]
  %v599 = vld [vmem:[%s1 + $0x11f8] sm:$0xff]
  %v600 = vld [vmem:[%s1 + $0x1200] sm:$0xff]
  %v601 = vld [vmem:[%s1 + $0x1208] sm:$0xff]
  %v602 = vld [vmem:[%s1 + $0x1210] sm:$0xff]
  %v603 = vld [vmem:[%s1 + $0x1218] sm:$0xff]
  %v604 = vld [vmem:[%s1 + $0x1220] sm:$0xff]
  %v605 = vld [vmem:[%s1 + $0x1228] sm:$0xff]
  %v606 = vld [vmem:[%s1 + $0x1230] sm:$0xff]
  %v607 = vld [vmem:[%s1 + $0x1238] sm:$0xff]
  %v608 = vld [vmem:[%s1 + $0x1240] sm:$0xff]
  %v609 = vld [vmem:[%s1 + $0x1248] sm:$0xff]
  %v610 = vld [vmem:[%s1 + $0x1250] sm:$0xff]
  %v611 = vld [vmem:[%s1 + $0x1258] sm:$0xff]
  %v612 = vld [vmem:[%s1 + $0x1260] sm:$0xff]
  %v613 = vld [vmem:[%s1 + $0x1268] sm:$0xff]
  %v614 = vld [vmem:[%s1 + $0x1270] sm:$0xff]
  %v615 = vld [vmem:[%s1 + $0x1278] sm:$0xff]
  %v616 = vld [vmem:[%s1 + $0x1280] sm:$0xff]
  %v617 = vld [vmem:[%s1 + $0x1288] sm:$0xff]
  %v618 = vld [vmem:[%s1 + $0x1290] sm:$0xff]
  %v619 = vld [vmem:[%s1 + $0x1298] sm:$0xff]
  %v620 = vld [vmem:[%s1 + $0x12a0] sm:$0xff]
  %v621 = vld [vmem:[%s1 + $0x12a8] sm:$0xff]
  %v622 = vld [vmem:[%s1 + $0x12b0] sm:$0xff]
  %v623 = vld [vmem:[%s1 + $0x12b8] sm:$0xff]
  %v624 = vld [vmem:[%s1 + $0x12c0] sm:$0xff]
  %v625 = vld [vmem:[%s1 + $0x12c8] sm:$0xff]
  %v626 = vld [vmem:[%s1 + $0x12d0] sm:$0xff]
  %v627 = vld [vmem:[%s1 + $0x12d8] sm:$0xff]
  %v628 = vld [vmem:[%s1 + $0x12e0] sm:$0xff]
  %v629 = vld [vmem:[%s1 + $0x12e8] sm:$0xff]
  %v630 = vld [vmem:[%s1 + $0x12f0] sm:$0xff]
  %v631 = vld [vmem:[%s1 + $0x12f8] sm:$0xff]
  %v632 = vld [vmem:[%s1 + $0x1300] sm:$0xff]
  %v633 = vld [vmem:[%s1 + $0x1308] sm:$0xff]
  %v634 = vld [vmem:[%s1 + $0x1310] sm:$0xff]
  %v635 = vld [vmem:[%s1 + $0x1318] sm:$0xff]
  %v636 = vld [vmem:[%s1 + $0x1320] sm:$0xff]
  %v637 = vld [vmem:[%s1 + $0x1328] sm:$0xff]
  %v638 = vld [vmem:[%s1 + $0x1330] sm:$0xff]
  %v639 = vld [vmem:[%s1 + $0x1338] sm:$0xff]
  %v640 = vld [vmem:[%s1 + $0x1340] sm:$0xff]
  %v641 = vld [vmem:[%s1 + $0x1348] sm:$0xff]
  %v642 = vld [vmem:[%s1 + $0x1350] sm:$0xff]
  %v643 = vld [vmem:[%s1 + $0x1358] sm:$0xff]
  %v644 = vld [vmem:[%s1 + $0x1360] sm:$0xff]
  %v645 = vld [vmem:[%s1 + $0x1368] sm:$0xff]
  %v646 = vld [vmem:[%s1 + $0x1370] sm:$0xff]
  %v647 = vld [vmem:[%s1 + $0x1378] sm:$0xff]
  %v648 = vld [vmem:[%s1 + $0x1380] sm:$0xff]
  %v649 = vld [vmem:[%s1 + $0x1388] sm:$0xff]
  %v650 = vld [vmem:[%s1 + $0x1390] sm:$0xff]
  %v651 = vld [vmem:[%s1 + $0x1398] sm:$0xff]
  %v652 = vld [vmem:[%s1 + $0x13a0] sm:$0xff]
  %v653 = vld [vmem:[%s1 + $0x13a8] sm:$0xff]
  %v654 = vld [vmem:[%s1 + $0x13b0] sm:$0xff]
  %v655 = vld [vmem:[%s1 + $0x13b8] sm:$0xff]
  %v656 = vld [vmem:[%s1 + $0x13c0] sm:$0xff]
  %v657 = vld [vmem:[%s1 + $0x13c8] sm:$0xff]
  %v658 = vld [vmem:[%s1 + $0x13d0] sm:$0xff]
  %v659 = vld [vmem:[%s1 + $0x13d8] sm:$0xff]
  %v660 = vld [vmem:[%s1 + $0x13e0] sm:$0xff]
  %v661 = vld [vmem:[%s1 + $0x13e8] sm:$0xff]
  %v662 = vld [vmem:[%s1 + $0x13f0] sm:$0xff]
  %v663 = vld [vmem:[%s1 + $0x13f8] sm:$0xff]
  %v664 = vld [vmem:[%s1 + $0x1400] sm:$0xff]
  %v665 = vld [vmem:[%s1 + $0x1408] sm:$0xff]
  %v666 = vld [vmem:[%s1 + $0x1410] sm:$0xff]
  %v667 = vld [vmem:[%s1 + $0x1418] sm:$0xff]
  %v668 = vld [vmem:[%s1 + $0x1420] sm:$0xff]
  %v669 = vld [vmem:[%s1 + $0x1428] sm:$0xff]
  %v670 = vld [vmem:[%s1 + $0x1430] sm:$0xff]
  %v671 = vld [vmem:[%s1 + $0x1438] sm:$0xff]
  %v672 = vld [vmem:[%s1 + $0x1440] sm:$0xff]
  %v673 = vld [vmem:[%s1 + $0x1448] sm:$0xff]
  %v674 = vld [vmem:[%s1 + $0x1450] sm:$0xff]
  %v675 = vld [vmem:[%s1 + $0x1458] sm:$0xff]
  %v676 = vld [vmem:[%s1 + $0x1460] sm:$0xff]
  %v677 = vld [vmem:[%s1 + $0x1468] sm:$0xff]
  %v678 = vld [vmem:[%s1 + $0x1470] sm:$0xff]
  %v679 = vld [vmem:[%s1 + $0x1478] sm:$0xff]
  %v680 = vld [vmem:[%s1 + $0x1480] sm:$0xff]
  %v681 = vld [vmem:[%s1 + $0x1488] sm:$0xff]
  %v682 = vld [vmem:[%s1 + $0x1490] sm:$0xff]
  %v683 = vld [vmem:[%s1 + $0x1498] sm:$0xff]
  %v684 = vld [vmem:[%s1 + $0x14a0] sm:$0xff]
  %v685 = vld [vmem:[%s1 + $0x14a8] sm:$0xff]
  %v686 = vld [vmem:[%s1 + $0x14b0] sm:$0xff]
  %v687 = vld [vmem:[%s1 + $0x14b8] sm:$0xff]
  %v688 = vld [vmem:[%s1 + $0x14c0] sm:$0xff]
  %v689 = vld [vmem:[%s1 + $0x14c8] sm:$0xff]
  %v690 = vld [vmem:[%s1 + $0x14d0] sm:$0xff]
  %v691 = vld [vmem:[%s1 + $0x14d8] sm:$0xff]
  %v692 = vld [vmem:[%s1 + $0x14e0] sm:$0xff]
  %v693 = vld [vmem:[%s1 + $0x14e8] sm:$0xff]
  %v694 = vld [vmem:[%s1 + $0x14f0] sm:$0xff]
  %v695 = vld [vmem:[%s1 + $0x14f8] sm:$0xff]
  %v696 = vld [vmem:[%s1 + $0x1500] sm:$0xff]
  %v697 = vld [vmem:[%s1 + $0x1508] sm:$0xff]
  %v698 = vld [vmem:[%s1 + $0x1510] sm:$0xff]
  %v699 = vld [vmem:[%s1 + $0x1518] sm:$0xff]
  %v700 = vld [vmem:[%s1 + $0x1520] sm:$0xff]
  %v701 = vld [vmem:[%s1 + $0x1528] sm:$0xff]
  %v702 = vld [vmem:[%s1 + $0x1530] sm:$0xff]
  %v703 = vld [vmem:[%s1 + $0x1538] sm:$0xff]
  %v704 = vld [vmem:[%s1 + $0x1540] sm:$0xff]
  %v705 = vld [vmem:[%s1 + $0x1548] sm:$0xff]
  %v706 = vld [vmem:[%s1 + $0x1550] sm:$0xff]
  %v707 = vld [vmem:[%s1 + $0x1558] sm:$0xff]
  %v708 = vld [vmem:[%s1 + $0x1560] sm:$0xff]
  %v709 = vld [vmem:[%s1 + $0x1568] sm:$0xff]
  %v710 = vld [vmem:[%s1 + $0x1570] sm:$0xff]
  %v711 = vld [vmem:[%s1 + $0x1578] sm:$0xff]
  %v712 = vld [vmem:[%s1 + $0x1580] sm:$0xff]
  %v713 = vld [vmem:[%s1 + $0x1588] sm:$0xff]
  %v714 = vld [vmem:[%s1 + $0x1590] sm:$0xff]
  %v715 = vld [vmem:[%s1 + $0x1598] sm:$0xff]
  %v716 = vld [vmem:[%s1 + $0x15a0] sm:$0xff]
  %v717 = vld [vmem:[%s1 + $0x15a8] sm:$0xff]
  %v718 = vld [vmem:[%s1 + $0x15b0] sm:$0xff]
  %v719 = vld [vmem:[%s1 + $0x15b8] sm:$0xff]
  %v720 = vld [vmem:[%s1 + $0x15c0] sm:$0xff]
  %v721 = vld [vmem:[%s1 + $0x15c8] sm:$0xff]
  %v722 = vld [vmem:[%s1 + $0x15d0] sm:$0xff]
  %v723 = vld [vmem:[%s1 + $0x15d8] sm:$0xff]
  %v724 = vld [vmem:[%s1 + $0x15e0] sm:$0xff]
  %v725 = vld [vmem:[%s1 + $0x15e8] sm:$0xff]
  %v726 = vld [vmem:[%s1 + $0x15f0] sm:$0xff]
  %v727 = vld [vmem:[%s1 + $0x15f8] sm:$0xff]
  %v728 = vld [vmem:[%s1 + $0x1600] sm:$0xff]
  %v729 = vld [vmem:[%s1 + $0x1608] sm:$0xff]
  %v730 = vld [vmem:[%s1 + $0x1610] sm:$0xff]
  %v731 = vld [vmem:[%s1 + $0x1618] sm:$0xff]
  %v732 = vld [vmem:[%s1 + $0x1620] sm:$0xff]
  %v733 = vld [vmem:[%s1 + $0x1628] sm:$0xff]
  %v734 = vld [vmem:[%s1 + $0x1630] sm:$0xff]
  %v735 = vld [vmem:[%s1 + $0x1638] sm:$0xff]
  %v736 = vld [vmem:[%s1 + $0x1640] sm:$0xff]
  %v737 = vld [vmem:[%s1 + $0x1648] sm:$0xff]
  %v738 = vld [vmem:[%s1 + $0x1650] sm:$0xff]
  %v739 = vld [vmem:[%s1 + $0x1658] sm:$0xff]
  %v740 = vld [vmem:[%s1 + $0x1660] sm:$0xff]
  %v741 = vld [vmem:[%s1 + $0x1668] sm:$0xff]
  %v742 = vld [vmem:[%s1 + $0x1670] sm:$0xff]
  %v743 = vld [vmem:[%s1 + $0x1678] sm:$0xff]
  %v744 = vld [vmem:[%s1 + $0x1680] sm:$0xff]
  %v745 = vld [vmem:[%s1 + $0x1688] sm:$0xff]
  %v746 = vld [vmem:[%s1 + $0x1690] sm:$0xff]
  %v747 = vld [vmem:[%s1 + $0x1698] sm:$0xff]
  %v748 = vld [vmem:[%s1 + $0x16a0] sm:$0xff]
  %v749 = vld [vmem:[%s1 + $0x16a8] sm:$0xff]
  %v750 = vld [vmem:[%s1 + $0x16b0] sm:$0xff]
  %v751 = vld [vmem:[%s1 + $0x16b8] sm:$0xff]
  %v752 = vld [vmem:[%s1 + $0x16c0] sm:$0xff]
  %v753 = vld [vmem:[%s1 + $0x16c8] sm:$0xff]
  %v754 = vld [vmem:[%s1 + $0x16d0] sm:$0xff]
  %v755 = vld [vmem:[%s1 + $0x16d8] sm:$0xff]
  %v756 = vld [vmem:[%s1 + $0x16e0] sm:$0xff]
  %v757 = vld [vmem:[%s1 + $0x16e8] sm:$0xff]
  %v758 = vld [vmem:[%s1 + $0x16f0] sm:$0xff]
  %v759 = vld [vmem:[%s1 + $0x16f8] sm:$0xff]
  %v760 = vld [vmem:[%s1 + $0x1700] sm:$0xff]
  %v761 = vld [vmem:[%s1 + $0x1708] sm:$0xff]
  %v762 = vld [vmem:[%s1 + $0x1710] sm:$0xff]
  %v763 = vld [vmem:[%s1 + $0x1718] sm:$0xff]
  %v764 = vld [vmem:[%s1 + $0x1720] sm:$0xff]
  %v765 = vld [vmem:[%s1 + $0x1728] sm:$0xff]
  %v766 = vld [vmem:[%s1 + $0x1730] sm:$0xff]
  %v767 = vld [vmem:[%s1 + $0x1738] sm:$0xff]
  %v768 = vld [vmem:[%s1 + $0x1740] sm:$0xff]
  %v769 = vld [vmem:[%s1 + $0x1748] sm:$0xff]
  %v770 = vld [vmem:[%s1 + $0x1750] sm:$0xff]
  %v771 = vld [vmem:[%s1 + $0x1758] sm:$0xff]
  %v772 = vld [vmem:[%s1 + $0x1760] sm:$0xff]
  %v773 = vld [vmem:[%s1 + $0x1768] sm:$0xff]
  %v774 = vld [vmem:[%s1 + $0x1770] sm:$0xff]
  %v775 = vld [vmem:[%s1 + $0x1778] sm:$0xff]
  %v776 = vld [vmem:[%s1 + $0x1780] sm:$0xff]
  %v777 = vld [vmem:[%s1 + $0x1788] sm:$0xff]
  %v778 = vld [vmem:[%s1 + $0x1790] sm:$0xff]
  %v779 = vld [vmem:[%s1 + $0x1798] sm:$0xff]
  %v780 = vld [vmem:[%s1 + $0x17a0] sm:$0xff]
  %v781 = vld [vmem:[%s1 + $0x17a8] sm:$0xff]
  %v782 = vld [vmem:[%s1 + $0x17b0] sm:$0xff]
  %v783 = vld [vmem:[%s1 + $0x17b8] sm:$0xff]
  %v784 = vld [vmem:[%s1 + $0x17c0] sm:$0xff]
  %v785 = vld [vmem:[%s1 + $0x17c8] sm:$0xff]
  %v786 = vld [vmem:[%s1 + $0x17d0] sm:$0xff]
  %v787 = vld [vmem:[%s1 + $0x17d8] sm:$0xff]
  %v788 = vld [vmem:[%s1 + $0x17e0] sm:$0xff]
  %v789 = vld [vmem:[%s1 + $0x17e8] sm:$0xff]
  %v790 = vld [vmem:[%s1 + $0x17f0] sm:$0xff]
  %v791 = vld [vmem:[%s1 + $0x17f8] sm:$0xff]
  %v792 = vld [vmem:[%s1 + $0x1800] sm:$0xff]
  %v793 = vld [vmem:[%s1 + $0x1808] sm:$0xff]
  %v794 = vld [vmem:[%s1 + $0x1810] sm:$0xff]
  %v795 = vld [vmem:[%s1 + $0x1818] sm:$0xff]
  %v796 = vld [vmem:[%s1 + $0x1820] sm:$0xff]
  %v797 = vld [vmem:[%s1 + $0x1828] sm:$0xff]
  %v798 = vld [vmem:[%s1 + $0x1830] sm:$0xff]
  %v799 = vld [vmem:[%s1 + $0x1838] sm:$0xff]
  %v800 = vld [vmem:[%s1 + $0x1840] sm:$0xff]
  %v801 = vld [vmem:[%s1 + $0x1848] sm:$0xff]
  %v802 = vld [vmem:[%s1 + $0x1850] sm:$0xff]
  %v803 = vld [vmem:[%s1 + $0x1858] sm:$0xff]
  %v804 = vld [vmem:[%s1 + $0x1860] sm:$0xff]
  %v805 = vld [vmem:[%s1 + $0x1868] sm:$0xff]
  %v806 = vld [vmem:[%s1 + $0x1870] sm:$0xff]
  %v807 = vld [vmem:[%s1 + $0x1878] sm:$0xff]
  %v808 = vld [vmem:[%s1 + $0x1880] sm:$0xff]
  %v809 = vld [vmem:[%s1 + $0x1888] sm:$0xff]
  %v810 = vld [vmem:[%s1 + $0x1890] sm:$0xff]
  %v811 = vld [vmem:[%s1 + $0x1898] sm:$0xff]
  %v812 = vld [vmem:[%s1 + $0x18a0] sm:$0xff]
  %v813 = vld [vmem:[%s1 + $0x18a8] sm:$0xff]
  %v814 = vld [vmem:[%s1 + $0x18b0] sm:$0xff]
  %v815 = vld [vmem:[%s1 + $0x18b8] sm:$0xff]
  %v816 = vld [vmem:[%s1 + $0x18c0] sm:$0xff]
  %v817 = vld [vmem:[%s1 + $0x18c8] sm:$0xff]
  %v818 = vld [vmem:[%s1 + $0x18d0] sm:$0xff]
  %v819 = vld [vmem:[%s1 + $0x18d8] sm:$0xff]
  %v820 = vld [vmem:[%s1 + $0x18e0] sm:$0xff]
  %v821 = vld [vmem:[%s1 + $0x18e8] sm:$0xff]
  %v822 = vld [vmem:[%s1 + $0x18f0] sm:$0xff]
  %v823 = vld [vmem:[%s1 + $0x18f8] sm:$0xff]
  %v824 = vld [vmem:[%s1 + $0x1900] sm:$0xff]
  %v825 = vld [vmem:[%s1 + $0x1908] sm:$0xff]
  %v826 = vld [vmem:[%s1 + $0x1910] sm:$0xff]
  %v827 = vld [vmem:[%s1 + $0x1918] sm:$0xff]
  %v828 = vld [vmem:[%s1 + $0x1920] sm:$0xff]
  %v829 = vld [vmem:[%s1 + $0x1928] sm:$0xff]
  %v830 = vld [vmem:[%s1 + $0x1930] sm:$0xff]
  %v831 = vld [vmem:[%s1 + $0x1938] sm:$0xff]
  %v832 = vld [vmem:[%s1 + $0x1940] sm:$0xff]
  %v833 = vld [vmem:[%s1 + $0x1948] sm:$0xff]
  %v834 = vld [vmem:[%s1 + $0x1950] sm:$0xff]
  %v835 = vld [vmem:[%s1 + $0x1958] sm:$0xff]
  %v836 = vld [vmem:[%s1 + $0x1960] sm:$0xff]
  %v837 = vld [vmem:[%s1 + $0x1968] sm:$0xff]
  %v838 = vld [vmem:[%s1 + $0x1970] sm:$0xff]
  %v839 = vld [vmem:[%s1 + $0x1978] sm:$0xff]
  %v840 = vld [vmem:[%s1 + $0x1980] sm:$0xff]
  %v841 = vld [vmem:[%s1 + $0x1988] sm:$0xff]
  %v842 = vld [vmem:[%s1 + $0x1990] sm:$0xff]
  %v843 = vld [vmem:[%s1 + $0x1998] sm:$0xff]
  %v844 = vld [vmem:[%s1 + $0x19a0] sm:$0xff]
  %v845 = vld [vmem:[%s1 + $0x19a8] sm:$0xff]
  %v846 = vld [vmem:[%s1 + $0x19b0] sm:$0xff]
  %v847 = vld [vmem:[%s1 + $0x19b8] sm:$0xff]
  %v848 = vld [vmem:[%s1 + $0x19c0] sm:$0xff]
  %v849 = vld [vmem:[%s1 + $0x19c8] sm:$0xff]
  %v850 = vld [vmem:[%s1 + $0x19d0] sm:$0xff]
  %v851 = vld [vmem:[%s1 + $0x19d8] sm:$0xff]
  %v852 = vld [vmem:[%s1 + $0x19e0] sm:$0xff]
  %v853 = vld [vmem:[%s1 + $0x19e8] sm:$0xff]
  %v854 = vld [vmem:[%s1 + $0x19f0] sm:$0xff]
  %v855 = vld [vmem:[%s1 + $0x19f8] sm:$0xff]
  %v856 = vld [vmem:[%s1 + $0x1a00] sm:$0xff]
  %v857 = vld [vmem:[%s1 + $0x1a08] sm:$0xff]
  %v858 = vld [vmem:[%s1 + $0x1a10] sm:$0xff]
  %v859 = vld [vmem:[%s1 + $0x1a18] sm:$0xff]
  %v860 = vld [vmem:[%s1 + $0x1a20] sm:$0xff]
  %v861 = vld [vmem:[%s1 + $0x1a28] sm:$0xff]
  %v862 = vld [vmem:[%s1 + $0x1a30] sm:$0xff]
  %v863 = vld [vmem:[%s1 + $0x1a38] sm:$0xff]
  %v864 = vld [vmem:[%s1 + $0x1a40] sm:$0xff]
  %v865 = vld [vmem:[%s1 + $0x1a48] sm:$0xff]
  %v866 = vld [vmem:[%s1 + $0x1a50] sm:$0xff]
  %v867 = vld [vmem:[%s1 + $0x1a58] sm:$0xff]
  %v868 = vld [vmem:[%s1 + $0x1a60] sm:$0xff]
  %v869 = vld [vmem:[%s1 + $0x1a68] sm:$0xff]
  %v870 = vld [vmem:[%s1 + $0x1a70] sm:$0xff]
  %v871 = vld [vmem:[%s1 + $0x1a78] sm:$0xff]
  %v872 = vld [vmem:[%s1 + $0x1a80] sm:$0xff]
  %v873 = vld [vmem:[%s1 + $0x1a88] sm:$0xff]
  %v874 = vld [vmem:[%s1 + $0x1a90] sm:$0xff]
  %v875 = vld [vmem:[%s1 + $0x1a98] sm:$0xff]
  %v876 = vld [vmem:[%s1 + $0x1aa0] sm:$0xff]
  %v877 = vld [vmem:[%s1 + $0x1aa8] sm:$0xff]
  %v878 = vld [vmem:[%s1 + $0x1ab0] sm:$0xff]
  %v879 = vld [vmem:[%s1 + $0x1ab8] sm:$0xff]
  %v880 = vld [vmem:[%s1 + $0x1ac0] sm:$0xff]
  %v881 = vld [vmem:[%s1 + $0x1ac8] sm:$0xff]
  %v882 = vld [vmem:[%s1 + $0x1ad0] sm:$0xff]
  %v883 = vld [vmem:[%s1 + $0x1ad8] sm:$0xff]
  %v884 = vld [vmem:[%s1 + $0x1ae0] sm:$0xff]
  %v885 = vld [vmem:[%s1 + $0x1ae8] sm:$0xff]
  %v886 = vld [vmem:[%s1 + $0x1af0] sm:$0xff]
  %v887 = vld [vmem:[%s1 + $0x1af8] sm:$0xff]
  %v888 = vld [vmem:[%s1 + $0x1b00] sm:$0xff]
  %v889 = vld [vmem:[%s1 + $0x1b08] sm:$0xff]
  %v890 = vld [vmem:[%s1 + $0x1b10] sm:$0xff]
  %v891 = vld [vmem:[%s1 + $0x1b18] sm:$0xff]
  %v892 = vld [vmem:[%s1 + $0x1b20] sm:$0xff]
  %v893 = vld [vmem:[%s1 + $0x1b28] sm:$0xff]
  %v894 = vld [vmem:[%s1 + $0x1b30] sm:$0xff]
  %v895 = vld [vmem:[%s1 + $0x1b38] sm:$0xff]
  %v896 = vld [vmem:[%s1 + $0x1b40] sm:$0xff]
  %v897 = vld [vmem:[%s1 + $0x1b48] sm:$0xff]
  %v898 = vld [vmem:[%s1 + $0x1b50] sm:$0xff]
  %v899 = vld [vmem:[%s1 + $0x1b58] sm:$0xff]
  %v900 = vld [vmem:[%s1 + $0x1b60] sm:$0xff]
  %v901 = vld [vmem:[%s1 + $0x1b68] sm:$0xff]
  %v902 = vld [vmem:[%s1 + $0x1b70] sm:$0xff]
  %v903 = vld [vmem:[%s1 + $0x1b78] sm:$0xff]
  %v904 = vld [vmem:[%s1 + $0x1b80] sm:$0xff]
  %v905 = vld [vmem:[%s1 + $0x1b88] sm:$0xff]
  %v906 = vld [vmem:[%s1 + $0x1b90] sm:$0xff]
  %v907 = vld [vmem:[%s1 + $0x1b98] sm:$0xff]
  %v908 = vld [vmem:[%s1 + $0x1ba0] sm:$0xff]
  %v909 = vld [vmem:[%s1 + $0x1ba8] sm:$0xff]
  %v910 = vld [vmem:[%s1 + $0x1bb0] sm:$0xff]
  %v911 = vld [vmem:[%s1 + $0x1bb8] sm:$0xff]
  %v912 = vld [vmem:[%s1 + $0x1bc0] sm:$0xff]
  %v913 = vld [vmem:[%s1 + $0x1bc8] sm:$0xff]
  %v914 = vld [vmem:[%s1 + $0x1bd0] sm:$0xff]
  %v915 = vld [vmem:[%s1 + $0x1bd8] sm:$0xff]
  %v916 = vld [vmem:[%s1 + $0x1be0] sm:$0xff]
  %v917 = vld [vmem:[%s1 + $0x1be8] sm:$0xff]
  %v918 = vld [vmem:[%s1 + $0x1bf0] sm:$0xff]
  %v919 = vld [vmem:[%s1 + $0x1bf8] sm:$0xff]
  %v920 = vld [vmem:[%s1 + $0x1c00] sm:$0xff]
  %v921 = vld [vmem:[%s1 + $0x1c08] sm:$0xff]
  %v922 = vld [vmem:[%s1 + $0x1c10] sm:$0xff]
  %v923 = vld [vmem:[%s1 + $0x1c18] sm:$0xff]
  %v924 = vld [vmem:[%s1 + $0x1c20] sm:$0xff]
  %v925 = vld [vmem:[%s1 + $0x1c28] sm:$0xff]
  %v926 = vld [vmem:[%s1 + $0x1c30] sm:$0xff]
  %v927 = vld [vmem:[%s1 + $0x1c38] sm:$0xff]
  %v928 = vld [vmem:[%s1 + $0x1c40] sm:$0xff]
  %v929 = vld [vmem:[%s1 + $0x1c48] sm:$0xff]
  %v930 = vld [vmem:[%s1 + $0x1c50] sm:$0xff]
  %v931 = vld [vmem:[%s1 + $0x1c58] sm:$0xff]
  %v932 = vld [vmem:[%s1 + $0x1c60] sm:$0xff]
  %v933 = vld [vmem:[%s1 + $0x1c68] sm:$0xff]
  %v934 = vld [vmem:[%s1 + $0x1c70] sm:$0xff]
  %v935 = vld [vmem:[%s1 + $0x1c78] sm:$0xff]
  %v936 = vld [vmem:[%s1 + $0x1c80] sm:$0xff]
  %v937 = vld [vmem:[%s1 + $0x1c88] sm:$0xff]
  %v938 = vld [vmem:[%s1 + $0x1c90] sm:$0xff]
  %v939 = vld [vmem:[%s1 + $0x1c98] sm:$0xff]
  %v940 = vld [vmem:[%s1 + $0x1ca0] sm:$0xff]
  %v941 = vld [vmem:[%s1 + $0x1ca8] sm:$0xff]
  %v942 = vld [vmem:[%s1 + $0x1cb0] sm:$0xff]
  %v943 = vld [vmem:[%s1 + $0x1cb8] sm:$0xff]
  %v944 = vld [vmem:[%s1 + $0x1cc0] sm:$0xff]
  %v945 = vld [vmem:[%s1 + $0x1cc8] sm:$0xff]
  %v946 = vld [vmem:[%s1 + $0x1cd0] sm:$0xff]
  %v947 = vld [vmem:[%s1 + $0x1cd8] sm:$0xff]
  %v948 = vld [vmem:[%s1 + $0x1ce0] sm:$0xff]
  %v949 = vld [vmem:[%s1 + $0x1ce8] sm:$0xff]
  %v950 = vld [vmem:[%s1 + $0x1cf0] sm:$0xff]
  %v951 = vld [vmem:[%s1 + $0x1cf8] sm:$0xff]
  %v952 = vld [vmem:[%s1 + $0x1d00] sm:$0xff]
  %v953 = vld [vmem:[%s1 + $0x1d08] sm:$0xff]
  %v954 = vld [vmem:[%s1 + $0x1d10] sm:$0xff]
  %v955 = vld [vmem:[%s1 + $0x1d18] sm:$0xff]
  %v956 = vld [vmem:[%s1 + $0x1d20] sm:$0xff]
  %v957 = vld [vmem:[%s1 + $0x1d28] sm:$0xff]
  %v958 = vld [vmem:[%s1 + $0x1d30] sm:$0xff]
  %v959 = vld [vmem:[%s1 + $0x1d38] sm:$0xff]
  %v960 = vld [vmem:[%s1 + $0x1d40] sm:$0xff]
  %v961 = vld [vmem:[%s1 + $0x1d48] sm:$0xff]
  %v962 = vld [vmem:[%s1 + $0x1d50] sm:$0xff]
  %v963 = vld [vmem:[%s1 + $0x1d58] sm:$0xff]
  %v964 = vld [vmem:[%s1 + $0x1d60] sm:$0xff]
  %v965 = vld [vmem:[%s1 + $0x1d68] sm:$0xff]
  %v966 = vld [vmem:[%s1 + $0x1d70] sm:$0xff]
  %v967 = vld [vmem:[%s1 + $0x1d78] sm:$0xff]
  %v968 = vld [vmem:[%s1 + $0x1d80] sm:$0xff]
  %v969 = vld [vmem:[%s1 + $0x1d88] sm:$0xff]
  %v970 = vld [vmem:[%s1 + $0x1d90] sm:$0xff]
  %v971 = vld [vmem:[%s1 + $0x1d98] sm:$0xff]
  %v972 = vld [vmem:[%s1 + $0x1da0] sm:$0xff]
  %v973 = vld [vmem:[%s1 + $0x1da8] sm:$0xff]
  %v974 = vld [vmem:[%s1 + $0x1db0] sm:$0xff]
  %v975 = vld [vmem:[%s1 + $0x1db8] sm:$0xff]
  %v976 = vld [vmem:[%s1 + $0x1dc0] sm:$0xff]
  %v977 = vld [vmem:[%s1 + $0x1dc8] sm:$0xff]
  %v978 = vld [vmem:[%s1 + $0x1dd0] sm:$0xff]
  %v979 = vld [vmem:[%s1 + $0x1dd8] sm:$0xff]
  %v980 = vld [vmem:[%s1 + $0x1de0] sm:$0xff]
  %v981 = vld [vmem:[%s1 + $0x1de8] sm:$0xff]
  %v982 = vld [vmem:[%s1 + $0x1df0] sm:$0xff]
  %v983 = vld [vmem:[%s1 + $0x1df8] sm:$0xff]
  %v984 = vld [vmem:[%s1 + $0x1e00] sm:$0xff]
  %v985 = vld [vmem:[%s1 + $0x1e08] sm:$0xff]
  %v986 = vld [vmem:[%s1 + $0x1e10] sm:$0xff]
  %v987 = vld [vmem:[%s1 + $0x1e18] sm:$0xff]
  %v988 = vld [vmem:[%s1 + $0x1e20] sm:$0xff]
  %v989 = vld [vmem:[%s1 + $0x1e28] sm:$0xff]
  %v990 = vld [vmem:[%s1 + $0x1e30] sm:$0xff]
  %v991 = vld [vmem:[%s1 + $0x1e38] sm:$0xff]
  %v992 = vld [vmem:[%s1 + $0x1e40] sm:$0xff]
  %v993 = vld [vmem:[%s1 + $0x1e48] sm:$0xff]
  %v994 = vld [vmem:[%s1 + $0x1e50] sm:$0xff]
  %v995 = vld [vmem:[%s1 + $0x1e58] sm:$0xff]
  %v996 = vld [vmem:[%s1 + $0x1e60] sm:$0xff]
  %v997 = vld [vmem:[%s1 + $0x1e68] sm:$0xff]
  %v998 = vld [vmem:[%s1 + $0x1e70] sm:$0xff]
  %v999 = vld [vmem:[%s1 + $0x1e78] sm:$0xff]
  %v1000 = vld [vmem:[%s1 + $0x1e80] sm:$0xff]
  %v1001 = vld [vmem:[%s1 + $0x1e88] sm:$0xff]
  %v1002 = vld [vmem:[%s1 + $0x1e90] sm:$0xff]
  %v1003 = vld [vmem:[%s1 + $0x1e98] sm:$0xff]
  %v1004 = vld [vmem:[%s1 + $0x1ea0] sm:$0xff]
  %v1005 = vld [vmem:[%s1 + $0x1ea8] sm:$0xff]
  %v1006 = vld [vmem:[%s1 + $0x1eb0] sm:$0xff]
  %v1007 = vld [vmem:[%s1 + $0x1eb8] sm:$0xff]
  %v1008 = vld [vmem:[%s1 + $0x1ec0] sm:$0xff]
  %v1009 = vld [vmem:[%s1 + $0x1ec8] sm:$0xff]
  %v1010 = vld [vmem:[%s1 + $0x1ed0] sm:$0xff]
  %v1011 = vld [vmem:[%s1 + $0x1ed8] sm:$0xff]
  %v1012 = vld [vmem:[%s1 + $0x1ee0] sm:$0xff]
  %v1013 = vld [vmem:[%s1 + $0x1ee8] sm:$0xff]
  %v1014 = vld [vmem:[%s1 + $0x1ef0] sm:$0xff]
  %v1015 = vld [vmem:[%s1 + $0x1ef8] sm:$0xff]
  %v1016 = vld [vmem:[%s1 + $0x1f00] sm:$0xff]
  %v1017 = vld [vmem:[%s1 + $0x1f08] sm:$0xff]
  %v1018 = vld [vmem:[%s1 + $0x1f10] sm:$0xff]
  %v1019 = vld [vmem:[%s1 + $0x1f18] sm:$0xff]
  %v1020 = vld [vmem:[%s1 + $0x1f20] sm:$0xff]
  %v1021 = vld [vmem:[%s1 + $0x1f28] sm:$0xff]
  %v1022 = vld [vmem:[%s1 + $0x1f30] sm:$0xff]
  %v1023 = vld [vmem:[%s1 + $0x1f38] sm:$0xff]
  %v1024 = vld [vmem:[%s1 + $0x1f40] sm:$0xff]
  %v1025 = vld [vmem:[%s1 + $0x1f48] sm:$0xff]
  %v1026 = vld [vmem:[%s1 + $0x1f50] sm:$0xff]
  %v1027 = vld [vmem:[%s1 + $0x1f58] sm:$0xff]
  %v1028 = vld [vmem:[%s1 + $0x1f60] sm:$0xff]
  %v1029 = vld [vmem:[%s1 + $0x1f68] sm:$0xff]
  %v1030 = vld [vmem:[%s1 + $0x1f70] sm:$0xff]
  %v1031 = vld [vmem:[%s1 + $0x1f78] sm:$0xff]
  %v1032 = vld [vmem:[%s1 + $0x1f80] sm:$0xff]
  %v1033 = vld [vmem:[%s1 + $0x1f88] sm:$0xff]
  %v1034 = vld [vmem:[%s1 + $0x1f90] sm:$0xff]
  %v1035 = vld [vmem:[%s1 + $0x1f98] sm:$0xff]
  %v1036 = vld [vmem:[%s1 + $0x1fa0] sm:$0xff]
  %v1037 = vld [vmem:[%s1 + $0x1fa8] sm:$0xff]
  %v1038 = vld [vmem:[%s1 + $0x1fb0] sm:$0xff]
  %v1039 = vld [vmem:[%s1 + $0x1fb8] sm:$0xff]
  %v1040 = vld [vmem:[%s1 + $0x1fc0] sm:$0xff]
  %v1041 = vld [vmem:[%s1 + $0x1fc8] sm:$0xff]
  %v1042 = vld [vmem:[%s1 + $0x1fd0] sm:$0xff]
  %v1043 = vld [vmem:[%s1 + $0x1fd8] sm:$0xff]
  %v1044 = vld [vmem:[%s1 + $0x1fe0] sm:$0xff]
  %v1045 = vld [vmem:[%s1 + $0x1fe8] sm:$0xff]
  %v1046 = vld [vmem:[%s1 + $0x1ff0] sm:$0xff]
  %v1047 = vld [vmem:[%s1 + $0x1ff8] sm:$0xff]
  %v1048 = vld [vmem:[%s2] sm:$0xff]
  %v1049 = vld [vmem:[%s2 + $0x8] sm:$0xff]
  %v1052 = vperm.slane %v1048, 0
  %v1053 = vperm.slane %v1048, 1
  %v1054 = vperm.slane %v1048, 2
  %v1055 = vperm.slane %v1048, 3
  %v1056 = vperm.slane %v1048, 4
  %v1057 = vperm.slane %v1048, 5
  %v1058 = vperm.slane %v1048, 6
  %v1059 = vperm.slane %v1048, 7
  %v1060 = vperm.slane %v1049, 0
  %v1061 = vperm.slane %v1049, 1
  %v1062 = vperm.slane %v1049, 2
  %v1063 = vperm.slane %v1049, 3
  %v1064 = vperm.slane %v1049, 4
  %v1065 = vperm.slane %v1049, 5
  %v1066 = vperm.slane %v1049, 6
  %v1067 = vperm.slane %v1049, 7
  %v1088 = vunpack.c.l.b16 %v20
  %v1089 = vunpack.c.h.b16 %v20
  %v1090 = vunpack.c.l.b16 %v21
  %v1091 = vunpack.c.h.b16 %v21
  %v1092 = vunpack.c.l.b16 %v22
  %v1093 = vunpack.c.h.b16 %v22
  %v1094 = vunpack.c.l.b16 %v23
  %v1095 = vunpack.c.h.b16 %v23
  %v1096 = vpack.c.b16 %v1088, %v1088
  %v1097 = vpack.c.b16 %v1089, %v1089
  %v1098 = vpack.c.b16 %v1090, %v1090
  %v1099 = vpack.c.b16 %v1091, %v1091
  %v1100 = vpack.c.b16 %v1092, %v1092
  %v1101 = vpack.c.b16 %v1093, %v1093
  %v1102 = vpack.c.b16 %v1094, %v1094
  %v1103 = vpack.c.b16 %v1095, %v1095
  %v2136 = vunpack.c.l.b16 %v24
  %v2137 = vunpack.c.h.b16 %v24
  %v2138 = vunpack.c.l.b16 %v25
  %v2139 = vunpack.c.h.b16 %v25
  %v2140 = vunpack.c.l.b16 %v26
  %v2141 = vunpack.c.h.b16 %v26
  %v2142 = vunpack.c.l.b16 %v27
  %v2143 = vunpack.c.h.b16 %v27
  %v2144 = vunpack.c.l.b16 %v28
  %v2145 = vunpack.c.h.b16 %v28
  %v2146 = vunpack.c.l.b16 %v29
  %v2147 = vunpack.c.h.b16 %v29
  %v2148 = vunpack.c.l.b16 %v30
  %v2149 = vunpack.c.h.b16 %v30
  %v2150 = vunpack.c.l.b16 %v31
  %v2151 = vunpack.c.h.b16 %v31
  %v2152 = vunpack.c.l.b16 %v32
  %v2153 = vunpack.c.h.b16 %v32
  %v2154 = vunpack.c.l.b16 %v33
  %v2155 = vunpack.c.h.b16 %v33
  %v2156 = vunpack.c.l.b16 %v34
  %v2157 = vunpack.c.h.b16 %v34
  %v2158 = vunpack.c.l.b16 %v35
  %v2159 = vunpack.c.h.b16 %v35
  %v2160 = vunpack.c.l.b16 %v36
  %v2161 = vunpack.c.h.b16 %v36
  %v2162 = vunpack.c.l.b16 %v37
  %v2163 = vunpack.c.h.b16 %v37
  %v2164 = vunpack.c.l.b16 %v38
  %v2165 = vunpack.c.h.b16 %v38
  %v2166 = vunpack.c.l.b16 %v39
  %v2167 = vunpack.c.h.b16 %v39
  %v2168 = vunpack.c.l.b16 %v40
  %v2169 = vunpack.c.h.b16 %v40
  %v2170 = vunpack.c.l.b16 %v41
  %v2171 = vunpack.c.h.b16 %v41
  %v2172 = vunpack.c.l.b16 %v42
  %v2173 = vunpack.c.h.b16 %v42
  %v2174 = vunpack.c.l.b16 %v43
  %v2175 = vunpack.c.h.b16 %v43
  %v2176 = vunpack.c.l.b16 %v44
  %v2177 = vunpack.c.h.b16 %v44
  %v2178 = vunpack.c.l.b16 %v45
  %v2179 = vunpack.c.h.b16 %v45
  %v2180 = vunpack.c.l.b16 %v46
  %v2181 = vunpack.c.h.b16 %v46
  %v2182 = vunpack.c.l.b16 %v47
  %v2183 = vunpack.c.h.b16 %v47
  %v2184 = vunpack.c.l.b16 %v48
  %v2185 = vunpack.c.h.b16 %v48
  %v2186 = vunpack.c.l.b16 %v49
  %v2187 = vunpack.c.h.b16 %v49
  %v2188 = vunpack.c.l.b16 %v50
  %v2189 = vunpack.c.h.b16 %v50
  %v2190 = vunpack.c.l.b16 %v51
  %v2191 = vunpack.c.h.b16 %v51
  %v2192 = vunpack.c.l.b16 %v52
  %v2193 = vunpack.c.h.b16 %v52
  %v2194 = vunpack.c.l.b16 %v53
  %v2195 = vunpack.c.h.b16 %v53
  %v2196 = vunpack.c.l.b16 %v54
  %v2197 = vunpack.c.h.b16 %v54
  %v2198 = vunpack.c.l.b16 %v55
  %v2199 = vunpack.c.h.b16 %v55
  %v2200 = vunpack.c.l.b16 %v56
  %v2201 = vunpack.c.h.b16 %v56
  %v2202 = vunpack.c.l.b16 %v57
  %v2203 = vunpack.c.h.b16 %v57
  %v2204 = vunpack.c.l.b16 %v58
  %v2205 = vunpack.c.h.b16 %v58
  %v2206 = vunpack.c.l.b16 %v59
  %v2207 = vunpack.c.h.b16 %v59
  %v2208 = vunpack.c.l.b16 %v60
  %v2209 = vunpack.c.h.b16 %v60
  %v2210 = vunpack.c.l.b16 %v61
  %v2211 = vunpack.c.h.b16 %v61
  %v2212 = vunpack.c.l.b16 %v62
  %v2213 = vunpack.c.h.b16 %v62
  %v2214 = vunpack.c.l.b16 %v63
  %v2215 = vunpack.c.h.b16 %v63
  %v2216 = vunpack.c.l.b16 %v64
  %v2217 = vunpack.c.h.b16 %v64
  %v2218 = vunpack.c.l.b16 %v65
  %v2219 = vunpack.c.h.b16 %v65
  %v2220 = vunpack.c.l.b16 %v66
  %v2221 = vunpack.c.h.b16 %v66
  %v2222 = vunpack.c.l.b16 %v67
  %v2223 = vunpack.c.h.b16 %v67
  %v2224 = vunpack.c.l.b16 %v68
  %v2225 = vunpack.c.h.b16 %v68
  %v2226 = vunpack.c.l.b16 %v69
  %v2227 = vunpack.c.h.b16 %v69
  %v2228 = vunpack.c.l.b16 %v70
  %v2229 = vunpack.c.h.b16 %v70
  %v2230 = vunpack.c.l.b16 %v71
  %v2231 = vunpack.c.h.b16 %v71
  %v2232 = vunpack.c.l.b16 %v72
  %v2233 = vunpack.c.h.b16 %v72
  %v2234 = vunpack.c.l.b16 %v73
  %v2235 = vunpack.c.h.b16 %v73
  %v2236 = vunpack.c.l.b16 %v74
  %v2237 = vunpack.c.h.b16 %v74
  %v2238 = vunpack.c.l.b16 %v75
  %v2239 = vunpack.c.h.b16 %v75
  %v2240 = vunpack.c.l.b16 %v76
  %v2241 = vunpack.c.h.b16 %v76
  %v2242 = vunpack.c.l.b16 %v77
  %v2243 = vunpack.c.h.b16 %v77
  %v2244 = vunpack.c.l.b16 %v78
  %v2245 = vunpack.c.h.b16 %v78
  %v2246 = vunpack.c.l.b16 %v79
  %v2247 = vunpack.c.h.b16 %v79
  %v2248 = vunpack.c.l.b16 %v80
  %v2249 = vunpack.c.h.b16 %v80
  %v2250 = vunpack.c.l.b16 %v81
  %v2251 = vunpack.c.h.b16 %v81
  %v2252 = vunpack.c.l.b16 %v82
  %v2253 = vunpack.c.h.b16 %v82
  %v2254 = vunpack.c.l.b16 %v83
  %v2255 = vunpack.c.h.b16 %v83
  %v2256 = vunpack.c.l.b16 %v84
  %v2257 = vunpack.c.h.b16 %v84
  %v2258 = vunpack.c.l.b16 %v85
  %v2259 = vunpack.c.h.b16 %v85
  %v2260 = vunpack.c.l.b16 %v86
  %v2261 = vunpack.c.h.b16 %v86
  %v2262 = vunpack.c.l.b16 %v87
  %v2263 = vunpack.c.h.b16 %v87
  %v2264 = vunpack.c.l.b16 %v88
  %v2265 = vunpack.c.h.b16 %v88
  %v2266 = vunpack.c.l.b16 %v89
  %v2267 = vunpack.c.h.b16 %v89
  %v2268 = vunpack.c.l.b16 %v90
  %v2269 = vunpack.c.h.b16 %v90
  %v2270 = vunpack.c.l.b16 %v91
  %v2271 = vunpack.c.h.b16 %v91
  %v2272 = vunpack.c.l.b16 %v92
  %v2273 = vunpack.c.h.b16 %v92
  %v2274 = vunpack.c.l.b16 %v93
  %v2275 = vunpack.c.h.b16 %v93
  %v2276 = vunpack.c.l.b16 %v94
  %v2277 = vunpack.c.h.b16 %v94
  %v2278 = vunpack.c.l.b16 %v95
  %v2279 = vunpack.c.h.b16 %v95
  %v2280 = vunpack.c.l.b16 %v96
  %v2281 = vunpack.c.h.b16 %v96
  %v2282 = vunpack.c.l.b16 %v97
  %v2283 = vunpack.c.h.b16 %v97
  %v2284 = vunpack.c.l.b16 %v98
  %v2285 = vunpack.c.h.b16 %v98
  %v2286 = vunpack.c.l.b16 %v99
  %v2287 = vunpack.c.h.b16 %v99
  %v2288 = vunpack.c.l.b16 %v100
  %v2289 = vunpack.c.h.b16 %v100
  %v2290 = vunpack.c.l.b16 %v101
  %v2291 = vunpack.c.h.b16 %v101
  %v2292 = vunpack.c.l.b16 %v102
  %v2293 = vunpack.c.h.b16 %v102
  %v2294 = vunpack.c.l.b16 %v103
  %v2295 = vunpack.c.h.b16 %v103
  %v2296 = vunpack.c.l.b16 %v104
  %v2297 = vunpack.c.h.b16 %v104
  %v2298 = vunpack.c.l.b16 %v105
  %v2299 = vunpack.c.h.b16 %v105
  %v2300 = vunpack.c.l.b16 %v106
  %v2301 = vunpack.c.h.b16 %v106
  %v2302 = vunpack.c.l.b16 %v107
  %v2303 = vunpack.c.h.b16 %v107
  %v2304 = vunpack.c.l.b16 %v108
  %v2305 = vunpack.c.h.b16 %v108
  %v2306 = vunpack.c.l.b16 %v109
  %v2307 = vunpack.c.h.b16 %v109
  %v2308 = vunpack.c.l.b16 %v110
  %v2309 = vunpack.c.h.b16 %v110
  %v2310 = vunpack.c.l.b16 %v111
  %v2311 = vunpack.c.h.b16 %v111
  %v2312 = vunpack.c.l.b16 %v112
  %v2313 = vunpack.c.h.b16 %v112
  %v2314 = vunpack.c.l.b16 %v113
  %v2315 = vunpack.c.h.b16 %v113
  %v2316 = vunpack.c.l.b16 %v114
  %v2317 = vunpack.c.h.b16 %v114
  %v2318 = vunpack.c.l.b16 %v115
  %v2319 = vunpack.c.h.b16 %v115
  %v2320 = vunpack.c.l.b16 %v116
  %v2321 = vunpack.c.h.b16 %v116
  %v2322 = vunpack.c.l.b16 %v117
  %v2323 = vunpack.c.h.b16 %v117
  %v2324 = vunpack.c.l.b16 %v118
  %v2325 = vunpack.c.h.b16 %v118
  %v2326 = vunpack.c.l.b16 %v119
  %v2327 = vunpack.c.h.b16 %v119
  %v2328 = vunpack.c.l.b16 %v120
  %v2329 = vunpack.c.h.b16 %v120
  %v2330 = vunpack.c.l.b16 %v121
  %v2331 = vunpack.c.h.b16 %v121
  %v2332 = vunpack.c.l.b16 %v122
  %v2333 = vunpack.c.h.b16 %v122
  %v2334 = vunpack.c.l.b16 %v123
  %v2335 = vunpack.c.h.b16 %v123
  %v2336 = vunpack.c.l.b16 %v124
  %v2337 = vunpack.c.h.b16 %v124
  %v2338 = vunpack.c.l.b16 %v125
  %v2339 = vunpack.c.h.b16 %v125
  %v2340 = vunpack.c.l.b16 %v126
  %v2341 = vunpack.c.h.b16 %v126
  %v2342 = vunpack.c.l.b16 %v127
  %v2343 = vunpack.c.h.b16 %v127
  %v2344 = vunpack.c.l.b16 %v128
  %v2345 = vunpack.c.h.b16 %v128
  %v2346 = vunpack.c.l.b16 %v129
  %v2347 = vunpack.c.h.b16 %v129
  %v2348 = vunpack.c.l.b16 %v130
  %v2349 = vunpack.c.h.b16 %v130
  %v2350 = vunpack.c.l.b16 %v131
  %v2351 = vunpack.c.h.b16 %v131
  %v2352 = vunpack.c.l.b16 %v132
  %v2353 = vunpack.c.h.b16 %v132
  %v2354 = vunpack.c.l.b16 %v133
  %v2355 = vunpack.c.h.b16 %v133
  %v2356 = vunpack.c.l.b16 %v134
  %v2357 = vunpack.c.h.b16 %v134
  %v2358 = vunpack.c.l.b16 %v135
  %v2359 = vunpack.c.h.b16 %v135
  %v2360 = vunpack.c.l.b16 %v136
  %v2361 = vunpack.c.h.b16 %v136
  %v2362 = vunpack.c.l.b16 %v137
  %v2363 = vunpack.c.h.b16 %v137
  %v2364 = vunpack.c.l.b16 %v138
  %v2365 = vunpack.c.h.b16 %v138
  %v2366 = vunpack.c.l.b16 %v139
  %v2367 = vunpack.c.h.b16 %v139
  %v2368 = vunpack.c.l.b16 %v140
  %v2369 = vunpack.c.h.b16 %v140
  %v2370 = vunpack.c.l.b16 %v141
  %v2371 = vunpack.c.h.b16 %v141
  %v2372 = vunpack.c.l.b16 %v142
  %v2373 = vunpack.c.h.b16 %v142
  %v2374 = vunpack.c.l.b16 %v143
  %v2375 = vunpack.c.h.b16 %v143
  %v2376 = vunpack.c.l.b16 %v144
  %v2377 = vunpack.c.h.b16 %v144
  %v2378 = vunpack.c.l.b16 %v145
  %v2379 = vunpack.c.h.b16 %v145
  %v2380 = vunpack.c.l.b16 %v146
  %v2381 = vunpack.c.h.b16 %v146
  %v2382 = vunpack.c.l.b16 %v147
  %v2383 = vunpack.c.h.b16 %v147
  %v2384 = vunpack.c.l.b16 %v148
  %v2385 = vunpack.c.h.b16 %v148
  %v2386 = vunpack.c.l.b16 %v149
  %v2387 = vunpack.c.h.b16 %v149
  %v2388 = vunpack.c.l.b16 %v150
  %v2389 = vunpack.c.h.b16 %v150
  %v2390 = vunpack.c.l.b16 %v151
  %v2391 = vunpack.c.h.b16 %v151
  %v2392 = vunpack.c.l.b16 %v152
  %v2393 = vunpack.c.h.b16 %v152
  %v2394 = vunpack.c.l.b16 %v153
  %v2395 = vunpack.c.h.b16 %v153
  %v2396 = vunpack.c.l.b16 %v154
  %v2397 = vunpack.c.h.b16 %v154
  %v2398 = vunpack.c.l.b16 %v155
  %v2399 = vunpack.c.h.b16 %v155
  %v2400 = vunpack.c.l.b16 %v156
  %v2401 = vunpack.c.h.b16 %v156
  %v2402 = vunpack.c.l.b16 %v157
  %v2403 = vunpack.c.h.b16 %v157
  %v2404 = vunpack.c.l.b16 %v158
  %v2405 = vunpack.c.h.b16 %v158
  %v2406 = vunpack.c.l.b16 %v159
  %v2407 = vunpack.c.h.b16 %v159
  %v2408 = vunpack.c.l.b16 %v160
  %v2409 = vunpack.c.h.b16 %v160
  %v2410 = vunpack.c.l.b16 %v161
  %v2411 = vunpack.c.h.b16 %v161
  %v2412 = vunpack.c.l.b16 %v162
  %v2413 = vunpack.c.h.b16 %v162
  %v2414 = vunpack.c.l.b16 %v163
  %v2415 = vunpack.c.h.b16 %v163
  %v2416 = vunpack.c.l.b16 %v164
  %v2417 = vunpack.c.h.b16 %v164
  %v2418 = vunpack.c.l.b16 %v165
  %v2419 = vunpack.c.h.b16 %v165
  %v2420 = vunpack.c.l.b16 %v166
  %v2421 = vunpack.c.h.b16 %v166
  %v2422 = vunpack.c.l.b16 %v167
  %v2423 = vunpack.c.h.b16 %v167
  %v2424 = vunpack.c.l.b16 %v168
  %v2425 = vunpack.c.h.b16 %v168
  %v2426 = vunpack.c.l.b16 %v169
  %v2427 = vunpack.c.h.b16 %v169
  %v2428 = vunpack.c.l.b16 %v170
  %v2429 = vunpack.c.h.b16 %v170
  %v2430 = vunpack.c.l.b16 %v171
  %v2431 = vunpack.c.h.b16 %v171
  %v2432 = vunpack.c.l.b16 %v172
  %v2433 = vunpack.c.h.b16 %v172
  %v2434 = vunpack.c.l.b16 %v173
  %v2435 = vunpack.c.h.b16 %v173
  %v2436 = vunpack.c.l.b16 %v174
  %v2437 = vunpack.c.h.b16 %v174
  %v2438 = vunpack.c.l.b16 %v175
  %v2439 = vunpack.c.h.b16 %v175
  %v2440 = vunpack.c.l.b16 %v176
  %v2441 = vunpack.c.h.b16 %v176
  %v2442 = vunpack.c.l.b16 %v177
  %v2443 = vunpack.c.h.b16 %v177
  %v2444 = vunpack.c.l.b16 %v178
  %v2445 = vunpack.c.h.b16 %v178
  %v2446 = vunpack.c.l.b16 %v179
  %v2447 = vunpack.c.h.b16 %v179
  %v2448 = vunpack.c.l.b16 %v180
  %v2449 = vunpack.c.h.b16 %v180
  %v2450 = vunpack.c.l.b16 %v181
  %v2451 = vunpack.c.h.b16 %v181
  %v2452 = vunpack.c.l.b16 %v182
  %v2453 = vunpack.c.h.b16 %v182
  %v2454 = vunpack.c.l.b16 %v183
  %v2455 = vunpack.c.h.b16 %v183
  %v2456 = vunpack.c.l.b16 %v184
  %v2457 = vunpack.c.h.b16 %v184
  %v2458 = vunpack.c.l.b16 %v185
  %v2459 = vunpack.c.h.b16 %v185
  %v2460 = vunpack.c.l.b16 %v186
  %v2461 = vunpack.c.h.b16 %v186
  %v2462 = vunpack.c.l.b16 %v187
  %v2463 = vunpack.c.h.b16 %v187
  %v2464 = vunpack.c.l.b16 %v188
  %v2465 = vunpack.c.h.b16 %v188
  %v2466 = vunpack.c.l.b16 %v189
  %v2467 = vunpack.c.h.b16 %v189
  %v2468 = vunpack.c.l.b16 %v190
  %v2469 = vunpack.c.h.b16 %v190
  %v2470 = vunpack.c.l.b16 %v191
  %v2471 = vunpack.c.h.b16 %v191
  %v2472 = vunpack.c.l.b16 %v192
  %v2473 = vunpack.c.h.b16 %v192
  %v2474 = vunpack.c.l.b16 %v193
  %v2475 = vunpack.c.h.b16 %v193
  %v2476 = vunpack.c.l.b16 %v194
  %v2477 = vunpack.c.h.b16 %v194
  %v2478 = vunpack.c.l.b16 %v195
  %v2479 = vunpack.c.h.b16 %v195
  %v2480 = vunpack.c.l.b16 %v196
  %v2481 = vunpack.c.h.b16 %v196
  %v2482 = vunpack.c.l.b16 %v197
  %v2483 = vunpack.c.h.b16 %v197
  %v2484 = vunpack.c.l.b16 %v198
  %v2485 = vunpack.c.h.b16 %v198
  %v2486 = vunpack.c.l.b16 %v199
  %v2487 = vunpack.c.h.b16 %v199
  %v2488 = vunpack.c.l.b16 %v200
  %v2489 = vunpack.c.h.b16 %v200
  %v2490 = vunpack.c.l.b16 %v201
  %v2491 = vunpack.c.h.b16 %v201
  %v2492 = vunpack.c.l.b16 %v202
  %v2493 = vunpack.c.h.b16 %v202
  %v2494 = vunpack.c.l.b16 %v203
  %v2495 = vunpack.c.h.b16 %v203
  %v2496 = vunpack.c.l.b16 %v204
  %v2497 = vunpack.c.h.b16 %v204
  %v2498 = vunpack.c.l.b16 %v205
  %v2499 = vunpack.c.h.b16 %v205
  %v2500 = vunpack.c.l.b16 %v206
  %v2501 = vunpack.c.h.b16 %v206
  %v2502 = vunpack.c.l.b16 %v207
  %v2503 = vunpack.c.h.b16 %v207
  %v2504 = vunpack.c.l.b16 %v208
  %v2505 = vunpack.c.h.b16 %v208
  %v2506 = vunpack.c.l.b16 %v209
  %v2507 = vunpack.c.h.b16 %v209
  %v2508 = vunpack.c.l.b16 %v210
  %v2509 = vunpack.c.h.b16 %v210
  %v2510 = vunpack.c.l.b16 %v211
  %v2511 = vunpack.c.h.b16 %v211
  %v2512 = vunpack.c.l.b16 %v212
  %v2513 = vunpack.c.h.b16 %v212
  %v2514 = vunpack.c.l.b16 %v213
  %v2515 = vunpack.c.h.b16 %v213
  %v2516 = vunpack.c.l.b16 %v214
  %v2517 = vunpack.c.h.b16 %v214
  %v2518 = vunpack.c.l.b16 %v215
  %v2519 = vunpack.c.h.b16 %v215
  %v2520 = vunpack.c.l.b16 %v216
  %v2521 = vunpack.c.h.b16 %v216
  %v2522 = vunpack.c.l.b16 %v217
  %v2523 = vunpack.c.h.b16 %v217
  %v2524 = vunpack.c.l.b16 %v218
  %v2525 = vunpack.c.h.b16 %v218
  %v2526 = vunpack.c.l.b16 %v219
  %v2527 = vunpack.c.h.b16 %v219
  %v2528 = vunpack.c.l.b16 %v220
  %v2529 = vunpack.c.h.b16 %v220
  %v2530 = vunpack.c.l.b16 %v221
  %v2531 = vunpack.c.h.b16 %v221
  %v2532 = vunpack.c.l.b16 %v222
  %v2533 = vunpack.c.h.b16 %v222
  %v2534 = vunpack.c.l.b16 %v223
  %v2535 = vunpack.c.h.b16 %v223
  %v2536 = vunpack.c.l.b16 %v224
  %v2537 = vunpack.c.h.b16 %v224
  %v2538 = vunpack.c.l.b16 %v225
  %v2539 = vunpack.c.h.b16 %v225
  %v2540 = vunpack.c.l.b16 %v226
  %v2541 = vunpack.c.h.b16 %v226
  %v2542 = vunpack.c.l.b16 %v227
  %v2543 = vunpack.c.h.b16 %v227
  %v2544 = vunpack.c.l.b16 %v228
  %v2545 = vunpack.c.h.b16 %v228
  %v2546 = vunpack.c.l.b16 %v229
  %v2547 = vunpack.c.h.b16 %v229
  %v2548 = vunpack.c.l.b16 %v230
  %v2549 = vunpack.c.h.b16 %v230
  %v2550 = vunpack.c.l.b16 %v231
  %v2551 = vunpack.c.h.b16 %v231
  %v2552 = vunpack.c.l.b16 %v232
  %v2553 = vunpack.c.h.b16 %v232
  %v2554 = vunpack.c.l.b16 %v233
  %v2555 = vunpack.c.h.b16 %v233
  %v2556 = vunpack.c.l.b16 %v234
  %v2557 = vunpack.c.h.b16 %v234
  %v2558 = vunpack.c.l.b16 %v235
  %v2559 = vunpack.c.h.b16 %v235
  %v2560 = vunpack.c.l.b16 %v236
  %v2561 = vunpack.c.h.b16 %v236
  %v2562 = vunpack.c.l.b16 %v237
  %v2563 = vunpack.c.h.b16 %v237
  %v2564 = vunpack.c.l.b16 %v238
  %v2565 = vunpack.c.h.b16 %v238
  %v2566 = vunpack.c.l.b16 %v239
  %v2567 = vunpack.c.h.b16 %v239
  %v2568 = vunpack.c.l.b16 %v240
  %v2569 = vunpack.c.h.b16 %v240
  %v2570 = vunpack.c.l.b16 %v241
  %v2571 = vunpack.c.h.b16 %v241
  %v2572 = vunpack.c.l.b16 %v242
  %v2573 = vunpack.c.h.b16 %v242
  %v2574 = vunpack.c.l.b16 %v243
  %v2575 = vunpack.c.h.b16 %v243
  %v2576 = vunpack.c.l.b16 %v244
  %v2577 = vunpack.c.h.b16 %v244
  %v2578 = vunpack.c.l.b16 %v245
  %v2579 = vunpack.c.h.b16 %v245
  %v2580 = vunpack.c.l.b16 %v246
  %v2581 = vunpack.c.h.b16 %v246
  %v2582 = vunpack.c.l.b16 %v247
  %v2583 = vunpack.c.h.b16 %v247
  %v2584 = vunpack.c.l.b16 %v248
  %v2585 = vunpack.c.h.b16 %v248
  %v2586 = vunpack.c.l.b16 %v249
  %v2587 = vunpack.c.h.b16 %v249
  %v2588 = vunpack.c.l.b16 %v250
  %v2589 = vunpack.c.h.b16 %v250
  %v2590 = vunpack.c.l.b16 %v251
  %v2591 = vunpack.c.h.b16 %v251
  %v2592 = vunpack.c.l.b16 %v252
  %v2593 = vunpack.c.h.b16 %v252
  %v2594 = vunpack.c.l.b16 %v253
  %v2595 = vunpack.c.h.b16 %v253
  %v2596 = vunpack.c.l.b16 %v254
  %v2597 = vunpack.c.h.b16 %v254
  %v2598 = vunpack.c.l.b16 %v255
  %v2599 = vunpack.c.h.b16 %v255
  %v2600 = vunpack.c.l.b16 %v256
  %v2601 = vunpack.c.h.b16 %v256
  %v2602 = vunpack.c.l.b16 %v257
  %v2603 = vunpack.c.h.b16 %v257
  %v2604 = vunpack.c.l.b16 %v258
  %v2605 = vunpack.c.h.b16 %v258
  %v2606 = vunpack.c.l.b16 %v259
  %v2607 = vunpack.c.h.b16 %v259
  %v2608 = vunpack.c.l.b16 %v260
  %v2609 = vunpack.c.h.b16 %v260
  %v2610 = vunpack.c.l.b16 %v261
  %v2611 = vunpack.c.h.b16 %v261
  %v2612 = vunpack.c.l.b16 %v262
  %v2613 = vunpack.c.h.b16 %v262
  %v2614 = vunpack.c.l.b16 %v263
  %v2615 = vunpack.c.h.b16 %v263
  %v2616 = vunpack.c.l.b16 %v264
  %v2617 = vunpack.c.h.b16 %v264
  %v2618 = vunpack.c.l.b16 %v265
  %v2619 = vunpack.c.h.b16 %v265
  %v2620 = vunpack.c.l.b16 %v266
  %v2621 = vunpack.c.h.b16 %v266
  %v2622 = vunpack.c.l.b16 %v267
  %v2623 = vunpack.c.h.b16 %v267
  %v2624 = vunpack.c.l.b16 %v268
  %v2625 = vunpack.c.h.b16 %v268
  %v2626 = vunpack.c.l.b16 %v269
  %v2627 = vunpack.c.h.b16 %v269
  %v2628 = vunpack.c.l.b16 %v270
  %v2629 = vunpack.c.h.b16 %v270
  %v2630 = vunpack.c.l.b16 %v271
  %v2631 = vunpack.c.h.b16 %v271
  %v2632 = vunpack.c.l.b16 %v272
  %v2633 = vunpack.c.h.b16 %v272
  %v2634 = vunpack.c.l.b16 %v273
  %v2635 = vunpack.c.h.b16 %v273
  %v2636 = vunpack.c.l.b16 %v274
  %v2637 = vunpack.c.h.b16 %v274
  %v2638 = vunpack.c.l.b16 %v275
  %v2639 = vunpack.c.h.b16 %v275
  %v2640 = vunpack.c.l.b16 %v276
  %v2641 = vunpack.c.h.b16 %v276
  %v2642 = vunpack.c.l.b16 %v277
  %v2643 = vunpack.c.h.b16 %v277
  %v2644 = vunpack.c.l.b16 %v278
  %v2645 = vunpack.c.h.b16 %v278
  %v2646 = vunpack.c.l.b16 %v279
  %v2647 = vunpack.c.h.b16 %v279
  %v2648 = vunpack.c.l.b16 %v280
  %v2649 = vunpack.c.h.b16 %v280
  %v2650 = vunpack.c.l.b16 %v281
  %v2651 = vunpack.c.h.b16 %v281
  %v2652 = vunpack.c.l.b16 %v282
  %v2653 = vunpack.c.h.b16 %v282
  %v2654 = vunpack.c.l.b16 %v283
  %v2655 = vunpack.c.h.b16 %v283
  %v2656 = vunpack.c.l.b16 %v284
  %v2657 = vunpack.c.h.b16 %v284
  %v2658 = vunpack.c.l.b16 %v285
  %v2659 = vunpack.c.h.b16 %v285
  %v2660 = vunpack.c.l.b16 %v286
  %v2661 = vunpack.c.h.b16 %v286
  %v2662 = vunpack.c.l.b16 %v287
  %v2663 = vunpack.c.h.b16 %v287
  %v2664 = vunpack.c.l.b16 %v288
  %v2665 = vunpack.c.h.b16 %v288
  %v2666 = vunpack.c.l.b16 %v289
  %v2667 = vunpack.c.h.b16 %v289
  %v2668 = vunpack.c.l.b16 %v290
  %v2669 = vunpack.c.h.b16 %v290
  %v2670 = vunpack.c.l.b16 %v291
  %v2671 = vunpack.c.h.b16 %v291
  %v2672 = vunpack.c.l.b16 %v292
  %v2673 = vunpack.c.h.b16 %v292
  %v2674 = vunpack.c.l.b16 %v293
  %v2675 = vunpack.c.h.b16 %v293
  %v2676 = vunpack.c.l.b16 %v294
  %v2677 = vunpack.c.h.b16 %v294
  %v2678 = vunpack.c.l.b16 %v295
  %v2679 = vunpack.c.h.b16 %v295
  %v2680 = vunpack.c.l.b16 %v296
  %v2681 = vunpack.c.h.b16 %v296
  %v2682 = vunpack.c.l.b16 %v297
  %v2683 = vunpack.c.h.b16 %v297
  %v2684 = vunpack.c.l.b16 %v298
  %v2685 = vunpack.c.h.b16 %v298
  %v2686 = vunpack.c.l.b16 %v299
  %v2687 = vunpack.c.h.b16 %v299
  %v2688 = vunpack.c.l.b16 %v300
  %v2689 = vunpack.c.h.b16 %v300
  %v2690 = vunpack.c.l.b16 %v301
  %v2691 = vunpack.c.h.b16 %v301
  %v2692 = vunpack.c.l.b16 %v302
  %v2693 = vunpack.c.h.b16 %v302
  %v2694 = vunpack.c.l.b16 %v303
  %v2695 = vunpack.c.h.b16 %v303
  %v2696 = vunpack.c.l.b16 %v304
  %v2697 = vunpack.c.h.b16 %v304
  %v2698 = vunpack.c.l.b16 %v305
  %v2699 = vunpack.c.h.b16 %v305
  %v2700 = vunpack.c.l.b16 %v306
  %v2701 = vunpack.c.h.b16 %v306
  %v2702 = vunpack.c.l.b16 %v307
  %v2703 = vunpack.c.h.b16 %v307
  %v2704 = vunpack.c.l.b16 %v308
  %v2705 = vunpack.c.h.b16 %v308
  %v2706 = vunpack.c.l.b16 %v309
  %v2707 = vunpack.c.h.b16 %v309
  %v2708 = vunpack.c.l.b16 %v310
  %v2709 = vunpack.c.h.b16 %v310
  %v2710 = vunpack.c.l.b16 %v311
  %v2711 = vunpack.c.h.b16 %v311
  %v2712 = vunpack.c.l.b16 %v312
  %v2713 = vunpack.c.h.b16 %v312
  %v2714 = vunpack.c.l.b16 %v313
  %v2715 = vunpack.c.h.b16 %v313
  %v2716 = vunpack.c.l.b16 %v314
  %v2717 = vunpack.c.h.b16 %v314
  %v2718 = vunpack.c.l.b16 %v315
  %v2719 = vunpack.c.h.b16 %v315
  %v2720 = vunpack.c.l.b16 %v316
  %v2721 = vunpack.c.h.b16 %v316
  %v2722 = vunpack.c.l.b16 %v317
  %v2723 = vunpack.c.h.b16 %v317
  %v2724 = vunpack.c.l.b16 %v318
  %v2725 = vunpack.c.h.b16 %v318
  %v2726 = vunpack.c.l.b16 %v319
  %v2727 = vunpack.c.h.b16 %v319
  %v2728 = vunpack.c.l.b16 %v320
  %v2729 = vunpack.c.h.b16 %v320
  %v2730 = vunpack.c.l.b16 %v321
  %v2731 = vunpack.c.h.b16 %v321
  %v2732 = vunpack.c.l.b16 %v322
  %v2733 = vunpack.c.h.b16 %v322
  %v2734 = vunpack.c.l.b16 %v323
  %v2735 = vunpack.c.h.b16 %v323
  %v2736 = vunpack.c.l.b16 %v324
  %v2737 = vunpack.c.h.b16 %v324
  %v2738 = vunpack.c.l.b16 %v325
  %v2739 = vunpack.c.h.b16 %v325
  %v2740 = vunpack.c.l.b16 %v326
  %v2741 = vunpack.c.h.b16 %v326
  %v2742 = vunpack.c.l.b16 %v327
  %v2743 = vunpack.c.h.b16 %v327
  %v2744 = vunpack.c.l.b16 %v328
  %v2745 = vunpack.c.h.b16 %v328
  %v2746 = vunpack.c.l.b16 %v329
  %v2747 = vunpack.c.h.b16 %v329
  %v2748 = vunpack.c.l.b16 %v330
  %v2749 = vunpack.c.h.b16 %v330
  %v2750 = vunpack.c.l.b16 %v331
  %v2751 = vunpack.c.h.b16 %v331
  %v2752 = vunpack.c.l.b16 %v332
  %v2753 = vunpack.c.h.b16 %v332
  %v2754 = vunpack.c.l.b16 %v333
  %v2755 = vunpack.c.h.b16 %v333
  %v2756 = vunpack.c.l.b16 %v334
  %v2757 = vunpack.c.h.b16 %v334
  %v2758 = vunpack.c.l.b16 %v335
  %v2759 = vunpack.c.h.b16 %v335
  %v2760 = vunpack.c.l.b16 %v336
  %v2761 = vunpack.c.h.b16 %v336
  %v2762 = vunpack.c.l.b16 %v337
  %v2763 = vunpack.c.h.b16 %v337
  %v2764 = vunpack.c.l.b16 %v338
  %v2765 = vunpack.c.h.b16 %v338
  %v2766 = vunpack.c.l.b16 %v339
  %v2767 = vunpack.c.h.b16 %v339
  %v2768 = vunpack.c.l.b16 %v340
  %v2769 = vunpack.c.h.b16 %v340
  %v2770 = vunpack.c.l.b16 %v341
  %v2771 = vunpack.c.h.b16 %v341
  %v2772 = vunpack.c.l.b16 %v342
  %v2773 = vunpack.c.h.b16 %v342
  %v2774 = vunpack.c.l.b16 %v343
  %v2775 = vunpack.c.h.b16 %v343
  %v2776 = vunpack.c.l.b16 %v344
  %v2777 = vunpack.c.h.b16 %v344
  %v2778 = vunpack.c.l.b16 %v345
  %v2779 = vunpack.c.h.b16 %v345
  %v2780 = vunpack.c.l.b16 %v346
  %v2781 = vunpack.c.h.b16 %v346
  %v2782 = vunpack.c.l.b16 %v347
  %v2783 = vunpack.c.h.b16 %v347
  %v2784 = vunpack.c.l.b16 %v348
  %v2785 = vunpack.c.h.b16 %v348
  %v2786 = vunpack.c.l.b16 %v349
  %v2787 = vunpack.c.h.b16 %v349
  %v2788 = vunpack.c.l.b16 %v350
  %v2789 = vunpack.c.h.b16 %v350
  %v2790 = vunpack.c.l.b16 %v351
  %v2791 = vunpack.c.h.b16 %v351
  %v2792 = vunpack.c.l.b16 %v352
  %v2793 = vunpack.c.h.b16 %v352
  %v2794 = vunpack.c.l.b16 %v353
  %v2795 = vunpack.c.h.b16 %v353
  %v2796 = vunpack.c.l.b16 %v354
  %v2797 = vunpack.c.h.b16 %v354
  %v2798 = vunpack.c.l.b16 %v355
  %v2799 = vunpack.c.h.b16 %v355
  %v2800 = vunpack.c.l.b16 %v356
  %v2801 = vunpack.c.h.b16 %v356
  %v2802 = vunpack.c.l.b16 %v357
  %v2803 = vunpack.c.h.b16 %v357
  %v2804 = vunpack.c.l.b16 %v358
  %v2805 = vunpack.c.h.b16 %v358
  %v2806 = vunpack.c.l.b16 %v359
  %v2807 = vunpack.c.h.b16 %v359
  %v2808 = vunpack.c.l.b16 %v360
  %v2809 = vunpack.c.h.b16 %v360
  %v2810 = vunpack.c.l.b16 %v361
  %v2811 = vunpack.c.h.b16 %v361
  %v2812 = vunpack.c.l.b16 %v362
  %v2813 = vunpack.c.h.b16 %v362
  %v2814 = vunpack.c.l.b16 %v363
  %v2815 = vunpack.c.h.b16 %v363
  %v2816 = vunpack.c.l.b16 %v364
  %v2817 = vunpack.c.h.b16 %v364
  %v2818 = vunpack.c.l.b16 %v365
  %v2819 = vunpack.c.h.b16 %v365
  %v2820 = vunpack.c.l.b16 %v366
  %v2821 = vunpack.c.h.b16 %v366
  %v2822 = vunpack.c.l.b16 %v367
  %v2823 = vunpack.c.h.b16 %v367
  %v2824 = vunpack.c.l.b16 %v368
  %v2825 = vunpack.c.h.b16 %v368
  %v2826 = vunpack.c.l.b16 %v369
  %v2827 = vunpack.c.h.b16 %v369
  %v2828 = vunpack.c.l.b16 %v370
  %v2829 = vunpack.c.h.b16 %v370
  %v2830 = vunpack.c.l.b16 %v371
  %v2831 = vunpack.c.h.b16 %v371
  %v2832 = vunpack.c.l.b16 %v372
  %v2833 = vunpack.c.h.b16 %v372
  %v2834 = vunpack.c.l.b16 %v373
  %v2835 = vunpack.c.h.b16 %v373
  %v2836 = vunpack.c.l.b16 %v374
  %v2837 = vunpack.c.h.b16 %v374
  %v2838 = vunpack.c.l.b16 %v375
  %v2839 = vunpack.c.h.b16 %v375
  %v2840 = vunpack.c.l.b16 %v376
  %v2841 = vunpack.c.h.b16 %v376
  %v2842 = vunpack.c.l.b16 %v377
  %v2843 = vunpack.c.h.b16 %v377
  %v2844 = vunpack.c.l.b16 %v378
  %v2845 = vunpack.c.h.b16 %v378
  %v2846 = vunpack.c.l.b16 %v379
  %v2847 = vunpack.c.h.b16 %v379
  %v2848 = vunpack.c.l.b16 %v380
  %v2849 = vunpack.c.h.b16 %v380
  %v2850 = vunpack.c.l.b16 %v381
  %v2851 = vunpack.c.h.b16 %v381
  %v2852 = vunpack.c.l.b16 %v382
  %v2853 = vunpack.c.h.b16 %v382
  %v2854 = vunpack.c.l.b16 %v383
  %v2855 = vunpack.c.h.b16 %v383
  %v2856 = vunpack.c.l.b16 %v384
  %v2857 = vunpack.c.h.b16 %v384
  %v2858 = vunpack.c.l.b16 %v385
  %v2859 = vunpack.c.h.b16 %v385
  %v2860 = vunpack.c.l.b16 %v386
  %v2861 = vunpack.c.h.b16 %v386
  %v2862 = vunpack.c.l.b16 %v387
  %v2863 = vunpack.c.h.b16 %v387
  %v2864 = vunpack.c.l.b16 %v388
  %v2865 = vunpack.c.h.b16 %v388
  %v2866 = vunpack.c.l.b16 %v389
  %v2867 = vunpack.c.h.b16 %v389
  %v2868 = vunpack.c.l.b16 %v390
  %v2869 = vunpack.c.h.b16 %v390
  %v2870 = vunpack.c.l.b16 %v391
  %v2871 = vunpack.c.h.b16 %v391
  %v2872 = vunpack.c.l.b16 %v392
  %v2873 = vunpack.c.h.b16 %v392
  %v2874 = vunpack.c.l.b16 %v393
  %v2875 = vunpack.c.h.b16 %v393
  %v2876 = vunpack.c.l.b16 %v394
  %v2877 = vunpack.c.h.b16 %v394
  %v2878 = vunpack.c.l.b16 %v395
  %v2879 = vunpack.c.h.b16 %v395
  %v2880 = vunpack.c.l.b16 %v396
  %v2881 = vunpack.c.h.b16 %v396
  %v2882 = vunpack.c.l.b16 %v397
  %v2883 = vunpack.c.h.b16 %v397
  %v2884 = vunpack.c.l.b16 %v398
  %v2885 = vunpack.c.h.b16 %v398
  %v2886 = vunpack.c.l.b16 %v399
  %v2887 = vunpack.c.h.b16 %v399
  %v2888 = vunpack.c.l.b16 %v400
  %v2889 = vunpack.c.h.b16 %v400
  %v2890 = vunpack.c.l.b16 %v401
  %v2891 = vunpack.c.h.b16 %v401
  %v2892 = vunpack.c.l.b16 %v402
  %v2893 = vunpack.c.h.b16 %v402
  %v2894 = vunpack.c.l.b16 %v403
  %v2895 = vunpack.c.h.b16 %v403
  %v2896 = vunpack.c.l.b16 %v404
  %v2897 = vunpack.c.h.b16 %v404
  %v2898 = vunpack.c.l.b16 %v405
  %v2899 = vunpack.c.h.b16 %v405
  %v2900 = vunpack.c.l.b16 %v406
  %v2901 = vunpack.c.h.b16 %v406
  %v2902 = vunpack.c.l.b16 %v407
  %v2903 = vunpack.c.h.b16 %v407
  %v2904 = vunpack.c.l.b16 %v408
  %v2905 = vunpack.c.h.b16 %v408
  %v2906 = vunpack.c.l.b16 %v409
  %v2907 = vunpack.c.h.b16 %v409
  %v2908 = vunpack.c.l.b16 %v410
  %v2909 = vunpack.c.h.b16 %v410
  %v2910 = vunpack.c.l.b16 %v411
  %v2911 = vunpack.c.h.b16 %v411
  %v2912 = vunpack.c.l.b16 %v412
  %v2913 = vunpack.c.h.b16 %v412
  %v2914 = vunpack.c.l.b16 %v413
  %v2915 = vunpack.c.h.b16 %v413
  %v2916 = vunpack.c.l.b16 %v414
  %v2917 = vunpack.c.h.b16 %v414
  %v2918 = vunpack.c.l.b16 %v415
  %v2919 = vunpack.c.h.b16 %v415
  %v2920 = vunpack.c.l.b16 %v416
  %v2921 = vunpack.c.h.b16 %v416
  %v2922 = vunpack.c.l.b16 %v417
  %v2923 = vunpack.c.h.b16 %v417
  %v2924 = vunpack.c.l.b16 %v418
  %v2925 = vunpack.c.h.b16 %v418
  %v2926 = vunpack.c.l.b16 %v419
  %v2927 = vunpack.c.h.b16 %v419
  %v2928 = vunpack.c.l.b16 %v420
  %v2929 = vunpack.c.h.b16 %v420
  %v2930 = vunpack.c.l.b16 %v421
  %v2931 = vunpack.c.h.b16 %v421
  %v2932 = vunpack.c.l.b16 %v422
  %v2933 = vunpack.c.h.b16 %v422
  %v2934 = vunpack.c.l.b16 %v423
  %v2935 = vunpack.c.h.b16 %v423
  %v2936 = vunpack.c.l.b16 %v424
  %v2937 = vunpack.c.h.b16 %v424
  %v2938 = vunpack.c.l.b16 %v425
  %v2939 = vunpack.c.h.b16 %v425
  %v2940 = vunpack.c.l.b16 %v426
  %v2941 = vunpack.c.h.b16 %v426
  %v2942 = vunpack.c.l.b16 %v427
  %v2943 = vunpack.c.h.b16 %v427
  %v2944 = vunpack.c.l.b16 %v428
  %v2945 = vunpack.c.h.b16 %v428
  %v2946 = vunpack.c.l.b16 %v429
  %v2947 = vunpack.c.h.b16 %v429
  %v2948 = vunpack.c.l.b16 %v430
  %v2949 = vunpack.c.h.b16 %v430
  %v2950 = vunpack.c.l.b16 %v431
  %v2951 = vunpack.c.h.b16 %v431
  %v2952 = vunpack.c.l.b16 %v432
  %v2953 = vunpack.c.h.b16 %v432
  %v2954 = vunpack.c.l.b16 %v433
  %v2955 = vunpack.c.h.b16 %v433
  %v2956 = vunpack.c.l.b16 %v434
  %v2957 = vunpack.c.h.b16 %v434
  %v2958 = vunpack.c.l.b16 %v435
  %v2959 = vunpack.c.h.b16 %v435
  %v2960 = vunpack.c.l.b16 %v436
  %v2961 = vunpack.c.h.b16 %v436
  %v2962 = vunpack.c.l.b16 %v437
  %v2963 = vunpack.c.h.b16 %v437
  %v2964 = vunpack.c.l.b16 %v438
  %v2965 = vunpack.c.h.b16 %v438
  %v2966 = vunpack.c.l.b16 %v439
  %v2967 = vunpack.c.h.b16 %v439
  %v2968 = vunpack.c.l.b16 %v440
  %v2969 = vunpack.c.h.b16 %v440
  %v2970 = vunpack.c.l.b16 %v441
  %v2971 = vunpack.c.h.b16 %v441
  %v2972 = vunpack.c.l.b16 %v442
  %v2973 = vunpack.c.h.b16 %v442
  %v2974 = vunpack.c.l.b16 %v443
  %v2975 = vunpack.c.h.b16 %v443
  %v2976 = vunpack.c.l.b16 %v444
  %v2977 = vunpack.c.h.b16 %v444
  %v2978 = vunpack.c.l.b16 %v445
  %v2979 = vunpack.c.h.b16 %v445
  %v2980 = vunpack.c.l.b16 %v446
  %v2981 = vunpack.c.h.b16 %v446
  %v2982 = vunpack.c.l.b16 %v447
  %v2983 = vunpack.c.h.b16 %v447
  %v2984 = vunpack.c.l.b16 %v448
  %v2985 = vunpack.c.h.b16 %v448
  %v2986 = vunpack.c.l.b16 %v449
  %v2987 = vunpack.c.h.b16 %v449
  %v2988 = vunpack.c.l.b16 %v450
  %v2989 = vunpack.c.h.b16 %v450
  %v2990 = vunpack.c.l.b16 %v451
  %v2991 = vunpack.c.h.b16 %v451
  %v2992 = vunpack.c.l.b16 %v452
  %v2993 = vunpack.c.h.b16 %v452
  %v2994 = vunpack.c.l.b16 %v453
  %v2995 = vunpack.c.h.b16 %v453
  %v2996 = vunpack.c.l.b16 %v454
  %v2997 = vunpack.c.h.b16 %v454
  %v2998 = vunpack.c.l.b16 %v455
  %v2999 = vunpack.c.h.b16 %v455
  %v3000 = vunpack.c.l.b16 %v456
  %v3001 = vunpack.c.h.b16 %v456
  %v3002 = vunpack.c.l.b16 %v457
  %v3003 = vunpack.c.h.b16 %v457
  %v3004 = vunpack.c.l.b16 %v458
  %v3005 = vunpack.c.h.b16 %v458
  %v3006 = vunpack.c.l.b16 %v459
  %v3007 = vunpack.c.h.b16 %v459
  %v3008 = vunpack.c.l.b16 %v460
  %v3009 = vunpack.c.h.b16 %v460
  %v3010 = vunpack.c.l.b16 %v461
  %v3011 = vunpack.c.h.b16 %v461
  %v3012 = vunpack.c.l.b16 %v462
  %v3013 = vunpack.c.h.b16 %v462
  %v3014 = vunpack.c.l.b16 %v463
  %v3015 = vunpack.c.h.b16 %v463
  %v3016 = vunpack.c.l.b16 %v464
  %v3017 = vunpack.c.h.b16 %v464
  %v3018 = vunpack.c.l.b16 %v465
  %v3019 = vunpack.c.h.b16 %v465
  %v3020 = vunpack.c.l.b16 %v466
  %v3021 = vunpack.c.h.b16 %v466
  %v3022 = vunpack.c.l.b16 %v467
  %v3023 = vunpack.c.h.b16 %v467
  %v3024 = vunpack.c.l.b16 %v468
  %v3025 = vunpack.c.h.b16 %v468
  %v3026 = vunpack.c.l.b16 %v469
  %v3027 = vunpack.c.h.b16 %v469
  %v3028 = vunpack.c.l.b16 %v470
  %v3029 = vunpack.c.h.b16 %v470
  %v3030 = vunpack.c.l.b16 %v471
  %v3031 = vunpack.c.h.b16 %v471
  %v3032 = vunpack.c.l.b16 %v472
  %v3033 = vunpack.c.h.b16 %v472
  %v3034 = vunpack.c.l.b16 %v473
  %v3035 = vunpack.c.h.b16 %v473
  %v3036 = vunpack.c.l.b16 %v474
  %v3037 = vunpack.c.h.b16 %v474
  %v3038 = vunpack.c.l.b16 %v475
  %v3039 = vunpack.c.h.b16 %v475
  %v3040 = vunpack.c.l.b16 %v476
  %v3041 = vunpack.c.h.b16 %v476
  %v3042 = vunpack.c.l.b16 %v477
  %v3043 = vunpack.c.h.b16 %v477
  %v3044 = vunpack.c.l.b16 %v478
  %v3045 = vunpack.c.h.b16 %v478
  %v3046 = vunpack.c.l.b16 %v479
  %v3047 = vunpack.c.h.b16 %v479
  %v3048 = vunpack.c.l.b16 %v480
  %v3049 = vunpack.c.h.b16 %v480
  %v3050 = vunpack.c.l.b16 %v481
  %v3051 = vunpack.c.h.b16 %v481
  %v3052 = vunpack.c.l.b16 %v482
  %v3053 = vunpack.c.h.b16 %v482
  %v3054 = vunpack.c.l.b16 %v483
  %v3055 = vunpack.c.h.b16 %v483
  %v3056 = vunpack.c.l.b16 %v484
  %v3057 = vunpack.c.h.b16 %v484
  %v3058 = vunpack.c.l.b16 %v485
  %v3059 = vunpack.c.h.b16 %v485
  %v3060 = vunpack.c.l.b16 %v486
  %v3061 = vunpack.c.h.b16 %v486
  %v3062 = vunpack.c.l.b16 %v487
  %v3063 = vunpack.c.h.b16 %v487
  %v3064 = vunpack.c.l.b16 %v488
  %v3065 = vunpack.c.h.b16 %v488
  %v3066 = vunpack.c.l.b16 %v489
  %v3067 = vunpack.c.h.b16 %v489
  %v3068 = vunpack.c.l.b16 %v490
  %v3069 = vunpack.c.h.b16 %v490
  %v3070 = vunpack.c.l.b16 %v491
  %v3071 = vunpack.c.h.b16 %v491
  %v3072 = vunpack.c.l.b16 %v492
  %v3073 = vunpack.c.h.b16 %v492
  %v3074 = vunpack.c.l.b16 %v493
  %v3075 = vunpack.c.h.b16 %v493
  %v3076 = vunpack.c.l.b16 %v494
  %v3077 = vunpack.c.h.b16 %v494
  %v3078 = vunpack.c.l.b16 %v495
  %v3079 = vunpack.c.h.b16 %v495
  %v3080 = vunpack.c.l.b16 %v496
  %v3081 = vunpack.c.h.b16 %v496
  %v3082 = vunpack.c.l.b16 %v497
  %v3083 = vunpack.c.h.b16 %v497
  %v3084 = vunpack.c.l.b16 %v498
  %v3085 = vunpack.c.h.b16 %v498
  %v3086 = vunpack.c.l.b16 %v499
  %v3087 = vunpack.c.h.b16 %v499
  %v3088 = vunpack.c.l.b16 %v500
  %v3089 = vunpack.c.h.b16 %v500
  %v3090 = vunpack.c.l.b16 %v501
  %v3091 = vunpack.c.h.b16 %v501
  %v3092 = vunpack.c.l.b16 %v502
  %v3093 = vunpack.c.h.b16 %v502
  %v3094 = vunpack.c.l.b16 %v503
  %v3095 = vunpack.c.h.b16 %v503
  %v3096 = vunpack.c.l.b16 %v504
  %v3097 = vunpack.c.h.b16 %v504
  %v3098 = vunpack.c.l.b16 %v505
  %v3099 = vunpack.c.h.b16 %v505
  %v3100 = vunpack.c.l.b16 %v506
  %v3101 = vunpack.c.h.b16 %v506
  %v3102 = vunpack.c.l.b16 %v507
  %v3103 = vunpack.c.h.b16 %v507
  %v3104 = vunpack.c.l.b16 %v508
  %v3105 = vunpack.c.h.b16 %v508
  %v3106 = vunpack.c.l.b16 %v509
  %v3107 = vunpack.c.h.b16 %v509
  %v3108 = vunpack.c.l.b16 %v510
  %v3109 = vunpack.c.h.b16 %v510
  %v3110 = vunpack.c.l.b16 %v511
  %v3111 = vunpack.c.h.b16 %v511
  %v3112 = vunpack.c.l.b16 %v512
  %v3113 = vunpack.c.h.b16 %v512
  %v3114 = vunpack.c.l.b16 %v513
  %v3115 = vunpack.c.h.b16 %v513
  %v3116 = vunpack.c.l.b16 %v514
  %v3117 = vunpack.c.h.b16 %v514
  %v3118 = vunpack.c.l.b16 %v515
  %v3119 = vunpack.c.h.b16 %v515
  %v3120 = vunpack.c.l.b16 %v516
  %v3121 = vunpack.c.h.b16 %v516
  %v3122 = vunpack.c.l.b16 %v517
  %v3123 = vunpack.c.h.b16 %v517
  %v3124 = vunpack.c.l.b16 %v518
  %v3125 = vunpack.c.h.b16 %v518
  %v3126 = vunpack.c.l.b16 %v519
  %v3127 = vunpack.c.h.b16 %v519
  %v3128 = vunpack.c.l.b16 %v520
  %v3129 = vunpack.c.h.b16 %v520
  %v3130 = vunpack.c.l.b16 %v521
  %v3131 = vunpack.c.h.b16 %v521
  %v3132 = vunpack.c.l.b16 %v522
  %v3133 = vunpack.c.h.b16 %v522
  %v3134 = vunpack.c.l.b16 %v523
  %v3135 = vunpack.c.h.b16 %v523
  %v3136 = vunpack.c.l.b16 %v524
  %v3137 = vunpack.c.h.b16 %v524
  %v3138 = vunpack.c.l.b16 %v525
  %v3139 = vunpack.c.h.b16 %v525
  %v3140 = vunpack.c.l.b16 %v526
  %v3141 = vunpack.c.h.b16 %v526
  %v3142 = vunpack.c.l.b16 %v527
  %v3143 = vunpack.c.h.b16 %v527
  %v3144 = vunpack.c.l.b16 %v528
  %v3145 = vunpack.c.h.b16 %v528
  %v3146 = vunpack.c.l.b16 %v529
  %v3147 = vunpack.c.h.b16 %v529
  %v3148 = vunpack.c.l.b16 %v530
  %v3149 = vunpack.c.h.b16 %v530
  %v3150 = vunpack.c.l.b16 %v531
  %v3151 = vunpack.c.h.b16 %v531
  %v3152 = vunpack.c.l.b16 %v532
  %v3153 = vunpack.c.h.b16 %v532
  %v3154 = vunpack.c.l.b16 %v533
  %v3155 = vunpack.c.h.b16 %v533
  %v3156 = vunpack.c.l.b16 %v534
  %v3157 = vunpack.c.h.b16 %v534
  %v3158 = vunpack.c.l.b16 %v535
  %v3159 = vunpack.c.h.b16 %v535
  %v3160 = vunpack.c.l.b16 %v536
  %v3161 = vunpack.c.h.b16 %v536
  %v3162 = vunpack.c.l.b16 %v537
  %v3163 = vunpack.c.h.b16 %v537
  %v3164 = vunpack.c.l.b16 %v538
  %v3165 = vunpack.c.h.b16 %v538
  %v3166 = vunpack.c.l.b16 %v539
  %v3167 = vunpack.c.h.b16 %v539
  %v3168 = vunpack.c.l.b16 %v540
  %v3169 = vunpack.c.h.b16 %v540
  %v3170 = vunpack.c.l.b16 %v541
  %v3171 = vunpack.c.h.b16 %v541
  %v3172 = vunpack.c.l.b16 %v542
  %v3173 = vunpack.c.h.b16 %v542
  %v3174 = vunpack.c.l.b16 %v543
  %v3175 = vunpack.c.h.b16 %v543
  %v3176 = vunpack.c.l.b16 %v544
  %v3177 = vunpack.c.h.b16 %v544
  %v3178 = vunpack.c.l.b16 %v545
  %v3179 = vunpack.c.h.b16 %v545
  %v3180 = vunpack.c.l.b16 %v546
  %v3181 = vunpack.c.h.b16 %v546
  %v3182 = vunpack.c.l.b16 %v547
  %v3183 = vunpack.c.h.b16 %v547
  %v3184 = vunpack.c.l.b16 %v548
  %v3185 = vunpack.c.h.b16 %v548
  %v3186 = vunpack.c.l.b16 %v549
  %v3187 = vunpack.c.h.b16 %v549
  %v3188 = vunpack.c.l.b16 %v550
  %v3189 = vunpack.c.h.b16 %v550
  %v3190 = vunpack.c.l.b16 %v551
  %v3191 = vunpack.c.h.b16 %v551
  %v3192 = vunpack.c.l.b16 %v552
  %v3193 = vunpack.c.h.b16 %v552
  %v3194 = vunpack.c.l.b16 %v553
  %v3195 = vunpack.c.h.b16 %v553
  %v3196 = vunpack.c.l.b16 %v554
  %v3197 = vunpack.c.h.b16 %v554
  %v3198 = vunpack.c.l.b16 %v555
  %v3199 = vunpack.c.h.b16 %v555
  %v3200 = vunpack.c.l.b16 %v556
  %v3201 = vunpack.c.h.b16 %v556
  %v3202 = vunpack.c.l.b16 %v557
  %v3203 = vunpack.c.h.b16 %v557
  %v3204 = vunpack.c.l.b16 %v558
  %v3205 = vunpack.c.h.b16 %v558
  %v3206 = vunpack.c.l.b16 %v559
  %v3207 = vunpack.c.h.b16 %v559
  %v3208 = vunpack.c.l.b16 %v560
  %v3209 = vunpack.c.h.b16 %v560
  %v3210 = vunpack.c.l.b16 %v561
  %v3211 = vunpack.c.h.b16 %v561
  %v3212 = vunpack.c.l.b16 %v562
  %v3213 = vunpack.c.h.b16 %v562
  %v3214 = vunpack.c.l.b16 %v563
  %v3215 = vunpack.c.h.b16 %v563
  %v3216 = vunpack.c.l.b16 %v564
  %v3217 = vunpack.c.h.b16 %v564
  %v3218 = vunpack.c.l.b16 %v565
  %v3219 = vunpack.c.h.b16 %v565
  %v3220 = vunpack.c.l.b16 %v566
  %v3221 = vunpack.c.h.b16 %v566
  %v3222 = vunpack.c.l.b16 %v567
  %v3223 = vunpack.c.h.b16 %v567
  %v3224 = vunpack.c.l.b16 %v568
  %v3225 = vunpack.c.h.b16 %v568
  %v3226 = vunpack.c.l.b16 %v569
  %v3227 = vunpack.c.h.b16 %v569
  %v3228 = vunpack.c.l.b16 %v570
  %v3229 = vunpack.c.h.b16 %v570
  %v3230 = vunpack.c.l.b16 %v571
  %v3231 = vunpack.c.h.b16 %v571
  %v3232 = vunpack.c.l.b16 %v572
  %v3233 = vunpack.c.h.b16 %v572
  %v3234 = vunpack.c.l.b16 %v573
  %v3235 = vunpack.c.h.b16 %v573
  %v3236 = vunpack.c.l.b16 %v574
  %v3237 = vunpack.c.h.b16 %v574
  %v3238 = vunpack.c.l.b16 %v575
  %v3239 = vunpack.c.h.b16 %v575
  %v3240 = vunpack.c.l.b16 %v576
  %v3241 = vunpack.c.h.b16 %v576
  %v3242 = vunpack.c.l.b16 %v577
  %v3243 = vunpack.c.h.b16 %v577
  %v3244 = vunpack.c.l.b16 %v578
  %v3245 = vunpack.c.h.b16 %v578
  %v3246 = vunpack.c.l.b16 %v579
  %v3247 = vunpack.c.h.b16 %v579
  %v3248 = vunpack.c.l.b16 %v580
  %v3249 = vunpack.c.h.b16 %v580
  %v3250 = vunpack.c.l.b16 %v581
  %v3251 = vunpack.c.h.b16 %v581
  %v3252 = vunpack.c.l.b16 %v582
  %v3253 = vunpack.c.h.b16 %v582
  %v3254 = vunpack.c.l.b16 %v583
  %v3255 = vunpack.c.h.b16 %v583
  %v3256 = vunpack.c.l.b16 %v584
  %v3257 = vunpack.c.h.b16 %v584
  %v3258 = vunpack.c.l.b16 %v585
  %v3259 = vunpack.c.h.b16 %v585
  %v3260 = vunpack.c.l.b16 %v586
  %v3261 = vunpack.c.h.b16 %v586
  %v3262 = vunpack.c.l.b16 %v587
  %v3263 = vunpack.c.h.b16 %v587
  %v3264 = vunpack.c.l.b16 %v588
  %v3265 = vunpack.c.h.b16 %v588
  %v3266 = vunpack.c.l.b16 %v589
  %v3267 = vunpack.c.h.b16 %v589
  %v3268 = vunpack.c.l.b16 %v590
  %v3269 = vunpack.c.h.b16 %v590
  %v3270 = vunpack.c.l.b16 %v591
  %v3271 = vunpack.c.h.b16 %v591
  %v3272 = vunpack.c.l.b16 %v592
  %v3273 = vunpack.c.h.b16 %v592
  %v3274 = vunpack.c.l.b16 %v593
  %v3275 = vunpack.c.h.b16 %v593
  %v3276 = vunpack.c.l.b16 %v594
  %v3277 = vunpack.c.h.b16 %v594
  %v3278 = vunpack.c.l.b16 %v595
  %v3279 = vunpack.c.h.b16 %v595
  %v3280 = vunpack.c.l.b16 %v596
  %v3281 = vunpack.c.h.b16 %v596
  %v3282 = vunpack.c.l.b16 %v597
  %v3283 = vunpack.c.h.b16 %v597
  %v3284 = vunpack.c.l.b16 %v598
  %v3285 = vunpack.c.h.b16 %v598
  %v3286 = vunpack.c.l.b16 %v599
  %v3287 = vunpack.c.h.b16 %v599
  %v3288 = vunpack.c.l.b16 %v600
  %v3289 = vunpack.c.h.b16 %v600
  %v3290 = vunpack.c.l.b16 %v601
  %v3291 = vunpack.c.h.b16 %v601
  %v3292 = vunpack.c.l.b16 %v602
  %v3293 = vunpack.c.h.b16 %v602
  %v3294 = vunpack.c.l.b16 %v603
  %v3295 = vunpack.c.h.b16 %v603
  %v3296 = vunpack.c.l.b16 %v604
  %v3297 = vunpack.c.h.b16 %v604
  %v3298 = vunpack.c.l.b16 %v605
  %v3299 = vunpack.c.h.b16 %v605
  %v3300 = vunpack.c.l.b16 %v606
  %v3301 = vunpack.c.h.b16 %v606
  %v3302 = vunpack.c.l.b16 %v607
  %v3303 = vunpack.c.h.b16 %v607
  %v3304 = vunpack.c.l.b16 %v608
  %v3305 = vunpack.c.h.b16 %v608
  %v3306 = vunpack.c.l.b16 %v609
  %v3307 = vunpack.c.h.b16 %v609
  %v3308 = vunpack.c.l.b16 %v610
  %v3309 = vunpack.c.h.b16 %v610
  %v3310 = vunpack.c.l.b16 %v611
  %v3311 = vunpack.c.h.b16 %v611
  %v3312 = vunpack.c.l.b16 %v612
  %v3313 = vunpack.c.h.b16 %v612
  %v3314 = vunpack.c.l.b16 %v613
  %v3315 = vunpack.c.h.b16 %v613
  %v3316 = vunpack.c.l.b16 %v614
  %v3317 = vunpack.c.h.b16 %v614
  %v3318 = vunpack.c.l.b16 %v615
  %v3319 = vunpack.c.h.b16 %v615
  %v3320 = vunpack.c.l.b16 %v616
  %v3321 = vunpack.c.h.b16 %v616
  %v3322 = vunpack.c.l.b16 %v617
  %v3323 = vunpack.c.h.b16 %v617
  %v3324 = vunpack.c.l.b16 %v618
  %v3325 = vunpack.c.h.b16 %v618
  %v3326 = vunpack.c.l.b16 %v619
  %v3327 = vunpack.c.h.b16 %v619
  %v3328 = vunpack.c.l.b16 %v620
  %v3329 = vunpack.c.h.b16 %v620
  %v3330 = vunpack.c.l.b16 %v621
  %v3331 = vunpack.c.h.b16 %v621
  %v3332 = vunpack.c.l.b16 %v622
  %v3333 = vunpack.c.h.b16 %v622
  %v3334 = vunpack.c.l.b16 %v623
  %v3335 = vunpack.c.h.b16 %v623
  %v3336 = vunpack.c.l.b16 %v624
  %v3337 = vunpack.c.h.b16 %v624
  %v3338 = vunpack.c.l.b16 %v625
  %v3339 = vunpack.c.h.b16 %v625
  %v3340 = vunpack.c.l.b16 %v626
  %v3341 = vunpack.c.h.b16 %v626
  %v3342 = vunpack.c.l.b16 %v627
  %v3343 = vunpack.c.h.b16 %v627
  %v3344 = vunpack.c.l.b16 %v628
  %v3345 = vunpack.c.h.b16 %v628
  %v3346 = vunpack.c.l.b16 %v629
  %v3347 = vunpack.c.h.b16 %v629
  %v3348 = vunpack.c.l.b16 %v630
  %v3349 = vunpack.c.h.b16 %v630
  %v3350 = vunpack.c.l.b16 %v631
  %v3351 = vunpack.c.h.b16 %v631
  %v3352 = vunpack.c.l.b16 %v632
  %v3353 = vunpack.c.h.b16 %v632
  %v3354 = vunpack.c.l.b16 %v633
  %v3355 = vunpack.c.h.b16 %v633
  %v3356 = vunpack.c.l.b16 %v634
  %v3357 = vunpack.c.h.b16 %v634
  %v3358 = vunpack.c.l.b16 %v635
  %v3359 = vunpack.c.h.b16 %v635
  %v3360 = vunpack.c.l.b16 %v636
  %v3361 = vunpack.c.h.b16 %v636
  %v3362 = vunpack.c.l.b16 %v637
  %v3363 = vunpack.c.h.b16 %v637
  %v3364 = vunpack.c.l.b16 %v638
  %v3365 = vunpack.c.h.b16 %v638
  %v3366 = vunpack.c.l.b16 %v639
  %v3367 = vunpack.c.h.b16 %v639
  %v3368 = vunpack.c.l.b16 %v640
  %v3369 = vunpack.c.h.b16 %v640
  %v3370 = vunpack.c.l.b16 %v641
  %v3371 = vunpack.c.h.b16 %v641
  %v3372 = vunpack.c.l.b16 %v642
  %v3373 = vunpack.c.h.b16 %v642
  %v3374 = vunpack.c.l.b16 %v643
  %v3375 = vunpack.c.h.b16 %v643
  %v3376 = vunpack.c.l.b16 %v644
  %v3377 = vunpack.c.h.b16 %v644
  %v3378 = vunpack.c.l.b16 %v645
  %v3379 = vunpack.c.h.b16 %v645
  %v3380 = vunpack.c.l.b16 %v646
  %v3381 = vunpack.c.h.b16 %v646
  %v3382 = vunpack.c.l.b16 %v647
  %v3383 = vunpack.c.h.b16 %v647
  %v3384 = vunpack.c.l.b16 %v648
  %v3385 = vunpack.c.h.b16 %v648
  %v3386 = vunpack.c.l.b16 %v649
  %v3387 = vunpack.c.h.b16 %v649
  %v3388 = vunpack.c.l.b16 %v650
  %v3389 = vunpack.c.h.b16 %v650
  %v3390 = vunpack.c.l.b16 %v651
  %v3391 = vunpack.c.h.b16 %v651
  %v3392 = vunpack.c.l.b16 %v652
  %v3393 = vunpack.c.h.b16 %v652
  %v3394 = vunpack.c.l.b16 %v653
  %v3395 = vunpack.c.h.b16 %v653
  %v3396 = vunpack.c.l.b16 %v654
  %v3397 = vunpack.c.h.b16 %v654
  %v3398 = vunpack.c.l.b16 %v655
  %v3399 = vunpack.c.h.b16 %v655
  %v3400 = vunpack.c.l.b16 %v656
  %v3401 = vunpack.c.h.b16 %v656
  %v3402 = vunpack.c.l.b16 %v657
  %v3403 = vunpack.c.h.b16 %v657
  %v3404 = vunpack.c.l.b16 %v658
  %v3405 = vunpack.c.h.b16 %v658
  %v3406 = vunpack.c.l.b16 %v659
  %v3407 = vunpack.c.h.b16 %v659
  %v3408 = vunpack.c.l.b16 %v660
  %v3409 = vunpack.c.h.b16 %v660
  %v3410 = vunpack.c.l.b16 %v661
  %v3411 = vunpack.c.h.b16 %v661
  %v3412 = vunpack.c.l.b16 %v662
  %v3413 = vunpack.c.h.b16 %v662
  %v3414 = vunpack.c.l.b16 %v663
  %v3415 = vunpack.c.h.b16 %v663
  %v3416 = vunpack.c.l.b16 %v664
  %v3417 = vunpack.c.h.b16 %v664
  %v3418 = vunpack.c.l.b16 %v665
  %v3419 = vunpack.c.h.b16 %v665
  %v3420 = vunpack.c.l.b16 %v666
  %v3421 = vunpack.c.h.b16 %v666
  %v3422 = vunpack.c.l.b16 %v667
  %v3423 = vunpack.c.h.b16 %v667
  %v3424 = vunpack.c.l.b16 %v668
  %v3425 = vunpack.c.h.b16 %v668
  %v3426 = vunpack.c.l.b16 %v669
  %v3427 = vunpack.c.h.b16 %v669
  %v3428 = vunpack.c.l.b16 %v670
  %v3429 = vunpack.c.h.b16 %v670
  %v3430 = vunpack.c.l.b16 %v671
  %v3431 = vunpack.c.h.b16 %v671
  %v3432 = vunpack.c.l.b16 %v672
  %v3433 = vunpack.c.h.b16 %v672
  %v3434 = vunpack.c.l.b16 %v673
  %v3435 = vunpack.c.h.b16 %v673
  %v3436 = vunpack.c.l.b16 %v674
  %v3437 = vunpack.c.h.b16 %v674
  %v3438 = vunpack.c.l.b16 %v675
  %v3439 = vunpack.c.h.b16 %v675
  %v3440 = vunpack.c.l.b16 %v676
  %v3441 = vunpack.c.h.b16 %v676
  %v3442 = vunpack.c.l.b16 %v677
  %v3443 = vunpack.c.h.b16 %v677
  %v3444 = vunpack.c.l.b16 %v678
  %v3445 = vunpack.c.h.b16 %v678
  %v3446 = vunpack.c.l.b16 %v679
  %v3447 = vunpack.c.h.b16 %v679
  %v3448 = vunpack.c.l.b16 %v680
  %v3449 = vunpack.c.h.b16 %v680
  %v3450 = vunpack.c.l.b16 %v681
  %v3451 = vunpack.c.h.b16 %v681
  %v3452 = vunpack.c.l.b16 %v682
  %v3453 = vunpack.c.h.b16 %v682
  %v3454 = vunpack.c.l.b16 %v683
  %v3455 = vunpack.c.h.b16 %v683
  %v3456 = vunpack.c.l.b16 %v684
  %v3457 = vunpack.c.h.b16 %v684
  %v3458 = vunpack.c.l.b16 %v685
  %v3459 = vunpack.c.h.b16 %v685
  %v3460 = vunpack.c.l.b16 %v686
  %v3461 = vunpack.c.h.b16 %v686
  %v3462 = vunpack.c.l.b16 %v687
  %v3463 = vunpack.c.h.b16 %v687
  %v3464 = vunpack.c.l.b16 %v688
  %v3465 = vunpack.c.h.b16 %v688
  %v3466 = vunpack.c.l.b16 %v689
  %v3467 = vunpack.c.h.b16 %v689
  %v3468 = vunpack.c.l.b16 %v690
  %v3469 = vunpack.c.h.b16 %v690
  %v3470 = vunpack.c.l.b16 %v691
  %v3471 = vunpack.c.h.b16 %v691
  %v3472 = vunpack.c.l.b16 %v692
  %v3473 = vunpack.c.h.b16 %v692
  %v3474 = vunpack.c.l.b16 %v693
  %v3475 = vunpack.c.h.b16 %v693
  %v3476 = vunpack.c.l.b16 %v694
  %v3477 = vunpack.c.h.b16 %v694
  %v3478 = vunpack.c.l.b16 %v695
  %v3479 = vunpack.c.h.b16 %v695
  %v3480 = vunpack.c.l.b16 %v696
  %v3481 = vunpack.c.h.b16 %v696
  %v3482 = vunpack.c.l.b16 %v697
  %v3483 = vunpack.c.h.b16 %v697
  %v3484 = vunpack.c.l.b16 %v698
  %v3485 = vunpack.c.h.b16 %v698
  %v3486 = vunpack.c.l.b16 %v699
  %v3487 = vunpack.c.h.b16 %v699
  %v3488 = vunpack.c.l.b16 %v700
  %v3489 = vunpack.c.h.b16 %v700
  %v3490 = vunpack.c.l.b16 %v701
  %v3491 = vunpack.c.h.b16 %v701
  %v3492 = vunpack.c.l.b16 %v702
  %v3493 = vunpack.c.h.b16 %v702
  %v3494 = vunpack.c.l.b16 %v703
  %v3495 = vunpack.c.h.b16 %v703
  %v3496 = vunpack.c.l.b16 %v704
  %v3497 = vunpack.c.h.b16 %v704
  %v3498 = vunpack.c.l.b16 %v705
  %v3499 = vunpack.c.h.b16 %v705
  %v3500 = vunpack.c.l.b16 %v706
  %v3501 = vunpack.c.h.b16 %v706
  %v3502 = vunpack.c.l.b16 %v707
  %v3503 = vunpack.c.h.b16 %v707
  %v3504 = vunpack.c.l.b16 %v708
  %v3505 = vunpack.c.h.b16 %v708
  %v3506 = vunpack.c.l.b16 %v709
  %v3507 = vunpack.c.h.b16 %v709
  %v3508 = vunpack.c.l.b16 %v710
  %v3509 = vunpack.c.h.b16 %v710
  %v3510 = vunpack.c.l.b16 %v711
  %v3511 = vunpack.c.h.b16 %v711
  %v3512 = vunpack.c.l.b16 %v712
  %v3513 = vunpack.c.h.b16 %v712
  %v3514 = vunpack.c.l.b16 %v713
  %v3515 = vunpack.c.h.b16 %v713
  %v3516 = vunpack.c.l.b16 %v714
  %v3517 = vunpack.c.h.b16 %v714
  %v3518 = vunpack.c.l.b16 %v715
  %v3519 = vunpack.c.h.b16 %v715
  %v3520 = vunpack.c.l.b16 %v716
  %v3521 = vunpack.c.h.b16 %v716
  %v3522 = vunpack.c.l.b16 %v717
  %v3523 = vunpack.c.h.b16 %v717
  %v3524 = vunpack.c.l.b16 %v718
  %v3525 = vunpack.c.h.b16 %v718
  %v3526 = vunpack.c.l.b16 %v719
  %v3527 = vunpack.c.h.b16 %v719
  %v3528 = vunpack.c.l.b16 %v720
  %v3529 = vunpack.c.h.b16 %v720
  %v3530 = vunpack.c.l.b16 %v721
  %v3531 = vunpack.c.h.b16 %v721
  %v3532 = vunpack.c.l.b16 %v722
  %v3533 = vunpack.c.h.b16 %v722
  %v3534 = vunpack.c.l.b16 %v723
  %v3535 = vunpack.c.h.b16 %v723
  %v3536 = vunpack.c.l.b16 %v724
  %v3537 = vunpack.c.h.b16 %v724
  %v3538 = vunpack.c.l.b16 %v725
  %v3539 = vunpack.c.h.b16 %v725
  %v3540 = vunpack.c.l.b16 %v726
  %v3541 = vunpack.c.h.b16 %v726
  %v3542 = vunpack.c.l.b16 %v727
  %v3543 = vunpack.c.h.b16 %v727
  %v3544 = vunpack.c.l.b16 %v728
  %v3545 = vunpack.c.h.b16 %v728
  %v3546 = vunpack.c.l.b16 %v729
  %v3547 = vunpack.c.h.b16 %v729
  %v3548 = vunpack.c.l.b16 %v730
  %v3549 = vunpack.c.h.b16 %v730
  %v3550 = vunpack.c.l.b16 %v731
  %v3551 = vunpack.c.h.b16 %v731
  %v3552 = vunpack.c.l.b16 %v732
  %v3553 = vunpack.c.h.b16 %v732
  %v3554 = vunpack.c.l.b16 %v733
  %v3555 = vunpack.c.h.b16 %v733
  %v3556 = vunpack.c.l.b16 %v734
  %v3557 = vunpack.c.h.b16 %v734
  %v3558 = vunpack.c.l.b16 %v735
  %v3559 = vunpack.c.h.b16 %v735
  %v3560 = vunpack.c.l.b16 %v736
  %v3561 = vunpack.c.h.b16 %v736
  %v3562 = vunpack.c.l.b16 %v737
  %v3563 = vunpack.c.h.b16 %v737
  %v3564 = vunpack.c.l.b16 %v738
  %v3565 = vunpack.c.h.b16 %v738
  %v3566 = vunpack.c.l.b16 %v739
  %v3567 = vunpack.c.h.b16 %v739
  %v3568 = vunpack.c.l.b16 %v740
  %v3569 = vunpack.c.h.b16 %v740
  %v3570 = vunpack.c.l.b16 %v741
  %v3571 = vunpack.c.h.b16 %v741
  %v3572 = vunpack.c.l.b16 %v742
  %v3573 = vunpack.c.h.b16 %v742
  %v3574 = vunpack.c.l.b16 %v743
  %v3575 = vunpack.c.h.b16 %v743
  %v3576 = vunpack.c.l.b16 %v744
  %v3577 = vunpack.c.h.b16 %v744
  %v3578 = vunpack.c.l.b16 %v745
  %v3579 = vunpack.c.h.b16 %v745
  %v3580 = vunpack.c.l.b16 %v746
  %v3581 = vunpack.c.h.b16 %v746
  %v3582 = vunpack.c.l.b16 %v747
  %v3583 = vunpack.c.h.b16 %v747
  %v3584 = vunpack.c.l.b16 %v748
  %v3585 = vunpack.c.h.b16 %v748
  %v3586 = vunpack.c.l.b16 %v749
  %v3587 = vunpack.c.h.b16 %v749
  %v3588 = vunpack.c.l.b16 %v750
  %v3589 = vunpack.c.h.b16 %v750
  %v3590 = vunpack.c.l.b16 %v751
  %v3591 = vunpack.c.h.b16 %v751
  %v3592 = vunpack.c.l.b16 %v752
  %v3593 = vunpack.c.h.b16 %v752
  %v3594 = vunpack.c.l.b16 %v753
  %v3595 = vunpack.c.h.b16 %v753
  %v3596 = vunpack.c.l.b16 %v754
  %v3597 = vunpack.c.h.b16 %v754
  %v3598 = vunpack.c.l.b16 %v755
  %v3599 = vunpack.c.h.b16 %v755
  %v3600 = vunpack.c.l.b16 %v756
  %v3601 = vunpack.c.h.b16 %v756
  %v3602 = vunpack.c.l.b16 %v757
  %v3603 = vunpack.c.h.b16 %v757
  %v3604 = vunpack.c.l.b16 %v758
  %v3605 = vunpack.c.h.b16 %v758
  %v3606 = vunpack.c.l.b16 %v759
  %v3607 = vunpack.c.h.b16 %v759
  %v3608 = vunpack.c.l.b16 %v760
  %v3609 = vunpack.c.h.b16 %v760
  %v3610 = vunpack.c.l.b16 %v761
  %v3611 = vunpack.c.h.b16 %v761
  %v3612 = vunpack.c.l.b16 %v762
  %v3613 = vunpack.c.h.b16 %v762
  %v3614 = vunpack.c.l.b16 %v763
  %v3615 = vunpack.c.h.b16 %v763
  %v3616 = vunpack.c.l.b16 %v764
  %v3617 = vunpack.c.h.b16 %v764
  %v3618 = vunpack.c.l.b16 %v765
  %v3619 = vunpack.c.h.b16 %v765
  %v3620 = vunpack.c.l.b16 %v766
  %v3621 = vunpack.c.h.b16 %v766
  %v3622 = vunpack.c.l.b16 %v767
  %v3623 = vunpack.c.h.b16 %v767
  %v3624 = vunpack.c.l.b16 %v768
  %v3625 = vunpack.c.h.b16 %v768
  %v3626 = vunpack.c.l.b16 %v769
  %v3627 = vunpack.c.h.b16 %v769
  %v3628 = vunpack.c.l.b16 %v770
  %v3629 = vunpack.c.h.b16 %v770
  %v3630 = vunpack.c.l.b16 %v771
  %v3631 = vunpack.c.h.b16 %v771
  %v3632 = vunpack.c.l.b16 %v772
  %v3633 = vunpack.c.h.b16 %v772
  %v3634 = vunpack.c.l.b16 %v773
  %v3635 = vunpack.c.h.b16 %v773
  %v3636 = vunpack.c.l.b16 %v774
  %v3637 = vunpack.c.h.b16 %v774
  %v3638 = vunpack.c.l.b16 %v775
  %v3639 = vunpack.c.h.b16 %v775
  %v3640 = vunpack.c.l.b16 %v776
  %v3641 = vunpack.c.h.b16 %v776
  %v3642 = vunpack.c.l.b16 %v777
  %v3643 = vunpack.c.h.b16 %v777
  %v3644 = vunpack.c.l.b16 %v778
  %v3645 = vunpack.c.h.b16 %v778
  %v3646 = vunpack.c.l.b16 %v779
  %v3647 = vunpack.c.h.b16 %v779
  %v3648 = vunpack.c.l.b16 %v780
  %v3649 = vunpack.c.h.b16 %v780
  %v3650 = vunpack.c.l.b16 %v781
  %v3651 = vunpack.c.h.b16 %v781
  %v3652 = vunpack.c.l.b16 %v782
  %v3653 = vunpack.c.h.b16 %v782
  %v3654 = vunpack.c.l.b16 %v783
  %v3655 = vunpack.c.h.b16 %v783
  %v3656 = vunpack.c.l.b16 %v784
  %v3657 = vunpack.c.h.b16 %v784
  %v3658 = vunpack.c.l.b16 %v785
  %v3659 = vunpack.c.h.b16 %v785
  %v3660 = vunpack.c.l.b16 %v786
  %v3661 = vunpack.c.h.b16 %v786
  %v3662 = vunpack.c.l.b16 %v787
  %v3663 = vunpack.c.h.b16 %v787
  %v3664 = vunpack.c.l.b16 %v788
  %v3665 = vunpack.c.h.b16 %v788
  %v3666 = vunpack.c.l.b16 %v789
  %v3667 = vunpack.c.h.b16 %v789
  %v3668 = vunpack.c.l.b16 %v790
  %v3669 = vunpack.c.h.b16 %v790
  %v3670 = vunpack.c.l.b16 %v791
  %v3671 = vunpack.c.h.b16 %v791
  %v3672 = vunpack.c.l.b16 %v792
  %v3673 = vunpack.c.h.b16 %v792
  %v3674 = vunpack.c.l.b16 %v793
  %v3675 = vunpack.c.h.b16 %v793
  %v3676 = vunpack.c.l.b16 %v794
  %v3677 = vunpack.c.h.b16 %v794
  %v3678 = vunpack.c.l.b16 %v795
  %v3679 = vunpack.c.h.b16 %v795
  %v3680 = vunpack.c.l.b16 %v796
  %v3681 = vunpack.c.h.b16 %v796
  %v3682 = vunpack.c.l.b16 %v797
  %v3683 = vunpack.c.h.b16 %v797
  %v3684 = vunpack.c.l.b16 %v798
  %v3685 = vunpack.c.h.b16 %v798
  %v3686 = vunpack.c.l.b16 %v799
  %v3687 = vunpack.c.h.b16 %v799
  %v3688 = vunpack.c.l.b16 %v800
  %v3689 = vunpack.c.h.b16 %v800
  %v3690 = vunpack.c.l.b16 %v801
  %v3691 = vunpack.c.h.b16 %v801
  %v3692 = vunpack.c.l.b16 %v802
  %v3693 = vunpack.c.h.b16 %v802
  %v3694 = vunpack.c.l.b16 %v803
  %v3695 = vunpack.c.h.b16 %v803
  %v3696 = vunpack.c.l.b16 %v804
  %v3697 = vunpack.c.h.b16 %v804
  %v3698 = vunpack.c.l.b16 %v805
  %v3699 = vunpack.c.h.b16 %v805
  %v3700 = vunpack.c.l.b16 %v806
  %v3701 = vunpack.c.h.b16 %v806
  %v3702 = vunpack.c.l.b16 %v807
  %v3703 = vunpack.c.h.b16 %v807
  %v3704 = vunpack.c.l.b16 %v808
  %v3705 = vunpack.c.h.b16 %v808
  %v3706 = vunpack.c.l.b16 %v809
  %v3707 = vunpack.c.h.b16 %v809
  %v3708 = vunpack.c.l.b16 %v810
  %v3709 = vunpack.c.h.b16 %v810
  %v3710 = vunpack.c.l.b16 %v811
  %v3711 = vunpack.c.h.b16 %v811
  %v3712 = vunpack.c.l.b16 %v812
  %v3713 = vunpack.c.h.b16 %v812
  %v3714 = vunpack.c.l.b16 %v813
  %v3715 = vunpack.c.h.b16 %v813
  %v3716 = vunpack.c.l.b16 %v814
  %v3717 = vunpack.c.h.b16 %v814
  %v3718 = vunpack.c.l.b16 %v815
  %v3719 = vunpack.c.h.b16 %v815
  %v3720 = vunpack.c.l.b16 %v816
  %v3721 = vunpack.c.h.b16 %v816
  %v3722 = vunpack.c.l.b16 %v817
  %v3723 = vunpack.c.h.b16 %v817
  %v3724 = vunpack.c.l.b16 %v818
  %v3725 = vunpack.c.h.b16 %v818
  %v3726 = vunpack.c.l.b16 %v819
  %v3727 = vunpack.c.h.b16 %v819
  %v3728 = vunpack.c.l.b16 %v820
  %v3729 = vunpack.c.h.b16 %v820
  %v3730 = vunpack.c.l.b16 %v821
  %v3731 = vunpack.c.h.b16 %v821
  %v3732 = vunpack.c.l.b16 %v822
  %v3733 = vunpack.c.h.b16 %v822
  %v3734 = vunpack.c.l.b16 %v823
  %v3735 = vunpack.c.h.b16 %v823
  %v3736 = vunpack.c.l.b16 %v824
  %v3737 = vunpack.c.h.b16 %v824
  %v3738 = vunpack.c.l.b16 %v825
  %v3739 = vunpack.c.h.b16 %v825
  %v3740 = vunpack.c.l.b16 %v826
  %v3741 = vunpack.c.h.b16 %v826
  %v3742 = vunpack.c.l.b16 %v827
  %v3743 = vunpack.c.h.b16 %v827
  %v3744 = vunpack.c.l.b16 %v828
  %v3745 = vunpack.c.h.b16 %v828
  %v3746 = vunpack.c.l.b16 %v829
  %v3747 = vunpack.c.h.b16 %v829
  %v3748 = vunpack.c.l.b16 %v830
  %v3749 = vunpack.c.h.b16 %v830
  %v3750 = vunpack.c.l.b16 %v831
  %v3751 = vunpack.c.h.b16 %v831
  %v3752 = vunpack.c.l.b16 %v832
  %v3753 = vunpack.c.h.b16 %v832
  %v3754 = vunpack.c.l.b16 %v833
  %v3755 = vunpack.c.h.b16 %v833
  %v3756 = vunpack.c.l.b16 %v834
  %v3757 = vunpack.c.h.b16 %v834
  %v3758 = vunpack.c.l.b16 %v835
  %v3759 = vunpack.c.h.b16 %v835
  %v3760 = vunpack.c.l.b16 %v836
  %v3761 = vunpack.c.h.b16 %v836
  %v3762 = vunpack.c.l.b16 %v837
  %v3763 = vunpack.c.h.b16 %v837
  %v3764 = vunpack.c.l.b16 %v838
  %v3765 = vunpack.c.h.b16 %v838
  %v3766 = vunpack.c.l.b16 %v839
  %v3767 = vunpack.c.h.b16 %v839
  %v3768 = vunpack.c.l.b16 %v840
  %v3769 = vunpack.c.h.b16 %v840
  %v3770 = vunpack.c.l.b16 %v841
  %v3771 = vunpack.c.h.b16 %v841
  %v3772 = vunpack.c.l.b16 %v842
  %v3773 = vunpack.c.h.b16 %v842
  %v3774 = vunpack.c.l.b16 %v843
  %v3775 = vunpack.c.h.b16 %v843
  %v3776 = vunpack.c.l.b16 %v844
  %v3777 = vunpack.c.h.b16 %v844
  %v3778 = vunpack.c.l.b16 %v845
  %v3779 = vunpack.c.h.b16 %v845
  %v3780 = vunpack.c.l.b16 %v846
  %v3781 = vunpack.c.h.b16 %v846
  %v3782 = vunpack.c.l.b16 %v847
  %v3783 = vunpack.c.h.b16 %v847
  %v3784 = vunpack.c.l.b16 %v848
  %v3785 = vunpack.c.h.b16 %v848
  %v3786 = vunpack.c.l.b16 %v849
  %v3787 = vunpack.c.h.b16 %v849
  %v3788 = vunpack.c.l.b16 %v850
  %v3789 = vunpack.c.h.b16 %v850
  %v3790 = vunpack.c.l.b16 %v851
  %v3791 = vunpack.c.h.b16 %v851
  %v3792 = vunpack.c.l.b16 %v852
  %v3793 = vunpack.c.h.b16 %v852
  %v3794 = vunpack.c.l.b16 %v853
  %v3795 = vunpack.c.h.b16 %v853
  %v3796 = vunpack.c.l.b16 %v854
  %v3797 = vunpack.c.h.b16 %v854
  %v3798 = vunpack.c.l.b16 %v855
  %v3799 = vunpack.c.h.b16 %v855
  %v3800 = vunpack.c.l.b16 %v856
  %v3801 = vunpack.c.h.b16 %v856
  %v3802 = vunpack.c.l.b16 %v857
  %v3803 = vunpack.c.h.b16 %v857
  %v3804 = vunpack.c.l.b16 %v858
  %v3805 = vunpack.c.h.b16 %v858
  %v3806 = vunpack.c.l.b16 %v859
  %v3807 = vunpack.c.h.b16 %v859
  %v3808 = vunpack.c.l.b16 %v860
  %v3809 = vunpack.c.h.b16 %v860
  %v3810 = vunpack.c.l.b16 %v861
  %v3811 = vunpack.c.h.b16 %v861
  %v3812 = vunpack.c.l.b16 %v862
  %v3813 = vunpack.c.h.b16 %v862
  %v3814 = vunpack.c.l.b16 %v863
  %v3815 = vunpack.c.h.b16 %v863
  %v3816 = vunpack.c.l.b16 %v864
  %v3817 = vunpack.c.h.b16 %v864
  %v3818 = vunpack.c.l.b16 %v865
  %v3819 = vunpack.c.h.b16 %v865
  %v3820 = vunpack.c.l.b16 %v866
  %v3821 = vunpack.c.h.b16 %v866
  %v3822 = vunpack.c.l.b16 %v867
  %v3823 = vunpack.c.h.b16 %v867
  %v3824 = vunpack.c.l.b16 %v868
  %v3825 = vunpack.c.h.b16 %v868
  %v3826 = vunpack.c.l.b16 %v869
  %v3827 = vunpack.c.h.b16 %v869
  %v3828 = vunpack.c.l.b16 %v870
  %v3829 = vunpack.c.h.b16 %v870
  %v3830 = vunpack.c.l.b16 %v871
  %v3831 = vunpack.c.h.b16 %v871
  %v3832 = vunpack.c.l.b16 %v872
  %v3833 = vunpack.c.h.b16 %v872
  %v3834 = vunpack.c.l.b16 %v873
  %v3835 = vunpack.c.h.b16 %v873
  %v3836 = vunpack.c.l.b16 %v874
  %v3837 = vunpack.c.h.b16 %v874
  %v3838 = vunpack.c.l.b16 %v875
  %v3839 = vunpack.c.h.b16 %v875
  %v3840 = vunpack.c.l.b16 %v876
  %v3841 = vunpack.c.h.b16 %v876
  %v3842 = vunpack.c.l.b16 %v877
  %v3843 = vunpack.c.h.b16 %v877
  %v3844 = vunpack.c.l.b16 %v878
  %v3845 = vunpack.c.h.b16 %v878
  %v3846 = vunpack.c.l.b16 %v879
  %v3847 = vunpack.c.h.b16 %v879
  %v3848 = vunpack.c.l.b16 %v880
  %v3849 = vunpack.c.h.b16 %v880
  %v3850 = vunpack.c.l.b16 %v881
  %v3851 = vunpack.c.h.b16 %v881
  %v3852 = vunpack.c.l.b16 %v882
  %v3853 = vunpack.c.h.b16 %v882
  %v3854 = vunpack.c.l.b16 %v883
  %v3855 = vunpack.c.h.b16 %v883
  %v3856 = vunpack.c.l.b16 %v884
  %v3857 = vunpack.c.h.b16 %v884
  %v3858 = vunpack.c.l.b16 %v885
  %v3859 = vunpack.c.h.b16 %v885
  %v3860 = vunpack.c.l.b16 %v886
  %v3861 = vunpack.c.h.b16 %v886
  %v3862 = vunpack.c.l.b16 %v887
  %v3863 = vunpack.c.h.b16 %v887
  %v3864 = vunpack.c.l.b16 %v888
  %v3865 = vunpack.c.h.b16 %v888
  %v3866 = vunpack.c.l.b16 %v889
  %v3867 = vunpack.c.h.b16 %v889
  %v3868 = vunpack.c.l.b16 %v890
  %v3869 = vunpack.c.h.b16 %v890
  %v3870 = vunpack.c.l.b16 %v891
  %v3871 = vunpack.c.h.b16 %v891
  %v3872 = vunpack.c.l.b16 %v892
  %v3873 = vunpack.c.h.b16 %v892
  %v3874 = vunpack.c.l.b16 %v893
  %v3875 = vunpack.c.h.b16 %v893
  %v3876 = vunpack.c.l.b16 %v894
  %v3877 = vunpack.c.h.b16 %v894
  %v3878 = vunpack.c.l.b16 %v895
  %v3879 = vunpack.c.h.b16 %v895
  %v3880 = vunpack.c.l.b16 %v896
  %v3881 = vunpack.c.h.b16 %v896
  %v3882 = vunpack.c.l.b16 %v897
  %v3883 = vunpack.c.h.b16 %v897
  %v3884 = vunpack.c.l.b16 %v898
  %v3885 = vunpack.c.h.b16 %v898
  %v3886 = vunpack.c.l.b16 %v899
  %v3887 = vunpack.c.h.b16 %v899
  %v3888 = vunpack.c.l.b16 %v900
  %v3889 = vunpack.c.h.b16 %v900
  %v3890 = vunpack.c.l.b16 %v901
  %v3891 = vunpack.c.h.b16 %v901
  %v3892 = vunpack.c.l.b16 %v902
  %v3893 = vunpack.c.h.b16 %v902
  %v3894 = vunpack.c.l.b16 %v903
  %v3895 = vunpack.c.h.b16 %v903
  %v3896 = vunpack.c.l.b16 %v904
  %v3897 = vunpack.c.h.b16 %v904
  %v3898 = vunpack.c.l.b16 %v905
  %v3899 = vunpack.c.h.b16 %v905
  %v3900 = vunpack.c.l.b16 %v906
  %v3901 = vunpack.c.h.b16 %v906
  %v3902 = vunpack.c.l.b16 %v907
  %v3903 = vunpack.c.h.b16 %v907
  %v3904 = vunpack.c.l.b16 %v908
  %v3905 = vunpack.c.h.b16 %v908
  %v3906 = vunpack.c.l.b16 %v909
  %v3907 = vunpack.c.h.b16 %v909
  %v3908 = vunpack.c.l.b16 %v910
  %v3909 = vunpack.c.h.b16 %v910
  %v3910 = vunpack.c.l.b16 %v911
  %v3911 = vunpack.c.h.b16 %v911
  %v3912 = vunpack.c.l.b16 %v912
  %v3913 = vunpack.c.h.b16 %v912
  %v3914 = vunpack.c.l.b16 %v913
  %v3915 = vunpack.c.h.b16 %v913
  %v3916 = vunpack.c.l.b16 %v914
  %v3917 = vunpack.c.h.b16 %v914
  %v3918 = vunpack.c.l.b16 %v915
  %v3919 = vunpack.c.h.b16 %v915
  %v3920 = vunpack.c.l.b16 %v916
  %v3921 = vunpack.c.h.b16 %v916
  %v3922 = vunpack.c.l.b16 %v917
  %v3923 = vunpack.c.h.b16 %v917
  %v3924 = vunpack.c.l.b16 %v918
  %v3925 = vunpack.c.h.b16 %v918
  %v3926 = vunpack.c.l.b16 %v919
  %v3927 = vunpack.c.h.b16 %v919
  %v3928 = vunpack.c.l.b16 %v920
  %v3929 = vunpack.c.h.b16 %v920
  %v3930 = vunpack.c.l.b16 %v921
  %v3931 = vunpack.c.h.b16 %v921
  %v3932 = vunpack.c.l.b16 %v922
  %v3933 = vunpack.c.h.b16 %v922
  %v3934 = vunpack.c.l.b16 %v923
  %v3935 = vunpack.c.h.b16 %v923
  %v3936 = vunpack.c.l.b16 %v924
  %v3937 = vunpack.c.h.b16 %v924
  %v3938 = vunpack.c.l.b16 %v925
  %v3939 = vunpack.c.h.b16 %v925
  %v3940 = vunpack.c.l.b16 %v926
  %v3941 = vunpack.c.h.b16 %v926
  %v3942 = vunpack.c.l.b16 %v927
  %v3943 = vunpack.c.h.b16 %v927
  %v3944 = vunpack.c.l.b16 %v928
  %v3945 = vunpack.c.h.b16 %v928
  %v3946 = vunpack.c.l.b16 %v929
  %v3947 = vunpack.c.h.b16 %v929
  %v3948 = vunpack.c.l.b16 %v930
  %v3949 = vunpack.c.h.b16 %v930
  %v3950 = vunpack.c.l.b16 %v931
  %v3951 = vunpack.c.h.b16 %v931
  %v3952 = vunpack.c.l.b16 %v932
  %v3953 = vunpack.c.h.b16 %v932
  %v3954 = vunpack.c.l.b16 %v933
  %v3955 = vunpack.c.h.b16 %v933
  %v3956 = vunpack.c.l.b16 %v934
  %v3957 = vunpack.c.h.b16 %v934
  %v3958 = vunpack.c.l.b16 %v935
  %v3959 = vunpack.c.h.b16 %v935
  %v3960 = vunpack.c.l.b16 %v936
  %v3961 = vunpack.c.h.b16 %v936
  %v3962 = vunpack.c.l.b16 %v937
  %v3963 = vunpack.c.h.b16 %v937
  %v3964 = vunpack.c.l.b16 %v938
  %v3965 = vunpack.c.h.b16 %v938
  %v3966 = vunpack.c.l.b16 %v939
  %v3967 = vunpack.c.h.b16 %v939
  %v3968 = vunpack.c.l.b16 %v940
  %v3969 = vunpack.c.h.b16 %v940
  %v3970 = vunpack.c.l.b16 %v941
  %v3971 = vunpack.c.h.b16 %v941
  %v3972 = vunpack.c.l.b16 %v942
  %v3973 = vunpack.c.h.b16 %v942
  %v3974 = vunpack.c.l.b16 %v943
  %v3975 = vunpack.c.h.b16 %v943
  %v3976 = vunpack.c.l.b16 %v944
  %v3977 = vunpack.c.h.b16 %v944
  %v3978 = vunpack.c.l.b16 %v945
  %v3979 = vunpack.c.h.b16 %v945
  %v3980 = vunpack.c.l.b16 %v946
  %v3981 = vunpack.c.h.b16 %v946
  %v3982 = vunpack.c.l.b16 %v947
  %v3983 = vunpack.c.h.b16 %v947
  %v3984 = vunpack.c.l.b16 %v948
  %v3985 = vunpack.c.h.b16 %v948
  %v3986 = vunpack.c.l.b16 %v949
  %v3987 = vunpack.c.h.b16 %v949
  %v3988 = vunpack.c.l.b16 %v950
  %v3989 = vunpack.c.h.b16 %v950
  %v3990 = vunpack.c.l.b16 %v951
  %v3991 = vunpack.c.h.b16 %v951
  %v3992 = vunpack.c.l.b16 %v952
  %v3993 = vunpack.c.h.b16 %v952
  %v3994 = vunpack.c.l.b16 %v953
  %v3995 = vunpack.c.h.b16 %v953
  %v3996 = vunpack.c.l.b16 %v954
  %v3997 = vunpack.c.h.b16 %v954
  %v3998 = vunpack.c.l.b16 %v955
  %v3999 = vunpack.c.h.b16 %v955
  %v4000 = vunpack.c.l.b16 %v956
  %v4001 = vunpack.c.h.b16 %v956
  %v4002 = vunpack.c.l.b16 %v957
  %v4003 = vunpack.c.h.b16 %v957
  %v4004 = vunpack.c.l.b16 %v958
  %v4005 = vunpack.c.h.b16 %v958
  %v4006 = vunpack.c.l.b16 %v959
  %v4007 = vunpack.c.h.b16 %v959
  %v4008 = vunpack.c.l.b16 %v960
  %v4009 = vunpack.c.h.b16 %v960
  %v4010 = vunpack.c.l.b16 %v961
  %v4011 = vunpack.c.h.b16 %v961
  %v4012 = vunpack.c.l.b16 %v962
  %v4013 = vunpack.c.h.b16 %v962
  %v4014 = vunpack.c.l.b16 %v963
  %v4015 = vunpack.c.h.b16 %v963
  %v4016 = vunpack.c.l.b16 %v964
  %v4017 = vunpack.c.h.b16 %v964
  %v4018 = vunpack.c.l.b16 %v965
  %v4019 = vunpack.c.h.b16 %v965
  %v4020 = vunpack.c.l.b16 %v966
  %v4021 = vunpack.c.h.b16 %v966
  %v4022 = vunpack.c.l.b16 %v967
  %v4023 = vunpack.c.h.b16 %v967
  %v4024 = vunpack.c.l.b16 %v968
  %v4025 = vunpack.c.h.b16 %v968
  %v4026 = vunpack.c.l.b16 %v969
  %v4027 = vunpack.c.h.b16 %v969
  %v4028 = vunpack.c.l.b16 %v970
  %v4029 = vunpack.c.h.b16 %v970
  %v4030 = vunpack.c.l.b16 %v971
  %v4031 = vunpack.c.h.b16 %v971
  %v4032 = vunpack.c.l.b16 %v972
  %v4033 = vunpack.c.h.b16 %v972
  %v4034 = vunpack.c.l.b16 %v973
  %v4035 = vunpack.c.h.b16 %v973
  %v4036 = vunpack.c.l.b16 %v974
  %v4037 = vunpack.c.h.b16 %v974
  %v4038 = vunpack.c.l.b16 %v975
  %v4039 = vunpack.c.h.b16 %v975
  %v4040 = vunpack.c.l.b16 %v976
  %v4041 = vunpack.c.h.b16 %v976
  %v4042 = vunpack.c.l.b16 %v977
  %v4043 = vunpack.c.h.b16 %v977
  %v4044 = vunpack.c.l.b16 %v978
  %v4045 = vunpack.c.h.b16 %v978
  %v4046 = vunpack.c.l.b16 %v979
  %v4047 = vunpack.c.h.b16 %v979
  %v4048 = vunpack.c.l.b16 %v980
  %v4049 = vunpack.c.h.b16 %v980
  %v4050 = vunpack.c.l.b16 %v981
  %v4051 = vunpack.c.h.b16 %v981
  %v4052 = vunpack.c.l.b16 %v982
  %v4053 = vunpack.c.h.b16 %v982
  %v4054 = vunpack.c.l.b16 %v983
  %v4055 = vunpack.c.h.b16 %v983
  %v4056 = vunpack.c.l.b16 %v984
  %v4057 = vunpack.c.h.b16 %v984
  %v4058 = vunpack.c.l.b16 %v985
  %v4059 = vunpack.c.h.b16 %v985
  %v4060 = vunpack.c.l.b16 %v986
  %v4061 = vunpack.c.h.b16 %v986
  %v4062 = vunpack.c.l.b16 %v987
  %v4063 = vunpack.c.h.b16 %v987
  %v4064 = vunpack.c.l.b16 %v988
  %v4065 = vunpack.c.h.b16 %v988
  %v4066 = vunpack.c.l.b16 %v989
  %v4067 = vunpack.c.h.b16 %v989
  %v4068 = vunpack.c.l.b16 %v990
  %v4069 = vunpack.c.h.b16 %v990
  %v4070 = vunpack.c.l.b16 %v991
  %v4071 = vunpack.c.h.b16 %v991
  %v4072 = vunpack.c.l.b16 %v992
  %v4073 = vunpack.c.h.b16 %v992
  %v4074 = vunpack.c.l.b16 %v993
  %v4075 = vunpack.c.h.b16 %v993
  %v4076 = vunpack.c.l.b16 %v994
  %v4077 = vunpack.c.h.b16 %v994
  %v4078 = vunpack.c.l.b16 %v995
  %v4079 = vunpack.c.h.b16 %v995
  %v4080 = vunpack.c.l.b16 %v996
  %v4081 = vunpack.c.h.b16 %v996
  %v4082 = vunpack.c.l.b16 %v997
  %v4083 = vunpack.c.h.b16 %v997
  %v4084 = vunpack.c.l.b16 %v998
  %v4085 = vunpack.c.h.b16 %v998
  %v4086 = vunpack.c.l.b16 %v999
  %v4087 = vunpack.c.h.b16 %v999
  %v4088 = vunpack.c.l.b16 %v1000
  %v4089 = vunpack.c.h.b16 %v1000
  %v4090 = vunpack.c.l.b16 %v1001
  %v4091 = vunpack.c.h.b16 %v1001
  %v4092 = vunpack.c.l.b16 %v1002
  %v4093 = vunpack.c.h.b16 %v1002
  %v4094 = vunpack.c.l.b16 %v1003
  %v4095 = vunpack.c.h.b16 %v1003
  %v4096 = vunpack.c.l.b16 %v1004
  %v4097 = vunpack.c.h.b16 %v1004
  %v4098 = vunpack.c.l.b16 %v1005
  %v4099 = vunpack.c.h.b16 %v1005
  %v4100 = vunpack.c.l.b16 %v1006
  %v4101 = vunpack.c.h.b16 %v1006
  %v4102 = vunpack.c.l.b16 %v1007
  %v4103 = vunpack.c.h.b16 %v1007
  %v4104 = vunpack.c.l.b16 %v1008
  %v4105 = vunpack.c.h.b16 %v1008
  %v4106 = vunpack.c.l.b16 %v1009
  %v4107 = vunpack.c.h.b16 %v1009
  %v4108 = vunpack.c.l.b16 %v1010
  %v4109 = vunpack.c.h.b16 %v1010
  %v4110 = vunpack.c.l.b16 %v1011
  %v4111 = vunpack.c.h.b16 %v1011
  %v4112 = vunpack.c.l.b16 %v1012
  %v4113 = vunpack.c.h.b16 %v1012
  %v4114 = vunpack.c.l.b16 %v1013
  %v4115 = vunpack.c.h.b16 %v1013
  %v4116 = vunpack.c.l.b16 %v1014
  %v4117 = vunpack.c.h.b16 %v1014
  %v4118 = vunpack.c.l.b16 %v1015
  %v4119 = vunpack.c.h.b16 %v1015
  %v4120 = vunpack.c.l.b16 %v1016
  %v4121 = vunpack.c.h.b16 %v1016
  %v4122 = vunpack.c.l.b16 %v1017
  %v4123 = vunpack.c.h.b16 %v1017
  %v4124 = vunpack.c.l.b16 %v1018
  %v4125 = vunpack.c.h.b16 %v1018
  %v4126 = vunpack.c.l.b16 %v1019
  %v4127 = vunpack.c.h.b16 %v1019
  %v4128 = vunpack.c.l.b16 %v1020
  %v4129 = vunpack.c.h.b16 %v1020
  %v4130 = vunpack.c.l.b16 %v1021
  %v4131 = vunpack.c.h.b16 %v1021
  %v4132 = vunpack.c.l.b16 %v1022
  %v4133 = vunpack.c.h.b16 %v1022
  %v4134 = vunpack.c.l.b16 %v1023
  %v4135 = vunpack.c.h.b16 %v1023
  %v4136 = vunpack.c.l.b16 %v1024
  %v4137 = vunpack.c.h.b16 %v1024
  %v4138 = vunpack.c.l.b16 %v1025
  %v4139 = vunpack.c.h.b16 %v1025
  %v4140 = vunpack.c.l.b16 %v1026
  %v4141 = vunpack.c.h.b16 %v1026
  %v4142 = vunpack.c.l.b16 %v1027
  %v4143 = vunpack.c.h.b16 %v1027
  %v4144 = vunpack.c.l.b16 %v1028
  %v4145 = vunpack.c.h.b16 %v1028
  %v4146 = vunpack.c.l.b16 %v1029
  %v4147 = vunpack.c.h.b16 %v1029
  %v4148 = vunpack.c.l.b16 %v1030
  %v4149 = vunpack.c.h.b16 %v1030
  %v4150 = vunpack.c.l.b16 %v1031
  %v4151 = vunpack.c.h.b16 %v1031
  %v4152 = vunpack.c.l.b16 %v1032
  %v4153 = vunpack.c.h.b16 %v1032
  %v4154 = vunpack.c.l.b16 %v1033
  %v4155 = vunpack.c.h.b16 %v1033
  %v4156 = vunpack.c.l.b16 %v1034
  %v4157 = vunpack.c.h.b16 %v1034
  %v4158 = vunpack.c.l.b16 %v1035
  %v4159 = vunpack.c.h.b16 %v1035
  %v4160 = vunpack.c.l.b16 %v1036
  %v4161 = vunpack.c.h.b16 %v1036
  %v4162 = vunpack.c.l.b16 %v1037
  %v4163 = vunpack.c.h.b16 %v1037
  %v4164 = vunpack.c.l.b16 %v1038
  %v4165 = vunpack.c.h.b16 %v1038
  %v4166 = vunpack.c.l.b16 %v1039
  %v4167 = vunpack.c.h.b16 %v1039
  %v4168 = vunpack.c.l.b16 %v1040
  %v4169 = vunpack.c.h.b16 %v1040
  %v4170 = vunpack.c.l.b16 %v1041
  %v4171 = vunpack.c.h.b16 %v1041
  %v4172 = vunpack.c.l.b16 %v1042
  %v4173 = vunpack.c.h.b16 %v1042
  %v4174 = vunpack.c.l.b16 %v1043
  %v4175 = vunpack.c.h.b16 %v1043
  %v4176 = vunpack.c.l.b16 %v1044
  %v4177 = vunpack.c.h.b16 %v1044
  %v4178 = vunpack.c.l.b16 %v1045
  %v4179 = vunpack.c.h.b16 %v1045
  %v4180 = vunpack.c.l.b16 %v1046
  %v4181 = vunpack.c.h.b16 %v1046
  %v4182 = vunpack.c.l.b16 %v1047
  %v4183 = vunpack.c.h.b16 %v1047
  %v4184 = vpack.c.b16 %v2152, %v2136
  %v4185 = vpack.c.b16 %v2153, %v2137
  %v4186 = vpack.c.b16 %v2154, %v2138
  %v4187 = vpack.c.b16 %v2155, %v2139
  %v4188 = vpack.c.b16 %v2156, %v2140
  %v4189 = vpack.c.b16 %v2157, %v2141
  %v4190 = vpack.c.b16 %v2158, %v2142
  %v4191 = vpack.c.b16 %v2159, %v2143
  %v4192 = vpack.c.b16 %v2160, %v2144
  %v4193 = vpack.c.b16 %v2161, %v2145
  %v4194 = vpack.c.b16 %v2162, %v2146
  %v4195 = vpack.c.b16 %v2163, %v2147
  %v4196 = vpack.c.b16 %v2164, %v2148
  %v4197 = vpack.c.b16 %v2165, %v2149
  %v4198 = vpack.c.b16 %v2166, %v2150
  %v4199 = vpack.c.b16 %v2167, %v2151
  %v4200 = vpack.c.b16 %v2184, %v2168
  %v4201 = vpack.c.b16 %v2185, %v2169
  %v4202 = vpack.c.b16 %v2186, %v2170
  %v4203 = vpack.c.b16 %v2187, %v2171
  %v4204 = vpack.c.b16 %v2188, %v2172
  %v4205 = vpack.c.b16 %v2189, %v2173
  %v4206 = vpack.c.b16 %v2190, %v2174
  %v4207 = vpack.c.b16 %v2191, %v2175
  %v4208 = vpack.c.b16 %v2192, %v2176
  %v4209 = vpack.c.b16 %v2193, %v2177
  %v4210 = vpack.c.b16 %v2194, %v2178
  %v4211 = vpack.c.b16 %v2195, %v2179
  %v4212 = vpack.c.b16 %v2196, %v2180
  %v4213 = vpack.c.b16 %v2197, %v2181
  %v4214 = vpack.c.b16 %v2198, %v2182
  %v4215 = vpack.c.b16 %v2199, %v2183
  %v4216 = vpack.c.b16 %v2216, %v2200
  %v4217 = vpack.c.b16 %v2217, %v2201
  %v4218 = vpack.c.b16 %v2218, %v2202
  %v4219 = vpack.c.b16 %v2219, %v2203
  %v4220 = vpack.c.b16 %v2220, %v2204
  %v4221 = vpack.c.b16 %v2221, %v2205
  %v4222 = vpack.c.b16 %v2222, %v2206
  %v4223 = vpack.c.b16 %v2223, %v2207
  %v4224 = vpack.c.b16 %v2224, %v2208
  %v4225 = vpack.c.b16 %v2225, %v2209
  %v4226 = vpack.c.b16 %v2226, %v2210
  %v4227 = vpack.c.b16 %v2227, %v2211
  %v4228 = vpack.c.b16 %v2228, %v2212
  %v4229 = vpack.c.b16 %v2229, %v2213
  %v4230 = vpack.c.b16 %v2230, %v2214
  %v4231 = vpack.c.b16 %v2231, %v2215
  %v4232 = vpack.c.b16 %v2248, %v2232
  %v4233 = vpack.c.b16 %v2249, %v2233
  %v4234 = vpack.c.b16 %v2250, %v2234
  %v4235 = vpack.c.b16 %v2251, %v2235
  %v4236 = vpack.c.b16 %v2252, %v2236
  %v4237 = vpack.c.b16 %v2253, %v2237
  %v4238 = vpack.c.b16 %v2254, %v2238
  %v4239 = vpack.c.b16 %v2255, %v2239
  %v4240 = vpack.c.b16 %v2256, %v2240
  %v4241 = vpack.c.b16 %v2257, %v2241
  %v4242 = vpack.c.b16 %v2258, %v2242
  %v4243 = vpack.c.b16 %v2259, %v2243
  %v4244 = vpack.c.b16 %v2260, %v2244
  %v4245 = vpack.c.b16 %v2261, %v2245
  %v4246 = vpack.c.b16 %v2262, %v2246
  %v4247 = vpack.c.b16 %v2263, %v2247
  %v4248 = vpack.c.b16 %v2280, %v2264
  %v4249 = vpack.c.b16 %v2281, %v2265
  %v4250 = vpack.c.b16 %v2282, %v2266
  %v4251 = vpack.c.b16 %v2283, %v2267
  %v4252 = vpack.c.b16 %v2284, %v2268
  %v4253 = vpack.c.b16 %v2285, %v2269
  %v4254 = vpack.c.b16 %v2286, %v2270
  %v4255 = vpack.c.b16 %v2287, %v2271
  %v4256 = vpack.c.b16 %v2288, %v2272
  %v4257 = vpack.c.b16 %v2289, %v2273
  %v4258 = vpack.c.b16 %v2290, %v2274
  %v4259 = vpack.c.b16 %v2291, %v2275
  %v4260 = vpack.c.b16 %v2292, %v2276
  %v4261 = vpack.c.b16 %v2293, %v2277
  %v4262 = vpack.c.b16 %v2294, %v2278
  %v4263 = vpack.c.b16 %v2295, %v2279
  %v4264 = vpack.c.b16 %v2312, %v2296
  %v4265 = vpack.c.b16 %v2313, %v2297
  %v4266 = vpack.c.b16 %v2314, %v2298
  %v4267 = vpack.c.b16 %v2315, %v2299
  %v4268 = vpack.c.b16 %v2316, %v2300
  %v4269 = vpack.c.b16 %v2317, %v2301
  %v4270 = vpack.c.b16 %v2318, %v2302
  %v4271 = vpack.c.b16 %v2319, %v2303
  %v4272 = vpack.c.b16 %v2320, %v2304
  %v4273 = vpack.c.b16 %v2321, %v2305
  %v4274 = vpack.c.b16 %v2322, %v2306
  %v4275 = vpack.c.b16 %v2323, %v2307
  %v4276 = vpack.c.b16 %v2324, %v2308
  %v4277 = vpack.c.b16 %v2325, %v2309
  %v4278 = vpack.c.b16 %v2326, %v2310
  %v4279 = vpack.c.b16 %v2327, %v2311
  %v4280 = vpack.c.b16 %v2344, %v2328
  %v4281 = vpack.c.b16 %v2345, %v2329
  %v4282 = vpack.c.b16 %v2346, %v2330
  %v4283 = vpack.c.b16 %v2347, %v2331
  %v4284 = vpack.c.b16 %v2348, %v2332
  %v4285 = vpack.c.b16 %v2349, %v2333
  %v4286 = vpack.c.b16 %v2350, %v2334
  %v4287 = vpack.c.b16 %v2351, %v2335
  %v4288 = vpack.c.b16 %v2352, %v2336
  %v4289 = vpack.c.b16 %v2353, %v2337
  %v4290 = vpack.c.b16 %v2354, %v2338
  %v4291 = vpack.c.b16 %v2355, %v2339
  %v4292 = vpack.c.b16 %v2356, %v2340
  %v4293 = vpack.c.b16 %v2357, %v2341
  %v4294 = vpack.c.b16 %v2358, %v2342
  %v4295 = vpack.c.b16 %v2359, %v2343
  %v4296 = vpack.c.b16 %v2376, %v2360
  %v4297 = vpack.c.b16 %v2377, %v2361
  %v4298 = vpack.c.b16 %v2378, %v2362
  %v4299 = vpack.c.b16 %v2379, %v2363
  %v4300 = vpack.c.b16 %v2380, %v2364
  %v4301 = vpack.c.b16 %v2381, %v2365
  %v4302 = vpack.c.b16 %v2382, %v2366
  %v4303 = vpack.c.b16 %v2383, %v2367
  %v4304 = vpack.c.b16 %v2384, %v2368
  %v4305 = vpack.c.b16 %v2385, %v2369
  %v4306 = vpack.c.b16 %v2386, %v2370
  %v4307 = vpack.c.b16 %v2387, %v2371
  %v4308 = vpack.c.b16 %v2388, %v2372
  %v4309 = vpack.c.b16 %v2389, %v2373
  %v4310 = vpack.c.b16 %v2390, %v2374
  %v4311 = vpack.c.b16 %v2391, %v2375
  %v4312 = vpack.c.b16 %v2408, %v2392
  %v4313 = vpack.c.b16 %v2409, %v2393
  %v4314 = vpack.c.b16 %v2410, %v2394
  %v4315 = vpack.c.b16 %v2411, %v2395
  %v4316 = vpack.c.b16 %v2412, %v2396
  %v4317 = vpack.c.b16 %v2413, %v2397
  %v4318 = vpack.c.b16 %v2414, %v2398
  %v4319 = vpack.c.b16 %v2415, %v2399
  %v4320 = vpack.c.b16 %v2416, %v2400
  %v4321 = vpack.c.b16 %v2417, %v2401
  %v4322 = vpack.c.b16 %v2418, %v2402
  %v4323 = vpack.c.b16 %v2419, %v2403
  %v4324 = vpack.c.b16 %v2420, %v2404
  %v4325 = vpack.c.b16 %v2421, %v2405
  %v4326 = vpack.c.b16 %v2422, %v2406
  %v4327 = vpack.c.b16 %v2423, %v2407
  %v4328 = vpack.c.b16 %v2440, %v2424
  %v4329 = vpack.c.b16 %v2441, %v2425
  %v4330 = vpack.c.b16 %v2442, %v2426
  %v4331 = vpack.c.b16 %v2443, %v2427
  %v4332 = vpack.c.b16 %v2444, %v2428
  %v4333 = vpack.c.b16 %v2445, %v2429
  %v4334 = vpack.c.b16 %v2446, %v2430
  %v4335 = vpack.c.b16 %v2447, %v2431
  %v4336 = vpack.c.b16 %v2448, %v2432
  %v4337 = vpack.c.b16 %v2449, %v2433
  %v4338 = vpack.c.b16 %v2450, %v2434
  %v4339 = vpack.c.b16 %v2451, %v2435
  %v4340 = vpack.c.b16 %v2452, %v2436
  %v4341 = vpack.c.b16 %v2453, %v2437
  %v4342 = vpack.c.b16 %v2454, %v2438
  %v4343 = vpack.c.b16 %v2455, %v2439
  %v4344 = vpack.c.b16 %v2472, %v2456
  %v4345 = vpack.c.b16 %v2473, %v2457
  %v4346 = vpack.c.b16 %v2474, %v2458
  %v4347 = vpack.c.b16 %v2475, %v2459
  %v4348 = vpack.c.b16 %v2476, %v2460
  %v4349 = vpack.c.b16 %v2477, %v2461
  %v4350 = vpack.c.b16 %v2478, %v2462
  %v4351 = vpack.c.b16 %v2479, %v2463
  %v4352 = vpack.c.b16 %v2480, %v2464
  %v4353 = vpack.c.b16 %v2481, %v2465
  %v4354 = vpack.c.b16 %v2482, %v2466
  %v4355 = vpack.c.b16 %v2483, %v2467
  %v4356 = vpack.c.b16 %v2484, %v2468
  %v4357 = vpack.c.b16 %v2485, %v2469
  %v4358 = vpack.c.b16 %v2486, %v2470
  %v4359 = vpack.c.b16 %v2487, %v2471
  %v4360 = vpack.c.b16 %v2504, %v2488
  %v4361 = vpack.c.b16 %v2505, %v2489
  %v4362 = vpack.c.b16 %v2506, %v2490
  %v4363 = vpack.c.b16 %v2507, %v2491
  %v4364 = vpack.c.b16 %v2508, %v2492
  %v4365 = vpack.c.b16 %v2509, %v2493
  %v4366 = vpack.c.b16 %v2510, %v2494
  %v4367 = vpack.c.b16 %v2511, %v2495
  %v4368 = vpack.c.b16 %v2512, %v2496
  %v4369 = vpack.c.b16 %v2513, %v2497
  %v4370 = vpack.c.b16 %v2514, %v2498
  %v4371 = vpack.c.b16 %v2515, %v2499
  %v4372 = vpack.c.b16 %v2516, %v2500
  %v4373 = vpack.c.b16 %v2517, %v2501
  %v4374 = vpack.c.b16 %v2518, %v2502
  %v4375 = vpack.c.b16 %v2519, %v2503
  %v4376 = vpack.c.b16 %v2536, %v2520
  %v4377 = vpack.c.b16 %v2537, %v2521
  %v4378 = vpack.c.b16 %v2538, %v2522
  %v4379 = vpack.c.b16 %v2539, %v2523
  %v4380 = vpack.c.b16 %v2540, %v2524
  %v4381 = vpack.c.b16 %v2541, %v2525
  %v4382 = vpack.c.b16 %v2542, %v2526
  %v4383 = vpack.c.b16 %v2543, %v2527
  %v4384 = vpack.c.b16 %v2544, %v2528
  %v4385 = vpack.c.b16 %v2545, %v2529
  %v4386 = vpack.c.b16 %v2546, %v2530
  %v4387 = vpack.c.b16 %v2547, %v2531
  %v4388 = vpack.c.b16 %v2548, %v2532
  %v4389 = vpack.c.b16 %v2549, %v2533
  %v4390 = vpack.c.b16 %v2550, %v2534
  %v4391 = vpack.c.b16 %v2551, %v2535
  %v4392 = vpack.c.b16 %v2568, %v2552
  %v4393 = vpack.c.b16 %v2569, %v2553
  %v4394 = vpack.c.b16 %v2570, %v2554
  %v4395 = vpack.c.b16 %v2571, %v2555
  %v4396 = vpack.c.b16 %v2572, %v2556
  %v4397 = vpack.c.b16 %v2573, %v2557
  %v4398 = vpack.c.b16 %v2574, %v2558
  %v4399 = vpack.c.b16 %v2575, %v2559
  %v4400 = vpack.c.b16 %v2576, %v2560
  %v4401 = vpack.c.b16 %v2577, %v2561
  %v4402 = vpack.c.b16 %v2578, %v2562
  %v4403 = vpack.c.b16 %v2579, %v2563
  %v4404 = vpack.c.b16 %v2580, %v2564
  %v4405 = vpack.c.b16 %v2581, %v2565
  %v4406 = vpack.c.b16 %v2582, %v2566
  %v4407 = vpack.c.b16 %v2583, %v2567
  %v4408 = vpack.c.b16 %v2600, %v2584
  %v4409 = vpack.c.b16 %v2601, %v2585
  %v4410 = vpack.c.b16 %v2602, %v2586
  %v4411 = vpack.c.b16 %v2603, %v2587
  %v4412 = vpack.c.b16 %v2604, %v2588
  %v4413 = vpack.c.b16 %v2605, %v2589
  %v4414 = vpack.c.b16 %v2606, %v2590
  %v4415 = vpack.c.b16 %v2607, %v2591
  %v4416 = vpack.c.b16 %v2608, %v2592
  %v4417 = vpack.c.b16 %v2609, %v2593
  %v4418 = vpack.c.b16 %v2610, %v2594
  %v4419 = vpack.c.b16 %v2611, %v2595
  %v4420 = vpack.c.b16 %v2612, %v2596
  %v4421 = vpack.c.b16 %v2613, %v2597
  %v4422 = vpack.c.b16 %v2614, %v2598
  %v4423 = vpack.c.b16 %v2615, %v2599
  %v4424 = vpack.c.b16 %v2632, %v2616
  %v4425 = vpack.c.b16 %v2633, %v2617
  %v4426 = vpack.c.b16 %v2634, %v2618
  %v4427 = vpack.c.b16 %v2635, %v2619
  %v4428 = vpack.c.b16 %v2636, %v2620
  %v4429 = vpack.c.b16 %v2637, %v2621
  %v4430 = vpack.c.b16 %v2638, %v2622
  %v4431 = vpack.c.b16 %v2639, %v2623
  %v4432 = vpack.c.b16 %v2640, %v2624
  %v4433 = vpack.c.b16 %v2641, %v2625
  %v4434 = vpack.c.b16 %v2642, %v2626
  %v4435 = vpack.c.b16 %v2643, %v2627
  %v4436 = vpack.c.b16 %v2644, %v2628
  %v4437 = vpack.c.b16 %v2645, %v2629
  %v4438 = vpack.c.b16 %v2646, %v2630
  %v4439 = vpack.c.b16 %v2647, %v2631
  %v4440 = vpack.c.b16 %v2664, %v2648
  %v4441 = vpack.c.b16 %v2665, %v2649
  %v4442 = vpack.c.b16 %v2666, %v2650
  %v4443 = vpack.c.b16 %v2667, %v2651
  %v4444 = vpack.c.b16 %v2668, %v2652
  %v4445 = vpack.c.b16 %v2669, %v2653
  %v4446 = vpack.c.b16 %v2670, %v2654
  %v4447 = vpack.c.b16 %v2671, %v2655
  %v4448 = vpack.c.b16 %v2672, %v2656
  %v4449 = vpack.c.b16 %v2673, %v2657
  %v4450 = vpack.c.b16 %v2674, %v2658
  %v4451 = vpack.c.b16 %v2675, %v2659
  %v4452 = vpack.c.b16 %v2676, %v2660
  %v4453 = vpack.c.b16 %v2677, %v2661
  %v4454 = vpack.c.b16 %v2678, %v2662
  %v4455 = vpack.c.b16 %v2679, %v2663
  %v4456 = vpack.c.b16 %v2696, %v2680
  %v4457 = vpack.c.b16 %v2697, %v2681
  %v4458 = vpack.c.b16 %v2698, %v2682
  %v4459 = vpack.c.b16 %v2699, %v2683
  %v4460 = vpack.c.b16 %v2700, %v2684
  %v4461 = vpack.c.b16 %v2701, %v2685
  %v4462 = vpack.c.b16 %v2702, %v2686
  %v4463 = vpack.c.b16 %v2703, %v2687
  %v4464 = vpack.c.b16 %v2704, %v2688
  %v4465 = vpack.c.b16 %v2705, %v2689
  %v4466 = vpack.c.b16 %v2706, %v2690
  %v4467 = vpack.c.b16 %v2707, %v2691
  %v4468 = vpack.c.b16 %v2708, %v2692
  %v4469 = vpack.c.b16 %v2709, %v2693
  %v4470 = vpack.c.b16 %v2710, %v2694
  %v4471 = vpack.c.b16 %v2711, %v2695
  %v4472 = vpack.c.b16 %v2728, %v2712
  %v4473 = vpack.c.b16 %v2729, %v2713
  %v4474 = vpack.c.b16 %v2730, %v2714
  %v4475 = vpack.c.b16 %v2731, %v2715
  %v4476 = vpack.c.b16 %v2732, %v2716
  %v4477 = vpack.c.b16 %v2733, %v2717
  %v4478 = vpack.c.b16 %v2734, %v2718
  %v4479 = vpack.c.b16 %v2735, %v2719
  %v4480 = vpack.c.b16 %v2736, %v2720
  %v4481 = vpack.c.b16 %v2737, %v2721
  %v4482 = vpack.c.b16 %v2738, %v2722
  %v4483 = vpack.c.b16 %v2739, %v2723
  %v4484 = vpack.c.b16 %v2740, %v2724
  %v4485 = vpack.c.b16 %v2741, %v2725
  %v4486 = vpack.c.b16 %v2742, %v2726
  %v4487 = vpack.c.b16 %v2743, %v2727
  %v4488 = vpack.c.b16 %v2760, %v2744
  %v4489 = vpack.c.b16 %v2761, %v2745
  %v4490 = vpack.c.b16 %v2762, %v2746
  %v4491 = vpack.c.b16 %v2763, %v2747
  %v4492 = vpack.c.b16 %v2764, %v2748
  %v4493 = vpack.c.b16 %v2765, %v2749
  %v4494 = vpack.c.b16 %v2766, %v2750
  %v4495 = vpack.c.b16 %v2767, %v2751
  %v4496 = vpack.c.b16 %v2768, %v2752
  %v4497 = vpack.c.b16 %v2769, %v2753
  %v4498 = vpack.c.b16 %v2770, %v2754
  %v4499 = vpack.c.b16 %v2771, %v2755
  %v4500 = vpack.c.b16 %v2772, %v2756
  %v4501 = vpack.c.b16 %v2773, %v2757
  %v4502 = vpack.c.b16 %v2774, %v2758
  %v4503 = vpack.c.b16 %v2775, %v2759
  %v4504 = vpack.c.b16 %v2792, %v2776
  %v4505 = vpack.c.b16 %v2793, %v2777
  %v4506 = vpack.c.b16 %v2794, %v2778
  %v4507 = vpack.c.b16 %v2795, %v2779
  %v4508 = vpack.c.b16 %v2796, %v2780
  %v4509 = vpack.c.b16 %v2797, %v2781
  %v4510 = vpack.c.b16 %v2798, %v2782
  %v4511 = vpack.c.b16 %v2799, %v2783
  %v4512 = vpack.c.b16 %v2800, %v2784
  %v4513 = vpack.c.b16 %v2801, %v2785
  %v4514 = vpack.c.b16 %v2802, %v2786
  %v4515 = vpack.c.b16 %v2803, %v2787
  %v4516 = vpack.c.b16 %v2804, %v2788
  %v4517 = vpack.c.b16 %v2805, %v2789
  %v4518 = vpack.c.b16 %v2806, %v2790
  %v4519 = vpack.c.b16 %v2807, %v2791
  %v4520 = vpack.c.b16 %v2824, %v2808
  %v4521 = vpack.c.b16 %v2825, %v2809
  %v4522 = vpack.c.b16 %v2826, %v2810
  %v4523 = vpack.c.b16 %v2827, %v2811
  %v4524 = vpack.c.b16 %v2828, %v2812
  %v4525 = vpack.c.b16 %v2829, %v2813
  %v4526 = vpack.c.b16 %v2830, %v2814
  %v4527 = vpack.c.b16 %v2831, %v2815
  %v4528 = vpack.c.b16 %v2832, %v2816
  %v4529 = vpack.c.b16 %v2833, %v2817
  %v4530 = vpack.c.b16 %v2834, %v2818
  %v4531 = vpack.c.b16 %v2835, %v2819
  %v4532 = vpack.c.b16 %v2836, %v2820
  %v4533 = vpack.c.b16 %v2837, %v2821
  %v4534 = vpack.c.b16 %v2838, %v2822
  %v4535 = vpack.c.b16 %v2839, %v2823
  %v4536 = vpack.c.b16 %v2856, %v2840
  %v4537 = vpack.c.b16 %v2857, %v2841
  %v4538 = vpack.c.b16 %v2858, %v2842
  %v4539 = vpack.c.b16 %v2859, %v2843
  %v4540 = vpack.c.b16 %v2860, %v2844
  %v4541 = vpack.c.b16 %v2861, %v2845
  %v4542 = vpack.c.b16 %v2862, %v2846
  %v4543 = vpack.c.b16 %v2863, %v2847
  %v4544 = vpack.c.b16 %v2864, %v2848
  %v4545 = vpack.c.b16 %v2865, %v2849
  %v4546 = vpack.c.b16 %v2866, %v2850
  %v4547 = vpack.c.b16 %v2867, %v2851
  %v4548 = vpack.c.b16 %v2868, %v2852
  %v4549 = vpack.c.b16 %v2869, %v2853
  %v4550 = vpack.c.b16 %v2870, %v2854
  %v4551 = vpack.c.b16 %v2871, %v2855
  %v4552 = vpack.c.b16 %v2888, %v2872
  %v4553 = vpack.c.b16 %v2889, %v2873
  %v4554 = vpack.c.b16 %v2890, %v2874
  %v4555 = vpack.c.b16 %v2891, %v2875
  %v4556 = vpack.c.b16 %v2892, %v2876
  %v4557 = vpack.c.b16 %v2893, %v2877
  %v4558 = vpack.c.b16 %v2894, %v2878
  %v4559 = vpack.c.b16 %v2895, %v2879
  %v4560 = vpack.c.b16 %v2896, %v2880
  %v4561 = vpack.c.b16 %v2897, %v2881
  %v4562 = vpack.c.b16 %v2898, %v2882
  %v4563 = vpack.c.b16 %v2899, %v2883
  %v4564 = vpack.c.b16 %v2900, %v2884
  %v4565 = vpack.c.b16 %v2901, %v2885
  %v4566 = vpack.c.b16 %v2902, %v2886
  %v4567 = vpack.c.b16 %v2903, %v2887
  %v4568 = vpack.c.b16 %v2920, %v2904
  %v4569 = vpack.c.b16 %v2921, %v2905
  %v4570 = vpack.c.b16 %v2922, %v2906
  %v4571 = vpack.c.b16 %v2923, %v2907
  %v4572 = vpack.c.b16 %v2924, %v2908
  %v4573 = vpack.c.b16 %v2925, %v2909
  %v4574 = vpack.c.b16 %v2926, %v2910
  %v4575 = vpack.c.b16 %v2927, %v2911
  %v4576 = vpack.c.b16 %v2928, %v2912
  %v4577 = vpack.c.b16 %v2929, %v2913
  %v4578 = vpack.c.b16 %v2930, %v2914
  %v4579 = vpack.c.b16 %v2931, %v2915
  %v4580 = vpack.c.b16 %v2932, %v2916
  %v4581 = vpack.c.b16 %v2933, %v2917
  %v4582 = vpack.c.b16 %v2934, %v2918
  %v4583 = vpack.c.b16 %v2935, %v2919
  %v4584 = vpack.c.b16 %v2952, %v2936
  %v4585 = vpack.c.b16 %v2953, %v2937
  %v4586 = vpack.c.b16 %v2954, %v2938
  %v4587 = vpack.c.b16 %v2955, %v2939
  %v4588 = vpack.c.b16 %v2956, %v2940
  %v4589 = vpack.c.b16 %v2957, %v2941
  %v4590 = vpack.c.b16 %v2958, %v2942
  %v4591 = vpack.c.b16 %v2959, %v2943
  %v4592 = vpack.c.b16 %v2960, %v2944
  %v4593 = vpack.c.b16 %v2961, %v2945
  %v4594 = vpack.c.b16 %v2962, %v2946
  %v4595 = vpack.c.b16 %v2963, %v2947
  %v4596 = vpack.c.b16 %v2964, %v2948
  %v4597 = vpack.c.b16 %v2965, %v2949
  %v4598 = vpack.c.b16 %v2966, %v2950
  %v4599 = vpack.c.b16 %v2967, %v2951
  %v4600 = vpack.c.b16 %v2984, %v2968
  %v4601 = vpack.c.b16 %v2985, %v2969
  %v4602 = vpack.c.b16 %v2986, %v2970
  %v4603 = vpack.c.b16 %v2987, %v2971
  %v4604 = vpack.c.b16 %v2988, %v2972
  %v4605 = vpack.c.b16 %v2989, %v2973
  %v4606 = vpack.c.b16 %v2990, %v2974
  %v4607 = vpack.c.b16 %v2991, %v2975
  %v4608 = vpack.c.b16 %v2992, %v2976
  %v4609 = vpack.c.b16 %v2993, %v2977
  %v4610 = vpack.c.b16 %v2994, %v2978
  %v4611 = vpack.c.b16 %v2995, %v2979
  %v4612 = vpack.c.b16 %v2996, %v2980
  %v4613 = vpack.c.b16 %v2997, %v2981
  %v4614 = vpack.c.b16 %v2998, %v2982
  %v4615 = vpack.c.b16 %v2999, %v2983
  %v4616 = vpack.c.b16 %v3016, %v3000
  %v4617 = vpack.c.b16 %v3017, %v3001
  %v4618 = vpack.c.b16 %v3018, %v3002
  %v4619 = vpack.c.b16 %v3019, %v3003
  %v4620 = vpack.c.b16 %v3020, %v3004
  %v4621 = vpack.c.b16 %v3021, %v3005
  %v4622 = vpack.c.b16 %v3022, %v3006
  %v4623 = vpack.c.b16 %v3023, %v3007
  %v4624 = vpack.c.b16 %v3024, %v3008
  %v4625 = vpack.c.b16 %v3025, %v3009
  %v4626 = vpack.c.b16 %v3026, %v3010
  %v4627 = vpack.c.b16 %v3027, %v3011
  %v4628 = vpack.c.b16 %v3028, %v3012
  %v4629 = vpack.c.b16 %v3029, %v3013
  %v4630 = vpack.c.b16 %v3030, %v3014
  %v4631 = vpack.c.b16 %v3031, %v3015
  %v4632 = vpack.c.b16 %v3048, %v3032
  %v4633 = vpack.c.b16 %v3049, %v3033
  %v4634 = vpack.c.b16 %v3050, %v3034
  %v4635 = vpack.c.b16 %v3051, %v3035
  %v4636 = vpack.c.b16 %v3052, %v3036
  %v4637 = vpack.c.b16 %v3053, %v3037
  %v4638 = vpack.c.b16 %v3054, %v3038
  %v4639 = vpack.c.b16 %v3055, %v3039
  %v4640 = vpack.c.b16 %v3056, %v3040
  %v4641 = vpack.c.b16 %v3057, %v3041
  %v4642 = vpack.c.b16 %v3058, %v3042
  %v4643 = vpack.c.b16 %v3059, %v3043
  %v4644 = vpack.c.b16 %v3060, %v3044
  %v4645 = vpack.c.b16 %v3061, %v3045
  %v4646 = vpack.c.b16 %v3062, %v3046
  %v4647 = vpack.c.b16 %v3063, %v3047
  %v4648 = vpack.c.b16 %v3080, %v3064
  %v4649 = vpack.c.b16 %v3081, %v3065
  %v4650 = vpack.c.b16 %v3082, %v3066
  %v4651 = vpack.c.b16 %v3083, %v3067
  %v4652 = vpack.c.b16 %v3084, %v3068
  %v4653 = vpack.c.b16 %v3085, %v3069
  %v4654 = vpack.c.b16 %v3086, %v3070
  %v4655 = vpack.c.b16 %v3087, %v3071
  %v4656 = vpack.c.b16 %v3088, %v3072
  %v4657 = vpack.c.b16 %v3089, %v3073
  %v4658 = vpack.c.b16 %v3090, %v3074
  %v4659 = vpack.c.b16 %v3091, %v3075
  %v4660 = vpack.c.b16 %v3092, %v3076
  %v4661 = vpack.c.b16 %v3093, %v3077
  %v4662 = vpack.c.b16 %v3094, %v3078
  %v4663 = vpack.c.b16 %v3095, %v3079
  %v4664 = vpack.c.b16 %v3112, %v3096
  %v4665 = vpack.c.b16 %v3113, %v3097
  %v4666 = vpack.c.b16 %v3114, %v3098
  %v4667 = vpack.c.b16 %v3115, %v3099
  %v4668 = vpack.c.b16 %v3116, %v3100
  %v4669 = vpack.c.b16 %v3117, %v3101
  %v4670 = vpack.c.b16 %v3118, %v3102
  %v4671 = vpack.c.b16 %v3119, %v3103
  %v4672 = vpack.c.b16 %v3120, %v3104
  %v4673 = vpack.c.b16 %v3121, %v3105
  %v4674 = vpack.c.b16 %v3122, %v3106
  %v4675 = vpack.c.b16 %v3123, %v3107
  %v4676 = vpack.c.b16 %v3124, %v3108
  %v4677 = vpack.c.b16 %v3125, %v3109
  %v4678 = vpack.c.b16 %v3126, %v3110
  %v4679 = vpack.c.b16 %v3127, %v3111
  %v4680 = vpack.c.b16 %v3144, %v3128
  %v4681 = vpack.c.b16 %v3145, %v3129
  %v4682 = vpack.c.b16 %v3146, %v3130
  %v4683 = vpack.c.b16 %v3147, %v3131
  %v4684 = vpack.c.b16 %v3148, %v3132
  %v4685 = vpack.c.b16 %v3149, %v3133
  %v4686 = vpack.c.b16 %v3150, %v3134
  %v4687 = vpack.c.b16 %v3151, %v3135
  %v4688 = vpack.c.b16 %v3152, %v3136
  %v4689 = vpack.c.b16 %v3153, %v3137
  %v4690 = vpack.c.b16 %v3154, %v3138
  %v4691 = vpack.c.b16 %v3155, %v3139
  %v4692 = vpack.c.b16 %v3156, %v3140
  %v4693 = vpack.c.b16 %v3157, %v3141
  %v4694 = vpack.c.b16 %v3158, %v3142
  %v4695 = vpack.c.b16 %v3159, %v3143
  %v4696 = vpack.c.b16 %v3176, %v3160
  %v4697 = vpack.c.b16 %v3177, %v3161
  %v4698 = vpack.c.b16 %v3178, %v3162
  %v4699 = vpack.c.b16 %v3179, %v3163
  %v4700 = vpack.c.b16 %v3180, %v3164
  %v4701 = vpack.c.b16 %v3181, %v3165
  %v4702 = vpack.c.b16 %v3182, %v3166
  %v4703 = vpack.c.b16 %v3183, %v3167
  %v4704 = vpack.c.b16 %v3184, %v3168
  %v4705 = vpack.c.b16 %v3185, %v3169
  %v4706 = vpack.c.b16 %v3186, %v3170
  %v4707 = vpack.c.b16 %v3187, %v3171
  %v4708 = vpack.c.b16 %v3188, %v3172
  %v4709 = vpack.c.b16 %v3189, %v3173
  %v4710 = vpack.c.b16 %v3190, %v3174
  %v4711 = vpack.c.b16 %v3191, %v3175
  %v4712 = vpack.c.b16 %v3208, %v3192
  %v4713 = vpack.c.b16 %v3209, %v3193
  %v4714 = vpack.c.b16 %v3210, %v3194
  %v4715 = vpack.c.b16 %v3211, %v3195
  %v4716 = vpack.c.b16 %v3212, %v3196
  %v4717 = vpack.c.b16 %v3213, %v3197
  %v4718 = vpack.c.b16 %v3214, %v3198
  %v4719 = vpack.c.b16 %v3215, %v3199
  %v4720 = vpack.c.b16 %v3216, %v3200
  %v4721 = vpack.c.b16 %v3217, %v3201
  %v4722 = vpack.c.b16 %v3218, %v3202
  %v4723 = vpack.c.b16 %v3219, %v3203
  %v4724 = vpack.c.b16 %v3220, %v3204
  %v4725 = vpack.c.b16 %v3221, %v3205
  %v4726 = vpack.c.b16 %v3222, %v3206
  %v4727 = vpack.c.b16 %v3223, %v3207
  %v4728 = vpack.c.b16 %v3240, %v3224
  %v4729 = vpack.c.b16 %v3241, %v3225
  %v4730 = vpack.c.b16 %v3242, %v3226
  %v4731 = vpack.c.b16 %v3243, %v3227
  %v4732 = vpack.c.b16 %v3244, %v3228
  %v4733 = vpack.c.b16 %v3245, %v3229
  %v4734 = vpack.c.b16 %v3246, %v3230
  %v4735 = vpack.c.b16 %v3247, %v3231
  %v4736 = vpack.c.b16 %v3248, %v3232
  %v4737 = vpack.c.b16 %v3249, %v3233
  %v4738 = vpack.c.b16 %v3250, %v3234
  %v4739 = vpack.c.b16 %v3251, %v3235
  %v4740 = vpack.c.b16 %v3252, %v3236
  %v4741 = vpack.c.b16 %v3253, %v3237
  %v4742 = vpack.c.b16 %v3254, %v3238
  %v4743 = vpack.c.b16 %v3255, %v3239
  %v4744 = vpack.c.b16 %v3272, %v3256
  %v4745 = vpack.c.b16 %v3273, %v3257
  %v4746 = vpack.c.b16 %v3274, %v3258
  %v4747 = vpack.c.b16 %v3275, %v3259
  %v4748 = vpack.c.b16 %v3276, %v3260
  %v4749 = vpack.c.b16 %v3277, %v3261
  %v4750 = vpack.c.b16 %v3278, %v3262
  %v4751 = vpack.c.b16 %v3279, %v3263
  %v4752 = vpack.c.b16 %v3280, %v3264
  %v4753 = vpack.c.b16 %v3281, %v3265
  %v4754 = vpack.c.b16 %v3282, %v3266
  %v4755 = vpack.c.b16 %v3283, %v3267
  %v4756 = vpack.c.b16 %v3284, %v3268
  %v4757 = vpack.c.b16 %v3285, %v3269
  %v4758 = vpack.c.b16 %v3286, %v3270
  %v4759 = vpack.c.b16 %v3287, %v3271
  %v4760 = vpack.c.b16 %v3304, %v3288
  %v4761 = vpack.c.b16 %v3305, %v3289
  %v4762 = vpack.c.b16 %v3306, %v3290
  %v4763 = vpack.c.b16 %v3307, %v3291
  %v4764 = vpack.c.b16 %v3308, %v3292
  %v4765 = vpack.c.b16 %v3309, %v3293
  %v4766 = vpack.c.b16 %v3310, %v3294
  %v4767 = vpack.c.b16 %v3311, %v3295
  %v4768 = vpack.c.b16 %v3312, %v3296
  %v4769 = vpack.c.b16 %v3313, %v3297
  %v4770 = vpack.c.b16 %v3314, %v3298
  %v4771 = vpack.c.b16 %v3315, %v3299
  %v4772 = vpack.c.b16 %v3316, %v3300
  %v4773 = vpack.c.b16 %v3317, %v3301
  %v4774 = vpack.c.b16 %v3318, %v3302
  %v4775 = vpack.c.b16 %v3319, %v3303
  %v4776 = vpack.c.b16 %v3336, %v3320
  %v4777 = vpack.c.b16 %v3337, %v3321
  %v4778 = vpack.c.b16 %v3338, %v3322
  %v4779 = vpack.c.b16 %v3339, %v3323
  %v4780 = vpack.c.b16 %v3340, %v3324
  %v4781 = vpack.c.b16 %v3341, %v3325
  %v4782 = vpack.c.b16 %v3342, %v3326
  %v4783 = vpack.c.b16 %v3343, %v3327
  %v4784 = vpack.c.b16 %v3344, %v3328
  %v4785 = vpack.c.b16 %v3345, %v3329
  %v4786 = vpack.c.b16 %v3346, %v3330
  %v4787 = vpack.c.b16 %v3347, %v3331
  %v4788 = vpack.c.b16 %v3348, %v3332
  %v4789 = vpack.c.b16 %v3349, %v3333
  %v4790 = vpack.c.b16 %v3350, %v3334
  %v4791 = vpack.c.b16 %v3351, %v3335
  %v4792 = vpack.c.b16 %v3368, %v3352
  %v4793 = vpack.c.b16 %v3369, %v3353
  %v4794 = vpack.c.b16 %v3370, %v3354
  %v4795 = vpack.c.b16 %v3371, %v3355
  %v4796 = vpack.c.b16 %v3372, %v3356
  %v4797 = vpack.c.b16 %v3373, %v3357
  %v4798 = vpack.c.b16 %v3374, %v3358
  %v4799 = vpack.c.b16 %v3375, %v3359
  %v4800 = vpack.c.b16 %v3376, %v3360
  %v4801 = vpack.c.b16 %v3377, %v3361
  %v4802 = vpack.c.b16 %v3378, %v3362
  %v4803 = vpack.c.b16 %v3379, %v3363
  %v4804 = vpack.c.b16 %v3380, %v3364
  %v4805 = vpack.c.b16 %v3381, %v3365
  %v4806 = vpack.c.b16 %v3382, %v3366
  %v4807 = vpack.c.b16 %v3383, %v3367
  %v4808 = vpack.c.b16 %v3400, %v3384
  %v4809 = vpack.c.b16 %v3401, %v3385
  %v4810 = vpack.c.b16 %v3402, %v3386
  %v4811 = vpack.c.b16 %v3403, %v3387
  %v4812 = vpack.c.b16 %v3404, %v3388
  %v4813 = vpack.c.b16 %v3405, %v3389
  %v4814 = vpack.c.b16 %v3406, %v3390
  %v4815 = vpack.c.b16 %v3407, %v3391
  %v4816 = vpack.c.b16 %v3408, %v3392
  %v4817 = vpack.c.b16 %v3409, %v3393
  %v4818 = vpack.c.b16 %v3410, %v3394
  %v4819 = vpack.c.b16 %v3411, %v3395
  %v4820 = vpack.c.b16 %v3412, %v3396
  %v4821 = vpack.c.b16 %v3413, %v3397
  %v4822 = vpack.c.b16 %v3414, %v3398
  %v4823 = vpack.c.b16 %v3415, %v3399
  %v4824 = vpack.c.b16 %v3432, %v3416
  %v4825 = vpack.c.b16 %v3433, %v3417
  %v4826 = vpack.c.b16 %v3434, %v3418
  %v4827 = vpack.c.b16 %v3435, %v3419
  %v4828 = vpack.c.b16 %v3436, %v3420
  %v4829 = vpack.c.b16 %v3437, %v3421
  %v4830 = vpack.c.b16 %v3438, %v3422
  %v4831 = vpack.c.b16 %v3439, %v3423
  %v4832 = vpack.c.b16 %v3440, %v3424
  %v4833 = vpack.c.b16 %v3441, %v3425
  %v4834 = vpack.c.b16 %v3442, %v3426
  %v4835 = vpack.c.b16 %v3443, %v3427
  %v4836 = vpack.c.b16 %v3444, %v3428
  %v4837 = vpack.c.b16 %v3445, %v3429
  %v4838 = vpack.c.b16 %v3446, %v3430
  %v4839 = vpack.c.b16 %v3447, %v3431
  %v4840 = vpack.c.b16 %v3464, %v3448
  %v4841 = vpack.c.b16 %v3465, %v3449
  %v4842 = vpack.c.b16 %v3466, %v3450
  %v4843 = vpack.c.b16 %v3467, %v3451
  %v4844 = vpack.c.b16 %v3468, %v3452
  %v4845 = vpack.c.b16 %v3469, %v3453
  %v4846 = vpack.c.b16 %v3470, %v3454
  %v4847 = vpack.c.b16 %v3471, %v3455
  %v4848 = vpack.c.b16 %v3472, %v3456
  %v4849 = vpack.c.b16 %v3473, %v3457
  %v4850 = vpack.c.b16 %v3474, %v3458
  %v4851 = vpack.c.b16 %v3475, %v3459
  %v4852 = vpack.c.b16 %v3476, %v3460
  %v4853 = vpack.c.b16 %v3477, %v3461
  %v4854 = vpack.c.b16 %v3478, %v3462
  %v4855 = vpack.c.b16 %v3479, %v3463
  %v4856 = vpack.c.b16 %v3496, %v3480
  %v4857 = vpack.c.b16 %v3497, %v3481
  %v4858 = vpack.c.b16 %v3498, %v3482
  %v4859 = vpack.c.b16 %v3499, %v3483
  %v4860 = vpack.c.b16 %v3500, %v3484
  %v4861 = vpack.c.b16 %v3501, %v3485
  %v4862 = vpack.c.b16 %v3502, %v3486
  %v4863 = vpack.c.b16 %v3503, %v3487
  %v4864 = vpack.c.b16 %v3504, %v3488
  %v4865 = vpack.c.b16 %v3505, %v3489
  %v4866 = vpack.c.b16 %v3506, %v3490
  %v4867 = vpack.c.b16 %v3507, %v3491
  %v4868 = vpack.c.b16 %v3508, %v3492
  %v4869 = vpack.c.b16 %v3509, %v3493
  %v4870 = vpack.c.b16 %v3510, %v3494
  %v4871 = vpack.c.b16 %v3511, %v3495
  %v4872 = vpack.c.b16 %v3528, %v3512
  %v4873 = vpack.c.b16 %v3529, %v3513
  %v4874 = vpack.c.b16 %v3530, %v3514
  %v4875 = vpack.c.b16 %v3531, %v3515
  %v4876 = vpack.c.b16 %v3532, %v3516
  %v4877 = vpack.c.b16 %v3533, %v3517
  %v4878 = vpack.c.b16 %v3534, %v3518
  %v4879 = vpack.c.b16 %v3535, %v3519
  %v4880 = vpack.c.b16 %v3536, %v3520
  %v4881 = vpack.c.b16 %v3537, %v3521
  %v4882 = vpack.c.b16 %v3538, %v3522
  %v4883 = vpack.c.b16 %v3539, %v3523
  %v4884 = vpack.c.b16 %v3540, %v3524
  %v4885 = vpack.c.b16 %v3541, %v3525
  %v4886 = vpack.c.b16 %v3542, %v3526
  %v4887 = vpack.c.b16 %v3543, %v3527
  %v4888 = vpack.c.b16 %v3560, %v3544
  %v4889 = vpack.c.b16 %v3561, %v3545
  %v4890 = vpack.c.b16 %v3562, %v3546
  %v4891 = vpack.c.b16 %v3563, %v3547
  %v4892 = vpack.c.b16 %v3564, %v3548
  %v4893 = vpack.c.b16 %v3565, %v3549
  %v4894 = vpack.c.b16 %v3566, %v3550
  %v4895 = vpack.c.b16 %v3567, %v3551
  %v4896 = vpack.c.b16 %v3568, %v3552
  %v4897 = vpack.c.b16 %v3569, %v3553
  %v4898 = vpack.c.b16 %v3570, %v3554
  %v4899 = vpack.c.b16 %v3571, %v3555
  %v4900 = vpack.c.b16 %v3572, %v3556
  %v4901 = vpack.c.b16 %v3573, %v3557
  %v4902 = vpack.c.b16 %v3574, %v3558
  %v4903 = vpack.c.b16 %v3575, %v3559
  %v4904 = vpack.c.b16 %v3592, %v3576
  %v4905 = vpack.c.b16 %v3593, %v3577
  %v4906 = vpack.c.b16 %v3594, %v3578
  %v4907 = vpack.c.b16 %v3595, %v3579
  %v4908 = vpack.c.b16 %v3596, %v3580
  %v4909 = vpack.c.b16 %v3597, %v3581
  %v4910 = vpack.c.b16 %v3598, %v3582
  %v4911 = vpack.c.b16 %v3599, %v3583
  %v4912 = vpack.c.b16 %v3600, %v3584
  %v4913 = vpack.c.b16 %v3601, %v3585
  %v4914 = vpack.c.b16 %v3602, %v3586
  %v4915 = vpack.c.b16 %v3603, %v3587
  %v4916 = vpack.c.b16 %v3604, %v3588
  %v4917 = vpack.c.b16 %v3605, %v3589
  %v4918 = vpack.c.b16 %v3606, %v3590
  %v4919 = vpack.c.b16 %v3607, %v3591
  %v4920 = vpack.c.b16 %v3624, %v3608
  %v4921 = vpack.c.b16 %v3625, %v3609
  %v4922 = vpack.c.b16 %v3626, %v3610
  %v4923 = vpack.c.b16 %v3627, %v3611
  %v4924 = vpack.c.b16 %v3628, %v3612
  %v4925 = vpack.c.b16 %v3629, %v3613
  %v4926 = vpack.c.b16 %v3630, %v3614
  %v4927 = vpack.c.b16 %v3631, %v3615
  %v4928 = vpack.c.b16 %v3632, %v3616
  %v4929 = vpack.c.b16 %v3633, %v3617
  %v4930 = vpack.c.b16 %v3634, %v3618
  %v4931 = vpack.c.b16 %v3635, %v3619
  %v4932 = vpack.c.b16 %v3636, %v3620
  %v4933 = vpack.c.b16 %v3637, %v3621
  %v4934 = vpack.c.b16 %v3638, %v3622
  %v4935 = vpack.c.b16 %v3639, %v3623
  %v4936 = vpack.c.b16 %v3656, %v3640
  %v4937 = vpack.c.b16 %v3657, %v3641
  %v4938 = vpack.c.b16 %v3658, %v3642
  %v4939 = vpack.c.b16 %v3659, %v3643
  %v4940 = vpack.c.b16 %v3660, %v3644
  %v4941 = vpack.c.b16 %v3661, %v3645
  %v4942 = vpack.c.b16 %v3662, %v3646
  %v4943 = vpack.c.b16 %v3663, %v3647
  %v4944 = vpack.c.b16 %v3664, %v3648
  %v4945 = vpack.c.b16 %v3665, %v3649
  %v4946 = vpack.c.b16 %v3666, %v3650
  %v4947 = vpack.c.b16 %v3667, %v3651
  %v4948 = vpack.c.b16 %v3668, %v3652
  %v4949 = vpack.c.b16 %v3669, %v3653
  %v4950 = vpack.c.b16 %v3670, %v3654
  %v4951 = vpack.c.b16 %v3671, %v3655
  %v4952 = vpack.c.b16 %v3688, %v3672
  %v4953 = vpack.c.b16 %v3689, %v3673
  %v4954 = vpack.c.b16 %v3690, %v3674
  %v4955 = vpack.c.b16 %v3691, %v3675
  %v4956 = vpack.c.b16 %v3692, %v3676
  %v4957 = vpack.c.b16 %v3693, %v3677
  %v4958 = vpack.c.b16 %v3694, %v3678
  %v4959 = vpack.c.b16 %v3695, %v3679
  %v4960 = vpack.c.b16 %v3696, %v3680
  %v4961 = vpack.c.b16 %v3697, %v3681
  %v4962 = vpack.c.b16 %v3698, %v3682
  %v4963 = vpack.c.b16 %v3699, %v3683
  %v4964 = vpack.c.b16 %v3700, %v3684
  %v4965 = vpack.c.b16 %v3701, %v3685
  %v4966 = vpack.c.b16 %v3702, %v3686
  %v4967 = vpack.c.b16 %v3703, %v3687
  %v4968 = vpack.c.b16 %v3720, %v3704
  %v4969 = vpack.c.b16 %v3721, %v3705
  %v4970 = vpack.c.b16 %v3722, %v3706
  %v4971 = vpack.c.b16 %v3723, %v3707
  %v4972 = vpack.c.b16 %v3724, %v3708
  %v4973 = vpack.c.b16 %v3725, %v3709
  %v4974 = vpack.c.b16 %v3726, %v3710
  %v4975 = vpack.c.b16 %v3727, %v3711
  %v4976 = vpack.c.b16 %v3728, %v3712
  %v4977 = vpack.c.b16 %v3729, %v3713
  %v4978 = vpack.c.b16 %v3730, %v3714
  %v4979 = vpack.c.b16 %v3731, %v3715
  %v4980 = vpack.c.b16 %v3732, %v3716
  %v4981 = vpack.c.b16 %v3733, %v3717
  %v4982 = vpack.c.b16 %v3734, %v3718
  %v4983 = vpack.c.b16 %v3735, %v3719
  %v4984 = vpack.c.b16 %v3752, %v3736
  %v4985 = vpack.c.b16 %v3753, %v3737
  %v4986 = vpack.c.b16 %v3754, %v3738
  %v4987 = vpack.c.b16 %v3755, %v3739
  %v4988 = vpack.c.b16 %v3756, %v3740
  %v4989 = vpack.c.b16 %v3757, %v3741
  %v4990 = vpack.c.b16 %v3758, %v3742
  %v4991 = vpack.c.b16 %v3759, %v3743
  %v4992 = vpack.c.b16 %v3760, %v3744
  %v4993 = vpack.c.b16 %v3761, %v3745
  %v4994 = vpack.c.b16 %v3762, %v3746
  %v4995 = vpack.c.b16 %v3763, %v3747
  %v4996 = vpack.c.b16 %v3764, %v3748
  %v4997 = vpack.c.b16 %v3765, %v3749
  %v4998 = vpack.c.b16 %v3766, %v3750
  %v4999 = vpack.c.b16 %v3767, %v3751
  %v5000 = vpack.c.b16 %v3784, %v3768
  %v5001 = vpack.c.b16 %v3785, %v3769
  %v5002 = vpack.c.b16 %v3786, %v3770
  %v5003 = vpack.c.b16 %v3787, %v3771
  %v5004 = vpack.c.b16 %v3788, %v3772
  %v5005 = vpack.c.b16 %v3789, %v3773
  %v5006 = vpack.c.b16 %v3790, %v3774
  %v5007 = vpack.c.b16 %v3791, %v3775
  %v5008 = vpack.c.b16 %v3792, %v3776
  %v5009 = vpack.c.b16 %v3793, %v3777
  %v5010 = vpack.c.b16 %v3794, %v3778
  %v5011 = vpack.c.b16 %v3795, %v3779
  %v5012 = vpack.c.b16 %v3796, %v3780
  %v5013 = vpack.c.b16 %v3797, %v3781
  %v5014 = vpack.c.b16 %v3798, %v3782
  %v5015 = vpack.c.b16 %v3799, %v3783
  %v5016 = vpack.c.b16 %v3816, %v3800
  %v5017 = vpack.c.b16 %v3817, %v3801
  %v5018 = vpack.c.b16 %v3818, %v3802
  %v5019 = vpack.c.b16 %v3819, %v3803
  %v5020 = vpack.c.b16 %v3820, %v3804
  %v5021 = vpack.c.b16 %v3821, %v3805
  %v5022 = vpack.c.b16 %v3822, %v3806
  %v5023 = vpack.c.b16 %v3823, %v3807
  %v5024 = vpack.c.b16 %v3824, %v3808
  %v5025 = vpack.c.b16 %v3825, %v3809
  %v5026 = vpack.c.b16 %v3826, %v3810
  %v5027 = vpack.c.b16 %v3827, %v3811
  %v5028 = vpack.c.b16 %v3828, %v3812
  %v5029 = vpack.c.b16 %v3829, %v3813
  %v5030 = vpack.c.b16 %v3830, %v3814
  %v5031 = vpack.c.b16 %v3831, %v3815
  %v5032 = vpack.c.b16 %v3848, %v3832
  %v5033 = vpack.c.b16 %v3849, %v3833
  %v5034 = vpack.c.b16 %v3850, %v3834
  %v5035 = vpack.c.b16 %v3851, %v3835
  %v5036 = vpack.c.b16 %v3852, %v3836
  %v5037 = vpack.c.b16 %v3853, %v3837
  %v5038 = vpack.c.b16 %v3854, %v3838
  %v5039 = vpack.c.b16 %v3855, %v3839
  %v5040 = vpack.c.b16 %v3856, %v3840
  %v5041 = vpack.c.b16 %v3857, %v3841
  %v5042 = vpack.c.b16 %v3858, %v3842
  %v5043 = vpack.c.b16 %v3859, %v3843
  %v5044 = vpack.c.b16 %v3860, %v3844
  %v5045 = vpack.c.b16 %v3861, %v3845
  %v5046 = vpack.c.b16 %v3862, %v3846
  %v5047 = vpack.c.b16 %v3863, %v3847
  %v5048 = vpack.c.b16 %v3880, %v3864
  %v5049 = vpack.c.b16 %v3881, %v3865
  %v5050 = vpack.c.b16 %v3882, %v3866
  %v5051 = vpack.c.b16 %v3883, %v3867
  %v5052 = vpack.c.b16 %v3884, %v3868
  %v5053 = vpack.c.b16 %v3885, %v3869
  %v5054 = vpack.c.b16 %v3886, %v3870
  %v5055 = vpack.c.b16 %v3887, %v3871
  %v5056 = vpack.c.b16 %v3888, %v3872
  %v5057 = vpack.c.b16 %v3889, %v3873
  %v5058 = vpack.c.b16 %v3890, %v3874
  %v5059 = vpack.c.b16 %v3891, %v3875
  %v5060 = vpack.c.b16 %v3892, %v3876
  %v5061 = vpack.c.b16 %v3893, %v3877
  %v5062 = vpack.c.b16 %v3894, %v3878
  %v5063 = vpack.c.b16 %v3895, %v3879
  %v5064 = vpack.c.b16 %v3912, %v3896
  %v5065 = vpack.c.b16 %v3913, %v3897
  %v5066 = vpack.c.b16 %v3914, %v3898
  %v5067 = vpack.c.b16 %v3915, %v3899
  %v5068 = vpack.c.b16 %v3916, %v3900
  %v5069 = vpack.c.b16 %v3917, %v3901
  %v5070 = vpack.c.b16 %v3918, %v3902
  %v5071 = vpack.c.b16 %v3919, %v3903
  %v5072 = vpack.c.b16 %v3920, %v3904
  %v5073 = vpack.c.b16 %v3921, %v3905
  %v5074 = vpack.c.b16 %v3922, %v3906
  %v5075 = vpack.c.b16 %v3923, %v3907
  %v5076 = vpack.c.b16 %v3924, %v3908
  %v5077 = vpack.c.b16 %v3925, %v3909
  %v5078 = vpack.c.b16 %v3926, %v3910
  %v5079 = vpack.c.b16 %v3927, %v3911
  %v5080 = vpack.c.b16 %v3944, %v3928
  %v5081 = vpack.c.b16 %v3945, %v3929
  %v5082 = vpack.c.b16 %v3946, %v3930
  %v5083 = vpack.c.b16 %v3947, %v3931
  %v5084 = vpack.c.b16 %v3948, %v3932
  %v5085 = vpack.c.b16 %v3949, %v3933
  %v5086 = vpack.c.b16 %v3950, %v3934
  %v5087 = vpack.c.b16 %v3951, %v3935
  %v5088 = vpack.c.b16 %v3952, %v3936
  %v5089 = vpack.c.b16 %v3953, %v3937
  %v5090 = vpack.c.b16 %v3954, %v3938
  %v5091 = vpack.c.b16 %v3955, %v3939
  %v5092 = vpack.c.b16 %v3956, %v3940
  %v5093 = vpack.c.b16 %v3957, %v3941
  %v5094 = vpack.c.b16 %v3958, %v3942
  %v5095 = vpack.c.b16 %v3959, %v3943
  %v5096 = vpack.c.b16 %v3976, %v3960
  %v5097 = vpack.c.b16 %v3977, %v3961
  %v5098 = vpack.c.b16 %v3978, %v3962
  %v5099 = vpack.c.b16 %v3979, %v3963
  %v5100 = vpack.c.b16 %v3980, %v3964
  %v5101 = vpack.c.b16 %v3981, %v3965
  %v5102 = vpack.c.b16 %v3982, %v3966
  %v5103 = vpack.c.b16 %v3983, %v3967
  %v5104 = vpack.c.b16 %v3984, %v3968
  %v5105 = vpack.c.b16 %v3985, %v3969
  %v5106 = vpack.c.b16 %v3986, %v3970
  %v5107 = vpack.c.b16 %v3987, %v3971
  %v5108 = vpack.c.b16 %v3988, %v3972
  %v5109 = vpack.c.b16 %v3989, %v3973
  %v5110 = vpack.c.b16 %v3990, %v3974
  %v5111 = vpack.c.b16 %v3991, %v3975
  %v5112 = vpack.c.b16 %v4008, %v3992
  %v5113 = vpack.c.b16 %v4009, %v3993
  %v5114 = vpack.c.b16 %v4010, %v3994
  %v5115 = vpack.c.b16 %v4011, %v3995
  %v5116 = vpack.c.b16 %v4012, %v3996
  %v5117 = vpack.c.b16 %v4013, %v3997
  %v5118 = vpack.c.b16 %v4014, %v3998
  %v5119 = vpack.c.b16 %v4015, %v3999
  %v5120 = vpack.c.b16 %v4016, %v4000
  %v5121 = vpack.c.b16 %v4017, %v4001
  %v5122 = vpack.c.b16 %v4018, %v4002
  %v5123 = vpack.c.b16 %v4019, %v4003
  %v5124 = vpack.c.b16 %v4020, %v4004
  %v5125 = vpack.c.b16 %v4021, %v4005
  %v5126 = vpack.c.b16 %v4022, %v4006
  %v5127 = vpack.c.b16 %v4023, %v4007
  %v5128 = vpack.c.b16 %v4040, %v4024
  %v5129 = vpack.c.b16 %v4041, %v4025
  %v5130 = vpack.c.b16 %v4042, %v4026
  %v5131 = vpack.c.b16 %v4043, %v4027
  %v5132 = vpack.c.b16 %v4044, %v4028
  %v5133 = vpack.c.b16 %v4045, %v4029
  %v5134 = vpack.c.b16 %v4046, %v4030
  %v5135 = vpack.c.b16 %v4047, %v4031
  %v5136 = vpack.c.b16 %v4048, %v4032
  %v5137 = vpack.c.b16 %v4049, %v4033
  %v5138 = vpack.c.b16 %v4050, %v4034
  %v5139 = vpack.c.b16 %v4051, %v4035
  %v5140 = vpack.c.b16 %v4052, %v4036
  %v5141 = vpack.c.b16 %v4053, %v4037
  %v5142 = vpack.c.b16 %v4054, %v4038
  %v5143 = vpack.c.b16 %v4055, %v4039
  %v5144 = vpack.c.b16 %v4072, %v4056
  %v5145 = vpack.c.b16 %v4073, %v4057
  %v5146 = vpack.c.b16 %v4074, %v4058
  %v5147 = vpack.c.b16 %v4075, %v4059
  %v5148 = vpack.c.b16 %v4076, %v4060
  %v5149 = vpack.c.b16 %v4077, %v4061
  %v5150 = vpack.c.b16 %v4078, %v4062
  %v5151 = vpack.c.b16 %v4079, %v4063
  %v5152 = vpack.c.b16 %v4080, %v4064
  %v5153 = vpack.c.b16 %v4081, %v4065
  %v5154 = vpack.c.b16 %v4082, %v4066
  %v5155 = vpack.c.b16 %v4083, %v4067
  %v5156 = vpack.c.b16 %v4084, %v4068
  %v5157 = vpack.c.b16 %v4085, %v4069
  %v5158 = vpack.c.b16 %v4086, %v4070
  %v5159 = vpack.c.b16 %v4087, %v4071
  %v5160 = vpack.c.b16 %v4104, %v4088
  %v5161 = vpack.c.b16 %v4105, %v4089
  %v5162 = vpack.c.b16 %v4106, %v4090
  %v5163 = vpack.c.b16 %v4107, %v4091
  %v5164 = vpack.c.b16 %v4108, %v4092
  %v5165 = vpack.c.b16 %v4109, %v4093
  %v5166 = vpack.c.b16 %v4110, %v4094
  %v5167 = vpack.c.b16 %v4111, %v4095
  %v5168 = vpack.c.b16 %v4112, %v4096
  %v5169 = vpack.c.b16 %v4113, %v4097
  %v5170 = vpack.c.b16 %v4114, %v4098
  %v5171 = vpack.c.b16 %v4115, %v4099
  %v5172 = vpack.c.b16 %v4116, %v4100
  %v5173 = vpack.c.b16 %v4117, %v4101
  %v5174 = vpack.c.b16 %v4118, %v4102
  %v5175 = vpack.c.b16 %v4119, %v4103
  %v5176 = vpack.c.b16 %v4136, %v4120
  %v5177 = vpack.c.b16 %v4137, %v4121
  %v5178 = vpack.c.b16 %v4138, %v4122
  %v5179 = vpack.c.b16 %v4139, %v4123
  %v5180 = vpack.c.b16 %v4140, %v4124
  %v5181 = vpack.c.b16 %v4141, %v4125
  %v5182 = vpack.c.b16 %v4142, %v4126
  %v5183 = vpack.c.b16 %v4143, %v4127
  %v5184 = vpack.c.b16 %v4144, %v4128
  %v5185 = vpack.c.b16 %v4145, %v4129
  %v5186 = vpack.c.b16 %v4146, %v4130
  %v5187 = vpack.c.b16 %v4147, %v4131
  %v5188 = vpack.c.b16 %v4148, %v4132
  %v5189 = vpack.c.b16 %v4149, %v4133
  %v5190 = vpack.c.b16 %v4150, %v4134
  %v5191 = vpack.c.b16 %v4151, %v4135
  %v5192 = vpack.c.b16 %v4168, %v4152
  %v5193 = vpack.c.b16 %v4169, %v4153
  %v5194 = vpack.c.b16 %v4170, %v4154
  %v5195 = vpack.c.b16 %v4171, %v4155
  %v5196 = vpack.c.b16 %v4172, %v4156
  %v5197 = vpack.c.b16 %v4173, %v4157
  %v5198 = vpack.c.b16 %v4174, %v4158
  %v5199 = vpack.c.b16 %v4175, %v4159
  %v5200 = vpack.c.b16 %v4176, %v4160
  %v5201 = vpack.c.b16 %v4177, %v4161
  %v5202 = vpack.c.b16 %v4178, %v4162
  %v5203 = vpack.c.b16 %v4179, %v4163
  %v5204 = vpack.c.b16 %v4180, %v4164
  %v5205 = vpack.c.b16 %v4181, %v4165
  %v5206 = vpack.c.b16 %v4182, %v4166
  %v5207 = vpack.c.b16 %v4183, %v4167
  %6232 = vmatpush.bf16.msra.mxu0 %v4296
  %6233 = vmatpush.bf16.msra.mxu0 %v4280
  %6234 = vmatpush.bf16.msra.mxu0 %v4264
  %6235 = vmatpush.bf16.msra.mxu0 %v4248
  %6236 = vmatpush.bf16.msra.mxu0 %v4232
  %6237 = vmatpush.bf16.msra.mxu0 %v4216
  %6238 = vmatpush.bf16.msra.mxu0 %v4200
  %6239 = vmatpush.bf16.msra.mxu0 %v4184
  %6240 = vmatmul.bf16.gmra.mxu0 %v1096
  %v6241 = vpop.f32.mrf.mxu0
  %v6242 = vadd.f32 %v1052, %v6241
  %v6243 = vpop.f32.mrf.mxu0
  %6244 = vdwg.mxu0
  %6245 = vmatpush.bf16.msra.mxu0 %v4424
  %6246 = vmatpush.bf16.msra.mxu0 %v4408
  %6247 = vmatpush.bf16.msra.mxu0 %v4392
  %6248 = vmatpush.bf16.msra.mxu0 %v4376
  %6249 = vmatpush.bf16.msra.mxu0 %v4360
  %6250 = vmatpush.bf16.msra.mxu0 %v4344
  %6251 = vmatpush.bf16.msra.mxu0 %v4328
  %6252 = vmatpush.bf16.msra.mxu0 %v4312
  %6253 = vmatmul.bf16.gmra.mxu0 %v1097
  %v6254 = vpop.f32.mrf.mxu0
  %v6255 = vadd.f32 %v6242, %v6254
  %v6256 = vpop.f32.mrf.mxu0
  %6257 = vdwg.mxu0
  %6258 = vmatpush.bf16.msra.mxu0 %v4552
  %6259 = vmatpush.bf16.msra.mxu0 %v4536
  %6260 = vmatpush.bf16.msra.mxu0 %v4520
  %6261 = vmatpush.bf16.msra.mxu0 %v4504
  %6262 = vmatpush.bf16.msra.mxu0 %v4488
  %6263 = vmatpush.bf16.msra.mxu0 %v4472
  %6264 = vmatpush.bf16.msra.mxu0 %v4456
  %6265 = vmatpush.bf16.msra.mxu0 %v4440
  %6266 = vmatmul.bf16.gmra.mxu0 %v1098
  %v6267 = vpop.f32.mrf.mxu0
  %v6268 = vadd.f32 %v6255, %v6267
  %v6269 = vpop.f32.mrf.mxu0
  %6270 = vdwg.mxu0
  %6271 = vmatpush.bf16.msra.mxu0 %v4680
  %6272 = vmatpush.bf16.msra.mxu0 %v4664
  %6273 = vmatpush.bf16.msra.mxu0 %v4648
  %6274 = vmatpush.bf16.msra.mxu0 %v4632
  %6275 = vmatpush.bf16.msra.mxu0 %v4616
  %6276 = vmatpush.bf16.msra.mxu0 %v4600
  %6277 = vmatpush.bf16.msra.mxu0 %v4584
  %6278 = vmatpush.bf16.msra.mxu0 %v4568
  %6279 = vmatmul.bf16.gmra.mxu0 %v1099
  %v6280 = vpop.f32.mrf.mxu0
  %v6281 = vadd.f32 %v6268, %v6280
  %v6282 = vpop.f32.mrf.mxu0
  %6283 = vdwg.mxu0
  %6284 = vmatpush.bf16.msra.mxu0 %v4808
  %6285 = vmatpush.bf16.msra.mxu0 %v4792
  %6286 = vmatpush.bf16.msra.mxu0 %v4776
  %6287 = vmatpush.bf16.msra.mxu0 %v4760
  %6288 = vmatpush.bf16.msra.mxu0 %v4744
  %6289 = vmatpush.bf16.msra.mxu0 %v4728
  %6290 = vmatpush.bf16.msra.mxu0 %v4712
  %6291 = vmatpush.bf16.msra.mxu0 %v4696
  %6292 = vmatmul.bf16.gmra.mxu0 %v1100
  %v6293 = vpop.f32.mrf.mxu0
  %v6294 = vadd.f32 %v6281, %v6293
  %v6295 = vpop.f32.mrf.mxu0
  %6296 = vdwg.mxu0
  %6297 = vmatpush.bf16.msra.mxu0 %v4936
  %6298 = vmatpush.bf16.msra.mxu0 %v4920
  %6299 = vmatpush.bf16.msra.mxu0 %v4904
  %6300 = vmatpush.bf16.msra.mxu0 %v4888
  %6301 = vmatpush.bf16.msra.mxu0 %v4872
  %6302 = vmatpush.bf16.msra.mxu0 %v4856
  %6303 = vmatpush.bf16.msra.mxu0 %v4840
  %6304 = vmatpush.bf16.msra.mxu0 %v4824
  %6305 = vmatmul.bf16.gmra.mxu0 %v1101
  %v6306 = vpop.f32.mrf.mxu0
  %v6307 = vadd.f32 %v6294, %v6306
  %v6308 = vpop.f32.mrf.mxu0
  %6309 = vdwg.mxu0
  %6310 = vmatpush.bf16.msra.mxu0 %v5064
  %6311 = vmatpush.bf16.msra.mxu0 %v5048
  %6312 = vmatpush.bf16.msra.mxu0 %v5032
  %6313 = vmatpush.bf16.msra.mxu0 %v5016
  %6314 = vmatpush.bf16.msra.mxu0 %v5000
  %6315 = vmatpush.bf16.msra.mxu0 %v4984
  %6316 = vmatpush.bf16.msra.mxu0 %v4968
  %6317 = vmatpush.bf16.msra.mxu0 %v4952
  %6318 = vmatmul.bf16.gmra.mxu0 %v1102
  %v6319 = vpop.f32.mrf.mxu0
  %v6320 = vadd.f32 %v6307, %v6319
  %v6321 = vpop.f32.mrf.mxu0
  %6322 = vdwg.mxu0
  %6323 = vmatpush.bf16.msra.mxu0 %v5192
  %6324 = vmatpush.bf16.msra.mxu0 %v5176
  %6325 = vmatpush.bf16.msra.mxu0 %v5160
  %6326 = vmatpush.bf16.msra.mxu0 %v5144
  %6327 = vmatpush.bf16.msra.mxu0 %v5128
  %6328 = vmatpush.bf16.msra.mxu0 %v5112
  %6329 = vmatpush.bf16.msra.mxu0 %v5096
  %6330 = vmatpush.bf16.msra.mxu0 %v5080
  %6331 = vmatmul.bf16.gmra.mxu0 %v1103
  %v6332 = vpop.f32.mrf.mxu0
  %v6333 = vadd.f32 %v6320, %v6332
  %v6334 = vpop.f32.mrf.mxu0
  %6335 = vdwg.mxu0
  %6336 = vmatpush.bf16.msra.mxu0 %v4297
  %6337 = vmatpush.bf16.msra.mxu0 %v4281
  %6338 = vmatpush.bf16.msra.mxu0 %v4265
  %6339 = vmatpush.bf16.msra.mxu0 %v4249
  %6340 = vmatpush.bf16.msra.mxu0 %v4233
  %6341 = vmatpush.bf16.msra.mxu0 %v4217
  %6342 = vmatpush.bf16.msra.mxu0 %v4201
  %6343 = vmatpush.bf16.msra.mxu0 %v4185
  %6344 = vmatmul.bf16.gmra.mxu0 %v1096
  %v6345 = vpop.f32.mrf.mxu0
  %v6346 = vadd.f32 %v1053, %v6345
  %v6347 = vpop.f32.mrf.mxu0
  %6348 = vdwg.mxu0
  %6349 = vmatpush.bf16.msra.mxu0 %v4425
  %6350 = vmatpush.bf16.msra.mxu0 %v4409
  %6351 = vmatpush.bf16.msra.mxu0 %v4393
  %6352 = vmatpush.bf16.msra.mxu0 %v4377
  %6353 = vmatpush.bf16.msra.mxu0 %v4361
  %6354 = vmatpush.bf16.msra.mxu0 %v4345
  %6355 = vmatpush.bf16.msra.mxu0 %v4329
  %6356 = vmatpush.bf16.msra.mxu0 %v4313
  %6357 = vmatmul.bf16.gmra.mxu0 %v1097
  %v6358 = vpop.f32.mrf.mxu0
  %v6359 = vadd.f32 %v6346, %v6358
  %v6360 = vpop.f32.mrf.mxu0
  %6361 = vdwg.mxu0
  %6362 = vmatpush.bf16.msra.mxu0 %v4553
  %6363 = vmatpush.bf16.msra.mxu0 %v4537
  %6364 = vmatpush.bf16.msra.mxu0 %v4521
  %6365 = vmatpush.bf16.msra.mxu0 %v4505
  %6366 = vmatpush.bf16.msra.mxu0 %v4489
  %6367 = vmatpush.bf16.msra.mxu0 %v4473
  %6368 = vmatpush.bf16.msra.mxu0 %v4457
  %6369 = vmatpush.bf16.msra.mxu0 %v4441
  %6370 = vmatmul.bf16.gmra.mxu0 %v1098
  %v6371 = vpop.f32.mrf.mxu0
  %v6372 = vadd.f32 %v6359, %v6371
  %v6373 = vpop.f32.mrf.mxu0
  %6374 = vdwg.mxu0
  %6375 = vmatpush.bf16.msra.mxu0 %v4681
  %6376 = vmatpush.bf16.msra.mxu0 %v4665
  %6377 = vmatpush.bf16.msra.mxu0 %v4649
  %6378 = vmatpush.bf16.msra.mxu0 %v4633
  %6379 = vmatpush.bf16.msra.mxu0 %v4617
  %6380 = vmatpush.bf16.msra.mxu0 %v4601
  %6381 = vmatpush.bf16.msra.mxu0 %v4585
  %6382 = vmatpush.bf16.msra.mxu0 %v4569
  %6383 = vmatmul.bf16.gmra.mxu0 %v1099
  %v6384 = vpop.f32.mrf.mxu0
  %v6385 = vadd.f32 %v6372, %v6384
  %v6386 = vpop.f32.mrf.mxu0
  %6387 = vdwg.mxu0
  %6388 = vmatpush.bf16.msra.mxu0 %v4809
  %6389 = vmatpush.bf16.msra.mxu0 %v4793
  %6390 = vmatpush.bf16.msra.mxu0 %v4777
  %6391 = vmatpush.bf16.msra.mxu0 %v4761
  %6392 = vmatpush.bf16.msra.mxu0 %v4745
  %6393 = vmatpush.bf16.msra.mxu0 %v4729
  %6394 = vmatpush.bf16.msra.mxu0 %v4713
  %6395 = vmatpush.bf16.msra.mxu0 %v4697
  %6396 = vmatmul.bf16.gmra.mxu0 %v1100
  %v6397 = vpop.f32.mrf.mxu0
  %v6398 = vadd.f32 %v6385, %v6397
  %v6399 = vpop.f32.mrf.mxu0
  %6400 = vdwg.mxu0
  %6401 = vmatpush.bf16.msra.mxu0 %v4937
  %6402 = vmatpush.bf16.msra.mxu0 %v4921
  %6403 = vmatpush.bf16.msra.mxu0 %v4905
  %6404 = vmatpush.bf16.msra.mxu0 %v4889
  %6405 = vmatpush.bf16.msra.mxu0 %v4873
  %6406 = vmatpush.bf16.msra.mxu0 %v4857
  %6407 = vmatpush.bf16.msra.mxu0 %v4841
  %6408 = vmatpush.bf16.msra.mxu0 %v4825
  %6409 = vmatmul.bf16.gmra.mxu0 %v1101
  %v6410 = vpop.f32.mrf.mxu0
  %v6411 = vadd.f32 %v6398, %v6410
  %v6412 = vpop.f32.mrf.mxu0
  %6413 = vdwg.mxu0
  %6414 = vmatpush.bf16.msra.mxu0 %v5065
  %6415 = vmatpush.bf16.msra.mxu0 %v5049
  %6416 = vmatpush.bf16.msra.mxu0 %v5033
  %6417 = vmatpush.bf16.msra.mxu0 %v5017
  %6418 = vmatpush.bf16.msra.mxu0 %v5001
  %6419 = vmatpush.bf16.msra.mxu0 %v4985
  %6420 = vmatpush.bf16.msra.mxu0 %v4969
  %6421 = vmatpush.bf16.msra.mxu0 %v4953
  %6422 = vmatmul.bf16.gmra.mxu0 %v1102
  %v6423 = vpop.f32.mrf.mxu0
  %v6424 = vadd.f32 %v6411, %v6423
  %v6425 = vpop.f32.mrf.mxu0
  %6426 = vdwg.mxu0
  %6427 = vmatpush.bf16.msra.mxu0 %v5193
  %6428 = vmatpush.bf16.msra.mxu0 %v5177
  %6429 = vmatpush.bf16.msra.mxu0 %v5161
  %6430 = vmatpush.bf16.msra.mxu0 %v5145
  %6431 = vmatpush.bf16.msra.mxu0 %v5129
  %6432 = vmatpush.bf16.msra.mxu0 %v5113
  %6433 = vmatpush.bf16.msra.mxu0 %v5097
  %6434 = vmatpush.bf16.msra.mxu0 %v5081
  %6435 = vmatmul.bf16.gmra.mxu0 %v1103
  %v6436 = vpop.f32.mrf.mxu0
  %v6437 = vadd.f32 %v6424, %v6436
  %v6438 = vpop.f32.mrf.mxu0
  %6439 = vdwg.mxu0
  %6440 = vmatpush.bf16.msra.mxu0 %v4298
  %6441 = vmatpush.bf16.msra.mxu0 %v4282
  %6442 = vmatpush.bf16.msra.mxu0 %v4266
  %6443 = vmatpush.bf16.msra.mxu0 %v4250
  %6444 = vmatpush.bf16.msra.mxu0 %v4234
  %6445 = vmatpush.bf16.msra.mxu0 %v4218
  %6446 = vmatpush.bf16.msra.mxu0 %v4202
  %6447 = vmatpush.bf16.msra.mxu0 %v4186
  %6448 = vmatmul.bf16.gmra.mxu0 %v1096
  %v6449 = vpop.f32.mrf.mxu0
  %v6450 = vadd.f32 %v1054, %v6449
  %v6451 = vpop.f32.mrf.mxu0
  %6452 = vdwg.mxu0
  %6453 = vmatpush.bf16.msra.mxu0 %v4426
  %6454 = vmatpush.bf16.msra.mxu0 %v4410
  %6455 = vmatpush.bf16.msra.mxu0 %v4394
  %6456 = vmatpush.bf16.msra.mxu0 %v4378
  %6457 = vmatpush.bf16.msra.mxu0 %v4362
  %6458 = vmatpush.bf16.msra.mxu0 %v4346
  %6459 = vmatpush.bf16.msra.mxu0 %v4330
  %6460 = vmatpush.bf16.msra.mxu0 %v4314
  %6461 = vmatmul.bf16.gmra.mxu0 %v1097
  %v6462 = vpop.f32.mrf.mxu0
  %v6463 = vadd.f32 %v6450, %v6462
  %v6464 = vpop.f32.mrf.mxu0
  %6465 = vdwg.mxu0
  %6466 = vmatpush.bf16.msra.mxu0 %v4554
  %6467 = vmatpush.bf16.msra.mxu0 %v4538
  %6468 = vmatpush.bf16.msra.mxu0 %v4522
  %6469 = vmatpush.bf16.msra.mxu0 %v4506
  %6470 = vmatpush.bf16.msra.mxu0 %v4490
  %6471 = vmatpush.bf16.msra.mxu0 %v4474
  %6472 = vmatpush.bf16.msra.mxu0 %v4458
  %6473 = vmatpush.bf16.msra.mxu0 %v4442
  %6474 = vmatmul.bf16.gmra.mxu0 %v1098
  %v6475 = vpop.f32.mrf.mxu0
  %v6476 = vadd.f32 %v6463, %v6475
  %v6477 = vpop.f32.mrf.mxu0
  %6478 = vdwg.mxu0
  %6479 = vmatpush.bf16.msra.mxu0 %v4682
  %6480 = vmatpush.bf16.msra.mxu0 %v4666
  %6481 = vmatpush.bf16.msra.mxu0 %v4650
  %6482 = vmatpush.bf16.msra.mxu0 %v4634
  %6483 = vmatpush.bf16.msra.mxu0 %v4618
  %6484 = vmatpush.bf16.msra.mxu0 %v4602
  %6485 = vmatpush.bf16.msra.mxu0 %v4586
  %6486 = vmatpush.bf16.msra.mxu0 %v4570
  %6487 = vmatmul.bf16.gmra.mxu0 %v1099
  %v6488 = vpop.f32.mrf.mxu0
  %v6489 = vadd.f32 %v6476, %v6488
  %v6490 = vpop.f32.mrf.mxu0
  %6491 = vdwg.mxu0
  %6492 = vmatpush.bf16.msra.mxu0 %v4810
  %6493 = vmatpush.bf16.msra.mxu0 %v4794
  %6494 = vmatpush.bf16.msra.mxu0 %v4778
  %6495 = vmatpush.bf16.msra.mxu0 %v4762
  %6496 = vmatpush.bf16.msra.mxu0 %v4746
  %6497 = vmatpush.bf16.msra.mxu0 %v4730
  %6498 = vmatpush.bf16.msra.mxu0 %v4714
  %6499 = vmatpush.bf16.msra.mxu0 %v4698
  %6500 = vmatmul.bf16.gmra.mxu0 %v1100
  %v6501 = vpop.f32.mrf.mxu0
  %v6502 = vadd.f32 %v6489, %v6501
  %v6503 = vpop.f32.mrf.mxu0
  %6504 = vdwg.mxu0
  %6505 = vmatpush.bf16.msra.mxu0 %v4938
  %6506 = vmatpush.bf16.msra.mxu0 %v4922
  %6507 = vmatpush.bf16.msra.mxu0 %v4906
  %6508 = vmatpush.bf16.msra.mxu0 %v4890
  %6509 = vmatpush.bf16.msra.mxu0 %v4874
  %6510 = vmatpush.bf16.msra.mxu0 %v4858
  %6511 = vmatpush.bf16.msra.mxu0 %v4842
  %6512 = vmatpush.bf16.msra.mxu0 %v4826
  %6513 = vmatmul.bf16.gmra.mxu0 %v1101
  %v6514 = vpop.f32.mrf.mxu0
  %v6515 = vadd.f32 %v6502, %v6514
  %v6516 = vpop.f32.mrf.mxu0
  %6517 = vdwg.mxu0
  %6518 = vmatpush.bf16.msra.mxu0 %v5066
  %6519 = vmatpush.bf16.msra.mxu0 %v5050
  %6520 = vmatpush.bf16.msra.mxu0 %v5034
  %6521 = vmatpush.bf16.msra.mxu0 %v5018
  %6522 = vmatpush.bf16.msra.mxu0 %v5002
  %6523 = vmatpush.bf16.msra.mxu0 %v4986
  %6524 = vmatpush.bf16.msra.mxu0 %v4970
  %6525 = vmatpush.bf16.msra.mxu0 %v4954
  %6526 = vmatmul.bf16.gmra.mxu0 %v1102
  %v6527 = vpop.f32.mrf.mxu0
  %v6528 = vadd.f32 %v6515, %v6527
  %v6529 = vpop.f32.mrf.mxu0
  %6530 = vdwg.mxu0
  %6531 = vmatpush.bf16.msra.mxu0 %v5194
  %6532 = vmatpush.bf16.msra.mxu0 %v5178
  %6533 = vmatpush.bf16.msra.mxu0 %v5162
  %6534 = vmatpush.bf16.msra.mxu0 %v5146
  %6535 = vmatpush.bf16.msra.mxu0 %v5130
  %6536 = vmatpush.bf16.msra.mxu0 %v5114
  %6537 = vmatpush.bf16.msra.mxu0 %v5098
  %6538 = vmatpush.bf16.msra.mxu0 %v5082
  %6539 = vmatmul.bf16.gmra.mxu0 %v1103
  %v6540 = vpop.f32.mrf.mxu0
  %v6541 = vadd.f32 %v6528, %v6540
  %v6542 = vpop.f32.mrf.mxu0
  %6543 = vdwg.mxu0
  %6544 = vmatpush.bf16.msra.mxu0 %v4299
  %6545 = vmatpush.bf16.msra.mxu0 %v4283
  %6546 = vmatpush.bf16.msra.mxu0 %v4267
  %6547 = vmatpush.bf16.msra.mxu0 %v4251
  %6548 = vmatpush.bf16.msra.mxu0 %v4235
  %6549 = vmatpush.bf16.msra.mxu0 %v4219
  %6550 = vmatpush.bf16.msra.mxu0 %v4203
  %6551 = vmatpush.bf16.msra.mxu0 %v4187
  %6552 = vmatmul.bf16.gmra.mxu0 %v1096
  %v6553 = vpop.f32.mrf.mxu0
  %v6554 = vadd.f32 %v1055, %v6553
  %v6555 = vpop.f32.mrf.mxu0
  %6556 = vdwg.mxu0
  %6557 = vmatpush.bf16.msra.mxu0 %v4427
  %6558 = vmatpush.bf16.msra.mxu0 %v4411
  %6559 = vmatpush.bf16.msra.mxu0 %v4395
  %6560 = vmatpush.bf16.msra.mxu0 %v4379
  %6561 = vmatpush.bf16.msra.mxu0 %v4363
  %6562 = vmatpush.bf16.msra.mxu0 %v4347
  %6563 = vmatpush.bf16.msra.mxu0 %v4331
  %6564 = vmatpush.bf16.msra.mxu0 %v4315
  %6565 = vmatmul.bf16.gmra.mxu0 %v1097
  %v6566 = vpop.f32.mrf.mxu0
  %v6567 = vadd.f32 %v6554, %v6566
  %v6568 = vpop.f32.mrf.mxu0
  %6569 = vdwg.mxu0
  %6570 = vmatpush.bf16.msra.mxu0 %v4555
  %6571 = vmatpush.bf16.msra.mxu0 %v4539
  %6572 = vmatpush.bf16.msra.mxu0 %v4523
  %6573 = vmatpush.bf16.msra.mxu0 %v4507
  %6574 = vmatpush.bf16.msra.mxu0 %v4491
  %6575 = vmatpush.bf16.msra.mxu0 %v4475
  %6576 = vmatpush.bf16.msra.mxu0 %v4459
  %6577 = vmatpush.bf16.msra.mxu0 %v4443
  %6578 = vmatmul.bf16.gmra.mxu0 %v1098
  %v6579 = vpop.f32.mrf.mxu0
  %v6580 = vadd.f32 %v6567, %v6579
  %v6581 = vpop.f32.mrf.mxu0
  %6582 = vdwg.mxu0
  %6583 = vmatpush.bf16.msra.mxu0 %v4683
  %6584 = vmatpush.bf16.msra.mxu0 %v4667
  %6585 = vmatpush.bf16.msra.mxu0 %v4651
  %6586 = vmatpush.bf16.msra.mxu0 %v4635
  %6587 = vmatpush.bf16.msra.mxu0 %v4619
  %6588 = vmatpush.bf16.msra.mxu0 %v4603
  %6589 = vmatpush.bf16.msra.mxu0 %v4587
  %6590 = vmatpush.bf16.msra.mxu0 %v4571
  %6591 = vmatmul.bf16.gmra.mxu0 %v1099
  %v6592 = vpop.f32.mrf.mxu0
  %v6593 = vadd.f32 %v6580, %v6592
  %v6594 = vpop.f32.mrf.mxu0
  %6595 = vdwg.mxu0
  %6596 = vmatpush.bf16.msra.mxu0 %v4811
  %6597 = vmatpush.bf16.msra.mxu0 %v4795
  %6598 = vmatpush.bf16.msra.mxu0 %v4779
  %6599 = vmatpush.bf16.msra.mxu0 %v4763
  %6600 = vmatpush.bf16.msra.mxu0 %v4747
  %6601 = vmatpush.bf16.msra.mxu0 %v4731
  %6602 = vmatpush.bf16.msra.mxu0 %v4715
  %6603 = vmatpush.bf16.msra.mxu0 %v4699
  %6604 = vmatmul.bf16.gmra.mxu0 %v1100
  %v6605 = vpop.f32.mrf.mxu0
  %v6606 = vadd.f32 %v6593, %v6605
  %v6607 = vpop.f32.mrf.mxu0
  %6608 = vdwg.mxu0
  %6609 = vmatpush.bf16.msra.mxu0 %v4939
  %6610 = vmatpush.bf16.msra.mxu0 %v4923
  %6611 = vmatpush.bf16.msra.mxu0 %v4907
  %6612 = vmatpush.bf16.msra.mxu0 %v4891
  %6613 = vmatpush.bf16.msra.mxu0 %v4875
  %6614 = vmatpush.bf16.msra.mxu0 %v4859
  %6615 = vmatpush.bf16.msra.mxu0 %v4843
  %6616 = vmatpush.bf16.msra.mxu0 %v4827
  %6617 = vmatmul.bf16.gmra.mxu0 %v1101
  %v6618 = vpop.f32.mrf.mxu0
  %v6619 = vadd.f32 %v6606, %v6618
  %v6620 = vpop.f32.mrf.mxu0
  %6621 = vdwg.mxu0
  %6622 = vmatpush.bf16.msra.mxu0 %v5067
  %6623 = vmatpush.bf16.msra.mxu0 %v5051
  %6624 = vmatpush.bf16.msra.mxu0 %v5035
  %6625 = vmatpush.bf16.msra.mxu0 %v5019
  %6626 = vmatpush.bf16.msra.mxu0 %v5003
  %6627 = vmatpush.bf16.msra.mxu0 %v4987
  %6628 = vmatpush.bf16.msra.mxu0 %v4971
  %6629 = vmatpush.bf16.msra.mxu0 %v4955
  %6630 = vmatmul.bf16.gmra.mxu0 %v1102
  %v6631 = vpop.f32.mrf.mxu0
  %v6632 = vadd.f32 %v6619, %v6631
  %v6633 = vpop.f32.mrf.mxu0
  %6634 = vdwg.mxu0
  %6635 = vmatpush.bf16.msra.mxu0 %v5195
  %6636 = vmatpush.bf16.msra.mxu0 %v5179
  %6637 = vmatpush.bf16.msra.mxu0 %v5163
  %6638 = vmatpush.bf16.msra.mxu0 %v5147
  %6639 = vmatpush.bf16.msra.mxu0 %v5131
  %6640 = vmatpush.bf16.msra.mxu0 %v5115
  %6641 = vmatpush.bf16.msra.mxu0 %v5099
  %6642 = vmatpush.bf16.msra.mxu0 %v5083
  %6643 = vmatmul.bf16.gmra.mxu0 %v1103
  %v6644 = vpop.f32.mrf.mxu0
  %v6645 = vadd.f32 %v6632, %v6644
  %v6646 = vpop.f32.mrf.mxu0
  %6647 = vdwg.mxu0
  %6648 = vmatpush.bf16.msra.mxu0 %v4300
  %6649 = vmatpush.bf16.msra.mxu0 %v4284
  %6650 = vmatpush.bf16.msra.mxu0 %v4268
  %6651 = vmatpush.bf16.msra.mxu0 %v4252
  %6652 = vmatpush.bf16.msra.mxu0 %v4236
  %6653 = vmatpush.bf16.msra.mxu0 %v4220
  %6654 = vmatpush.bf16.msra.mxu0 %v4204
  %6655 = vmatpush.bf16.msra.mxu0 %v4188
  %6656 = vmatmul.bf16.gmra.mxu0 %v1096
  %v6657 = vpop.f32.mrf.mxu0
  %v6658 = vadd.f32 %v1056, %v6657
  %v6659 = vpop.f32.mrf.mxu0
  %6660 = vdwg.mxu0
  %6661 = vmatpush.bf16.msra.mxu0 %v4428
  %6662 = vmatpush.bf16.msra.mxu0 %v4412
  %6663 = vmatpush.bf16.msra.mxu0 %v4396
  %6664 = vmatpush.bf16.msra.mxu0 %v4380
  %6665 = vmatpush.bf16.msra.mxu0 %v4364
  %6666 = vmatpush.bf16.msra.mxu0 %v4348
  %6667 = vmatpush.bf16.msra.mxu0 %v4332
  %6668 = vmatpush.bf16.msra.mxu0 %v4316
  %6669 = vmatmul.bf16.gmra.mxu0 %v1097
  %v6670 = vpop.f32.mrf.mxu0
  %v6671 = vadd.f32 %v6658, %v6670
  %v6672 = vpop.f32.mrf.mxu0
  %6673 = vdwg.mxu0
  %6674 = vmatpush.bf16.msra.mxu0 %v4556
  %6675 = vmatpush.bf16.msra.mxu0 %v4540
  %6676 = vmatpush.bf16.msra.mxu0 %v4524
  %6677 = vmatpush.bf16.msra.mxu0 %v4508
  %6678 = vmatpush.bf16.msra.mxu0 %v4492
  %6679 = vmatpush.bf16.msra.mxu0 %v4476
  %6680 = vmatpush.bf16.msra.mxu0 %v4460
  %6681 = vmatpush.bf16.msra.mxu0 %v4444
  %6682 = vmatmul.bf16.gmra.mxu0 %v1098
  %v6683 = vpop.f32.mrf.mxu0
  %v6684 = vadd.f32 %v6671, %v6683
  %v6685 = vpop.f32.mrf.mxu0
  %6686 = vdwg.mxu0
  %6687 = vmatpush.bf16.msra.mxu0 %v4684
  %6688 = vmatpush.bf16.msra.mxu0 %v4668
  %6689 = vmatpush.bf16.msra.mxu0 %v4652
  %6690 = vmatpush.bf16.msra.mxu0 %v4636
  %6691 = vmatpush.bf16.msra.mxu0 %v4620
  %6692 = vmatpush.bf16.msra.mxu0 %v4604
  %6693 = vmatpush.bf16.msra.mxu0 %v4588
  %6694 = vmatpush.bf16.msra.mxu0 %v4572
  %6695 = vmatmul.bf16.gmra.mxu0 %v1099
  %v6696 = vpop.f32.mrf.mxu0
  %v6697 = vadd.f32 %v6684, %v6696
  %v6698 = vpop.f32.mrf.mxu0
  %6699 = vdwg.mxu0
  %6700 = vmatpush.bf16.msra.mxu0 %v4812
  %6701 = vmatpush.bf16.msra.mxu0 %v4796
  %6702 = vmatpush.bf16.msra.mxu0 %v4780
  %6703 = vmatpush.bf16.msra.mxu0 %v4764
  %6704 = vmatpush.bf16.msra.mxu0 %v4748
  %6705 = vmatpush.bf16.msra.mxu0 %v4732
  %6706 = vmatpush.bf16.msra.mxu0 %v4716
  %6707 = vmatpush.bf16.msra.mxu0 %v4700
  %6708 = vmatmul.bf16.gmra.mxu0 %v1100
  %v6709 = vpop.f32.mrf.mxu0
  %v6710 = vadd.f32 %v6697, %v6709
  %v6711 = vpop.f32.mrf.mxu0
  %6712 = vdwg.mxu0
  %6713 = vmatpush.bf16.msra.mxu0 %v4940
  %6714 = vmatpush.bf16.msra.mxu0 %v4924
  %6715 = vmatpush.bf16.msra.mxu0 %v4908
  %6716 = vmatpush.bf16.msra.mxu0 %v4892
  %6717 = vmatpush.bf16.msra.mxu0 %v4876
  %6718 = vmatpush.bf16.msra.mxu0 %v4860
  %6719 = vmatpush.bf16.msra.mxu0 %v4844
  %6720 = vmatpush.bf16.msra.mxu0 %v4828
  %6721 = vmatmul.bf16.gmra.mxu0 %v1101
  %v6722 = vpop.f32.mrf.mxu0
  %v6723 = vadd.f32 %v6710, %v6722
  %v6724 = vpop.f32.mrf.mxu0
  %6725 = vdwg.mxu0
  %6726 = vmatpush.bf16.msra.mxu0 %v5068
  %6727 = vmatpush.bf16.msra.mxu0 %v5052
  %6728 = vmatpush.bf16.msra.mxu0 %v5036
  %6729 = vmatpush.bf16.msra.mxu0 %v5020
  %6730 = vmatpush.bf16.msra.mxu0 %v5004
  %6731 = vmatpush.bf16.msra.mxu0 %v4988
  %6732 = vmatpush.bf16.msra.mxu0 %v4972
  %6733 = vmatpush.bf16.msra.mxu0 %v4956
  %6734 = vmatmul.bf16.gmra.mxu0 %v1102
  %v6735 = vpop.f32.mrf.mxu0
  %v6736 = vadd.f32 %v6723, %v6735
  %v6737 = vpop.f32.mrf.mxu0
  %6738 = vdwg.mxu0
  %6739 = vmatpush.bf16.msra.mxu0 %v5196
  %6740 = vmatpush.bf16.msra.mxu0 %v5180
  %6741 = vmatpush.bf16.msra.mxu0 %v5164
  %6742 = vmatpush.bf16.msra.mxu0 %v5148
  %6743 = vmatpush.bf16.msra.mxu0 %v5132
  %6744 = vmatpush.bf16.msra.mxu0 %v5116
  %6745 = vmatpush.bf16.msra.mxu0 %v5100
  %6746 = vmatpush.bf16.msra.mxu0 %v5084
  %6747 = vmatmul.bf16.gmra.mxu0 %v1103
  %v6748 = vpop.f32.mrf.mxu0
  %v6749 = vadd.f32 %v6736, %v6748
  %v6750 = vpop.f32.mrf.mxu0
  %6751 = vdwg.mxu0
  %6752 = vmatpush.bf16.msra.mxu0 %v4301
  %6753 = vmatpush.bf16.msra.mxu0 %v4285
  %6754 = vmatpush.bf16.msra.mxu0 %v4269
  %6755 = vmatpush.bf16.msra.mxu0 %v4253
  %6756 = vmatpush.bf16.msra.mxu0 %v4237
  %6757 = vmatpush.bf16.msra.mxu0 %v4221
  %6758 = vmatpush.bf16.msra.mxu0 %v4205
  %6759 = vmatpush.bf16.msra.mxu0 %v4189
  %6760 = vmatmul.bf16.gmra.mxu0 %v1096
  %v6761 = vpop.f32.mrf.mxu0
  %v6762 = vadd.f32 %v1057, %v6761
  %v6763 = vpop.f32.mrf.mxu0
  %6764 = vdwg.mxu0
  %6765 = vmatpush.bf16.msra.mxu0 %v4429
  %6766 = vmatpush.bf16.msra.mxu0 %v4413
  %6767 = vmatpush.bf16.msra.mxu0 %v4397
  %6768 = vmatpush.bf16.msra.mxu0 %v4381
  %6769 = vmatpush.bf16.msra.mxu0 %v4365
  %6770 = vmatpush.bf16.msra.mxu0 %v4349
  %6771 = vmatpush.bf16.msra.mxu0 %v4333
  %6772 = vmatpush.bf16.msra.mxu0 %v4317
  %6773 = vmatmul.bf16.gmra.mxu0 %v1097
  %v6774 = vpop.f32.mrf.mxu0
  %v6775 = vadd.f32 %v6762, %v6774
  %v6776 = vpop.f32.mrf.mxu0
  %6777 = vdwg.mxu0
  %6778 = vmatpush.bf16.msra.mxu0 %v4557
  %6779 = vmatpush.bf16.msra.mxu0 %v4541
  %6780 = vmatpush.bf16.msra.mxu0 %v4525
  %6781 = vmatpush.bf16.msra.mxu0 %v4509
  %6782 = vmatpush.bf16.msra.mxu0 %v4493
  %6783 = vmatpush.bf16.msra.mxu0 %v4477
  %6784 = vmatpush.bf16.msra.mxu0 %v4461
  %6785 = vmatpush.bf16.msra.mxu0 %v4445
  %6786 = vmatmul.bf16.gmra.mxu0 %v1098
  %v6787 = vpop.f32.mrf.mxu0
  %v6788 = vadd.f32 %v6775, %v6787
  %v6789 = vpop.f32.mrf.mxu0
  %6790 = vdwg.mxu0
  %6791 = vmatpush.bf16.msra.mxu0 %v4685
  %6792 = vmatpush.bf16.msra.mxu0 %v4669
  %6793 = vmatpush.bf16.msra.mxu0 %v4653
  %6794 = vmatpush.bf16.msra.mxu0 %v4637
  %6795 = vmatpush.bf16.msra.mxu0 %v4621
  %6796 = vmatpush.bf16.msra.mxu0 %v4605
  %6797 = vmatpush.bf16.msra.mxu0 %v4589
  %6798 = vmatpush.bf16.msra.mxu0 %v4573
  %6799 = vmatmul.bf16.gmra.mxu0 %v1099
  %v6800 = vpop.f32.mrf.mxu0
  %v6801 = vadd.f32 %v6788, %v6800
  %v6802 = vpop.f32.mrf.mxu0
  %6803 = vdwg.mxu0
  %6804 = vmatpush.bf16.msra.mxu0 %v4813
  %6805 = vmatpush.bf16.msra.mxu0 %v4797
  %6806 = vmatpush.bf16.msra.mxu0 %v4781
  %6807 = vmatpush.bf16.msra.mxu0 %v4765
  %6808 = vmatpush.bf16.msra.mxu0 %v4749
  %6809 = vmatpush.bf16.msra.mxu0 %v4733
  %6810 = vmatpush.bf16.msra.mxu0 %v4717
  %6811 = vmatpush.bf16.msra.mxu0 %v4701
  %6812 = vmatmul.bf16.gmra.mxu0 %v1100
  %v6813 = vpop.f32.mrf.mxu0
  %v6814 = vadd.f32 %v6801, %v6813
  %v6815 = vpop.f32.mrf.mxu0
  %6816 = vdwg.mxu0
  %6817 = vmatpush.bf16.msra.mxu0 %v4941
  %6818 = vmatpush.bf16.msra.mxu0 %v4925
  %6819 = vmatpush.bf16.msra.mxu0 %v4909
  %6820 = vmatpush.bf16.msra.mxu0 %v4893
  %6821 = vmatpush.bf16.msra.mxu0 %v4877
  %6822 = vmatpush.bf16.msra.mxu0 %v4861
  %6823 = vmatpush.bf16.msra.mxu0 %v4845
  %6824 = vmatpush.bf16.msra.mxu0 %v4829
  %6825 = vmatmul.bf16.gmra.mxu0 %v1101
  %v6826 = vpop.f32.mrf.mxu0
  %v6827 = vadd.f32 %v6814, %v6826
  %v6828 = vpop.f32.mrf.mxu0
  %6829 = vdwg.mxu0
  %6830 = vmatpush.bf16.msra.mxu0 %v5069
  %6831 = vmatpush.bf16.msra.mxu0 %v5053
  %6832 = vmatpush.bf16.msra.mxu0 %v5037
  %6833 = vmatpush.bf16.msra.mxu0 %v5021
  %6834 = vmatpush.bf16.msra.mxu0 %v5005
  %6835 = vmatpush.bf16.msra.mxu0 %v4989
  %6836 = vmatpush.bf16.msra.mxu0 %v4973
  %6837 = vmatpush.bf16.msra.mxu0 %v4957
  %6838 = vmatmul.bf16.gmra.mxu0 %v1102
  %v6839 = vpop.f32.mrf.mxu0
  %v6840 = vadd.f32 %v6827, %v6839
  %v6841 = vpop.f32.mrf.mxu0
  %6842 = vdwg.mxu0
  %6843 = vmatpush.bf16.msra.mxu0 %v5197
  %6844 = vmatpush.bf16.msra.mxu0 %v5181
  %6845 = vmatpush.bf16.msra.mxu0 %v5165
  %6846 = vmatpush.bf16.msra.mxu0 %v5149
  %6847 = vmatpush.bf16.msra.mxu0 %v5133
  %6848 = vmatpush.bf16.msra.mxu0 %v5117
  %6849 = vmatpush.bf16.msra.mxu0 %v5101
  %6850 = vmatpush.bf16.msra.mxu0 %v5085
  %6851 = vmatmul.bf16.gmra.mxu0 %v1103
  %v6852 = vpop.f32.mrf.mxu0
  %v6853 = vadd.f32 %v6840, %v6852
  %v6854 = vpop.f32.mrf.mxu0
  %6855 = vdwg.mxu0
  %6856 = vmatpush.bf16.msra.mxu0 %v4302
  %6857 = vmatpush.bf16.msra.mxu0 %v4286
  %6858 = vmatpush.bf16.msra.mxu0 %v4270
  %6859 = vmatpush.bf16.msra.mxu0 %v4254
  %6860 = vmatpush.bf16.msra.mxu0 %v4238
  %6861 = vmatpush.bf16.msra.mxu0 %v4222
  %6862 = vmatpush.bf16.msra.mxu0 %v4206
  %6863 = vmatpush.bf16.msra.mxu0 %v4190
  %6864 = vmatmul.bf16.gmra.mxu0 %v1096
  %v6865 = vpop.f32.mrf.mxu0
  %v6866 = vadd.f32 %v1058, %v6865
  %v6867 = vpop.f32.mrf.mxu0
  %6868 = vdwg.mxu0
  %6869 = vmatpush.bf16.msra.mxu0 %v4430
  %6870 = vmatpush.bf16.msra.mxu0 %v4414
  %6871 = vmatpush.bf16.msra.mxu0 %v4398
  %6872 = vmatpush.bf16.msra.mxu0 %v4382
  %6873 = vmatpush.bf16.msra.mxu0 %v4366
  %6874 = vmatpush.bf16.msra.mxu0 %v4350
  %6875 = vmatpush.bf16.msra.mxu0 %v4334
  %6876 = vmatpush.bf16.msra.mxu0 %v4318
  %6877 = vmatmul.bf16.gmra.mxu0 %v1097
  %v6878 = vpop.f32.mrf.mxu0
  %v6879 = vadd.f32 %v6866, %v6878
  %v6880 = vpop.f32.mrf.mxu0
  %6881 = vdwg.mxu0
  %6882 = vmatpush.bf16.msra.mxu0 %v4558
  %6883 = vmatpush.bf16.msra.mxu0 %v4542
  %6884 = vmatpush.bf16.msra.mxu0 %v4526
  %6885 = vmatpush.bf16.msra.mxu0 %v4510
  %6886 = vmatpush.bf16.msra.mxu0 %v4494
  %6887 = vmatpush.bf16.msra.mxu0 %v4478
  %6888 = vmatpush.bf16.msra.mxu0 %v4462
  %6889 = vmatpush.bf16.msra.mxu0 %v4446
  %6890 = vmatmul.bf16.gmra.mxu0 %v1098
  %v6891 = vpop.f32.mrf.mxu0
  %v6892 = vadd.f32 %v6879, %v6891
  %v6893 = vpop.f32.mrf.mxu0
  %6894 = vdwg.mxu0
  %6895 = vmatpush.bf16.msra.mxu0 %v4686
  %6896 = vmatpush.bf16.msra.mxu0 %v4670
  %6897 = vmatpush.bf16.msra.mxu0 %v4654
  %6898 = vmatpush.bf16.msra.mxu0 %v4638
  %6899 = vmatpush.bf16.msra.mxu0 %v4622
  %6900 = vmatpush.bf16.msra.mxu0 %v4606
  %6901 = vmatpush.bf16.msra.mxu0 %v4590
  %6902 = vmatpush.bf16.msra.mxu0 %v4574
  %6903 = vmatmul.bf16.gmra.mxu0 %v1099
  %v6904 = vpop.f32.mrf.mxu0
  %v6905 = vadd.f32 %v6892, %v6904
  %v6906 = vpop.f32.mrf.mxu0
  %6907 = vdwg.mxu0
  %6908 = vmatpush.bf16.msra.mxu0 %v4814
  %6909 = vmatpush.bf16.msra.mxu0 %v4798
  %6910 = vmatpush.bf16.msra.mxu0 %v4782
  %6911 = vmatpush.bf16.msra.mxu0 %v4766
  %6912 = vmatpush.bf16.msra.mxu0 %v4750
  %6913 = vmatpush.bf16.msra.mxu0 %v4734
  %6914 = vmatpush.bf16.msra.mxu0 %v4718
  %6915 = vmatpush.bf16.msra.mxu0 %v4702
  %6916 = vmatmul.bf16.gmra.mxu0 %v1100
  %v6917 = vpop.f32.mrf.mxu0
  %v6918 = vadd.f32 %v6905, %v6917
  %v6919 = vpop.f32.mrf.mxu0
  %6920 = vdwg.mxu0
  %6921 = vmatpush.bf16.msra.mxu0 %v4942
  %6922 = vmatpush.bf16.msra.mxu0 %v4926
  %6923 = vmatpush.bf16.msra.mxu0 %v4910
  %6924 = vmatpush.bf16.msra.mxu0 %v4894
  %6925 = vmatpush.bf16.msra.mxu0 %v4878
  %6926 = vmatpush.bf16.msra.mxu0 %v4862
  %6927 = vmatpush.bf16.msra.mxu0 %v4846
  %6928 = vmatpush.bf16.msra.mxu0 %v4830
  %6929 = vmatmul.bf16.gmra.mxu0 %v1101
  %v6930 = vpop.f32.mrf.mxu0
  %v6931 = vadd.f32 %v6918, %v6930
  %v6932 = vpop.f32.mrf.mxu0
  %6933 = vdwg.mxu0
  %6934 = vmatpush.bf16.msra.mxu0 %v5070
  %6935 = vmatpush.bf16.msra.mxu0 %v5054
  %6936 = vmatpush.bf16.msra.mxu0 %v5038
  %6937 = vmatpush.bf16.msra.mxu0 %v5022
  %6938 = vmatpush.bf16.msra.mxu0 %v5006
  %6939 = vmatpush.bf16.msra.mxu0 %v4990
  %6940 = vmatpush.bf16.msra.mxu0 %v4974
  %6941 = vmatpush.bf16.msra.mxu0 %v4958
  %6942 = vmatmul.bf16.gmra.mxu0 %v1102
  %v6943 = vpop.f32.mrf.mxu0
  %v6944 = vadd.f32 %v6931, %v6943
  %v6945 = vpop.f32.mrf.mxu0
  %6946 = vdwg.mxu0
  %6947 = vmatpush.bf16.msra.mxu0 %v5198
  %6948 = vmatpush.bf16.msra.mxu0 %v5182
  %6949 = vmatpush.bf16.msra.mxu0 %v5166
  %6950 = vmatpush.bf16.msra.mxu0 %v5150
  %6951 = vmatpush.bf16.msra.mxu0 %v5134
  %6952 = vmatpush.bf16.msra.mxu0 %v5118
  %6953 = vmatpush.bf16.msra.mxu0 %v5102
  %6954 = vmatpush.bf16.msra.mxu0 %v5086
  %6955 = vmatmul.bf16.gmra.mxu0 %v1103
  %v6956 = vpop.f32.mrf.mxu0
  %v6957 = vadd.f32 %v6944, %v6956
  %v6958 = vpop.f32.mrf.mxu0
  %6959 = vdwg.mxu0
  %6960 = vmatpush.bf16.msra.mxu0 %v4303
  %6961 = vmatpush.bf16.msra.mxu0 %v4287
  %6962 = vmatpush.bf16.msra.mxu0 %v4271
  %6963 = vmatpush.bf16.msra.mxu0 %v4255
  %6964 = vmatpush.bf16.msra.mxu0 %v4239
  %6965 = vmatpush.bf16.msra.mxu0 %v4223
  %6966 = vmatpush.bf16.msra.mxu0 %v4207
  %6967 = vmatpush.bf16.msra.mxu0 %v4191
  %6968 = vmatmul.bf16.gmra.mxu0 %v1096
  %v6969 = vpop.f32.mrf.mxu0
  %v6970 = vadd.f32 %v1059, %v6969
  %v6971 = vpop.f32.mrf.mxu0
  %6972 = vdwg.mxu0
  %6973 = vmatpush.bf16.msra.mxu0 %v4431
  %6974 = vmatpush.bf16.msra.mxu0 %v4415
  %6975 = vmatpush.bf16.msra.mxu0 %v4399
  %6976 = vmatpush.bf16.msra.mxu0 %v4383
  %6977 = vmatpush.bf16.msra.mxu0 %v4367
  %6978 = vmatpush.bf16.msra.mxu0 %v4351
  %6979 = vmatpush.bf16.msra.mxu0 %v4335
  %6980 = vmatpush.bf16.msra.mxu0 %v4319
  %6981 = vmatmul.bf16.gmra.mxu0 %v1097
  %v6982 = vpop.f32.mrf.mxu0
  %v6983 = vadd.f32 %v6970, %v6982
  %v6984 = vpop.f32.mrf.mxu0
  %6985 = vdwg.mxu0
  %6986 = vmatpush.bf16.msra.mxu0 %v4559
  %6987 = vmatpush.bf16.msra.mxu0 %v4543
  %6988 = vmatpush.bf16.msra.mxu0 %v4527
  %6989 = vmatpush.bf16.msra.mxu0 %v4511
  %6990 = vmatpush.bf16.msra.mxu0 %v4495
  %6991 = vmatpush.bf16.msra.mxu0 %v4479
  %6992 = vmatpush.bf16.msra.mxu0 %v4463
  %6993 = vmatpush.bf16.msra.mxu0 %v4447
  %6994 = vmatmul.bf16.gmra.mxu0 %v1098
  %v6995 = vpop.f32.mrf.mxu0
  %v6996 = vadd.f32 %v6983, %v6995
  %v6997 = vpop.f32.mrf.mxu0
  %6998 = vdwg.mxu0
  %6999 = vmatpush.bf16.msra.mxu0 %v4687
  %7000 = vmatpush.bf16.msra.mxu0 %v4671
  %7001 = vmatpush.bf16.msra.mxu0 %v4655
  %7002 = vmatpush.bf16.msra.mxu0 %v4639
  %7003 = vmatpush.bf16.msra.mxu0 %v4623
  %7004 = vmatpush.bf16.msra.mxu0 %v4607
  %7005 = vmatpush.bf16.msra.mxu0 %v4591
  %7006 = vmatpush.bf16.msra.mxu0 %v4575
  %7007 = vmatmul.bf16.gmra.mxu0 %v1099
  %v7008 = vpop.f32.mrf.mxu0
  %v7009 = vadd.f32 %v6996, %v7008
  %v7010 = vpop.f32.mrf.mxu0
  %7011 = vdwg.mxu0
  %7012 = vmatpush.bf16.msra.mxu0 %v4815
  %7013 = vmatpush.bf16.msra.mxu0 %v4799
  %7014 = vmatpush.bf16.msra.mxu0 %v4783
  %7015 = vmatpush.bf16.msra.mxu0 %v4767
  %7016 = vmatpush.bf16.msra.mxu0 %v4751
  %7017 = vmatpush.bf16.msra.mxu0 %v4735
  %7018 = vmatpush.bf16.msra.mxu0 %v4719
  %7019 = vmatpush.bf16.msra.mxu0 %v4703
  %7020 = vmatmul.bf16.gmra.mxu0 %v1100
  %v7021 = vpop.f32.mrf.mxu0
  %v7022 = vadd.f32 %v7009, %v7021
  %v7023 = vpop.f32.mrf.mxu0
  %7024 = vdwg.mxu0
  %7025 = vmatpush.bf16.msra.mxu0 %v4943
  %7026 = vmatpush.bf16.msra.mxu0 %v4927
  %7027 = vmatpush.bf16.msra.mxu0 %v4911
  %7028 = vmatpush.bf16.msra.mxu0 %v4895
  %7029 = vmatpush.bf16.msra.mxu0 %v4879
  %7030 = vmatpush.bf16.msra.mxu0 %v4863
  %7031 = vmatpush.bf16.msra.mxu0 %v4847
  %7032 = vmatpush.bf16.msra.mxu0 %v4831
  %7033 = vmatmul.bf16.gmra.mxu0 %v1101
  %v7034 = vpop.f32.mrf.mxu0
  %v7035 = vadd.f32 %v7022, %v7034
  %v7036 = vpop.f32.mrf.mxu0
  %7037 = vdwg.mxu0
  %7038 = vmatpush.bf16.msra.mxu0 %v5071
  %7039 = vmatpush.bf16.msra.mxu0 %v5055
  %7040 = vmatpush.bf16.msra.mxu0 %v5039
  %7041 = vmatpush.bf16.msra.mxu0 %v5023
  %7042 = vmatpush.bf16.msra.mxu0 %v5007
  %7043 = vmatpush.bf16.msra.mxu0 %v4991
  %7044 = vmatpush.bf16.msra.mxu0 %v4975
  %7045 = vmatpush.bf16.msra.mxu0 %v4959
  %7046 = vmatmul.bf16.gmra.mxu0 %v1102
  %v7047 = vpop.f32.mrf.mxu0
  %v7048 = vadd.f32 %v7035, %v7047
  %v7049 = vpop.f32.mrf.mxu0
  %7050 = vdwg.mxu0
  %7051 = vmatpush.bf16.msra.mxu0 %v5199
  %7052 = vmatpush.bf16.msra.mxu0 %v5183
  %7053 = vmatpush.bf16.msra.mxu0 %v5167
  %7054 = vmatpush.bf16.msra.mxu0 %v5151
  %7055 = vmatpush.bf16.msra.mxu0 %v5135
  %7056 = vmatpush.bf16.msra.mxu0 %v5119
  %7057 = vmatpush.bf16.msra.mxu0 %v5103
  %7058 = vmatpush.bf16.msra.mxu0 %v5087
  %7059 = vmatmul.bf16.gmra.mxu0 %v1103
  %v7060 = vpop.f32.mrf.mxu0
  %v7061 = vadd.f32 %v7048, %v7060
  %v7062 = vpop.f32.mrf.mxu0
  %7063 = vdwg.mxu0
  %7064 = vmatpush.bf16.msra.mxu0 %v4304
  %7065 = vmatpush.bf16.msra.mxu0 %v4288
  %7066 = vmatpush.bf16.msra.mxu0 %v4272
  %7067 = vmatpush.bf16.msra.mxu0 %v4256
  %7068 = vmatpush.bf16.msra.mxu0 %v4240
  %7069 = vmatpush.bf16.msra.mxu0 %v4224
  %7070 = vmatpush.bf16.msra.mxu0 %v4208
  %7071 = vmatpush.bf16.msra.mxu0 %v4192
  %7072 = vmatmul.bf16.gmra.mxu0 %v1096
  %v7073 = vpop.f32.mrf.mxu0
  %v7074 = vadd.f32 %v1060, %v7073
  %v7075 = vpop.f32.mrf.mxu0
  %7076 = vdwg.mxu0
  %7077 = vmatpush.bf16.msra.mxu0 %v4432
  %7078 = vmatpush.bf16.msra.mxu0 %v4416
  %7079 = vmatpush.bf16.msra.mxu0 %v4400
  %7080 = vmatpush.bf16.msra.mxu0 %v4384
  %7081 = vmatpush.bf16.msra.mxu0 %v4368
  %7082 = vmatpush.bf16.msra.mxu0 %v4352
  %7083 = vmatpush.bf16.msra.mxu0 %v4336
  %7084 = vmatpush.bf16.msra.mxu0 %v4320
  %7085 = vmatmul.bf16.gmra.mxu0 %v1097
  %v7086 = vpop.f32.mrf.mxu0
  %v7087 = vadd.f32 %v7074, %v7086
  %v7088 = vpop.f32.mrf.mxu0
  %7089 = vdwg.mxu0
  %7090 = vmatpush.bf16.msra.mxu0 %v4560
  %7091 = vmatpush.bf16.msra.mxu0 %v4544
  %7092 = vmatpush.bf16.msra.mxu0 %v4528
  %7093 = vmatpush.bf16.msra.mxu0 %v4512
  %7094 = vmatpush.bf16.msra.mxu0 %v4496
  %7095 = vmatpush.bf16.msra.mxu0 %v4480
  %7096 = vmatpush.bf16.msra.mxu0 %v4464
  %7097 = vmatpush.bf16.msra.mxu0 %v4448
  %7098 = vmatmul.bf16.gmra.mxu0 %v1098
  %v7099 = vpop.f32.mrf.mxu0
  %v7100 = vadd.f32 %v7087, %v7099
  %v7101 = vpop.f32.mrf.mxu0
  %7102 = vdwg.mxu0
  %7103 = vmatpush.bf16.msra.mxu0 %v4688
  %7104 = vmatpush.bf16.msra.mxu0 %v4672
  %7105 = vmatpush.bf16.msra.mxu0 %v4656
  %7106 = vmatpush.bf16.msra.mxu0 %v4640
  %7107 = vmatpush.bf16.msra.mxu0 %v4624
  %7108 = vmatpush.bf16.msra.mxu0 %v4608
  %7109 = vmatpush.bf16.msra.mxu0 %v4592
  %7110 = vmatpush.bf16.msra.mxu0 %v4576
  %7111 = vmatmul.bf16.gmra.mxu0 %v1099
  %v7112 = vpop.f32.mrf.mxu0
  %v7113 = vadd.f32 %v7100, %v7112
  %v7114 = vpop.f32.mrf.mxu0
  %7115 = vdwg.mxu0
  %7116 = vmatpush.bf16.msra.mxu0 %v4816
  %7117 = vmatpush.bf16.msra.mxu0 %v4800
  %7118 = vmatpush.bf16.msra.mxu0 %v4784
  %7119 = vmatpush.bf16.msra.mxu0 %v4768
  %7120 = vmatpush.bf16.msra.mxu0 %v4752
  %7121 = vmatpush.bf16.msra.mxu0 %v4736
  %7122 = vmatpush.bf16.msra.mxu0 %v4720
  %7123 = vmatpush.bf16.msra.mxu0 %v4704
  %7124 = vmatmul.bf16.gmra.mxu0 %v1100
  %v7125 = vpop.f32.mrf.mxu0
  %v7126 = vadd.f32 %v7113, %v7125
  %v7127 = vpop.f32.mrf.mxu0
  %7128 = vdwg.mxu0
  %7129 = vmatpush.bf16.msra.mxu0 %v4944
  %7130 = vmatpush.bf16.msra.mxu0 %v4928
  %7131 = vmatpush.bf16.msra.mxu0 %v4912
  %7132 = vmatpush.bf16.msra.mxu0 %v4896
  %7133 = vmatpush.bf16.msra.mxu0 %v4880
  %7134 = vmatpush.bf16.msra.mxu0 %v4864
  %7135 = vmatpush.bf16.msra.mxu0 %v4848
  %7136 = vmatpush.bf16.msra.mxu0 %v4832
  %7137 = vmatmul.bf16.gmra.mxu0 %v1101
  %v7138 = vpop.f32.mrf.mxu0
  %v7139 = vadd.f32 %v7126, %v7138
  %v7140 = vpop.f32.mrf.mxu0
  %7141 = vdwg.mxu0
  %7142 = vmatpush.bf16.msra.mxu0 %v5072
  %7143 = vmatpush.bf16.msra.mxu0 %v5056
  %7144 = vmatpush.bf16.msra.mxu0 %v5040
  %7145 = vmatpush.bf16.msra.mxu0 %v5024
  %7146 = vmatpush.bf16.msra.mxu0 %v5008
  %7147 = vmatpush.bf16.msra.mxu0 %v4992
  %7148 = vmatpush.bf16.msra.mxu0 %v4976
  %7149 = vmatpush.bf16.msra.mxu0 %v4960
  %7150 = vmatmul.bf16.gmra.mxu0 %v1102
  %v7151 = vpop.f32.mrf.mxu0
  %v7152 = vadd.f32 %v7139, %v7151
  %v7153 = vpop.f32.mrf.mxu0
  %7154 = vdwg.mxu0
  %7155 = vmatpush.bf16.msra.mxu0 %v5200
  %7156 = vmatpush.bf16.msra.mxu0 %v5184
  %7157 = vmatpush.bf16.msra.mxu0 %v5168
  %7158 = vmatpush.bf16.msra.mxu0 %v5152
  %7159 = vmatpush.bf16.msra.mxu0 %v5136
  %7160 = vmatpush.bf16.msra.mxu0 %v5120
  %7161 = vmatpush.bf16.msra.mxu0 %v5104
  %7162 = vmatpush.bf16.msra.mxu0 %v5088
  %7163 = vmatmul.bf16.gmra.mxu0 %v1103
  %v7164 = vpop.f32.mrf.mxu0
  %v7165 = vadd.f32 %v7152, %v7164
  %v7166 = vpop.f32.mrf.mxu0
  %7167 = vdwg.mxu0
  %7168 = vmatpush.bf16.msra.mxu0 %v4305
  %7169 = vmatpush.bf16.msra.mxu0 %v4289
  %7170 = vmatpush.bf16.msra.mxu0 %v4273
  %7171 = vmatpush.bf16.msra.mxu0 %v4257
  %7172 = vmatpush.bf16.msra.mxu0 %v4241
  %7173 = vmatpush.bf16.msra.mxu0 %v4225
  %7174 = vmatpush.bf16.msra.mxu0 %v4209
  %7175 = vmatpush.bf16.msra.mxu0 %v4193
  %7176 = vmatmul.bf16.gmra.mxu0 %v1096
  %v7177 = vpop.f32.mrf.mxu0
  %v7178 = vadd.f32 %v1061, %v7177
  %v7179 = vpop.f32.mrf.mxu0
  %7180 = vdwg.mxu0
  %7181 = vmatpush.bf16.msra.mxu0 %v4433
  %7182 = vmatpush.bf16.msra.mxu0 %v4417
  %7183 = vmatpush.bf16.msra.mxu0 %v4401
  %7184 = vmatpush.bf16.msra.mxu0 %v4385
  %7185 = vmatpush.bf16.msra.mxu0 %v4369
  %7186 = vmatpush.bf16.msra.mxu0 %v4353
  %7187 = vmatpush.bf16.msra.mxu0 %v4337
  %7188 = vmatpush.bf16.msra.mxu0 %v4321
  %7189 = vmatmul.bf16.gmra.mxu0 %v1097
  %v7190 = vpop.f32.mrf.mxu0
  %v7191 = vadd.f32 %v7178, %v7190
  %v7192 = vpop.f32.mrf.mxu0
  %7193 = vdwg.mxu0
  %7194 = vmatpush.bf16.msra.mxu0 %v4561
  %7195 = vmatpush.bf16.msra.mxu0 %v4545
  %7196 = vmatpush.bf16.msra.mxu0 %v4529
  %7197 = vmatpush.bf16.msra.mxu0 %v4513
  %7198 = vmatpush.bf16.msra.mxu0 %v4497
  %7199 = vmatpush.bf16.msra.mxu0 %v4481
  %7200 = vmatpush.bf16.msra.mxu0 %v4465
  %7201 = vmatpush.bf16.msra.mxu0 %v4449
  %7202 = vmatmul.bf16.gmra.mxu0 %v1098
  %v7203 = vpop.f32.mrf.mxu0
  %v7204 = vadd.f32 %v7191, %v7203
  %v7205 = vpop.f32.mrf.mxu0
  %7206 = vdwg.mxu0
  %7207 = vmatpush.bf16.msra.mxu0 %v4689
  %7208 = vmatpush.bf16.msra.mxu0 %v4673
  %7209 = vmatpush.bf16.msra.mxu0 %v4657
  %7210 = vmatpush.bf16.msra.mxu0 %v4641
  %7211 = vmatpush.bf16.msra.mxu0 %v4625
  %7212 = vmatpush.bf16.msra.mxu0 %v4609
  %7213 = vmatpush.bf16.msra.mxu0 %v4593
  %7214 = vmatpush.bf16.msra.mxu0 %v4577
  %7215 = vmatmul.bf16.gmra.mxu0 %v1099
  %v7216 = vpop.f32.mrf.mxu0
  %v7217 = vadd.f32 %v7204, %v7216
  %v7218 = vpop.f32.mrf.mxu0
  %7219 = vdwg.mxu0
  %7220 = vmatpush.bf16.msra.mxu0 %v4817
  %7221 = vmatpush.bf16.msra.mxu0 %v4801
  %7222 = vmatpush.bf16.msra.mxu0 %v4785
  %7223 = vmatpush.bf16.msra.mxu0 %v4769
  %7224 = vmatpush.bf16.msra.mxu0 %v4753
  %7225 = vmatpush.bf16.msra.mxu0 %v4737
  %7226 = vmatpush.bf16.msra.mxu0 %v4721
  %7227 = vmatpush.bf16.msra.mxu0 %v4705
  %7228 = vmatmul.bf16.gmra.mxu0 %v1100
  %v7229 = vpop.f32.mrf.mxu0
  %v7230 = vadd.f32 %v7217, %v7229
  %v7231 = vpop.f32.mrf.mxu0
  %7232 = vdwg.mxu0
  %7233 = vmatpush.bf16.msra.mxu0 %v4945
  %7234 = vmatpush.bf16.msra.mxu0 %v4929
  %7235 = vmatpush.bf16.msra.mxu0 %v4913
  %7236 = vmatpush.bf16.msra.mxu0 %v4897
  %7237 = vmatpush.bf16.msra.mxu0 %v4881
  %7238 = vmatpush.bf16.msra.mxu0 %v4865
  %7239 = vmatpush.bf16.msra.mxu0 %v4849
  %7240 = vmatpush.bf16.msra.mxu0 %v4833
  %7241 = vmatmul.bf16.gmra.mxu0 %v1101
  %v7242 = vpop.f32.mrf.mxu0
  %v7243 = vadd.f32 %v7230, %v7242
  %v7244 = vpop.f32.mrf.mxu0
  %7245 = vdwg.mxu0
  %7246 = vmatpush.bf16.msra.mxu0 %v5073
  %7247 = vmatpush.bf16.msra.mxu0 %v5057
  %7248 = vmatpush.bf16.msra.mxu0 %v5041
  %7249 = vmatpush.bf16.msra.mxu0 %v5025
  %7250 = vmatpush.bf16.msra.mxu0 %v5009
  %7251 = vmatpush.bf16.msra.mxu0 %v4993
  %7252 = vmatpush.bf16.msra.mxu0 %v4977
  %7253 = vmatpush.bf16.msra.mxu0 %v4961
  %7254 = vmatmul.bf16.gmra.mxu0 %v1102
  %v7255 = vpop.f32.mrf.mxu0
  %v7256 = vadd.f32 %v7243, %v7255
  %v7257 = vpop.f32.mrf.mxu0
  %7258 = vdwg.mxu0
  %7259 = vmatpush.bf16.msra.mxu0 %v5201
  %7260 = vmatpush.bf16.msra.mxu0 %v5185
  %7261 = vmatpush.bf16.msra.mxu0 %v5169
  %7262 = vmatpush.bf16.msra.mxu0 %v5153
  %7263 = vmatpush.bf16.msra.mxu0 %v5137
  %7264 = vmatpush.bf16.msra.mxu0 %v5121
  %7265 = vmatpush.bf16.msra.mxu0 %v5105
  %7266 = vmatpush.bf16.msra.mxu0 %v5089
  %7267 = vmatmul.bf16.gmra.mxu0 %v1103
  %v7268 = vpop.f32.mrf.mxu0
  %v7269 = vadd.f32 %v7256, %v7268
  %v7270 = vpop.f32.mrf.mxu0
  %7271 = vdwg.mxu0
  %7272 = vmatpush.bf16.msra.mxu0 %v4306
  %7273 = vmatpush.bf16.msra.mxu0 %v4290
  %7274 = vmatpush.bf16.msra.mxu0 %v4274
  %7275 = vmatpush.bf16.msra.mxu0 %v4258
  %7276 = vmatpush.bf16.msra.mxu0 %v4242
  %7277 = vmatpush.bf16.msra.mxu0 %v4226
  %7278 = vmatpush.bf16.msra.mxu0 %v4210
  %7279 = vmatpush.bf16.msra.mxu0 %v4194
  %7280 = vmatmul.bf16.gmra.mxu0 %v1096
  %v7281 = vpop.f32.mrf.mxu0
  %v7282 = vadd.f32 %v1062, %v7281
  %v7283 = vpop.f32.mrf.mxu0
  %7284 = vdwg.mxu0
  %7285 = vmatpush.bf16.msra.mxu0 %v4434
  %7286 = vmatpush.bf16.msra.mxu0 %v4418
  %7287 = vmatpush.bf16.msra.mxu0 %v4402
  %7288 = vmatpush.bf16.msra.mxu0 %v4386
  %7289 = vmatpush.bf16.msra.mxu0 %v4370
  %7290 = vmatpush.bf16.msra.mxu0 %v4354
  %7291 = vmatpush.bf16.msra.mxu0 %v4338
  %7292 = vmatpush.bf16.msra.mxu0 %v4322
  %7293 = vmatmul.bf16.gmra.mxu0 %v1097
  %v7294 = vpop.f32.mrf.mxu0
  %v7295 = vadd.f32 %v7282, %v7294
  %v7296 = vpop.f32.mrf.mxu0
  %7297 = vdwg.mxu0
  %7298 = vmatpush.bf16.msra.mxu0 %v4562
  %7299 = vmatpush.bf16.msra.mxu0 %v4546
  %7300 = vmatpush.bf16.msra.mxu0 %v4530
  %7301 = vmatpush.bf16.msra.mxu0 %v4514
  %7302 = vmatpush.bf16.msra.mxu0 %v4498
  %7303 = vmatpush.bf16.msra.mxu0 %v4482
  %7304 = vmatpush.bf16.msra.mxu0 %v4466
  %7305 = vmatpush.bf16.msra.mxu0 %v4450
  %7306 = vmatmul.bf16.gmra.mxu0 %v1098
  %v7307 = vpop.f32.mrf.mxu0
  %v7308 = vadd.f32 %v7295, %v7307
  %v7309 = vpop.f32.mrf.mxu0
  %7310 = vdwg.mxu0
  %7311 = vmatpush.bf16.msra.mxu0 %v4690
  %7312 = vmatpush.bf16.msra.mxu0 %v4674
  %7313 = vmatpush.bf16.msra.mxu0 %v4658
  %7314 = vmatpush.bf16.msra.mxu0 %v4642
  %7315 = vmatpush.bf16.msra.mxu0 %v4626
  %7316 = vmatpush.bf16.msra.mxu0 %v4610
  %7317 = vmatpush.bf16.msra.mxu0 %v4594
  %7318 = vmatpush.bf16.msra.mxu0 %v4578
  %7319 = vmatmul.bf16.gmra.mxu0 %v1099
  %v7320 = vpop.f32.mrf.mxu0
  %v7321 = vadd.f32 %v7308, %v7320
  %v7322 = vpop.f32.mrf.mxu0
  %7323 = vdwg.mxu0
  %7324 = vmatpush.bf16.msra.mxu0 %v4818
  %7325 = vmatpush.bf16.msra.mxu0 %v4802
  %7326 = vmatpush.bf16.msra.mxu0 %v4786
  %7327 = vmatpush.bf16.msra.mxu0 %v4770
  %7328 = vmatpush.bf16.msra.mxu0 %v4754
  %7329 = vmatpush.bf16.msra.mxu0 %v4738
  %7330 = vmatpush.bf16.msra.mxu0 %v4722
  %7331 = vmatpush.bf16.msra.mxu0 %v4706
  %7332 = vmatmul.bf16.gmra.mxu0 %v1100
  %v7333 = vpop.f32.mrf.mxu0
  %v7334 = vadd.f32 %v7321, %v7333
  %v7335 = vpop.f32.mrf.mxu0
  %7336 = vdwg.mxu0
  %7337 = vmatpush.bf16.msra.mxu0 %v4946
  %7338 = vmatpush.bf16.msra.mxu0 %v4930
  %7339 = vmatpush.bf16.msra.mxu0 %v4914
  %7340 = vmatpush.bf16.msra.mxu0 %v4898
  %7341 = vmatpush.bf16.msra.mxu0 %v4882
  %7342 = vmatpush.bf16.msra.mxu0 %v4866
  %7343 = vmatpush.bf16.msra.mxu0 %v4850
  %7344 = vmatpush.bf16.msra.mxu0 %v4834
  %7345 = vmatmul.bf16.gmra.mxu0 %v1101
  %v7346 = vpop.f32.mrf.mxu0
  %v7347 = vadd.f32 %v7334, %v7346
  %v7348 = vpop.f32.mrf.mxu0
  %7349 = vdwg.mxu0
  %7350 = vmatpush.bf16.msra.mxu0 %v5074
  %7351 = vmatpush.bf16.msra.mxu0 %v5058
  %7352 = vmatpush.bf16.msra.mxu0 %v5042
  %7353 = vmatpush.bf16.msra.mxu0 %v5026
  %7354 = vmatpush.bf16.msra.mxu0 %v5010
  %7355 = vmatpush.bf16.msra.mxu0 %v4994
  %7356 = vmatpush.bf16.msra.mxu0 %v4978
  %7357 = vmatpush.bf16.msra.mxu0 %v4962
  %7358 = vmatmul.bf16.gmra.mxu0 %v1102
  %v7359 = vpop.f32.mrf.mxu0
  %v7360 = vadd.f32 %v7347, %v7359
  %v7361 = vpop.f32.mrf.mxu0
  %7362 = vdwg.mxu0
  %7363 = vmatpush.bf16.msra.mxu0 %v5202
  %7364 = vmatpush.bf16.msra.mxu0 %v5186
  %7365 = vmatpush.bf16.msra.mxu0 %v5170
  %7366 = vmatpush.bf16.msra.mxu0 %v5154
  %7367 = vmatpush.bf16.msra.mxu0 %v5138
  %7368 = vmatpush.bf16.msra.mxu0 %v5122
  %7369 = vmatpush.bf16.msra.mxu0 %v5106
  %7370 = vmatpush.bf16.msra.mxu0 %v5090
  %7371 = vmatmul.bf16.gmra.mxu0 %v1103
  %v7372 = vpop.f32.mrf.mxu0
  %v7373 = vadd.f32 %v7360, %v7372
  %v7374 = vpop.f32.mrf.mxu0
  %7375 = vdwg.mxu0
  %7376 = vmatpush.bf16.msra.mxu0 %v4307
  %7377 = vmatpush.bf16.msra.mxu0 %v4291
  %7378 = vmatpush.bf16.msra.mxu0 %v4275
  %7379 = vmatpush.bf16.msra.mxu0 %v4259
  %7380 = vmatpush.bf16.msra.mxu0 %v4243
  %7381 = vmatpush.bf16.msra.mxu0 %v4227
  %7382 = vmatpush.bf16.msra.mxu0 %v4211
  %7383 = vmatpush.bf16.msra.mxu0 %v4195
  %7384 = vmatmul.bf16.gmra.mxu0 %v1096
  %v7385 = vpop.f32.mrf.mxu0
  %v7386 = vadd.f32 %v1063, %v7385
  %v7387 = vpop.f32.mrf.mxu0
  %7388 = vdwg.mxu0
  %7389 = vmatpush.bf16.msra.mxu0 %v4435
  %7390 = vmatpush.bf16.msra.mxu0 %v4419
  %7391 = vmatpush.bf16.msra.mxu0 %v4403
  %7392 = vmatpush.bf16.msra.mxu0 %v4387
  %7393 = vmatpush.bf16.msra.mxu0 %v4371
  %7394 = vmatpush.bf16.msra.mxu0 %v4355
  %7395 = vmatpush.bf16.msra.mxu0 %v4339
  %7396 = vmatpush.bf16.msra.mxu0 %v4323
  %7397 = vmatmul.bf16.gmra.mxu0 %v1097
  %v7398 = vpop.f32.mrf.mxu0
  %v7399 = vadd.f32 %v7386, %v7398
  %v7400 = vpop.f32.mrf.mxu0
  %7401 = vdwg.mxu0
  %7402 = vmatpush.bf16.msra.mxu0 %v4563
  %7403 = vmatpush.bf16.msra.mxu0 %v4547
  %7404 = vmatpush.bf16.msra.mxu0 %v4531
  %7405 = vmatpush.bf16.msra.mxu0 %v4515
  %7406 = vmatpush.bf16.msra.mxu0 %v4499
  %7407 = vmatpush.bf16.msra.mxu0 %v4483
  %7408 = vmatpush.bf16.msra.mxu0 %v4467
  %7409 = vmatpush.bf16.msra.mxu0 %v4451
  %7410 = vmatmul.bf16.gmra.mxu0 %v1098
  %v7411 = vpop.f32.mrf.mxu0
  %v7412 = vadd.f32 %v7399, %v7411
  %v7413 = vpop.f32.mrf.mxu0
  %7414 = vdwg.mxu0
  %7415 = vmatpush.bf16.msra.mxu0 %v4691
  %7416 = vmatpush.bf16.msra.mxu0 %v4675
  %7417 = vmatpush.bf16.msra.mxu0 %v4659
  %7418 = vmatpush.bf16.msra.mxu0 %v4643
  %7419 = vmatpush.bf16.msra.mxu0 %v4627
  %7420 = vmatpush.bf16.msra.mxu0 %v4611
  %7421 = vmatpush.bf16.msra.mxu0 %v4595
  %7422 = vmatpush.bf16.msra.mxu0 %v4579
  %7423 = vmatmul.bf16.gmra.mxu0 %v1099
  %v7424 = vpop.f32.mrf.mxu0
  %v7425 = vadd.f32 %v7412, %v7424
  %v7426 = vpop.f32.mrf.mxu0
  %7427 = vdwg.mxu0
  %7428 = vmatpush.bf16.msra.mxu0 %v4819
  %7429 = vmatpush.bf16.msra.mxu0 %v4803
  %7430 = vmatpush.bf16.msra.mxu0 %v4787
  %7431 = vmatpush.bf16.msra.mxu0 %v4771
  %7432 = vmatpush.bf16.msra.mxu0 %v4755
  %7433 = vmatpush.bf16.msra.mxu0 %v4739
  %7434 = vmatpush.bf16.msra.mxu0 %v4723
  %7435 = vmatpush.bf16.msra.mxu0 %v4707
  %7436 = vmatmul.bf16.gmra.mxu0 %v1100
  %v7437 = vpop.f32.mrf.mxu0
  %v7438 = vadd.f32 %v7425, %v7437
  %v7439 = vpop.f32.mrf.mxu0
  %7440 = vdwg.mxu0
  %7441 = vmatpush.bf16.msra.mxu0 %v4947
  %7442 = vmatpush.bf16.msra.mxu0 %v4931
  %7443 = vmatpush.bf16.msra.mxu0 %v4915
  %7444 = vmatpush.bf16.msra.mxu0 %v4899
  %7445 = vmatpush.bf16.msra.mxu0 %v4883
  %7446 = vmatpush.bf16.msra.mxu0 %v4867
  %7447 = vmatpush.bf16.msra.mxu0 %v4851
  %7448 = vmatpush.bf16.msra.mxu0 %v4835
  %7449 = vmatmul.bf16.gmra.mxu0 %v1101
  %v7450 = vpop.f32.mrf.mxu0
  %v7451 = vadd.f32 %v7438, %v7450
  %v7452 = vpop.f32.mrf.mxu0
  %7453 = vdwg.mxu0
  %7454 = vmatpush.bf16.msra.mxu0 %v5075
  %7455 = vmatpush.bf16.msra.mxu0 %v5059
  %7456 = vmatpush.bf16.msra.mxu0 %v5043
  %7457 = vmatpush.bf16.msra.mxu0 %v5027
  %7458 = vmatpush.bf16.msra.mxu0 %v5011
  %7459 = vmatpush.bf16.msra.mxu0 %v4995
  %7460 = vmatpush.bf16.msra.mxu0 %v4979
  %7461 = vmatpush.bf16.msra.mxu0 %v4963
  %7462 = vmatmul.bf16.gmra.mxu0 %v1102
  %v7463 = vpop.f32.mrf.mxu0
  %v7464 = vadd.f32 %v7451, %v7463
  %v7465 = vpop.f32.mrf.mxu0
  %7466 = vdwg.mxu0
  %7467 = vmatpush.bf16.msra.mxu0 %v5203
  %7468 = vmatpush.bf16.msra.mxu0 %v5187
  %7469 = vmatpush.bf16.msra.mxu0 %v5171
  %7470 = vmatpush.bf16.msra.mxu0 %v5155
  %7471 = vmatpush.bf16.msra.mxu0 %v5139
  %7472 = vmatpush.bf16.msra.mxu0 %v5123
  %7473 = vmatpush.bf16.msra.mxu0 %v5107
  %7474 = vmatpush.bf16.msra.mxu0 %v5091
  %7475 = vmatmul.bf16.gmra.mxu0 %v1103
  %v7476 = vpop.f32.mrf.mxu0
  %v7477 = vadd.f32 %v7464, %v7476
  %v7478 = vpop.f32.mrf.mxu0
  %7479 = vdwg.mxu0
  %7480 = vmatpush.bf16.msra.mxu0 %v4308
  %7481 = vmatpush.bf16.msra.mxu0 %v4292
  %7482 = vmatpush.bf16.msra.mxu0 %v4276
  %7483 = vmatpush.bf16.msra.mxu0 %v4260
  %7484 = vmatpush.bf16.msra.mxu0 %v4244
  %7485 = vmatpush.bf16.msra.mxu0 %v4228
  %7486 = vmatpush.bf16.msra.mxu0 %v4212
  %7487 = vmatpush.bf16.msra.mxu0 %v4196
  %7488 = vmatmul.bf16.gmra.mxu0 %v1096
  %v7489 = vpop.f32.mrf.mxu0
  %v7490 = vadd.f32 %v1064, %v7489
  %v7491 = vpop.f32.mrf.mxu0
  %7492 = vdwg.mxu0
  %7493 = vmatpush.bf16.msra.mxu0 %v4436
  %7494 = vmatpush.bf16.msra.mxu0 %v4420
  %7495 = vmatpush.bf16.msra.mxu0 %v4404
  %7496 = vmatpush.bf16.msra.mxu0 %v4388
  %7497 = vmatpush.bf16.msra.mxu0 %v4372
  %7498 = vmatpush.bf16.msra.mxu0 %v4356
  %7499 = vmatpush.bf16.msra.mxu0 %v4340
  %7500 = vmatpush.bf16.msra.mxu0 %v4324
  %7501 = vmatmul.bf16.gmra.mxu0 %v1097
  %v7502 = vpop.f32.mrf.mxu0
  %v7503 = vadd.f32 %v7490, %v7502
  %v7504 = vpop.f32.mrf.mxu0
  %7505 = vdwg.mxu0
  %7506 = vmatpush.bf16.msra.mxu0 %v4564
  %7507 = vmatpush.bf16.msra.mxu0 %v4548
  %7508 = vmatpush.bf16.msra.mxu0 %v4532
  %7509 = vmatpush.bf16.msra.mxu0 %v4516
  %7510 = vmatpush.bf16.msra.mxu0 %v4500
  %7511 = vmatpush.bf16.msra.mxu0 %v4484
  %7512 = vmatpush.bf16.msra.mxu0 %v4468
  %7513 = vmatpush.bf16.msra.mxu0 %v4452
  %7514 = vmatmul.bf16.gmra.mxu0 %v1098
  %v7515 = vpop.f32.mrf.mxu0
  %v7516 = vadd.f32 %v7503, %v7515
  %v7517 = vpop.f32.mrf.mxu0
  %7518 = vdwg.mxu0
  %7519 = vmatpush.bf16.msra.mxu0 %v4692
  %7520 = vmatpush.bf16.msra.mxu0 %v4676
  %7521 = vmatpush.bf16.msra.mxu0 %v4660
  %7522 = vmatpush.bf16.msra.mxu0 %v4644
  %7523 = vmatpush.bf16.msra.mxu0 %v4628
  %7524 = vmatpush.bf16.msra.mxu0 %v4612
  %7525 = vmatpush.bf16.msra.mxu0 %v4596
  %7526 = vmatpush.bf16.msra.mxu0 %v4580
  %7527 = vmatmul.bf16.gmra.mxu0 %v1099
  %v7528 = vpop.f32.mrf.mxu0
  %v7529 = vadd.f32 %v7516, %v7528
  %v7530 = vpop.f32.mrf.mxu0
  %7531 = vdwg.mxu0
  %7532 = vmatpush.bf16.msra.mxu0 %v4820
  %7533 = vmatpush.bf16.msra.mxu0 %v4804
  %7534 = vmatpush.bf16.msra.mxu0 %v4788
  %7535 = vmatpush.bf16.msra.mxu0 %v4772
  %7536 = vmatpush.bf16.msra.mxu0 %v4756
  %7537 = vmatpush.bf16.msra.mxu0 %v4740
  %7538 = vmatpush.bf16.msra.mxu0 %v4724
  %7539 = vmatpush.bf16.msra.mxu0 %v4708
  %7540 = vmatmul.bf16.gmra.mxu0 %v1100
  %v7541 = vpop.f32.mrf.mxu0
  %v7542 = vadd.f32 %v7529, %v7541
  %v7543 = vpop.f32.mrf.mxu0
  %7544 = vdwg.mxu0
  %7545 = vmatpush.bf16.msra.mxu0 %v4948
  %7546 = vmatpush.bf16.msra.mxu0 %v4932
  %7547 = vmatpush.bf16.msra.mxu0 %v4916
  %7548 = vmatpush.bf16.msra.mxu0 %v4900
  %7549 = vmatpush.bf16.msra.mxu0 %v4884
  %7550 = vmatpush.bf16.msra.mxu0 %v4868
  %7551 = vmatpush.bf16.msra.mxu0 %v4852
  %7552 = vmatpush.bf16.msra.mxu0 %v4836
  %7553 = vmatmul.bf16.gmra.mxu0 %v1101
  %v7554 = vpop.f32.mrf.mxu0
  %v7555 = vadd.f32 %v7542, %v7554
  %v7556 = vpop.f32.mrf.mxu0
  %7557 = vdwg.mxu0
  %7558 = vmatpush.bf16.msra.mxu0 %v5076
  %7559 = vmatpush.bf16.msra.mxu0 %v5060
  %7560 = vmatpush.bf16.msra.mxu0 %v5044
  %7561 = vmatpush.bf16.msra.mxu0 %v5028
  %7562 = vmatpush.bf16.msra.mxu0 %v5012
  %7563 = vmatpush.bf16.msra.mxu0 %v4996
  %7564 = vmatpush.bf16.msra.mxu0 %v4980
  %7565 = vmatpush.bf16.msra.mxu0 %v4964
  %7566 = vmatmul.bf16.gmra.mxu0 %v1102
  %v7567 = vpop.f32.mrf.mxu0
  %v7568 = vadd.f32 %v7555, %v7567
  %v7569 = vpop.f32.mrf.mxu0
  %7570 = vdwg.mxu0
  %7571 = vmatpush.bf16.msra.mxu0 %v5204
  %7572 = vmatpush.bf16.msra.mxu0 %v5188
  %7573 = vmatpush.bf16.msra.mxu0 %v5172
  %7574 = vmatpush.bf16.msra.mxu0 %v5156
  %7575 = vmatpush.bf16.msra.mxu0 %v5140
  %7576 = vmatpush.bf16.msra.mxu0 %v5124
  %7577 = vmatpush.bf16.msra.mxu0 %v5108
  %7578 = vmatpush.bf16.msra.mxu0 %v5092
  %7579 = vmatmul.bf16.gmra.mxu0 %v1103
  %v7580 = vpop.f32.mrf.mxu0
  %v7581 = vadd.f32 %v7568, %v7580
  %v7582 = vpop.f32.mrf.mxu0
  %7583 = vdwg.mxu0
  %7584 = vmatpush.bf16.msra.mxu0 %v4309
  %7585 = vmatpush.bf16.msra.mxu0 %v4293
  %7586 = vmatpush.bf16.msra.mxu0 %v4277
  %7587 = vmatpush.bf16.msra.mxu0 %v4261
  %7588 = vmatpush.bf16.msra.mxu0 %v4245
  %7589 = vmatpush.bf16.msra.mxu0 %v4229
  %7590 = vmatpush.bf16.msra.mxu0 %v4213
  %7591 = vmatpush.bf16.msra.mxu0 %v4197
  %7592 = vmatmul.bf16.gmra.mxu0 %v1096
  %v7593 = vpop.f32.mrf.mxu0
  %v7594 = vadd.f32 %v1065, %v7593
  %v7595 = vpop.f32.mrf.mxu0
  %7596 = vdwg.mxu0
  %7597 = vmatpush.bf16.msra.mxu0 %v4437
  %7598 = vmatpush.bf16.msra.mxu0 %v4421
  %7599 = vmatpush.bf16.msra.mxu0 %v4405
  %7600 = vmatpush.bf16.msra.mxu0 %v4389
  %7601 = vmatpush.bf16.msra.mxu0 %v4373
  %7602 = vmatpush.bf16.msra.mxu0 %v4357
  %7603 = vmatpush.bf16.msra.mxu0 %v4341
  %7604 = vmatpush.bf16.msra.mxu0 %v4325
  %7605 = vmatmul.bf16.gmra.mxu0 %v1097
  %v7606 = vpop.f32.mrf.mxu0
  %v7607 = vadd.f32 %v7594, %v7606
  %v7608 = vpop.f32.mrf.mxu0
  %7609 = vdwg.mxu0
  %7610 = vmatpush.bf16.msra.mxu0 %v4565
  %7611 = vmatpush.bf16.msra.mxu0 %v4549
  %7612 = vmatpush.bf16.msra.mxu0 %v4533
  %7613 = vmatpush.bf16.msra.mxu0 %v4517
  %7614 = vmatpush.bf16.msra.mxu0 %v4501
  %7615 = vmatpush.bf16.msra.mxu0 %v4485
  %7616 = vmatpush.bf16.msra.mxu0 %v4469
  %7617 = vmatpush.bf16.msra.mxu0 %v4453
  %7618 = vmatmul.bf16.gmra.mxu0 %v1098
  %v7619 = vpop.f32.mrf.mxu0
  %v7620 = vadd.f32 %v7607, %v7619
  %v7621 = vpop.f32.mrf.mxu0
  %7622 = vdwg.mxu0
  %7623 = vmatpush.bf16.msra.mxu0 %v4693
  %7624 = vmatpush.bf16.msra.mxu0 %v4677
  %7625 = vmatpush.bf16.msra.mxu0 %v4661
  %7626 = vmatpush.bf16.msra.mxu0 %v4645
  %7627 = vmatpush.bf16.msra.mxu0 %v4629
  %7628 = vmatpush.bf16.msra.mxu0 %v4613
  %7629 = vmatpush.bf16.msra.mxu0 %v4597
  %7630 = vmatpush.bf16.msra.mxu0 %v4581
  %7631 = vmatmul.bf16.gmra.mxu0 %v1099
  %v7632 = vpop.f32.mrf.mxu0
  %v7633 = vadd.f32 %v7620, %v7632
  %v7634 = vpop.f32.mrf.mxu0
  %7635 = vdwg.mxu0
  %7636 = vmatpush.bf16.msra.mxu0 %v4821
  %7637 = vmatpush.bf16.msra.mxu0 %v4805
  %7638 = vmatpush.bf16.msra.mxu0 %v4789
  %7639 = vmatpush.bf16.msra.mxu0 %v4773
  %7640 = vmatpush.bf16.msra.mxu0 %v4757
  %7641 = vmatpush.bf16.msra.mxu0 %v4741
  %7642 = vmatpush.bf16.msra.mxu0 %v4725
  %7643 = vmatpush.bf16.msra.mxu0 %v4709
  %7644 = vmatmul.bf16.gmra.mxu0 %v1100
  %v7645 = vpop.f32.mrf.mxu0
  %v7646 = vadd.f32 %v7633, %v7645
  %v7647 = vpop.f32.mrf.mxu0
  %7648 = vdwg.mxu0
  %7649 = vmatpush.bf16.msra.mxu0 %v4949
  %7650 = vmatpush.bf16.msra.mxu0 %v4933
  %7651 = vmatpush.bf16.msra.mxu0 %v4917
  %7652 = vmatpush.bf16.msra.mxu0 %v4901
  %7653 = vmatpush.bf16.msra.mxu0 %v4885
  %7654 = vmatpush.bf16.msra.mxu0 %v4869
  %7655 = vmatpush.bf16.msra.mxu0 %v4853
  %7656 = vmatpush.bf16.msra.mxu0 %v4837
  %7657 = vmatmul.bf16.gmra.mxu0 %v1101
  %v7658 = vpop.f32.mrf.mxu0
  %v7659 = vadd.f32 %v7646, %v7658
  %v7660 = vpop.f32.mrf.mxu0
  %7661 = vdwg.mxu0
  %7662 = vmatpush.bf16.msra.mxu0 %v5077
  %7663 = vmatpush.bf16.msra.mxu0 %v5061
  %7664 = vmatpush.bf16.msra.mxu0 %v5045
  %7665 = vmatpush.bf16.msra.mxu0 %v5029
  %7666 = vmatpush.bf16.msra.mxu0 %v5013
  %7667 = vmatpush.bf16.msra.mxu0 %v4997
  %7668 = vmatpush.bf16.msra.mxu0 %v4981
  %7669 = vmatpush.bf16.msra.mxu0 %v4965
  %7670 = vmatmul.bf16.gmra.mxu0 %v1102
  %v7671 = vpop.f32.mrf.mxu0
  %v7672 = vadd.f32 %v7659, %v7671
  %v7673 = vpop.f32.mrf.mxu0
  %7674 = vdwg.mxu0
  %7675 = vmatpush.bf16.msra.mxu0 %v5205
  %7676 = vmatpush.bf16.msra.mxu0 %v5189
  %7677 = vmatpush.bf16.msra.mxu0 %v5173
  %7678 = vmatpush.bf16.msra.mxu0 %v5157
  %7679 = vmatpush.bf16.msra.mxu0 %v5141
  %7680 = vmatpush.bf16.msra.mxu0 %v5125
  %7681 = vmatpush.bf16.msra.mxu0 %v5109
  %7682 = vmatpush.bf16.msra.mxu0 %v5093
  %7683 = vmatmul.bf16.gmra.mxu0 %v1103
  %v7684 = vpop.f32.mrf.mxu0
  %v7685 = vadd.f32 %v7672, %v7684
  %v7686 = vpop.f32.mrf.mxu0
  %7687 = vdwg.mxu0
  %7688 = vmatpush.bf16.msra.mxu0 %v4310
  %7689 = vmatpush.bf16.msra.mxu0 %v4294
  %7690 = vmatpush.bf16.msra.mxu0 %v4278
  %7691 = vmatpush.bf16.msra.mxu0 %v4262
  %7692 = vmatpush.bf16.msra.mxu0 %v4246
  %7693 = vmatpush.bf16.msra.mxu0 %v4230
  %7694 = vmatpush.bf16.msra.mxu0 %v4214
  %7695 = vmatpush.bf16.msra.mxu0 %v4198
  %7696 = vmatmul.bf16.gmra.mxu0 %v1096
  %v7697 = vpop.f32.mrf.mxu0
  %v7698 = vadd.f32 %v1066, %v7697
  %v7699 = vpop.f32.mrf.mxu0
  %7700 = vdwg.mxu0
  %7701 = vmatpush.bf16.msra.mxu0 %v4438
  %7702 = vmatpush.bf16.msra.mxu0 %v4422
  %7703 = vmatpush.bf16.msra.mxu0 %v4406
  %7704 = vmatpush.bf16.msra.mxu0 %v4390
  %7705 = vmatpush.bf16.msra.mxu0 %v4374
  %7706 = vmatpush.bf16.msra.mxu0 %v4358
  %7707 = vmatpush.bf16.msra.mxu0 %v4342
  %7708 = vmatpush.bf16.msra.mxu0 %v4326
  %7709 = vmatmul.bf16.gmra.mxu0 %v1097
  %v7710 = vpop.f32.mrf.mxu0
  %v7711 = vadd.f32 %v7698, %v7710
  %v7712 = vpop.f32.mrf.mxu0
  %7713 = vdwg.mxu0
  %7714 = vmatpush.bf16.msra.mxu0 %v4566
  %7715 = vmatpush.bf16.msra.mxu0 %v4550
  %7716 = vmatpush.bf16.msra.mxu0 %v4534
  %7717 = vmatpush.bf16.msra.mxu0 %v4518
  %7718 = vmatpush.bf16.msra.mxu0 %v4502
  %7719 = vmatpush.bf16.msra.mxu0 %v4486
  %7720 = vmatpush.bf16.msra.mxu0 %v4470
  %7721 = vmatpush.bf16.msra.mxu0 %v4454
  %7722 = vmatmul.bf16.gmra.mxu0 %v1098
  %v7723 = vpop.f32.mrf.mxu0
  %v7724 = vadd.f32 %v7711, %v7723
  %v7725 = vpop.f32.mrf.mxu0
  %7726 = vdwg.mxu0
  %7727 = vmatpush.bf16.msra.mxu0 %v4694
  %7728 = vmatpush.bf16.msra.mxu0 %v4678
  %7729 = vmatpush.bf16.msra.mxu0 %v4662
  %7730 = vmatpush.bf16.msra.mxu0 %v4646
  %7731 = vmatpush.bf16.msra.mxu0 %v4630
  %7732 = vmatpush.bf16.msra.mxu0 %v4614
  %7733 = vmatpush.bf16.msra.mxu0 %v4598
  %7734 = vmatpush.bf16.msra.mxu0 %v4582
  %7735 = vmatmul.bf16.gmra.mxu0 %v1099
  %v7736 = vpop.f32.mrf.mxu0
  %v7737 = vadd.f32 %v7724, %v7736
  %v7738 = vpop.f32.mrf.mxu0
  %7739 = vdwg.mxu0
  %7740 = vmatpush.bf16.msra.mxu0 %v4822
  %7741 = vmatpush.bf16.msra.mxu0 %v4806
  %7742 = vmatpush.bf16.msra.mxu0 %v4790
  %7743 = vmatpush.bf16.msra.mxu0 %v4774
  %7744 = vmatpush.bf16.msra.mxu0 %v4758
  %7745 = vmatpush.bf16.msra.mxu0 %v4742
  %7746 = vmatpush.bf16.msra.mxu0 %v4726
  %7747 = vmatpush.bf16.msra.mxu0 %v4710
  %7748 = vmatmul.bf16.gmra.mxu0 %v1100
  %v7749 = vpop.f32.mrf.mxu0
  %v7750 = vadd.f32 %v7737, %v7749
  %v7751 = vpop.f32.mrf.mxu0
  %7752 = vdwg.mxu0
  %7753 = vmatpush.bf16.msra.mxu0 %v4950
  %7754 = vmatpush.bf16.msra.mxu0 %v4934
  %7755 = vmatpush.bf16.msra.mxu0 %v4918
  %7756 = vmatpush.bf16.msra.mxu0 %v4902
  %7757 = vmatpush.bf16.msra.mxu0 %v4886
  %7758 = vmatpush.bf16.msra.mxu0 %v4870
  %7759 = vmatpush.bf16.msra.mxu0 %v4854
  %7760 = vmatpush.bf16.msra.mxu0 %v4838
  %7761 = vmatmul.bf16.gmra.mxu0 %v1101
  %v7762 = vpop.f32.mrf.mxu0
  %v7763 = vadd.f32 %v7750, %v7762
  %v7764 = vpop.f32.mrf.mxu0
  %7765 = vdwg.mxu0
  %7766 = vmatpush.bf16.msra.mxu0 %v5078
  %7767 = vmatpush.bf16.msra.mxu0 %v5062
  %7768 = vmatpush.bf16.msra.mxu0 %v5046
  %7769 = vmatpush.bf16.msra.mxu0 %v5030
  %7770 = vmatpush.bf16.msra.mxu0 %v5014
  %7771 = vmatpush.bf16.msra.mxu0 %v4998
  %7772 = vmatpush.bf16.msra.mxu0 %v4982
  %7773 = vmatpush.bf16.msra.mxu0 %v4966
  %7774 = vmatmul.bf16.gmra.mxu0 %v1102
  %v7775 = vpop.f32.mrf.mxu0
  %v7776 = vadd.f32 %v7763, %v7775
  %v7777 = vpop.f32.mrf.mxu0
  %7778 = vdwg.mxu0
  %7779 = vmatpush.bf16.msra.mxu0 %v5206
  %7780 = vmatpush.bf16.msra.mxu0 %v5190
  %7781 = vmatpush.bf16.msra.mxu0 %v5174
  %7782 = vmatpush.bf16.msra.mxu0 %v5158
  %7783 = vmatpush.bf16.msra.mxu0 %v5142
  %7784 = vmatpush.bf16.msra.mxu0 %v5126
  %7785 = vmatpush.bf16.msra.mxu0 %v5110
  %7786 = vmatpush.bf16.msra.mxu0 %v5094
  %7787 = vmatmul.bf16.gmra.mxu0 %v1103
  %v7788 = vpop.f32.mrf.mxu0
  %v7789 = vadd.f32 %v7776, %v7788
  %v7790 = vpop.f32.mrf.mxu0
  %7791 = vdwg.mxu0
  %7792 = vmatpush.bf16.msra.mxu0 %v4311
  %7793 = vmatpush.bf16.msra.mxu0 %v4295
  %7794 = vmatpush.bf16.msra.mxu0 %v4279
  %7795 = vmatpush.bf16.msra.mxu0 %v4263
  %7796 = vmatpush.bf16.msra.mxu0 %v4247
  %7797 = vmatpush.bf16.msra.mxu0 %v4231
  %7798 = vmatpush.bf16.msra.mxu0 %v4215
  %7799 = vmatpush.bf16.msra.mxu0 %v4199
  %7800 = vmatmul.bf16.gmra.mxu0 %v1096
  %v7801 = vpop.f32.mrf.mxu0
  %v7802 = vadd.f32 %v1067, %v7801
  %v7803 = vpop.f32.mrf.mxu0
  %7804 = vdwg.mxu0
  %7805 = vmatpush.bf16.msra.mxu0 %v4439
  %7806 = vmatpush.bf16.msra.mxu0 %v4423
  %7807 = vmatpush.bf16.msra.mxu0 %v4407
  %7808 = vmatpush.bf16.msra.mxu0 %v4391
  %7809 = vmatpush.bf16.msra.mxu0 %v4375
  %7810 = vmatpush.bf16.msra.mxu0 %v4359
  %7811 = vmatpush.bf16.msra.mxu0 %v4343
  %7812 = vmatpush.bf16.msra.mxu0 %v4327
  %7813 = vmatmul.bf16.gmra.mxu0 %v1097
  %v7814 = vpop.f32.mrf.mxu0
  %v7815 = vadd.f32 %v7802, %v7814
  %v7816 = vpop.f32.mrf.mxu0
  %7817 = vdwg.mxu0
  %7818 = vmatpush.bf16.msra.mxu0 %v4567
  %7819 = vmatpush.bf16.msra.mxu0 %v4551
  %7820 = vmatpush.bf16.msra.mxu0 %v4535
  %7821 = vmatpush.bf16.msra.mxu0 %v4519
  %7822 = vmatpush.bf16.msra.mxu0 %v4503
  %7823 = vmatpush.bf16.msra.mxu0 %v4487
  %7824 = vmatpush.bf16.msra.mxu0 %v4471
  %7825 = vmatpush.bf16.msra.mxu0 %v4455
  %7826 = vmatmul.bf16.gmra.mxu0 %v1098
  %v7827 = vpop.f32.mrf.mxu0
  %v7828 = vadd.f32 %v7815, %v7827
  %v7829 = vpop.f32.mrf.mxu0
  %7830 = vdwg.mxu0
  %7831 = vmatpush.bf16.msra.mxu0 %v4695
  %7832 = vmatpush.bf16.msra.mxu0 %v4679
  %7833 = vmatpush.bf16.msra.mxu0 %v4663
  %7834 = vmatpush.bf16.msra.mxu0 %v4647
  %7835 = vmatpush.bf16.msra.mxu0 %v4631
  %7836 = vmatpush.bf16.msra.mxu0 %v4615
  %7837 = vmatpush.bf16.msra.mxu0 %v4599
  %7838 = vmatpush.bf16.msra.mxu0 %v4583
  %7839 = vmatmul.bf16.gmra.mxu0 %v1099
  %v7840 = vpop.f32.mrf.mxu0
  %v7841 = vadd.f32 %v7828, %v7840
  %v7842 = vpop.f32.mrf.mxu0
  %7843 = vdwg.mxu0
  %7844 = vmatpush.bf16.msra.mxu0 %v4823
  %7845 = vmatpush.bf16.msra.mxu0 %v4807
  %7846 = vmatpush.bf16.msra.mxu0 %v4791
  %7847 = vmatpush.bf16.msra.mxu0 %v4775
  %7848 = vmatpush.bf16.msra.mxu0 %v4759
  %7849 = vmatpush.bf16.msra.mxu0 %v4743
  %7850 = vmatpush.bf16.msra.mxu0 %v4727
  %7851 = vmatpush.bf16.msra.mxu0 %v4711
  %7852 = vmatmul.bf16.gmra.mxu0 %v1100
  %v7853 = vpop.f32.mrf.mxu0
  %v7854 = vadd.f32 %v7841, %v7853
  %v7855 = vpop.f32.mrf.mxu0
  %7856 = vdwg.mxu0
  %7857 = vmatpush.bf16.msra.mxu0 %v4951
  %7858 = vmatpush.bf16.msra.mxu0 %v4935
  %7859 = vmatpush.bf16.msra.mxu0 %v4919
  %7860 = vmatpush.bf16.msra.mxu0 %v4903
  %7861 = vmatpush.bf16.msra.mxu0 %v4887
  %7862 = vmatpush.bf16.msra.mxu0 %v4871
  %7863 = vmatpush.bf16.msra.mxu0 %v4855
  %7864 = vmatpush.bf16.msra.mxu0 %v4839
  %7865 = vmatmul.bf16.gmra.mxu0 %v1101
  %v7866 = vpop.f32.mrf.mxu0
  %v7867 = vadd.f32 %v7854, %v7866
  %v7868 = vpop.f32.mrf.mxu0
  %7869 = vdwg.mxu0
  %7870 = vmatpush.bf16.msra.mxu0 %v5079
  %7871 = vmatpush.bf16.msra.mxu0 %v5063
  %7872 = vmatpush.bf16.msra.mxu0 %v5047
  %7873 = vmatpush.bf16.msra.mxu0 %v5031
  %7874 = vmatpush.bf16.msra.mxu0 %v5015
  %7875 = vmatpush.bf16.msra.mxu0 %v4999
  %7876 = vmatpush.bf16.msra.mxu0 %v4983
  %7877 = vmatpush.bf16.msra.mxu0 %v4967
  %7878 = vmatmul.bf16.gmra.mxu0 %v1102
  %v7879 = vpop.f32.mrf.mxu0
  %v7880 = vadd.f32 %v7867, %v7879
  %v7881 = vpop.f32.mrf.mxu0
  %7882 = vdwg.mxu0
  %7883 = vmatpush.bf16.msra.mxu0 %v5207
  %7884 = vmatpush.bf16.msra.mxu0 %v5191
  %7885 = vmatpush.bf16.msra.mxu0 %v5175
  %7886 = vmatpush.bf16.msra.mxu0 %v5159
  %7887 = vmatpush.bf16.msra.mxu0 %v5143
  %7888 = vmatpush.bf16.msra.mxu0 %v5127
  %7889 = vmatpush.bf16.msra.mxu0 %v5111
  %7890 = vmatpush.bf16.msra.mxu0 %v5095
  %7891 = vmatmul.bf16.gmra.mxu0 %v1103
  %v7892 = vpop.f32.mrf.mxu0
  %v7893 = vadd.f32 %v7880, %v7892
  %v7894 = vpop.f32.mrf.mxu0
  %7895 = vdwg.mxu0
  %v7896 = vmax.f32 %v6333, 0.0
  %v7897 = vmax.f32 %v6437, 0.0
  %v7898 = vmax.f32 %v6541, 0.0
  %v7899 = vmax.f32 %v6645, 0.0
  %v7900 = vmax.f32 %v6749, 0.0
  %v7901 = vmax.f32 %v6853, 0.0
  %v7902 = vmax.f32 %v6957, 0.0
  %v7903 = vmax.f32 %v7061, 0.0
  %v7904 = vmax.f32 %v7165, 0.0
  %v7905 = vmax.f32 %v7269, 0.0
  %v7906 = vmax.f32 %v7373, 0.0
  %v7907 = vmax.f32 %v7477, 0.0
  %v7908 = vmax.f32 %v7581, 0.0
  %v7909 = vmax.f32 %v7685, 0.0
  %v7910 = vmax.f32 %v7789, 0.0
  %v7911 = vmax.f32 %v7893, 0.0
  %v7912 = vpack.c.bf16 %v7896, %v7896
  %v7913 = vpack.c.bf16 %v7897, %v7897
  %v7914 = vpack.c.bf16 %v7898, %v7898
  %v7915 = vpack.c.bf16 %v7899, %v7899
  %v7916 = vpack.c.bf16 %v7900, %v7900
  %v7917 = vpack.c.bf16 %v7901, %v7901
  %v7918 = vpack.c.bf16 %v7902, %v7902
  %v7919 = vpack.c.bf16 %v7903, %v7903
  %v7920 = vpack.c.bf16 %v7904, %v7904
  %v7921 = vpack.c.bf16 %v7905, %v7905
  %v7922 = vpack.c.bf16 %v7906, %v7906
  %v7923 = vpack.c.bf16 %v7907, %v7907
  %v7924 = vpack.c.bf16 %v7908, %v7908
  %v7925 = vpack.c.bf16 %v7909, %v7909
  %v7926 = vpack.c.bf16 %v7910, %v7910
  %v7927 = vpack.c.bf16 %v7911, %v7911
  %v7928 = vld [vmem:[%s3] sm:$0xf]
  %v7929 = vld [vmem:[%s3 + $0x4] sm:$0xf]
  %v7930 = vld [vmem:[%s3 + $0x8] sm:$0xf]
  %v7931 = vld [vmem:[%s3 + $0xc] sm:$0xf]
  %v7932 = vld [vmem:[%s3 + $0x10] sm:$0xf]
  %v7933 = vld [vmem:[%s3 + $0x14] sm:$0xf]
  %v7934 = vld [vmem:[%s3 + $0x18] sm:$0xf]
  %v7935 = vld [vmem:[%s3 + $0x1c] sm:$0xf]
  %v7936 = vld [vmem:[%s3 + $0x20] sm:$0xf]
  %v7937 = vld [vmem:[%s3 + $0x24] sm:$0xf]
  %v7938 = vld [vmem:[%s3 + $0x28] sm:$0xf]
  %v7939 = vld [vmem:[%s3 + $0x2c] sm:$0xf]
  %v7940 = vld [vmem:[%s3 + $0x30] sm:$0xf]
  %v7941 = vld [vmem:[%s3 + $0x34] sm:$0xf]
  %v7942 = vld [vmem:[%s3 + $0x38] sm:$0xf]
  %v7943 = vld [vmem:[%s3 + $0x3c] sm:$0xf]
  %v7944 = vld [vmem:[%s3 + $0x40] sm:$0xf]
  %v7945 = vld [vmem:[%s3 + $0x44] sm:$0xf]
  %v7946 = vld [vmem:[%s3 + $0x48] sm:$0xf]
  %v7947 = vld [vmem:[%s3 + $0x4c] sm:$0xf]
  %v7948 = vld [vmem:[%s3 + $0x50] sm:$0xf]
  %v7949 = vld [vmem:[%s3 + $0x54] sm:$0xf]
  %v7950 = vld [vmem:[%s3 + $0x58] sm:$0xf]
  %v7951 = vld [vmem:[%s3 + $0x5c] sm:$0xf]
  %v7952 = vld [vmem:[%s3 + $0x60] sm:$0xf]
  %v7953 = vld [vmem:[%s3 + $0x64] sm:$0xf]
  %v7954 = vld [vmem:[%s3 + $0x68] sm:$0xf]
  %v7955 = vld [vmem:[%s3 + $0x6c] sm:$0xf]
  %v7956 = vld [vmem:[%s3 + $0x70] sm:$0xf]
  %v7957 = vld [vmem:[%s3 + $0x74] sm:$0xf]
  %v7958 = vld [vmem:[%s3 + $0x78] sm:$0xf]
  %v7959 = vld [vmem:[%s3 + $0x7c] sm:$0xf]
  %v7960 = vld [vmem:[%s3 + $0x80] sm:$0xf]
  %v7961 = vld [vmem:[%s3 + $0x84] sm:$0xf]
  %v7962 = vld [vmem:[%s3 + $0x88] sm:$0xf]
  %v7963 = vld [vmem:[%s3 + $0x8c] sm:$0xf]
  %v7964 = vld [vmem:[%s3 + $0x90] sm:$0xf]
  %v7965 = vld [vmem:[%s3 + $0x94] sm:$0xf]
  %v7966 = vld [vmem:[%s3 + $0x98] sm:$0xf]
  %v7967 = vld [vmem:[%s3 + $0x9c] sm:$0xf]
  %v7968 = vld [vmem:[%s3 + $0xa0] sm:$0xf]
  %v7969 = vld [vmem:[%s3 + $0xa4] sm:$0xf]
  %v7970 = vld [vmem:[%s3 + $0xa8] sm:$0xf]
  %v7971 = vld [vmem:[%s3 + $0xac] sm:$0xf]
  %v7972 = vld [vmem:[%s3 + $0xb0] sm:$0xf]
  %v7973 = vld [vmem:[%s3 + $0xb4] sm:$0xf]
  %v7974 = vld [vmem:[%s3 + $0xb8] sm:$0xf]
  %v7975 = vld [vmem:[%s3 + $0xbc] sm:$0xf]
  %v7976 = vld [vmem:[%s3 + $0xc0] sm:$0xf]
  %v7977 = vld [vmem:[%s3 + $0xc4] sm:$0xf]
  %v7978 = vld [vmem:[%s3 + $0xc8] sm:$0xf]
  %v7979 = vld [vmem:[%s3 + $0xcc] sm:$0xf]
  %v7980 = vld [vmem:[%s3 + $0xd0] sm:$0xf]
  %v7981 = vld [vmem:[%s3 + $0xd4] sm:$0xf]
  %v7982 = vld [vmem:[%s3 + $0xd8] sm:$0xf]
  %v7983 = vld [vmem:[%s3 + $0xdc] sm:$0xf]
  %v7984 = vld [vmem:[%s3 + $0xe0] sm:$0xf]
  %v7985 = vld [vmem:[%s3 + $0xe4] sm:$0xf]
  %v7986 = vld [vmem:[%s3 + $0xe8] sm:$0xf]
  %v7987 = vld [vmem:[%s3 + $0xec] sm:$0xf]
  %v7988 = vld [vmem:[%s3 + $0xf0] sm:$0xf]
  %v7989 = vld [vmem:[%s3 + $0xf4] sm:$0xf]
  %v7990 = vld [vmem:[%s3 + $0xf8] sm:$0xf]
  %v7991 = vld [vmem:[%s3 + $0xfc] sm:$0xf]
  %v7992 = vld [vmem:[%s3 + $0x100] sm:$0xf]
  %v7993 = vld [vmem:[%s3 + $0x104] sm:$0xf]
  %v7994 = vld [vmem:[%s3 + $0x108] sm:$0xf]
  %v7995 = vld [vmem:[%s3 + $0x10c] sm:$0xf]
  %v7996 = vld [vmem:[%s3 + $0x110] sm:$0xf]
  %v7997 = vld [vmem:[%s3 + $0x114] sm:$0xf]
  %v7998 = vld [vmem:[%s3 + $0x118] sm:$0xf]
  %v7999 = vld [vmem:[%s3 + $0x11c] sm:$0xf]
  %v8000 = vld [vmem:[%s3 + $0x120] sm:$0xf]
  %v8001 = vld [vmem:[%s3 + $0x124] sm:$0xf]
  %v8002 = vld [vmem:[%s3 + $0x128] sm:$0xf]
  %v8003 = vld [vmem:[%s3 + $0x12c] sm:$0xf]
  %v8004 = vld [vmem:[%s3 + $0x130] sm:$0xf]
  %v8005 = vld [vmem:[%s3 + $0x134] sm:$0xf]
  %v8006 = vld [vmem:[%s3 + $0x138] sm:$0xf]
  %v8007 = vld [vmem:[%s3 + $0x13c] sm:$0xf]
  %v8008 = vld [vmem:[%s3 + $0x140] sm:$0xf]
  %v8009 = vld [vmem:[%s3 + $0x144] sm:$0xf]
  %v8010 = vld [vmem:[%s3 + $0x148] sm:$0xf]
  %v8011 = vld [vmem:[%s3 + $0x14c] sm:$0xf]
  %v8012 = vld [vmem:[%s3 + $0x150] sm:$0xf]
  %v8013 = vld [vmem:[%s3 + $0x154] sm:$0xf]
  %v8014 = vld [vmem:[%s3 + $0x158] sm:$0xf]
  %v8015 = vld [vmem:[%s3 + $0x15c] sm:$0xf]
  %v8016 = vld [vmem:[%s3 + $0x160] sm:$0xf]
  %v8017 = vld [vmem:[%s3 + $0x164] sm:$0xf]
  %v8018 = vld [vmem:[%s3 + $0x168] sm:$0xf]
  %v8019 = vld [vmem:[%s3 + $0x16c] sm:$0xf]
  %v8020 = vld [vmem:[%s3 + $0x170] sm:$0xf]
  %v8021 = vld [vmem:[%s3 + $0x174] sm:$0xf]
  %v8022 = vld [vmem:[%s3 + $0x178] sm:$0xf]
  %v8023 = vld [vmem:[%s3 + $0x17c] sm:$0xf]
  %v8024 = vld [vmem:[%s3 + $0x180] sm:$0xf]
  %v8025 = vld [vmem:[%s3 + $0x184] sm:$0xf]
  %v8026 = vld [vmem:[%s3 + $0x188] sm:$0xf]
  %v8027 = vld [vmem:[%s3 + $0x18c] sm:$0xf]
  %v8028 = vld [vmem:[%s3 + $0x190] sm:$0xf]
  %v8029 = vld [vmem:[%s3 + $0x194] sm:$0xf]
  %v8030 = vld [vmem:[%s3 + $0x198] sm:$0xf]
  %v8031 = vld [vmem:[%s3 + $0x19c] sm:$0xf]
  %v8032 = vld [vmem:[%s3 + $0x1a0] sm:$0xf]
  %v8033 = vld [vmem:[%s3 + $0x1a4] sm:$0xf]
  %v8034 = vld [vmem:[%s3 + $0x1a8] sm:$0xf]
  %v8035 = vld [vmem:[%s3 + $0x1ac] sm:$0xf]
  %v8036 = vld [vmem:[%s3 + $0x1b0] sm:$0xf]
  %v8037 = vld [vmem:[%s3 + $0x1b4] sm:$0xf]
  %v8038 = vld [vmem:[%s3 + $0x1b8] sm:$0xf]
  %v8039 = vld [vmem:[%s3 + $0x1bc] sm:$0xf]
  %v8040 = vld [vmem:[%s3 + $0x1c0] sm:$0xf]
  %v8041 = vld [vmem:[%s3 + $0x1c4] sm:$0xf]
  %v8042 = vld [vmem:[%s3 + $0x1c8] sm:$0xf]
  %v8043 = vld [vmem:[%s3 + $0x1cc] sm:$0xf]
  %v8044 = vld [vmem:[%s3 + $0x1d0] sm:$0xf]
  %v8045 = vld [vmem:[%s3 + $0x1d4] sm:$0xf]
  %v8046 = vld [vmem:[%s3 + $0x1d8] sm:$0xf]
  %v8047 = vld [vmem:[%s3 + $0x1dc] sm:$0xf]
  %v8048 = vld [vmem:[%s3 + $0x1e0] sm:$0xf]
  %v8049 = vld [vmem:[%s3 + $0x1e4] sm:$0xf]
  %v8050 = vld [vmem:[%s3 + $0x1e8] sm:$0xf]
  %v8051 = vld [vmem:[%s3 + $0x1ec] sm:$0xf]
  %v8052 = vld [vmem:[%s3 + $0x1f0] sm:$0xf]
  %v8053 = vld [vmem:[%s3 + $0x1f4] sm:$0xf]
  %v8054 = vld [vmem:[%s3 + $0x1f8] sm:$0xf]
  %v8055 = vld [vmem:[%s3 + $0x1fc] sm:$0xf]
  %v8056 = vld [vmem:[%s3 + $0x200] sm:$0xf]
  %v8057 = vld [vmem:[%s3 + $0x204] sm:$0xf]
  %v8058 = vld [vmem:[%s3 + $0x208] sm:$0xf]
  %v8059 = vld [vmem:[%s3 + $0x20c] sm:$0xf]
  %v8060 = vld [vmem:[%s3 + $0x210] sm:$0xf]
  %v8061 = vld [vmem:[%s3 + $0x214] sm:$0xf]
  %v8062 = vld [vmem:[%s3 + $0x218] sm:$0xf]
  %v8063 = vld [vmem:[%s3 + $0x21c] sm:$0xf]
  %v8064 = vld [vmem:[%s3 + $0x220] sm:$0xf]
  %v8065 = vld [vmem:[%s3 + $0x224] sm:$0xf]
  %v8066 = vld [vmem:[%s3 + $0x228] sm:$0xf]
  %v8067 = vld [vmem:[%s3 + $0x22c] sm:$0xf]
  %v8068 = vld [vmem:[%s3 + $0x230] sm:$0xf]
  %v8069 = vld [vmem:[%s3 + $0x234] sm:$0xf]
  %v8070 = vld [vmem:[%s3 + $0x238] sm:$0xf]
  %v8071 = vld [vmem:[%s3 + $0x23c] sm:$0xf]
  %v8072 = vld [vmem:[%s3 + $0x240] sm:$0xf]
  %v8073 = vld [vmem:[%s3 + $0x244] sm:$0xf]
  %v8074 = vld [vmem:[%s3 + $0x248] sm:$0xf]
  %v8075 = vld [vmem:[%s3 + $0x24c] sm:$0xf]
  %v8076 = vld [vmem:[%s3 + $0x250] sm:$0xf]
  %v8077 = vld [vmem:[%s3 + $0x254] sm:$0xf]
  %v8078 = vld [vmem:[%s3 + $0x258] sm:$0xf]
  %v8079 = vld [vmem:[%s3 + $0x25c] sm:$0xf]
  %v8080 = vld [vmem:[%s3 + $0x260] sm:$0xf]
  %v8081 = vld [vmem:[%s3 + $0x264] sm:$0xf]
  %v8082 = vld [vmem:[%s3 + $0x268] sm:$0xf]
  %v8083 = vld [vmem:[%s3 + $0x26c] sm:$0xf]
  %v8084 = vld [vmem:[%s3 + $0x270] sm:$0xf]
  %v8085 = vld [vmem:[%s3 + $0x274] sm:$0xf]
  %v8086 = vld [vmem:[%s3 + $0x278] sm:$0xf]
  %v8087 = vld [vmem:[%s3 + $0x27c] sm:$0xf]
  %v8088 = vld [vmem:[%s3 + $0x280] sm:$0xf]
  %v8089 = vld [vmem:[%s3 + $0x284] sm:$0xf]
  %v8090 = vld [vmem:[%s3 + $0x288] sm:$0xf]
  %v8091 = vld [vmem:[%s3 + $0x28c] sm:$0xf]
  %v8092 = vld [vmem:[%s3 + $0x290] sm:$0xf]
  %v8093 = vld [vmem:[%s3 + $0x294] sm:$0xf]
  %v8094 = vld [vmem:[%s3 + $0x298] sm:$0xf]
  %v8095 = vld [vmem:[%s3 + $0x29c] sm:$0xf]
  %v8096 = vld [vmem:[%s3 + $0x2a0] sm:$0xf]
  %v8097 = vld [vmem:[%s3 + $0x2a4] sm:$0xf]
  %v8098 = vld [vmem:[%s3 + $0x2a8] sm:$0xf]
  %v8099 = vld [vmem:[%s3 + $0x2ac] sm:$0xf]
  %v8100 = vld [vmem:[%s3 + $0x2b0] sm:$0xf]
  %v8101 = vld [vmem:[%s3 + $0x2b4] sm:$0xf]
  %v8102 = vld [vmem:[%s3 + $0x2b8] sm:$0xf]
  %v8103 = vld [vmem:[%s3 + $0x2bc] sm:$0xf]
  %v8104 = vld [vmem:[%s3 + $0x2c0] sm:$0xf]
  %v8105 = vld [vmem:[%s3 + $0x2c4] sm:$0xf]
  %v8106 = vld [vmem:[%s3 + $0x2c8] sm:$0xf]
  %v8107 = vld [vmem:[%s3 + $0x2cc] sm:$0xf]
  %v8108 = vld [vmem:[%s3 + $0x2d0] sm:$0xf]
  %v8109 = vld [vmem:[%s3 + $0x2d4] sm:$0xf]
  %v8110 = vld [vmem:[%s3 + $0x2d8] sm:$0xf]
  %v8111 = vld [vmem:[%s3 + $0x2dc] sm:$0xf]
  %v8112 = vld [vmem:[%s3 + $0x2e0] sm:$0xf]
  %v8113 = vld [vmem:[%s3 + $0x2e4] sm:$0xf]
  %v8114 = vld [vmem:[%s3 + $0x2e8] sm:$0xf]
  %v8115 = vld [vmem:[%s3 + $0x2ec] sm:$0xf]
  %v8116 = vld [vmem:[%s3 + $0x2f0] sm:$0xf]
  %v8117 = vld [vmem:[%s3 + $0x2f4] sm:$0xf]
  %v8118 = vld [vmem:[%s3 + $0x2f8] sm:$0xf]
  %v8119 = vld [vmem:[%s3 + $0x2fc] sm:$0xf]
  %v8120 = vld [vmem:[%s3 + $0x300] sm:$0xf]
  %v8121 = vld [vmem:[%s3 + $0x304] sm:$0xf]
  %v8122 = vld [vmem:[%s3 + $0x308] sm:$0xf]
  %v8123 = vld [vmem:[%s3 + $0x30c] sm:$0xf]
  %v8124 = vld [vmem:[%s3 + $0x310] sm:$0xf]
  %v8125 = vld [vmem:[%s3 + $0x314] sm:$0xf]
  %v8126 = vld [vmem:[%s3 + $0x318] sm:$0xf]
  %v8127 = vld [vmem:[%s3 + $0x31c] sm:$0xf]
  %v8128 = vld [vmem:[%s3 + $0x320] sm:$0xf]
  %v8129 = vld [vmem:[%s3 + $0x324] sm:$0xf]
  %v8130 = vld [vmem:[%s3 + $0x328] sm:$0xf]
  %v8131 = vld [vmem:[%s3 + $0x32c] sm:$0xf]
  %v8132 = vld [vmem:[%s3 + $0x330] sm:$0xf]
  %v8133 = vld [vmem:[%s3 + $0x334] sm:$0xf]
  %v8134 = vld [vmem:[%s3 + $0x338] sm:$0xf]
  %v8135 = vld [vmem:[%s3 + $0x33c] sm:$0xf]
  %v8136 = vld [vmem:[%s3 + $0x340] sm:$0xf]
  %v8137 = vld [vmem:[%s3 + $0x344] sm:$0xf]
  %v8138 = vld [vmem:[%s3 + $0x348] sm:$0xf]
  %v8139 = vld [vmem:[%s3 + $0x34c] sm:$0xf]
  %v8140 = vld [vmem:[%s3 + $0x350] sm:$0xf]
  %v8141 = vld [vmem:[%s3 + $0x354] sm:$0xf]
  %v8142 = vld [vmem:[%s3 + $0x358] sm:$0xf]
  %v8143 = vld [vmem:[%s3 + $0x35c] sm:$0xf]
  %v8144 = vld [vmem:[%s3 + $0x360] sm:$0xf]
  %v8145 = vld [vmem:[%s3 + $0x364] sm:$0xf]
  %v8146 = vld [vmem:[%s3 + $0x368] sm:$0xf]
  %v8147 = vld [vmem:[%s3 + $0x36c] sm:$0xf]
  %v8148 = vld [vmem:[%s3 + $0x370] sm:$0xf]
  %v8149 = vld [vmem:[%s3 + $0x374] sm:$0xf]
  %v8150 = vld [vmem:[%s3 + $0x378] sm:$0xf]
  %v8151 = vld [vmem:[%s3 + $0x37c] sm:$0xf]
  %v8152 = vld [vmem:[%s3 + $0x380] sm:$0xf]
  %v8153 = vld [vmem:[%s3 + $0x384] sm:$0xf]
  %v8154 = vld [vmem:[%s3 + $0x388] sm:$0xf]
  %v8155 = vld [vmem:[%s3 + $0x38c] sm:$0xf]
  %v8156 = vld [vmem:[%s3 + $0x390] sm:$0xf]
  %v8157 = vld [vmem:[%s3 + $0x394] sm:$0xf]
  %v8158 = vld [vmem:[%s3 + $0x398] sm:$0xf]
  %v8159 = vld [vmem:[%s3 + $0x39c] sm:$0xf]
  %v8160 = vld [vmem:[%s3 + $0x3a0] sm:$0xf]
  %v8161 = vld [vmem:[%s3 + $0x3a4] sm:$0xf]
  %v8162 = vld [vmem:[%s3 + $0x3a8] sm:$0xf]
  %v8163 = vld [vmem:[%s3 + $0x3ac] sm:$0xf]
  %v8164 = vld [vmem:[%s3 + $0x3b0] sm:$0xf]
  %v8165 = vld [vmem:[%s3 + $0x3b4] sm:$0xf]
  %v8166 = vld [vmem:[%s3 + $0x3b8] sm:$0xf]
  %v8167 = vld [vmem:[%s3 + $0x3bc] sm:$0xf]
  %v8168 = vld [vmem:[%s3 + $0x3c0] sm:$0xf]
  %v8169 = vld [vmem:[%s3 + $0x3c4] sm:$0xf]
  %v8170 = vld [vmem:[%s3 + $0x3c8] sm:$0xf]
  %v8171 = vld [vmem:[%s3 + $0x3cc] sm:$0xf]
  %v8172 = vld [vmem:[%s3 + $0x3d0] sm:$0xf]
  %v8173 = vld [vmem:[%s3 + $0x3d4] sm:$0xf]
  %v8174 = vld [vmem:[%s3 + $0x3d8] sm:$0xf]
  %v8175 = vld [vmem:[%s3 + $0x3dc] sm:$0xf]
  %v8176 = vld [vmem:[%s3 + $0x3e0] sm:$0xf]
  %v8177 = vld [vmem:[%s3 + $0x3e4] sm:$0xf]
  %v8178 = vld [vmem:[%s3 + $0x3e8] sm:$0xf]
  %v8179 = vld [vmem:[%s3 + $0x3ec] sm:$0xf]
  %v8180 = vld [vmem:[%s3 + $0x3f0] sm:$0xf]
  %v8181 = vld [vmem:[%s3 + $0x3f4] sm:$0xf]
  %v8182 = vld [vmem:[%s3 + $0x3f8] sm:$0xf]
  %v8183 = vld [vmem:[%s3 + $0x3fc] sm:$0xf]
  %v8184 = vld [vmem:[%s4] sm:$0x1]
  %v8186 = vperm.slane %v8184, 0
  %v8444 = vunpack.c.l.b16 %v7928
  %v8445 = vunpack.c.l.b16 %v7929
  %v8446 = vunpack.c.l.b16 %v7930
  %v8447 = vunpack.c.l.b16 %v7931
  %v8448 = vunpack.c.l.b16 %v7932
  %v8449 = vunpack.c.l.b16 %v7933
  %v8450 = vunpack.c.l.b16 %v7934
  %v8451 = vunpack.c.l.b16 %v7935
  %v8452 = vunpack.c.l.b16 %v7936
  %v8453 = vunpack.c.l.b16 %v7937
  %v8454 = vunpack.c.l.b16 %v7938
  %v8455 = vunpack.c.l.b16 %v7939
  %v8456 = vunpack.c.l.b16 %v7940
  %v8457 = vunpack.c.l.b16 %v7941
  %v8458 = vunpack.c.l.b16 %v7942
  %v8459 = vunpack.c.l.b16 %v7943
  %v8460 = vunpack.c.l.b16 %v7944
  %v8461 = vunpack.c.l.b16 %v7945
  %v8462 = vunpack.c.l.b16 %v7946
  %v8463 = vunpack.c.l.b16 %v7947
  %v8464 = vunpack.c.l.b16 %v7948
  %v8465 = vunpack.c.l.b16 %v7949
  %v8466 = vunpack.c.l.b16 %v7950
  %v8467 = vunpack.c.l.b16 %v7951
  %v8468 = vunpack.c.l.b16 %v7952
  %v8469 = vunpack.c.l.b16 %v7953
  %v8470 = vunpack.c.l.b16 %v7954
  %v8471 = vunpack.c.l.b16 %v7955
  %v8472 = vunpack.c.l.b16 %v7956
  %v8473 = vunpack.c.l.b16 %v7957
  %v8474 = vunpack.c.l.b16 %v7958
  %v8475 = vunpack.c.l.b16 %v7959
  %v8476 = vunpack.c.l.b16 %v7960
  %v8477 = vunpack.c.l.b16 %v7961
  %v8478 = vunpack.c.l.b16 %v7962
  %v8479 = vunpack.c.l.b16 %v7963
  %v8480 = vunpack.c.l.b16 %v7964
  %v8481 = vunpack.c.l.b16 %v7965
  %v8482 = vunpack.c.l.b16 %v7966
  %v8483 = vunpack.c.l.b16 %v7967
  %v8484 = vunpack.c.l.b16 %v7968
  %v8485 = vunpack.c.l.b16 %v7969
  %v8486 = vunpack.c.l.b16 %v7970
  %v8487 = vunpack.c.l.b16 %v7971
  %v8488 = vunpack.c.l.b16 %v7972
  %v8489 = vunpack.c.l.b16 %v7973
  %v8490 = vunpack.c.l.b16 %v7974
  %v8491 = vunpack.c.l.b16 %v7975
  %v8492 = vunpack.c.l.b16 %v7976
  %v8493 = vunpack.c.l.b16 %v7977
  %v8494 = vunpack.c.l.b16 %v7978
  %v8495 = vunpack.c.l.b16 %v7979
  %v8496 = vunpack.c.l.b16 %v7980
  %v8497 = vunpack.c.l.b16 %v7981
  %v8498 = vunpack.c.l.b16 %v7982
  %v8499 = vunpack.c.l.b16 %v7983
  %v8500 = vunpack.c.l.b16 %v7984
  %v8501 = vunpack.c.l.b16 %v7985
  %v8502 = vunpack.c.l.b16 %v7986
  %v8503 = vunpack.c.l.b16 %v7987
  %v8504 = vunpack.c.l.b16 %v7988
  %v8505 = vunpack.c.l.b16 %v7989
  %v8506 = vunpack.c.l.b16 %v7990
  %v8507 = vunpack.c.l.b16 %v7991
  %v8508 = vunpack.c.l.b16 %v7992
  %v8509 = vunpack.c.l.b16 %v7993
  %v8510 = vunpack.c.l.b16 %v7994
  %v8511 = vunpack.c.l.b16 %v7995
  %v8512 = vunpack.c.l.b16 %v7996
  %v8513 = vunpack.c.l.b16 %v7997
  %v8514 = vunpack.c.l.b16 %v7998
  %v8515 = vunpack.c.l.b16 %v7999
  %v8516 = vunpack.c.l.b16 %v8000
  %v8517 = vunpack.c.l.b16 %v8001
  %v8518 = vunpack.c.l.b16 %v8002
  %v8519 = vunpack.c.l.b16 %v8003
  %v8520 = vunpack.c.l.b16 %v8004
  %v8521 = vunpack.c.l.b16 %v8005
  %v8522 = vunpack.c.l.b16 %v8006
  %v8523 = vunpack.c.l.b16 %v8007
  %v8524 = vunpack.c.l.b16 %v8008
  %v8525 = vunpack.c.l.b16 %v8009
  %v8526 = vunpack.c.l.b16 %v8010
  %v8527 = vunpack.c.l.b16 %v8011
  %v8528 = vunpack.c.l.b16 %v8012
  %v8529 = vunpack.c.l.b16 %v8013
  %v8530 = vunpack.c.l.b16 %v8014
  %v8531 = vunpack.c.l.b16 %v8015
  %v8532 = vunpack.c.l.b16 %v8016
  %v8533 = vunpack.c.l.b16 %v8017
  %v8534 = vunpack.c.l.b16 %v8018
  %v8535 = vunpack.c.l.b16 %v8019
  %v8536 = vunpack.c.l.b16 %v8020
  %v8537 = vunpack.c.l.b16 %v8021
  %v8538 = vunpack.c.l.b16 %v8022
  %v8539 = vunpack.c.l.b16 %v8023
  %v8540 = vunpack.c.l.b16 %v8024
  %v8541 = vunpack.c.l.b16 %v8025
  %v8542 = vunpack.c.l.b16 %v8026
  %v8543 = vunpack.c.l.b16 %v8027
  %v8544 = vunpack.c.l.b16 %v8028
  %v8545 = vunpack.c.l.b16 %v8029
  %v8546 = vunpack.c.l.b16 %v8030
  %v8547 = vunpack.c.l.b16 %v8031
  %v8548 = vunpack.c.l.b16 %v8032
  %v8549 = vunpack.c.l.b16 %v8033
  %v8550 = vunpack.c.l.b16 %v8034
  %v8551 = vunpack.c.l.b16 %v8035
  %v8552 = vunpack.c.l.b16 %v8036
  %v8553 = vunpack.c.l.b16 %v8037
  %v8554 = vunpack.c.l.b16 %v8038
  %v8555 = vunpack.c.l.b16 %v8039
  %v8556 = vunpack.c.l.b16 %v8040
  %v8557 = vunpack.c.l.b16 %v8041
  %v8558 = vunpack.c.l.b16 %v8042
  %v8559 = vunpack.c.l.b16 %v8043
  %v8560 = vunpack.c.l.b16 %v8044
  %v8561 = vunpack.c.l.b16 %v8045
  %v8562 = vunpack.c.l.b16 %v8046
  %v8563 = vunpack.c.l.b16 %v8047
  %v8564 = vunpack.c.l.b16 %v8048
  %v8565 = vunpack.c.l.b16 %v8049
  %v8566 = vunpack.c.l.b16 %v8050
  %v8567 = vunpack.c.l.b16 %v8051
  %v8568 = vunpack.c.l.b16 %v8052
  %v8569 = vunpack.c.l.b16 %v8053
  %v8570 = vunpack.c.l.b16 %v8054
  %v8571 = vunpack.c.l.b16 %v8055
  %v8572 = vunpack.c.l.b16 %v8056
  %v8573 = vunpack.c.l.b16 %v8057
  %v8574 = vunpack.c.l.b16 %v8058
  %v8575 = vunpack.c.l.b16 %v8059
  %v8576 = vunpack.c.l.b16 %v8060
  %v8577 = vunpack.c.l.b16 %v8061
  %v8578 = vunpack.c.l.b16 %v8062
  %v8579 = vunpack.c.l.b16 %v8063
  %v8580 = vunpack.c.l.b16 %v8064
  %v8581 = vunpack.c.l.b16 %v8065
  %v8582 = vunpack.c.l.b16 %v8066
  %v8583 = vunpack.c.l.b16 %v8067
  %v8584 = vunpack.c.l.b16 %v8068
  %v8585 = vunpack.c.l.b16 %v8069
  %v8586 = vunpack.c.l.b16 %v8070
  %v8587 = vunpack.c.l.b16 %v8071
  %v8588 = vunpack.c.l.b16 %v8072
  %v8589 = vunpack.c.l.b16 %v8073
  %v8590 = vunpack.c.l.b16 %v8074
  %v8591 = vunpack.c.l.b16 %v8075
  %v8592 = vunpack.c.l.b16 %v8076
  %v8593 = vunpack.c.l.b16 %v8077
  %v8594 = vunpack.c.l.b16 %v8078
  %v8595 = vunpack.c.l.b16 %v8079
  %v8596 = vunpack.c.l.b16 %v8080
  %v8597 = vunpack.c.l.b16 %v8081
  %v8598 = vunpack.c.l.b16 %v8082
  %v8599 = vunpack.c.l.b16 %v8083
  %v8600 = vunpack.c.l.b16 %v8084
  %v8601 = vunpack.c.l.b16 %v8085
  %v8602 = vunpack.c.l.b16 %v8086
  %v8603 = vunpack.c.l.b16 %v8087
  %v8604 = vunpack.c.l.b16 %v8088
  %v8605 = vunpack.c.l.b16 %v8089
  %v8606 = vunpack.c.l.b16 %v8090
  %v8607 = vunpack.c.l.b16 %v8091
  %v8608 = vunpack.c.l.b16 %v8092
  %v8609 = vunpack.c.l.b16 %v8093
  %v8610 = vunpack.c.l.b16 %v8094
  %v8611 = vunpack.c.l.b16 %v8095
  %v8612 = vunpack.c.l.b16 %v8096
  %v8613 = vunpack.c.l.b16 %v8097
  %v8614 = vunpack.c.l.b16 %v8098
  %v8615 = vunpack.c.l.b16 %v8099
  %v8616 = vunpack.c.l.b16 %v8100
  %v8617 = vunpack.c.l.b16 %v8101
  %v8618 = vunpack.c.l.b16 %v8102
  %v8619 = vunpack.c.l.b16 %v8103
  %v8620 = vunpack.c.l.b16 %v8104
  %v8621 = vunpack.c.l.b16 %v8105
  %v8622 = vunpack.c.l.b16 %v8106
  %v8623 = vunpack.c.l.b16 %v8107
  %v8624 = vunpack.c.l.b16 %v8108
  %v8625 = vunpack.c.l.b16 %v8109
  %v8626 = vunpack.c.l.b16 %v8110
  %v8627 = vunpack.c.l.b16 %v8111
  %v8628 = vunpack.c.l.b16 %v8112
  %v8629 = vunpack.c.l.b16 %v8113
  %v8630 = vunpack.c.l.b16 %v8114
  %v8631 = vunpack.c.l.b16 %v8115
  %v8632 = vunpack.c.l.b16 %v8116
  %v8633 = vunpack.c.l.b16 %v8117
  %v8634 = vunpack.c.l.b16 %v8118
  %v8635 = vunpack.c.l.b16 %v8119
  %v8636 = vunpack.c.l.b16 %v8120
  %v8637 = vunpack.c.l.b16 %v8121
  %v8638 = vunpack.c.l.b16 %v8122
  %v8639 = vunpack.c.l.b16 %v8123
  %v8640 = vunpack.c.l.b16 %v8124
  %v8641 = vunpack.c.l.b16 %v8125
  %v8642 = vunpack.c.l.b16 %v8126
  %v8643 = vunpack.c.l.b16 %v8127
  %v8644 = vunpack.c.l.b16 %v8128
  %v8645 = vunpack.c.l.b16 %v8129
  %v8646 = vunpack.c.l.b16 %v8130
  %v8647 = vunpack.c.l.b16 %v8131
  %v8648 = vunpack.c.l.b16 %v8132
  %v8649 = vunpack.c.l.b16 %v8133
  %v8650 = vunpack.c.l.b16 %v8134
  %v8651 = vunpack.c.l.b16 %v8135
  %v8652 = vunpack.c.l.b16 %v8136
  %v8653 = vunpack.c.l.b16 %v8137
  %v8654 = vunpack.c.l.b16 %v8138
  %v8655 = vunpack.c.l.b16 %v8139
  %v8656 = vunpack.c.l.b16 %v8140
  %v8657 = vunpack.c.l.b16 %v8141
  %v8658 = vunpack.c.l.b16 %v8142
  %v8659 = vunpack.c.l.b16 %v8143
  %v8660 = vunpack.c.l.b16 %v8144
  %v8661 = vunpack.c.l.b16 %v8145
  %v8662 = vunpack.c.l.b16 %v8146
  %v8663 = vunpack.c.l.b16 %v8147
  %v8664 = vunpack.c.l.b16 %v8148
  %v8665 = vunpack.c.l.b16 %v8149
  %v8666 = vunpack.c.l.b16 %v8150
  %v8667 = vunpack.c.l.b16 %v8151
  %v8668 = vunpack.c.l.b16 %v8152
  %v8669 = vunpack.c.l.b16 %v8153
  %v8670 = vunpack.c.l.b16 %v8154
  %v8671 = vunpack.c.l.b16 %v8155
  %v8672 = vunpack.c.l.b16 %v8156
  %v8673 = vunpack.c.l.b16 %v8157
  %v8674 = vunpack.c.l.b16 %v8158
  %v8675 = vunpack.c.l.b16 %v8159
  %v8676 = vunpack.c.l.b16 %v8160
  %v8677 = vunpack.c.l.b16 %v8161
  %v8678 = vunpack.c.l.b16 %v8162
  %v8679 = vunpack.c.l.b16 %v8163
  %v8680 = vunpack.c.l.b16 %v8164
  %v8681 = vunpack.c.l.b16 %v8165
  %v8682 = vunpack.c.l.b16 %v8166
  %v8683 = vunpack.c.l.b16 %v8167
  %v8684 = vunpack.c.l.b16 %v8168
  %v8685 = vunpack.c.l.b16 %v8169
  %v8686 = vunpack.c.l.b16 %v8170
  %v8687 = vunpack.c.l.b16 %v8171
  %v8688 = vunpack.c.l.b16 %v8172
  %v8689 = vunpack.c.l.b16 %v8173
  %v8690 = vunpack.c.l.b16 %v8174
  %v8691 = vunpack.c.l.b16 %v8175
  %v8692 = vunpack.c.l.b16 %v8176
  %v8693 = vunpack.c.l.b16 %v8177
  %v8694 = vunpack.c.l.b16 %v8178
  %v8695 = vunpack.c.l.b16 %v8179
  %v8696 = vunpack.c.l.b16 %v8180
  %v8697 = vunpack.c.l.b16 %v8181
  %v8698 = vunpack.c.l.b16 %v8182
  %v8699 = vunpack.c.l.b16 %v8183
  %v8700 = vpack.c.b16 %v8445, %v8444
  %v8701 = vpack.c.b16 %v8447, %v8446
  %v8702 = vpack.c.b16 %v8449, %v8448
  %v8703 = vpack.c.b16 %v8451, %v8450
  %v8704 = vpack.c.b16 %v8453, %v8452
  %v8705 = vpack.c.b16 %v8455, %v8454
  %v8706 = vpack.c.b16 %v8457, %v8456
  %v8707 = vpack.c.b16 %v8459, %v8458
  %v8708 = vpack.c.b16 %v8461, %v8460
  %v8709 = vpack.c.b16 %v8463, %v8462
  %v8710 = vpack.c.b16 %v8465, %v8464
  %v8711 = vpack.c.b16 %v8467, %v8466
  %v8712 = vpack.c.b16 %v8469, %v8468
  %v8713 = vpack.c.b16 %v8471, %v8470
  %v8714 = vpack.c.b16 %v8473, %v8472
  %v8715 = vpack.c.b16 %v8475, %v8474
  %v8716 = vpack.c.b16 %v8477, %v8476
  %v8717 = vpack.c.b16 %v8479, %v8478
  %v8718 = vpack.c.b16 %v8481, %v8480
  %v8719 = vpack.c.b16 %v8483, %v8482
  %v8720 = vpack.c.b16 %v8485, %v8484
  %v8721 = vpack.c.b16 %v8487, %v8486
  %v8722 = vpack.c.b16 %v8489, %v8488
  %v8723 = vpack.c.b16 %v8491, %v8490
  %v8724 = vpack.c.b16 %v8493, %v8492
  %v8725 = vpack.c.b16 %v8495, %v8494
  %v8726 = vpack.c.b16 %v8497, %v8496
  %v8727 = vpack.c.b16 %v8499, %v8498
  %v8728 = vpack.c.b16 %v8501, %v8500
  %v8729 = vpack.c.b16 %v8503, %v8502
  %v8730 = vpack.c.b16 %v8505, %v8504
  %v8731 = vpack.c.b16 %v8507, %v8506
  %v8732 = vpack.c.b16 %v8509, %v8508
  %v8733 = vpack.c.b16 %v8511, %v8510
  %v8734 = vpack.c.b16 %v8513, %v8512
  %v8735 = vpack.c.b16 %v8515, %v8514
  %v8736 = vpack.c.b16 %v8517, %v8516
  %v8737 = vpack.c.b16 %v8519, %v8518
  %v8738 = vpack.c.b16 %v8521, %v8520
  %v8739 = vpack.c.b16 %v8523, %v8522
  %v8740 = vpack.c.b16 %v8525, %v8524
  %v8741 = vpack.c.b16 %v8527, %v8526
  %v8742 = vpack.c.b16 %v8529, %v8528
  %v8743 = vpack.c.b16 %v8531, %v8530
  %v8744 = vpack.c.b16 %v8533, %v8532
  %v8745 = vpack.c.b16 %v8535, %v8534
  %v8746 = vpack.c.b16 %v8537, %v8536
  %v8747 = vpack.c.b16 %v8539, %v8538
  %v8748 = vpack.c.b16 %v8541, %v8540
  %v8749 = vpack.c.b16 %v8543, %v8542
  %v8750 = vpack.c.b16 %v8545, %v8544
  %v8751 = vpack.c.b16 %v8547, %v8546
  %v8752 = vpack.c.b16 %v8549, %v8548
  %v8753 = vpack.c.b16 %v8551, %v8550
  %v8754 = vpack.c.b16 %v8553, %v8552
  %v8755 = vpack.c.b16 %v8555, %v8554
  %v8756 = vpack.c.b16 %v8557, %v8556
  %v8757 = vpack.c.b16 %v8559, %v8558
  %v8758 = vpack.c.b16 %v8561, %v8560
  %v8759 = vpack.c.b16 %v8563, %v8562
  %v8760 = vpack.c.b16 %v8565, %v8564
  %v8761 = vpack.c.b16 %v8567, %v8566
  %v8762 = vpack.c.b16 %v8569, %v8568
  %v8763 = vpack.c.b16 %v8571, %v8570
  %v8764 = vpack.c.b16 %v8573, %v8572
  %v8765 = vpack.c.b16 %v8575, %v8574
  %v8766 = vpack.c.b16 %v8577, %v8576
  %v8767 = vpack.c.b16 %v8579, %v8578
  %v8768 = vpack.c.b16 %v8581, %v8580
  %v8769 = vpack.c.b16 %v8583, %v8582
  %v8770 = vpack.c.b16 %v8585, %v8584
  %v8771 = vpack.c.b16 %v8587, %v8586
  %v8772 = vpack.c.b16 %v8589, %v8588
  %v8773 = vpack.c.b16 %v8591, %v8590
  %v8774 = vpack.c.b16 %v8593, %v8592
  %v8775 = vpack.c.b16 %v8595, %v8594
  %v8776 = vpack.c.b16 %v8597, %v8596
  %v8777 = vpack.c.b16 %v8599, %v8598
  %v8778 = vpack.c.b16 %v8601, %v8600
  %v8779 = vpack.c.b16 %v8603, %v8602
  %v8780 = vpack.c.b16 %v8605, %v8604
  %v8781 = vpack.c.b16 %v8607, %v8606
  %v8782 = vpack.c.b16 %v8609, %v8608
  %v8783 = vpack.c.b16 %v8611, %v8610
  %v8784 = vpack.c.b16 %v8613, %v8612
  %v8785 = vpack.c.b16 %v8615, %v8614
  %v8786 = vpack.c.b16 %v8617, %v8616
  %v8787 = vpack.c.b16 %v8619, %v8618
  %v8788 = vpack.c.b16 %v8621, %v8620
  %v8789 = vpack.c.b16 %v8623, %v8622
  %v8790 = vpack.c.b16 %v8625, %v8624
  %v8791 = vpack.c.b16 %v8627, %v8626
  %v8792 = vpack.c.b16 %v8629, %v8628
  %v8793 = vpack.c.b16 %v8631, %v8630
  %v8794 = vpack.c.b16 %v8633, %v8632
  %v8795 = vpack.c.b16 %v8635, %v8634
  %v8796 = vpack.c.b16 %v8637, %v8636
  %v8797 = vpack.c.b16 %v8639, %v8638
  %v8798 = vpack.c.b16 %v8641, %v8640
  %v8799 = vpack.c.b16 %v8643, %v8642
  %v8800 = vpack.c.b16 %v8645, %v8644
  %v8801 = vpack.c.b16 %v8647, %v8646
  %v8802 = vpack.c.b16 %v8649, %v8648
  %v8803 = vpack.c.b16 %v8651, %v8650
  %v8804 = vpack.c.b16 %v8653, %v8652
  %v8805 = vpack.c.b16 %v8655, %v8654
  %v8806 = vpack.c.b16 %v8657, %v8656
  %v8807 = vpack.c.b16 %v8659, %v8658
  %v8808 = vpack.c.b16 %v8661, %v8660
  %v8809 = vpack.c.b16 %v8663, %v8662
  %v8810 = vpack.c.b16 %v8665, %v8664
  %v8811 = vpack.c.b16 %v8667, %v8666
  %v8812 = vpack.c.b16 %v8669, %v8668
  %v8813 = vpack.c.b16 %v8671, %v8670
  %v8814 = vpack.c.b16 %v8673, %v8672
  %v8815 = vpack.c.b16 %v8675, %v8674
  %v8816 = vpack.c.b16 %v8677, %v8676
  %v8817 = vpack.c.b16 %v8679, %v8678
  %v8818 = vpack.c.b16 %v8681, %v8680
  %v8819 = vpack.c.b16 %v8683, %v8682
  %v8820 = vpack.c.b16 %v8685, %v8684
  %v8821 = vpack.c.b16 %v8687, %v8686
  %v8822 = vpack.c.b16 %v8689, %v8688
  %v8823 = vpack.c.b16 %v8691, %v8690
  %v8824 = vpack.c.b16 %v8693, %v8692
  %v8825 = vpack.c.b16 %v8695, %v8694
  %v8826 = vpack.c.b16 %v8697, %v8696
  %v8827 = vpack.c.b16 %v8699, %v8698
  %8956 = vmatpush.bf16.msra.mxu0 %v8707
  %8957 = vmatpush.bf16.msra.mxu0 %v8706
  %8958 = vmatpush.bf16.msra.mxu0 %v8705
  %8959 = vmatpush.bf16.msra.mxu0 %v8704
  %8960 = vmatpush.bf16.msra.mxu0 %v8703
  %8961 = vmatpush.bf16.msra.mxu0 %v8702
  %8962 = vmatpush.bf16.msra.mxu0 %v8701
  %8963 = vmatpush.bf16.msra.mxu0 %v8700
  %8964 = vmatmul.bf16.gmra.mxu0 %v7912
  %v8965 = vpop.f32.mrf.mxu0
  %v8966 = vadd.f32 %v8186, %v8965
  %v8967 = vpop.f32.mrf.mxu0
  %8968 = vdwg.mxu0
  %8969 = vmatpush.bf16.msra.mxu0 %v8715
  %8970 = vmatpush.bf16.msra.mxu0 %v8714
  %8971 = vmatpush.bf16.msra.mxu0 %v8713
  %8972 = vmatpush.bf16.msra.mxu0 %v8712
  %8973 = vmatpush.bf16.msra.mxu0 %v8711
  %8974 = vmatpush.bf16.msra.mxu0 %v8710
  %8975 = vmatpush.bf16.msra.mxu0 %v8709
  %8976 = vmatpush.bf16.msra.mxu0 %v8708
  %8977 = vmatmul.bf16.gmra.mxu0 %v7913
  %v8978 = vpop.f32.mrf.mxu0
  %v8979 = vadd.f32 %v8966, %v8978
  %v8980 = vpop.f32.mrf.mxu0
  %8981 = vdwg.mxu0
  %8982 = vmatpush.bf16.msra.mxu0 %v8723
  %8983 = vmatpush.bf16.msra.mxu0 %v8722
  %8984 = vmatpush.bf16.msra.mxu0 %v8721
  %8985 = vmatpush.bf16.msra.mxu0 %v8720
  %8986 = vmatpush.bf16.msra.mxu0 %v8719
  %8987 = vmatpush.bf16.msra.mxu0 %v8718
  %8988 = vmatpush.bf16.msra.mxu0 %v8717
  %8989 = vmatpush.bf16.msra.mxu0 %v8716
  %8990 = vmatmul.bf16.gmra.mxu0 %v7914
  %v8991 = vpop.f32.mrf.mxu0
  %v8992 = vadd.f32 %v8979, %v8991
  %v8993 = vpop.f32.mrf.mxu0
  %8994 = vdwg.mxu0
  %8995 = vmatpush.bf16.msra.mxu0 %v8731
  %8996 = vmatpush.bf16.msra.mxu0 %v8730
  %8997 = vmatpush.bf16.msra.mxu0 %v8729
  %8998 = vmatpush.bf16.msra.mxu0 %v8728
  %8999 = vmatpush.bf16.msra.mxu0 %v8727
  %9000 = vmatpush.bf16.msra.mxu0 %v8726
  %9001 = vmatpush.bf16.msra.mxu0 %v8725
  %9002 = vmatpush.bf16.msra.mxu0 %v8724
  %9003 = vmatmul.bf16.gmra.mxu0 %v7915
  %v9004 = vpop.f32.mrf.mxu0
  %v9005 = vadd.f32 %v8992, %v9004
  %v9006 = vpop.f32.mrf.mxu0
  %9007 = vdwg.mxu0
  %9008 = vmatpush.bf16.msra.mxu0 %v8739
  %9009 = vmatpush.bf16.msra.mxu0 %v8738
  %9010 = vmatpush.bf16.msra.mxu0 %v8737
  %9011 = vmatpush.bf16.msra.mxu0 %v8736
  %9012 = vmatpush.bf16.msra.mxu0 %v8735
  %9013 = vmatpush.bf16.msra.mxu0 %v8734
  %9014 = vmatpush.bf16.msra.mxu0 %v8733
  %9015 = vmatpush.bf16.msra.mxu0 %v8732
  %9016 = vmatmul.bf16.gmra.mxu0 %v7916
  %v9017 = vpop.f32.mrf.mxu0
  %v9018 = vadd.f32 %v9005, %v9017
  %v9019 = vpop.f32.mrf.mxu0
  %9020 = vdwg.mxu0
  %9021 = vmatpush.bf16.msra.mxu0 %v8747
  %9022 = vmatpush.bf16.msra.mxu0 %v8746
  %9023 = vmatpush.bf16.msra.mxu0 %v8745
  %9024 = vmatpush.bf16.msra.mxu0 %v8744
  %9025 = vmatpush.bf16.msra.mxu0 %v8743
  %9026 = vmatpush.bf16.msra.mxu0 %v8742
  %9027 = vmatpush.bf16.msra.mxu0 %v8741
  %9028 = vmatpush.bf16.msra.mxu0 %v8740
  %9029 = vmatmul.bf16.gmra.mxu0 %v7917
  %v9030 = vpop.f32.mrf.mxu0
  %v9031 = vadd.f32 %v9018, %v9030
  %v9032 = vpop.f32.mrf.mxu0
  %9033 = vdwg.mxu0
  %9034 = vmatpush.bf16.msra.mxu0 %v8755
  %9035 = vmatpush.bf16.msra.mxu0 %v8754
  %9036 = vmatpush.bf16.msra.mxu0 %v8753
  %9037 = vmatpush.bf16.msra.mxu0 %v8752
  %9038 = vmatpush.bf16.msra.mxu0 %v8751
  %9039 = vmatpush.bf16.msra.mxu0 %v8750
  %9040 = vmatpush.bf16.msra.mxu0 %v8749
  %9041 = vmatpush.bf16.msra.mxu0 %v8748
  %9042 = vmatmul.bf16.gmra.mxu0 %v7918
  %v9043 = vpop.f32.mrf.mxu0
  %v9044 = vadd.f32 %v9031, %v9043
  %v9045 = vpop.f32.mrf.mxu0
  %9046 = vdwg.mxu0
  %9047 = vmatpush.bf16.msra.mxu0 %v8763
  %9048 = vmatpush.bf16.msra.mxu0 %v8762
  %9049 = vmatpush.bf16.msra.mxu0 %v8761
  %9050 = vmatpush.bf16.msra.mxu0 %v8760
  %9051 = vmatpush.bf16.msra.mxu0 %v8759
  %9052 = vmatpush.bf16.msra.mxu0 %v8758
  %9053 = vmatpush.bf16.msra.mxu0 %v8757
  %9054 = vmatpush.bf16.msra.mxu0 %v8756
  %9055 = vmatmul.bf16.gmra.mxu0 %v7919
  %v9056 = vpop.f32.mrf.mxu0
  %v9057 = vadd.f32 %v9044, %v9056
  %v9058 = vpop.f32.mrf.mxu0
  %9059 = vdwg.mxu0
  %9060 = vmatpush.bf16.msra.mxu0 %v8771
  %9061 = vmatpush.bf16.msra.mxu0 %v8770
  %9062 = vmatpush.bf16.msra.mxu0 %v8769
  %9063 = vmatpush.bf16.msra.mxu0 %v8768
  %9064 = vmatpush.bf16.msra.mxu0 %v8767
  %9065 = vmatpush.bf16.msra.mxu0 %v8766
  %9066 = vmatpush.bf16.msra.mxu0 %v8765
  %9067 = vmatpush.bf16.msra.mxu0 %v8764
  %9068 = vmatmul.bf16.gmra.mxu0 %v7920
  %v9069 = vpop.f32.mrf.mxu0
  %v9070 = vadd.f32 %v9057, %v9069
  %v9071 = vpop.f32.mrf.mxu0
  %9072 = vdwg.mxu0
  %9073 = vmatpush.bf16.msra.mxu0 %v8779
  %9074 = vmatpush.bf16.msra.mxu0 %v8778
  %9075 = vmatpush.bf16.msra.mxu0 %v8777
  %9076 = vmatpush.bf16.msra.mxu0 %v8776
  %9077 = vmatpush.bf16.msra.mxu0 %v8775
  %9078 = vmatpush.bf16.msra.mxu0 %v8774
  %9079 = vmatpush.bf16.msra.mxu0 %v8773
  %9080 = vmatpush.bf16.msra.mxu0 %v8772
  %9081 = vmatmul.bf16.gmra.mxu0 %v7921
  %v9082 = vpop.f32.mrf.mxu0
  %v9083 = vadd.f32 %v9070, %v9082
  %v9084 = vpop.f32.mrf.mxu0
  %9085 = vdwg.mxu0
  %9086 = vmatpush.bf16.msra.mxu0 %v8787
  %9087 = vmatpush.bf16.msra.mxu0 %v8786
  %9088 = vmatpush.bf16.msra.mxu0 %v8785
  %9089 = vmatpush.bf16.msra.mxu0 %v8784
  %9090 = vmatpush.bf16.msra.mxu0 %v8783
  %9091 = vmatpush.bf16.msra.mxu0 %v8782
  %9092 = vmatpush.bf16.msra.mxu0 %v8781
  %9093 = vmatpush.bf16.msra.mxu0 %v8780
  %9094 = vmatmul.bf16.gmra.mxu0 %v7922
  %v9095 = vpop.f32.mrf.mxu0
  %v9096 = vadd.f32 %v9083, %v9095
  %v9097 = vpop.f32.mrf.mxu0
  %9098 = vdwg.mxu0
  %9099 = vmatpush.bf16.msra.mxu0 %v8795
  %9100 = vmatpush.bf16.msra.mxu0 %v8794
  %9101 = vmatpush.bf16.msra.mxu0 %v8793
  %9102 = vmatpush.bf16.msra.mxu0 %v8792
  %9103 = vmatpush.bf16.msra.mxu0 %v8791
  %9104 = vmatpush.bf16.msra.mxu0 %v8790
  %9105 = vmatpush.bf16.msra.mxu0 %v8789
  %9106 = vmatpush.bf16.msra.mxu0 %v8788
  %9107 = vmatmul.bf16.gmra.mxu0 %v7923
  %v9108 = vpop.f32.mrf.mxu0
  %v9109 = vadd.f32 %v9096, %v9108
  %v9110 = vpop.f32.mrf.mxu0
  %9111 = vdwg.mxu0
  %9112 = vmatpush.bf16.msra.mxu0 %v8803
  %9113 = vmatpush.bf16.msra.mxu0 %v8802
  %9114 = vmatpush.bf16.msra.mxu0 %v8801
  %9115 = vmatpush.bf16.msra.mxu0 %v8800
  %9116 = vmatpush.bf16.msra.mxu0 %v8799
  %9117 = vmatpush.bf16.msra.mxu0 %v8798
  %9118 = vmatpush.bf16.msra.mxu0 %v8797
  %9119 = vmatpush.bf16.msra.mxu0 %v8796
  %9120 = vmatmul.bf16.gmra.mxu0 %v7924
  %v9121 = vpop.f32.mrf.mxu0
  %v9122 = vadd.f32 %v9109, %v9121
  %v9123 = vpop.f32.mrf.mxu0
  %9124 = vdwg.mxu0
  %9125 = vmatpush.bf16.msra.mxu0 %v8811
  %9126 = vmatpush.bf16.msra.mxu0 %v8810
  %9127 = vmatpush.bf16.msra.mxu0 %v8809
  %9128 = vmatpush.bf16.msra.mxu0 %v8808
  %9129 = vmatpush.bf16.msra.mxu0 %v8807
  %9130 = vmatpush.bf16.msra.mxu0 %v8806
  %9131 = vmatpush.bf16.msra.mxu0 %v8805
  %9132 = vmatpush.bf16.msra.mxu0 %v8804
  %9133 = vmatmul.bf16.gmra.mxu0 %v7925
  %v9134 = vpop.f32.mrf.mxu0
  %v9135 = vadd.f32 %v9122, %v9134
  %v9136 = vpop.f32.mrf.mxu0
  %9137 = vdwg.mxu0
  %9138 = vmatpush.bf16.msra.mxu0 %v8819
  %9139 = vmatpush.bf16.msra.mxu0 %v8818
  %9140 = vmatpush.bf16.msra.mxu0 %v8817
  %9141 = vmatpush.bf16.msra.mxu0 %v8816
  %9142 = vmatpush.bf16.msra.mxu0 %v8815
  %9143 = vmatpush.bf16.msra.mxu0 %v8814
  %9144 = vmatpush.bf16.msra.mxu0 %v8813
  %9145 = vmatpush.bf16.msra.mxu0 %v8812
  %9146 = vmatmul.bf16.gmra.mxu0 %v7926
  %v9147 = vpop.f32.mrf.mxu0
  %v9148 = vadd.f32 %v9135, %v9147
  %v9149 = vpop.f32.mrf.mxu0
  %9150 = vdwg.mxu0
  %9151 = vmatpush.bf16.msra.mxu0 %v8827
  %9152 = vmatpush.bf16.msra.mxu0 %v8826
  %9153 = vmatpush.bf16.msra.mxu0 %v8825
  %9154 = vmatpush.bf16.msra.mxu0 %v8824
  %9155 = vmatpush.bf16.msra.mxu0 %v8823
  %9156 = vmatpush.bf16.msra.mxu0 %v8822
  %9157 = vmatpush.bf16.msra.mxu0 %v8821
  %9158 = vmatpush.bf16.msra.mxu0 %v8820
  %9159 = vmatmul.bf16.gmra.mxu0 %v7927
  %v9160 = vpop.f32.mrf.mxu0
  %v9161 = vadd.f32 %v9148, %v9160
  %v9162 = vpop.f32.mrf.mxu0
  %9163 = vdwg.mxu0
  %v9164 = vlaneseq
  %v9165 = vand.u32 %v9164, 127
  %vm9166 = vcmp.lt.s32.totalorder %v9165, 62
  %v9167 = vsel %vm9166, %v9161, -inf
  %9168 = vmax.xlane.f32.xlu0 %v9167
  %v9169 = vpop.xlane.xlu0 %9168
  %v9170 = vsub.f32 %v9167, %v9169
  %v9171 = vmul.f32 %v9170, 1.442695
  %v9172 = vpow.pop %v9171
  %9173 = vadd.xlane.f32.xlu0 %v9172
  %v9174 = vpop.xlane.xlu0 %9173
  %v9175 = vlog2.pop %v9174
  %v9176 = vmul.f32 %v9175, 0.6931472
  %v9177 = vadd.f32 %v9169, %v9176
  %v9178 = vsub.f32 %v9167, %v9177
  %9179 = vst [vmem:[%s5] sm:$0xff] %v9178
  // Predicated region
  $region22: #{flnet_forward.5} parent=0 // pred_check
    _
  $region23: #{flnet_forward.5} parent=0 // pred_check_branch
    %9181 = sbr.rel (0) target = $region25
  $region24: #{flnet_forward.5} parent=0 // pred_region
    _
  $region25: #{flnet_forward.5} parent=0 // pred_fallthru
    _
  // Predicated region
  $region26: #{flnet_forward.5} parent=0 // pred_check
    _
  $region27: #{flnet_forward.5} parent=0 // pred_check_branch
    %9183 = sbr.rel (0) target = $region29
  $region28: #{flnet_forward.5} parent=0 // pred_region
    _
  $region29: #{flnet_forward.5} parent=0 // pred_fallthru
    _

</llo_original>
